<compile_context>
chip_gen: v7x
topology: tpu7x:2x2x1
jax: 0.10.0
libtpu: 0.0.40
codegen_flags: <defaults>
</compile_context>

<pallas_src>
import functools

import jax
import jax.numpy as jnp
from jax.experimental import pallas as pl
from jax.experimental.pallas import tpu as pltpu

BN_EPS = 1e-5
C_POL = 64          # policy-head conv channels
C_VAL = 6           # value-head conv channels
HEAD_PAD = 128      # combined head-conv output width (lane-dense)

_VMEM = pl.BlockSpec(memory_space=pltpu.MemorySpace.VMEM)


# ----------------------------------------------------------------------------
# Kernel 1: fused conv backbone (start + res blocks + combined head conv)
# ----------------------------------------------------------------------------
def _fused_convnet_kernel(x_ref, bbw_ref, bbg_ref, bbb_ref,
                          hw_ref, hg_ref, hb_ref,
                          head_ref, xpad_ref, *, num_res_blocks):
    """All convs of the network in one VMEM-resident kernel.

    x_ref:   (N, H, W, Cin_raw) f32   raw input planes (13 channels)
    bbw_ref: (1+2*nb, 9*C, C)  bf16   start + res-block conv weights (K-merged)
    bbg/bbb: (1+2*nb, 1, C)    f32    BN gamma/beta
    hw_ref:  (9*C, 128) bf16, hg/hb: (1, 128) f32   fused policy+value head conv/BN
    head_ref:(M, 128)  bf16          cols 0:64 policy act, 64:70 value act
    xpad_ref:(N, H+2, W+2, C)  f32   padded activation scratch (VMEM)
    """
    N, Hp, Wp, C = xpad_ref.shape
    H, W = Hp - 2, Wp - 2
    M = N * H * W
    cin_raw = x_ref.shape[-1]

    # Zero the padded buffer (border must stay 0 for 'same' 3x3 conv), then
    # place the input planes in the interior; channels >= cin_raw stay 0.
    xpad_ref[...] = jnp.zeros_like(xpad_ref)
    xpad_ref[:, 1:H + 1, 1:W + 1, :cin_raw] = x_ref[...].astype(xpad_ref.dtype)

    def gather_patches():
        # In-kernel im2col: 9 statically shifted reads of the padded activation,
        # merged along lanes -> the conv becomes ONE K = 9*C matmul.
        taps = []
        for dy in range(3):
            for dx in range(3):
                t = xpad_ref[:, dy:dy + H, dx:dx + W, :].astype(jnp.bfloat16)
                taps.append(t.reshape(M, C))
        return jnp.concatenate(taps, axis=1)                 # (M, 9*C) bf16

    def conv_bn_relu(patches, w, gamma, beta, *, residual=None):
        # Single MXU matmul (bf16 in, f32 accumulate).
        acc = jnp.dot(patches, w, preferred_element_type=jnp.float32)
        # One-pass BatchNorm2d training-mode statistics over M = N*H*W.
        # (No conv bias: it is cancelled exactly by the mean subtraction.)
        mean = jnp.mean(acc, axis=0, keepdims=True)
        var = jnp.maximum(jnp.mean(acc * acc, axis=0, keepdims=True)
                          - mean * mean, 0.0)
        y = (acc - mean) * jax.lax.rsqrt(var + BN_EPS)
        y = y * gamma + beta
        if residual is not None:
            y = y + residual
        return jnp.maximum(y, 0.0)                           # (M, Cout) f32

    def writeback(y):
        xpad_ref[:, 1:H + 1, 1:W + 1, :] = (
            y.astype(xpad_ref.dtype).reshape(N, H, W, C))

    # startBlock: conv -> BN -> ReLU
    writeback(conv_bn_relu(gather_patches(), bbw_ref[0], bbg_ref[0], bbb_ref[0]))

    # backBone: ResBlocks (conv->BN->ReLU, conv->BN, +residual, ReLU)
    for b in range(num_res_blocks):
        res = xpad_ref[:, 1:H + 1, 1:W + 1, :].reshape(M, C)
        writeback(conv_bn_relu(gather_patches(),
                               bbw_ref[1 + 2 * b], bbg_ref[1 + 2 * b],
                               bbb_ref[1 + 2 * b]))
        writeback(conv_bn_relu(gather_patches(),
                               bbw_ref[2 + 2 * b], bbg_ref[2 + 2 * b],
                               bbb_ref[2 + 2 * b], residual=res))

    # Heads: policy(64) + value(6) convs fused into one matmul / one BN pass /
    # one lane-dense 128-wide store.  Padded columns stay exactly 0.
    head_ref[...] = conv_bn_relu(gather_patches(), hw_ref[...], hg_ref[...],
                                 hb_ref[...]).astype(head_ref.dtype)


# ----------------------------------------------------------------------------
# Kernel 2: both fully-connected heads (policy logits + tanh value)
# ----------------------------------------------------------------------------
def _heads_fc_kernel(pf_ref, vf_ref, pw_ref, pb_ref, vw_ref, vb_ref,
                     pol_ref, val_ref):
    pol = jnp.dot(pf_ref[...], pw_ref[...], preferred_element_type=jnp.float32)
    pol_ref[...] = pol + pb_ref[...]          # (N, 256) lane-dense store
    val = jnp.dot(vf_ref[...], vw_ref[...], preferred_element_type=jnp.float32)
    val_ref[...] = jnp.tanh(val + vb_ref[...])


# ----------------------------------------------------------------------------
# Parameter init (deterministic, synthetic)
# ----------------------------------------------------------------------------
class Game:
    row_count = 8
    column_count = 8
    action_size = 64
    promotion_size = 8


def init_params(key, num_res_blocks, num_hidden, game):
    assert num_hidden >= 13
    H, W = game.row_count, game.column_count
    n_policy = game.action_size * 2 + game.promotion_size        # 136
    n_policy_pad = pl.cdiv(n_policy, 128) * 128                  # 256 (lane-dense)
    keys = iter(jax.random.split(key, 4 * num_res_blocks + 16))

    def conv_w(cin, cout):
        # 3x3 conv stored as a (9*num_hidden, cout) matrix, rows grouped
        # (tap-major, cin-minor).  Input planes below num_hidden (start block:
        # 13) are zero-padded; conv bias is omitted (cancelled by BN).
        w = 0.1 * jax.random.normal(next(keys), (9, cin, cout), jnp.float32)
        if cin < num_hidden:
            w = jnp.pad(w, ((0, 0), (0, num_hidden - cin), (0, 0)))
        return w.reshape(9 * num_hidden, cout).astype(jnp.bfloat16)

    L = 1 + 2 * num_res_blocks
    bb_w = jnp.stack([conv_w(13, num_hidden)]
                     + [conv_w(num_hidden, num_hidden)
                        for _ in range(2 * num_res_blocks)])
    bb_g = jnp.ones((L, 1, num_hidden), jnp.float32)
    bb_b = jnp.zeros((L, 1, num_hidden), jnp.float32)

    # Fused policy(64ch)+value(6ch) head conv, padded to 128 output columns so
    # the fused kernel does ONE matmul and ONE lane-dense store for both heads.
    pol_conv_w = conv_w(num_hidden, C_POL)
    val_conv_w = conv_w(num_hidden, C_VAL)
    head_conv_w = jnp.pad(jnp.concatenate([pol_conv_w, val_conv_w], axis=1),
                          ((0, 0), (0, HEAD_PAD - C_POL - C_VAL)))
    head_conv_g = jnp.pad(jnp.ones((1, C_POL + C_VAL), jnp.float32),
                          ((0, 0), (0, HEAD_PAD - C_POL - C_VAL)))
    head_conv_b = jnp.zeros((1, HEAD_PAD), jnp.float32)

    # FC weights: rows are stored in NHWC (h, w, c) flatten order.  When
    # porting real PyTorch weights, permute rows from (c, h, w) order once at
    # load time (no runtime transposes).  Policy output padded to 256 columns.
    pol_fc_w = (jax.random.normal(next(keys), (C_POL * H * W, n_policy),
                                  jnp.float32) / jnp.sqrt(float(C_POL * H * W)))
    pol_fc_w = jnp.pad(pol_fc_w,
                       ((0, 0), (0, n_policy_pad - n_policy))).astype(jnp.bfloat16)
    pol_fc_b = jnp.pad(
        0.01 * jax.random.normal(next(keys), (1, n_policy), jnp.float32),
        ((0, 0), (0, n_policy_pad - n_policy)))
    val_fc_w = (jax.random.normal(next(keys), (C_VAL * H * W, 1), jnp.float32)
                / jnp.sqrt(float(C_VAL * H * W))).astype(jnp.bfloat16)
    val_fc_b = jnp.zeros((1, 1), jnp.float32)

    return {
        "bb_w": bb_w, "bb_g": bb_g, "bb_b": bb_b,
        "head_conv_w": head_conv_w,
        "head_conv_g": head_conv_g,
        "head_conv_b": head_conv_b,
        "pol_fc_w": pol_fc_w, "pol_fc_b": pol_fc_b,
        "val_fc_w": val_fc_w, "val_fc_b": val_fc_b,
    }


# ----------------------------------------------------------------------------
# Forward pass (mirrors ResNet.forward)
# ----------------------------------------------------------------------------
def resnet_forward(params, x_nchw, game):
    N = x_nchw.shape[0]
    H, W = game.row_count, game.column_count
    num_hidden = params["bb_w"].shape[-1]
    num_res_blocks = (params["bb_w"].shape[0] - 1) // 2
    M = N * H * W

    # Only NCHW -> NHWC layout plumbing happens in XLA (channels on lanes).
    x = jnp.transpose(x_nchw, (0, 2, 3, 1))

    head_act = pl.pallas_call(
        functools.partial(_fused_convnet_kernel, num_res_blocks=num_res_blocks),
        out_shape=jax.ShapeDtypeStruct((M, HEAD_PAD), jnp.bfloat16),
        in_specs=[_VMEM] * 7,
        out_specs=_VMEM,
        scratch_shapes=[pltpu.VMEM((N, H + 2, W + 2, num_hidden), jnp.float32)],
    )(x, params["bb_w"], params["bb_g"], params["bb_b"],
      params["head_conv_w"], params["head_conv_g"], params["head_conv_b"])

    # Per-sample NHWC flatten (FC weight rows are stored in this order).
    p_flat = head_act[:, :C_POL].reshape(N, H * W * C_POL)
    v_flat = head_act[:, C_POL:C_POL + C_VAL].reshape(N, H * W * C_VAL)

    pol_pad, value = pl.pallas_call(
        _heads_fc_kernel,
        out_shape=(jax.ShapeDtypeStruct((N, params["pol_fc_w"].shape[-1]),
                                        jnp.float32),
                   jax.ShapeDtypeStruct((N, 1), jnp.float32)),
        in_specs=[_VMEM] * 6,
        out_specs=(_VMEM, _VMEM),
    )(p_flat, v_flat, params["pol_fc_w"], params["pol_fc_b"],
      params["val_fc_w"], params["val_fc_b"])

    n_policy = game.action_size * 2 + game.promotion_size
    start_policy = pol_pad[:, :game.action_size]
    end_policy = pol_pad[:, game.action_size:n_policy]
    return start_policy, end_policy, value


# ----------------------------------------------------------------------------
if __name__ == "__main__":
    game = Game()
    num_res_blocks = 2
    num_hidden = 32
    batch = 2

    key = jax.random.PRNGKey(0)
    pkey, xkey = jax.random.split(key)
    params = init_params(pkey, num_res_blocks, num_hidden, game)

    # PyTorch-convention input: NCHW, 13 input planes, 8x8 board.
    x = jax.random.normal(xkey, (batch, 13, game.row_count, game.column_count),
                          jnp.float32)

    fwd = jax.jit(functools.partial(resnet_forward, game=game))
    start_policy, end_policy, value = fwd(params, x)
    jax.block_until_ready((start_policy, end_policy, value))

    assert start_policy.shape == (batch, game.action_size)
    assert end_policy.shape == (batch, game.action_size + game.promotion_size)
    assert value.shape == (batch, 1)
    assert bool(jnp.all(jnp.isfinite(start_policy)))
    assert bool(jnp.all(jnp.isfinite(end_policy)))
    assert bool(jnp.all(jnp.isfinite(value)))
    assert bool(jnp.all(jnp.abs(value) <= 1.0))
    print("KERNEL_OK")
</pallas_src>

<mosaic_0001>
module attributes {stable_mosaic.version = 11 : i64} {
  func.func @_fused_convnet_kernel(%arg0: memref<2x8x8x13xf32, #tpu.memory_space<vmem>>, %arg1: memref<5x288x32xbf16, #tpu.memory_space<vmem>>, %arg2: memref<5x1x32xf32, #tpu.memory_space<vmem>>, %arg3: memref<5x1x32xf32, #tpu.memory_space<vmem>>, %arg4: memref<288x128xbf16, #tpu.memory_space<vmem>>, %arg5: memref<1x128xf32, #tpu.memory_space<vmem>>, %arg6: memref<1x128xf32, #tpu.memory_space<vmem>>, %arg7: memref<128x128xbf16, #tpu.memory_space<vmem>>, %arg8: memref<2x10x10x32xf32, #tpu.memory_space<vmem>>) attributes {dimension_semantics = [], scalar_prefetch = 0 : i64, scratch_operands = 1 : i64, tpu.core_type = #tpu.core_type<tc>} {
    %cst = arith.constant 0.000000e+00 : f32
    %0 = vector.broadcast %cst : f32 to vector<2x10x10x32xf32>
    %c0 = arith.constant 0 : index
    %c0_0 = arith.constant 0 : index
    %c0_1 = arith.constant 0 : index
    %c0_2 = arith.constant 0 : index
    %1 = vector.load %arg8[%c0, %c0_0, %c0_1, %c0_2] : memref<2x10x10x32xf32, #tpu.memory_space<vmem>>, vector<2x10x10x32xf32>
    tpu.vector_store %arg8[%c0, %c0_0, %c0_1, %c0_2], %0 {strides = array<i32>} : memref<2x10x10x32xf32, #tpu.memory_space<vmem>>, vector<2x10x10x32xf32>,
    %c0_3 = arith.constant 0 : index
    %c0_4 = arith.constant 0 : index
    %c0_5 = arith.constant 0 : index
    %c0_6 = arith.constant 0 : index
    %2 = vector.load %arg0[%c0_3, %c0_4, %c0_5, %c0_6] : memref<2x8x8x13xf32, #tpu.memory_space<vmem>>, vector<2x8x8x13xf32>
    %c0_7 = arith.constant 0 : index
    %c1 = arith.constant 1 : index
    %c1_8 = arith.constant 1 : index
    %c0_9 = arith.constant 0 : index
    %3 = vector.load %arg8[%c0_7, %c1, %c1_8, %c0_9] : memref<2x10x10x32xf32, #tpu.memory_space<vmem>>, vector<2x8x8x13xf32>
    tpu.vector_store %arg8[%c0_7, %c1, %c1_8, %c0_9], %2 {strides = array<i32>} : memref<2x10x10x32xf32, #tpu.memory_space<vmem>>, vector<2x8x8x13xf32>,
    %c0_10 = arith.constant 0 : index
    %c0_11 = arith.constant 0 : index
    %c0_12 = arith.constant 0 : index
    %c0_13 = arith.constant 0 : index
    %4 = vector.load %arg8[%c0_10, %c0_11, %c0_12, %c0_13] : memref<2x10x10x32xf32, #tpu.memory_space<vmem>>, vector<2x8x8x32xf32>
    %5 = arith.truncf %4 : vector<2x8x8x32xf32> to vector<2x8x8x32xbf16>
    %6 = vector.shape_cast %5 : vector<2x8x8x32xbf16> to vector<128x32xbf16>
    %c0_14 = arith.constant 0 : index
    %c0_15 = arith.constant 0 : index
    %c1_16 = arith.constant 1 : index
    %c0_17 = arith.constant 0 : index
    %7 = vector.load %arg8[%c0_14, %c0_15, %c1_16, %c0_17] : memref<2x10x10x32xf32, #tpu.memory_space<vmem>>, vector<2x8x8x32xf32>
    %8 = arith.truncf %7 : vector<2x8x8x32xf32> to vector<2x8x8x32xbf16>
    %9 = vector.shape_cast %8 : vector<2x8x8x32xbf16> to vector<128x32xbf16>
    %c0_18 = arith.constant 0 : index
    %c0_19 = arith.constant 0 : index
    %c2 = arith.constant 2 : index
    %c0_20 = arith.constant 0 : index
    %10 = vector.load %arg8[%c0_18, %c0_19, %c2, %c0_20] : memref<2x10x10x32xf32, #tpu.memory_space<vmem>>, vector<2x8x8x32xf32>
    %11 = arith.truncf %10 : vector<2x8x8x32xf32> to vector<2x8x8x32xbf16>
    %12 = vector.shape_cast %11 : vector<2x8x8x32xbf16> to vector<128x32xbf16>
    %c0_21 = arith.constant 0 : index
    %c1_22 = arith.constant 1 : index
    %c0_23 = arith.constant 0 : index
    %c0_24 = arith.constant 0 : index
    %13 = vector.load %arg8[%c0_21, %c1_22, %c0_23, %c0_24] : memref<2x10x10x32xf32, #tpu.memory_space<vmem>>, vector<2x8x8x32xf32>
    %14 = arith.truncf %13 : vector<2x8x8x32xf32> to vector<2x8x8x32xbf16>
    %15 = vector.shape_cast %14 : vector<2x8x8x32xbf16> to vector<128x32xbf16>
    %c0_25 = arith.constant 0 : index
    %c1_26 = arith.constant 1 : index
    %c1_27 = arith.constant 1 : index
    %c0_28 = arith.constant 0 : index
    %16 = vector.load %arg8[%c0_25, %c1_26, %c1_27, %c0_28] : memref<2x10x10x32xf32, #tpu.memory_space<vmem>>, vector<2x8x8x32xf32>
    %17 = arith.truncf %16 : vector<2x8x8x32xf32> to vector<2x8x8x32xbf16>
    %18 = vector.shape_cast %17 : vector<2x8x8x32xbf16> to vector<128x32xbf16>
    %c0_29 = arith.constant 0 : index
    %c1_30 = arith.constant 1 : index
    %c2_31 = arith.constant 2 : index
    %c0_32 = arith.constant 0 : index
    %19 = vector.load %arg8[%c0_29, %c1_30, %c2_31, %c0_32] : memref<2x10x10x32xf32, #tpu.memory_space<vmem>>, vector<2x8x8x32xf32>
    %20 = arith.truncf %19 : vector<2x8x8x32xf32> to vector<2x8x8x32xbf16>
    %21 = vector.shape_cast %20 : vector<2x8x8x32xbf16> to vector<128x32xbf16>
    %c0_33 = arith.constant 0 : index
    %c2_34 = arith.constant 2 : index
    %c0_35 = arith.constant 0 : index
    %c0_36 = arith.constant 0 : index
    %22 = vector.load %arg8[%c0_33, %c2_34, %c0_35, %c0_36] : memref<2x10x10x32xf32, #tpu.memory_space<vmem>>, vector<2x8x8x32xf32>
    %23 = arith.truncf %22 : vector<2x8x8x32xf32> to vector<2x8x8x32xbf16>
    %24 = vector.shape_cast %23 : vector<2x8x8x32xbf16> to vector<128x32xbf16>
    %c0_37 = arith.constant 0 : index
    %c2_38 = arith.constant 2 : index
    %c1_39 = arith.constant 1 : index
    %c0_40 = arith.constant 0 : index
    %25 = vector.load %arg8[%c0_37, %c2_38, %c1_39, %c0_40] : memref<2x10x10x32xf32, #tpu.memory_space<vmem>>, vector<2x8x8x32xf32>
    %26 = arith.truncf %25 : vector<2x8x8x32xf32> to vector<2x8x8x32xbf16>
    %27 = vector.shape_cast %26 : vector<2x8x8x32xbf16> to vector<128x32xbf16>
    %c0_41 = arith.constant 0 : index
    %c2_42 = arith.constant 2 : index
    %c2_43 = arith.constant 2 : index
    %c0_44 = arith.constant 0 : index
    %28 = vector.load %arg8[%c0_41, %c2_42, %c2_43, %c0_44] : memref<2x10x10x32xf32, #tpu.memory_space<vmem>>, vector<2x8x8x32xf32>
    %29 = arith.truncf %28 : vector<2x8x8x32xf32> to vector<2x8x8x32xbf16>
    %30 = vector.shape_cast %29 : vector<2x8x8x32xbf16> to vector<128x32xbf16>
    %31 = tpu.concatenate %6, %9, %12, %15, %18, %21, %24, %27, %30 in 1 : vector<128x32xbf16>, vector<128x32xbf16>, vector<128x32xbf16>, vector<128x32xbf16>, vector<128x32xbf16>, vector<128x32xbf16>, vector<128x32xbf16>, vector<128x32xbf16>, vector<128x32xbf16> -> vector<128x288xbf16>
    %c0_45 = arith.constant 0 : index
    %c0_46 = arith.constant 0 : index
    %c0_47 = arith.constant 0 : index
    %32 = vector.load %arg1[%c0_45, %c0_46, %c0_47] : memref<5x288x32xbf16, #tpu.memory_space<vmem>>, vector<1x288x32xbf16>
    %33 = vector.shape_cast %32 : vector<1x288x32xbf16> to vector<288x32xbf16>
    %c0_48 = arith.constant 0 : index
    %c0_49 = arith.constant 0 : index
    %c0_50 = arith.constant 0 : index
    %34 = vector.load %arg2[%c0_48, %c0_49, %c0_50] : memref<5x1x32xf32, #tpu.memory_space<vmem>>, vector<1x1x32xf32>
    %35 = vector.shape_cast %34 : vector<1x1x32xf32> to vector<1x32xf32>
    %c0_51 = arith.constant 0 : index
    %c0_52 = arith.constant 0 : index
    %c0_53 = arith.constant 0 : index
    %36 = vector.load %arg3[%c0_51, %c0_52, %c0_53] : memref<5x1x32xf32, #tpu.memory_space<vmem>>, vector<1x1x32xf32>
    %37 = vector.shape_cast %36 : vector<1x1x32xf32> to vector<1x32xf32>
    %cst_54 = arith.constant dense<0.000000e+00> : vector<128x32xf32>
    %38 = tpu.matmul %31, %33, %cst_54 {dimension_numbers = #tpu.dot_dimension_numbers<[1], [0], [0], [1], [0, 0, 1, 1], [], []>} : vector<128x288xbf16>, vector<288x32xbf16>, vector<128x32xf32> -> vector<128x32xf32>
    %cst_55 = arith.constant dense<0.000000e+00> : vector<32xf32>
    %39 = vector.multi_reduction <add>, %38, %cst_55 [0] : vector<128x32xf32> to vector<32xf32>
    %40 = vector.shape_cast %39 : vector<32xf32> to vector<1x32xf32>
    %cst_56 = arith.constant 1.280000e+02 : f32
    %41 = vector.broadcast %cst_56 : f32 to vector<1x32xf32>
    %42 = arith.divf %40, %41 : vector<1x32xf32>
    %43 = arith.mulf %38, %38 : vector<128x32xf32>
    %cst_57 = arith.constant dense<0.000000e+00> : vector<32xf32>
    %44 = vector.multi_reduction <add>, %43, %cst_57 [0] : vector<128x32xf32> to vector<32xf32>
    %45 = vector.shape_cast %44 : vector<32xf32> to vector<1x32xf32>
    %cst_58 = arith.constant 1.280000e+02 : f32
    %46 = vector.broadcast %cst_58 : f32 to vector<1x32xf32>
    %47 = arith.divf %45, %46 : vector<1x32xf32>
    %48 = arith.mulf %42, %42 : vector<1x32xf32>
    %49 = arith.subf %47, %48 : vector<1x32xf32>
    %cst_59 = arith.constant 0.000000e+00 : f32
    %50 = vector.broadcast %cst_59 : f32 to vector<1x32xf32>
    %51 = arith.maximumf %49, %50 : vector<1x32xf32>
    %52 = vector.broadcast %42 : vector<1x32xf32> to vector<128x32xf32>
    %53 = arith.subf %38, %52 : vector<128x32xf32>
    %cst_60 = arith.constant 9.99999974E-6 : f32
    %54 = vector.broadcast %cst_60 : f32 to vector<1x32xf32>
    %55 = arith.addf %51, %54 : vector<1x32xf32>
    %56 = math.rsqrt %55 : vector<1x32xf32>
    %57 = vector.broadcast %56 : vector<1x32xf32> to vector<128x32xf32>
    %58 = arith.mulf %53, %57 : vector<128x32xf32>
    %59 = vector.broadcast %35 : vector<1x32xf32> to vector<128x32xf32>
    %60 = arith.mulf %58, %59 : vector<128x32xf32>
    %61 = vector.broadcast %37 : vector<1x32xf32> to vector<128x32xf32>
    %62 = arith.addf %60, %61 : vector<128x32xf32>
    %cst_61 = arith.constant 0.000000e+00 : f32
    %63 = vector.broadcast %cst_61 : f32 to vector<128x32xf32>
    %64 = arith.maximumf %62, %63 : vector<128x32xf32>
    %65 = vector.shape_cast %64 : vector<128x32xf32> to vector<2x8x8x32xf32>
    %c0_62 = arith.constant 0 : index
    %c1_63 = arith.constant 1 : index
    %c1_64 = arith.constant 1 : index
    %c0_65 = arith.constant 0 : index
    %66 = vector.load %arg8[%c0_62, %c1_63, %c1_64, %c0_65] : memref<2x10x10x32xf32, #tpu.memory_space<vmem>>, vector<2x8x8x32xf32>
    tpu.vector_store %arg8[%c0_62, %c1_63, %c1_64, %c0_65], %65 {strides = array<i32>} : memref<2x10x10x32xf32, #tpu.memory_space<vmem>>, vector<2x8x8x32xf32>,
    %c0_66 = arith.constant 0 : index
    %c1_67 = arith.constant 1 : index
    %c1_68 = arith.constant 1 : index
    %c0_69 = arith.constant 0 : index
    %67 = vector.load %arg8[%c0_66, %c1_67, %c1_68, %c0_69] : memref<2x10x10x32xf32, #tpu.memory_space<vmem>>, vector<2x8x8x32xf32>
    %68 = vector.shape_cast %67 : vector<2x8x8x32xf32> to vector<128x32xf32>
    %c0_70 = arith.constant 0 : index
    %c0_71 = arith.constant 0 : index
    %c0_72 = arith.constant 0 : index
    %c0_73 = arith.constant 0 : index
    %69 = vector.load %arg8[%c0_70, %c0_71, %c0_72, %c0_73] : memref<2x10x10x32xf32, #tpu.memory_space<vmem>>, vector<2x8x8x32xf32>
    %70 = arith.truncf %69 : vector<2x8x8x32xf32> to vector<2x8x8x32xbf16>
    %71 = vector.shape_cast %70 : vector<2x8x8x32xbf16> to vector<128x32xbf16>
    %c0_74 = arith.constant 0 : index
    %c0_75 = arith.constant 0 : index
    %c1_76 = arith.constant 1 : index
    %c0_77 = arith.constant 0 : index
    %72 = vector.load %arg8[%c0_74, %c0_75, %c1_76, %c0_77] : memref<2x10x10x32xf32, #tpu.memory_space<vmem>>, vector<2x8x8x32xf32>
    %73 = arith.truncf %72 : vector<2x8x8x32xf32> to vector<2x8x8x32xbf16>
    %74 = vector.shape_cast %73 : vector<2x8x8x32xbf16> to vector<128x32xbf16>
    %c0_78 = arith.constant 0 : index
    %c0_79 = arith.constant 0 : index
    %c2_80 = arith.constant 2 : index
    %c0_81 = arith.constant 0 : index
    %75 = vector.load %arg8[%c0_78, %c0_79, %c2_80, %c0_81] : memref<2x10x10x32xf32, #tpu.memory_space<vmem>>, vector<2x8x8x32xf32>
    %76 = arith.truncf %75 : vector<2x8x8x32xf32> to vector<2x8x8x32xbf16>
    %77 = vector.shape_cast %76 : vector<2x8x8x32xbf16> to vector<128x32xbf16>
    %c0_82 = arith.constant 0 : index
    %c1_83 = arith.constant 1 : index
    %c0_84 = arith.constant 0 : index
    %c0_85 = arith.constant 0 : index
    %78 = vector.load %arg8[%c0_82, %c1_83, %c0_84, %c0_85] : memref<2x10x10x32xf32, #tpu.memory_space<vmem>>, vector<2x8x8x32xf32>
    %79 = arith.truncf %78 : vector<2x8x8x32xf32> to vector<2x8x8x32xbf16>
    %80 = vector.shape_cast %79 : vector<2x8x8x32xbf16> to vector<128x32xbf16>
    %c0_86 = arith.constant 0 : index
    %c1_87 = arith.constant 1 : index
    %c1_88 = arith.constant 1 : index
    %c0_89 = arith.constant 0 : index
    %81 = vector.load %arg8[%c0_86, %c1_87, %c1_88, %c0_89] : memref<2x10x10x32xf32, #tpu.memory_space<vmem>>, vector<2x8x8x32xf32>
    %82 = arith.truncf %81 : vector<2x8x8x32xf32> to vector<2x8x8x32xbf16>
    %83 = vector.shape_cast %82 : vector<2x8x8x32xbf16> to vector<128x32xbf16>
    %c0_90 = arith.constant 0 : index
    %c1_91 = arith.constant 1 : index
    %c2_92 = arith.constant 2 : index
    %c0_93 = arith.constant 0 : index
    %84 = vector.load %arg8[%c0_90, %c1_91, %c2_92, %c0_93] : memref<2x10x10x32xf32, #tpu.memory_space<vmem>>, vector<2x8x8x32xf32>
    %85 = arith.truncf %84 : vector<2x8x8x32xf32> to vector<2x8x8x32xbf16>
    %86 = vector.shape_cast %85 : vector<2x8x8x32xbf16> to vector<128x32xbf16>
    %c0_94 = arith.constant 0 : index
    %c2_95 = arith.constant 2 : index
    %c0_96 = arith.constant 0 : index
    %c0_97 = arith.constant 0 : index
    %87 = vector.load %arg8[%c0_94, %c2_95, %c0_96, %c0_97] : memref<2x10x10x32xf32, #tpu.memory_space<vmem>>, vector<2x8x8x32xf32>
    %88 = arith.truncf %87 : vector<2x8x8x32xf32> to vector<2x8x8x32xbf16>
    %89 = vector.shape_cast %88 : vector<2x8x8x32xbf16> to vector<128x32xbf16>
    %c0_98 = arith.constant 0 : index
    %c2_99 = arith.constant 2 : index
    %c1_100 = arith.constant 1 : index
    %c0_101 = arith.constant 0 : index
    %90 = vector.load %arg8[%c0_98, %c2_99, %c1_100, %c0_101] : memref<2x10x10x32xf32, #tpu.memory_space<vmem>>, vector<2x8x8x32xf32>
    %91 = arith.truncf %90 : vector<2x8x8x32xf32> to vector<2x8x8x32xbf16>
    %92 = vector.shape_cast %91 : vector<2x8x8x32xbf16> to vector<128x32xbf16>
    %c0_102 = arith.constant 0 : index
    %c2_103 = arith.constant 2 : index
    %c2_104 = arith.constant 2 : index
    %c0_105 = arith.constant 0 : index
    %93 = vector.load %arg8[%c0_102, %c2_103, %c2_104, %c0_105] : memref<2x10x10x32xf32, #tpu.memory_space<vmem>>, vector<2x8x8x32xf32>
    %94 = arith.truncf %93 : vector<2x8x8x32xf32> to vector<2x8x8x32xbf16>
    %95 = vector.shape_cast %94 : vector<2x8x8x32xbf16> to vector<128x32xbf16>
    %96 = tpu.concatenate %71, %74, %77, %80, %83, %86, %89, %92, %95 in 1 : vector<128x32xbf16>, vector<128x32xbf16>, vector<128x32xbf16>, vector<128x32xbf16>, vector<128x32xbf16>, vector<128x32xbf16>, vector<128x32xbf16>, vector<128x32xbf16>, vector<128x32xbf16> -> vector<128x288xbf16>
    %c1_106 = arith.constant 1 : index
    %c0_107 = arith.constant 0 : index
    %c0_108 = arith.constant 0 : index
    %97 = vector.load %arg1[%c1_106, %c0_107, %c0_108] : memref<5x288x32xbf16, #tpu.memory_space<vmem>>, vector<1x288x32xbf16>
    %98 = vector.shape_cast %97 : vector<1x288x32xbf16> to vector<288x32xbf16>
    %c1_109 = arith.constant 1 : index
    %c0_110 = arith.constant 0 : index
    %c0_111 = arith.constant 0 : index
    %99 = vector.load %arg2[%c1_109, %c0_110, %c0_111] : memref<5x1x32xf32, #tpu.memory_space<vmem>>, vector<1x1x32xf32>
    %100 = vector.shape_cast %99 : vector<1x1x32xf32> to vector<1x32xf32>
    %c1_112 = arith.constant 1 : index
    %c0_113 = arith.constant 0 : index
    %c0_114 = arith.constant 0 : index
    %101 = vector.load %arg3[%c1_112, %c0_113, %c0_114] : memref<5x1x32xf32, #tpu.memory_space<vmem>>, vector<1x1x32xf32>
    %102 = vector.shape_cast %101 : vector<1x1x32xf32> to vector<1x32xf32>
    %cst_115 = arith.constant dense<0.000000e+00> : vector<128x32xf32>
    %103 = tpu.matmul %96, %98, %cst_115 {dimension_numbers = #tpu.dot_dimension_numbers<[1], [0], [0], [1], [0, 0, 1, 1], [], []>} : vector<128x288xbf16>, vector<288x32xbf16>, vector<128x32xf32> -> vector<128x32xf32>
    %cst_116 = arith.constant dense<0.000000e+00> : vector<32xf32>
    %104 = vector.multi_reduction <add>, %103, %cst_116 [0] : vector<128x32xf32> to vector<32xf32>
    %105 = vector.shape_cast %104 : vector<32xf32> to vector<1x32xf32>
    %cst_117 = arith.constant 1.280000e+02 : f32
    %106 = vector.broadcast %cst_117 : f32 to vector<1x32xf32>
    %107 = arith.divf %105, %106 : vector<1x32xf32>
    %108 = arith.mulf %103, %103 : vector<128x32xf32>
    %cst_118 = arith.constant dense<0.000000e+00> : vector<32xf32>
    %109 = vector.multi_reduction <add>, %108, %cst_118 [0] : vector<128x32xf32> to vector<32xf32>
    %110 = vector.shape_cast %109 : vector<32xf32> to vector<1x32xf32>
    %cst_119 = arith.constant 1.280000e+02 : f32
    %111 = vector.broadcast %cst_119 : f32 to vector<1x32xf32>
    %112 = arith.divf %110, %111 : vector<1x32xf32>
    %113 = arith.mulf %107, %107 : vector<1x32xf32>
    %114 = arith.subf %112, %113 : vector<1x32xf32>
    %cst_120 = arith.constant 0.000000e+00 : f32
    %115 = vector.broadcast %cst_120 : f32 to vector<1x32xf32>
    %116 = arith.maximumf %114, %115 : vector<1x32xf32>
    %117 = vector.broadcast %107 : vector<1x32xf32> to vector<128x32xf32>
    %118 = arith.subf %103, %117 : vector<128x32xf32>
    %cst_121 = arith.constant 9.99999974E-6 : f32
    %119 = vector.broadcast %cst_121 : f32 to vector<1x32xf32>
    %120 = arith.addf %116, %119 : vector<1x32xf32>
    %121 = math.rsqrt %120 : vector<1x32xf32>
    %122 = vector.broadcast %121 : vector<1x32xf32> to vector<128x32xf32>
    %123 = arith.mulf %118, %122 : vector<128x32xf32>
    %124 = vector.broadcast %100 : vector<1x32xf32> to vector<128x32xf32>
    %125 = arith.mulf %123, %124 : vector<128x32xf32>
    %126 = vector.broadcast %102 : vector<1x32xf32> to vector<128x32xf32>
    %127 = arith.addf %125, %126 : vector<128x32xf32>
    %cst_122 = arith.constant 0.000000e+00 : f32
    %128 = vector.broadcast %cst_122 : f32 to vector<128x32xf32>
    %129 = arith.maximumf %127, %128 : vector<128x32xf32>
    %130 = vector.shape_cast %129 : vector<128x32xf32> to vector<2x8x8x32xf32>
    %c0_123 = arith.constant 0 : index
    %c1_124 = arith.constant 1 : index
    %c1_125 = arith.constant 1 : index
    %c0_126 = arith.constant 0 : index
    %131 = vector.load %arg8[%c0_123, %c1_124, %c1_125, %c0_126] : memref<2x10x10x32xf32, #tpu.memory_space<vmem>>, vector<2x8x8x32xf32>
    tpu.vector_store %arg8[%c0_123, %c1_124, %c1_125, %c0_126], %130 {strides = array<i32>} : memref<2x10x10x32xf32, #tpu.memory_space<vmem>>, vector<2x8x8x32xf32>,
    %c0_127 = arith.constant 0 : index
    %c0_128 = arith.constant 0 : index
    %c0_129 = arith.constant 0 : index
    %c0_130 = arith.constant 0 : index
    %132 = vector.load %arg8[%c0_127, %c0_128, %c0_129, %c0_130] : memref<2x10x10x32xf32, #tpu.memory_space<vmem>>, vector<2x8x8x32xf32>
    %133 = arith.truncf %132 : vector<2x8x8x32xf32> to vector<2x8x8x32xbf16>
    %134 = vector.shape_cast %133 : vector<2x8x8x32xbf16> to vector<128x32xbf16>
    %c0_131 = arith.constant 0 : index
    %c0_132 = arith.constant 0 : index
    %c1_133 = arith.constant 1 : index
    %c0_134 = arith.constant 0 : index
    %135 = vector.load %arg8[%c0_131, %c0_132, %c1_133, %c0_134] : memref<2x10x10x32xf32, #tpu.memory_space<vmem>>, vector<2x8x8x32xf32>
    %136 = arith.truncf %135 : vector<2x8x8x32xf32> to vector<2x8x8x32xbf16>
    %137 = vector.shape_cast %136 : vector<2x8x8x32xbf16> to vector<128x32xbf16>
    %c0_135 = arith.constant 0 : index
    %c0_136 = arith.constant 0 : index
    %c2_137 = arith.constant 2 : index
    %c0_138 = arith.constant 0 : index
    %138 = vector.load %arg8[%c0_135, %c0_136, %c2_137, %c0_138] : memref<2x10x10x32xf32, #tpu.memory_space<vmem>>, vector<2x8x8x32xf32>
    %139 = arith.truncf %138 : vector<2x8x8x32xf32> to vector<2x8x8x32xbf16>
    %140 = vector.shape_cast %139 : vector<2x8x8x32xbf16> to vector<128x32xbf16>
    %c0_139 = arith.constant 0 : index
    %c1_140 = arith.constant 1 : index
    %c0_141 = arith.constant 0 : index
    %c0_142 = arith.constant 0 : index
    %141 = vector.load %arg8[%c0_139, %c1_140, %c0_141, %c0_142] : memref<2x10x10x32xf32, #tpu.memory_space<vmem>>, vector<2x8x8x32xf32>
    %142 = arith.truncf %141 : vector<2x8x8x32xf32> to vector<2x8x8x32xbf16>
    %143 = vector.shape_cast %142 : vector<2x8x8x32xbf16> to vector<128x32xbf16>
    %c0_143 = arith.constant 0 : index
    %c1_144 = arith.constant 1 : index
    %c1_145 = arith.constant 1 : index
    %c0_146 = arith.constant 0 : index
    %144 = vector.load %arg8[%c0_143, %c1_144, %c1_145, %c0_146] : memref<2x10x10x32xf32, #tpu.memory_space<vmem>>, vector<2x8x8x32xf32>
    %145 = arith.truncf %144 : vector<2x8x8x32xf32> to vector<2x8x8x32xbf16>
    %146 = vector.shape_cast %145 : vector<2x8x8x32xbf16> to vector<128x32xbf16>
    %c0_147 = arith.constant 0 : index
    %c1_148 = arith.constant 1 : index
    %c2_149 = arith.constant 2 : index
    %c0_150 = arith.constant 0 : index
    %147 = vector.load %arg8[%c0_147, %c1_148, %c2_149, %c0_150] : memref<2x10x10x32xf32, #tpu.memory_space<vmem>>, vector<2x8x8x32xf32>
    %148 = arith.truncf %147 : vector<2x8x8x32xf32> to vector<2x8x8x32xbf16>
    %149 = vector.shape_cast %148 : vector<2x8x8x32xbf16> to vector<128x32xbf16>
    %c0_151 = arith.constant 0 : index
    %c2_152 = arith.constant 2 : index
    %c0_153 = arith.constant 0 : index
    %c0_154 = arith.constant 0 : index
    %150 = vector.load %arg8[%c0_151, %c2_152, %c0_153, %c0_154] : memref<2x10x10x32xf32, #tpu.memory_space<vmem>>, vector<2x8x8x32xf32>
    %151 = arith.truncf %150 : vector<2x8x8x32xf32> to vector<2x8x8x32xbf16>
    %152 = vector.shape_cast %151 : vector<2x8x8x32xbf16> to vector<128x32xbf16>
    %c0_155 = arith.constant 0 : index
    %c2_156 = arith.constant 2 : index
    %c1_157 = arith.constant 1 : index
    %c0_158 = arith.constant 0 : index
    %153 = vector.load %arg8[%c0_155, %c2_156, %c1_157, %c0_158] : memref<2x10x10x32xf32, #tpu.memory_space<vmem>>, vector<2x8x8x32xf32>
    %154 = arith.truncf %153 : vector<2x8x8x32xf32> to vector<2x8x8x32xbf16>
    %155 = vector.shape_cast %154 : vector<2x8x8x32xbf16> to vector<128x32xbf16>
    %c0_159 = arith.constant 0 : index
    %c2_160 = arith.constant 2 : index
    %c2_161 = arith.constant 2 : index
    %c0_162 = arith.constant 0 : index
    %156 = vector.load %arg8[%c0_159, %c2_160, %c2_161, %c0_162] : memref<2x10x10x32xf32, #tpu.memory_space<vmem>>, vector<2x8x8x32xf32>
    %157 = arith.truncf %156 : vector<2x8x8x32xf32> to vector<2x8x8x32xbf16>
    %158 = vector.shape_cast %157 : vector<2x8x8x32xbf16> to vector<128x32xbf16>
    %159 = tpu.concatenate %134, %137, %140, %143, %146, %149, %152, %155, %158 in 1 : vector<128x32xbf16>, vector<128x32xbf16>, vector<128x32xbf16>, vector<128x32xbf16>, vector<128x32xbf16>, vector<128x32xbf16>, vector<128x32xbf16>, vector<128x32xbf16>, vector<128x32xbf16> -> vector<128x288xbf16>
    %c2_163 = arith.constant 2 : index
    %c0_164 = arith.constant 0 : index
    %c0_165 = arith.constant 0 : index
    %160 = vector.load %arg1[%c2_163, %c0_164, %c0_165] : memref<5x288x32xbf16, #tpu.memory_space<vmem>>, vector<1x288x32xbf16>
    %161 = vector.shape_cast %160 : vector<1x288x32xbf16> to vector<288x32xbf16>
    %c2_166 = arith.constant 2 : index
    %c0_167 = arith.constant 0 : index
    %c0_168 = arith.constant 0 : index
    %162 = vector.load %arg2[%c2_166, %c0_167, %c0_168] : memref<5x1x32xf32, #tpu.memory_space<vmem>>, vector<1x1x32xf32>
    %163 = vector.shape_cast %162 : vector<1x1x32xf32> to vector<1x32xf32>
    %c2_169 = arith.constant 2 : index
    %c0_170 = arith.constant 0 : index
    %c0_171 = arith.constant 0 : index
    %164 = vector.load %arg3[%c2_169, %c0_170, %c0_171] : memref<5x1x32xf32, #tpu.memory_space<vmem>>, vector<1x1x32xf32>
    %165 = vector.shape_cast %164 : vector<1x1x32xf32> to vector<1x32xf32>
    %cst_172 = arith.constant dense<0.000000e+00> : vector<128x32xf32>
    %166 = tpu.matmul %159, %161, %cst_172 {dimension_numbers = #tpu.dot_dimension_numbers<[1], [0], [0], [1], [0, 0, 1, 1], [], []>} : vector<128x288xbf16>, vector<288x32xbf16>, vector<128x32xf32> -> vector<128x32xf32>
    %cst_173 = arith.constant dense<0.000000e+00> : vector<32xf32>
    %167 = vector.multi_reduction <add>, %166, %cst_173 [0] : vector<128x32xf32> to vector<32xf32>
    %168 = vector.shape_cast %167 : vector<32xf32> to vector<1x32xf32>
    %cst_174 = arith.constant 1.280000e+02 : f32
    %169 = vector.broadcast %cst_174 : f32 to vector<1x32xf32>
    %170 = arith.divf %168, %169 : vector<1x32xf32>
    %171 = arith.mulf %166, %166 : vector<128x32xf32>
    %cst_175 = arith.constant dense<0.000000e+00> : vector<32xf32>
    %172 = vector.multi_reduction <add>, %171, %cst_175 [0] : vector<128x32xf32> to vector<32xf32>
    %173 = vector.shape_cast %172 : vector<32xf32> to vector<1x32xf32>
    %cst_176 = arith.constant 1.280000e+02 : f32
    %174 = vector.broadcast %cst_176 : f32 to vector<1x32xf32>
    %175 = arith.divf %173, %174 : vector<1x32xf32>
    %176 = arith.mulf %170, %170 : vector<1x32xf32>
    %177 = arith.subf %175, %176 : vector<1x32xf32>
    %cst_177 = arith.constant 0.000000e+00 : f32
    %178 = vector.broadcast %cst_177 : f32 to vector<1x32xf32>
    %179 = arith.maximumf %177, %178 : vector<1x32xf32>
    %180 = vector.broadcast %170 : vector<1x32xf32> to vector<128x32xf32>
    %181 = arith.subf %166, %180 : vector<128x32xf32>
    %cst_178 = arith.constant 9.99999974E-6 : f32
    %182 = vector.broadcast %cst_178 : f32 to vector<1x32xf32>
    %183 = arith.addf %179, %182 : vector<1x32xf32>
    %184 = math.rsqrt %183 : vector<1x32xf32>
    %185 = vector.broadcast %184 : vector<1x32xf32> to vector<128x32xf32>
    %186 = arith.mulf %181, %185 : vector<128x32xf32>
    %187 = vector.broadcast %163 : vector<1x32xf32> to vector<128x32xf32>
    %188 = arith.mulf %186, %187 : vector<128x32xf32>
    %189 = vector.broadcast %165 : vector<1x32xf32> to vector<128x32xf32>
    %190 = arith.addf %188, %189 : vector<128x32xf32>
    %191 = arith.addf %190, %68 : vector<128x32xf32>
    %cst_179 = arith.constant 0.000000e+00 : f32
    %192 = vector.broadcast %cst_179 : f32 to vector<128x32xf32>
    %193 = arith.maximumf %191, %192 : vector<128x32xf32>
    %194 = vector.shape_cast %193 : vector<128x32xf32> to vector<2x8x8x32xf32>
    %c0_180 = arith.constant 0 : index
    %c1_181 = arith.constant 1 : index
    %c1_182 = arith.constant 1 : index
    %c0_183 = arith.constant 0 : index
    %195 = vector.load %arg8[%c0_180, %c1_181, %c1_182, %c0_183] : memref<2x10x10x32xf32, #tpu.memory_space<vmem>>, vector<2x8x8x32xf32>
    tpu.vector_store %arg8[%c0_180, %c1_181, %c1_182, %c0_183], %194 {strides = array<i32>} : memref<2x10x10x32xf32, #tpu.memory_space<vmem>>, vector<2x8x8x32xf32>,
    %c0_184 = arith.constant 0 : index
    %c1_185 = arith.constant 1 : index
    %c1_186 = arith.constant 1 : index
    %c0_187 = arith.constant 0 : index
    %196 = vector.load %arg8[%c0_184, %c1_185, %c1_186, %c0_187] : memref<2x10x10x32xf32, #tpu.memory_space<vmem>>, vector<2x8x8x32xf32>
    %197 = vector.shape_cast %196 : vector<2x8x8x32xf32> to vector<128x32xf32>
    %c0_188 = arith.constant 0 : index
    %c0_189 = arith.constant 0 : index
    %c0_190 = arith.constant 0 : index
    %c0_191 = arith.constant 0 : index
    %198 = vector.load %arg8[%c0_188, %c0_189, %c0_190, %c0_191] : memref<2x10x10x32xf32, #tpu.memory_space<vmem>>, vector<2x8x8x32xf32>
    %199 = arith.truncf %198 : vector<2x8x8x32xf32> to vector<2x8x8x32xbf16>
    %200 = vector.shape_cast %199 : vector<2x8x8x32xbf16> to vector<128x32xbf16>
    %c0_192 = arith.constant 0 : index
    %c0_193 = arith.constant 0 : index
    %c1_194 = arith.constant 1 : index
    %c0_195 = arith.constant 0 : index
    %201 = vector.load %arg8[%c0_192, %c0_193, %c1_194, %c0_195] : memref<2x10x10x32xf32, #tpu.memory_space<vmem>>, vector<2x8x8x32xf32>
    %202 = arith.truncf %201 : vector<2x8x8x32xf32> to vector<2x8x8x32xbf16>
    %203 = vector.shape_cast %202 : vector<2x8x8x32xbf16> to vector<128x32xbf16>
    %c0_196 = arith.constant 0 : index
    %c0_197 = arith.constant 0 : index
    %c2_198 = arith.constant 2 : index
    %c0_199 = arith.constant 0 : index
    %204 = vector.load %arg8[%c0_196, %c0_197, %c2_198, %c0_199] : memref<2x10x10x32xf32, #tpu.memory_space<vmem>>, vector<2x8x8x32xf32>
    %205 = arith.truncf %204 : vector<2x8x8x32xf32> to vector<2x8x8x32xbf16>
    %206 = vector.shape_cast %205 : vector<2x8x8x32xbf16> to vector<128x32xbf16>
    %c0_200 = arith.constant 0 : index
    %c1_201 = arith.constant 1 : index
    %c0_202 = arith.constant 0 : index
    %c0_203 = arith.constant 0 : index
    %207 = vector.load %arg8[%c0_200, %c1_201, %c0_202, %c0_203] : memref<2x10x10x32xf32, #tpu.memory_space<vmem>>, vector<2x8x8x32xf32>
    %208 = arith.truncf %207 : vector<2x8x8x32xf32> to vector<2x8x8x32xbf16>
    %209 = vector.shape_cast %208 : vector<2x8x8x32xbf16> to vector<128x32xbf16>
    %c0_204 = arith.constant 0 : index
    %c1_205 = arith.constant 1 : index
    %c1_206 = arith.constant 1 : index
    %c0_207 = arith.constant 0 : index
    %210 = vector.load %arg8[%c0_204, %c1_205, %c1_206, %c0_207] : memref<2x10x10x32xf32, #tpu.memory_space<vmem>>, vector<2x8x8x32xf32>
    %211 = arith.truncf %210 : vector<2x8x8x32xf32> to vector<2x8x8x32xbf16>
    %212 = vector.shape_cast %211 : vector<2x8x8x32xbf16> to vector<128x32xbf16>
    %c0_208 = arith.constant 0 : index
    %c1_209 = arith.constant 1 : index
    %c2_210 = arith.constant 2 : index
    %c0_211 = arith.constant 0 : index
    %213 = vector.load %arg8[%c0_208, %c1_209, %c2_210, %c0_211] : memref<2x10x10x32xf32, #tpu.memory_space<vmem>>, vector<2x8x8x32xf32>
    %214 = arith.truncf %213 : vector<2x8x8x32xf32> to vector<2x8x8x32xbf16>
    %215 = vector.shape_cast %214 : vector<2x8x8x32xbf16> to vector<128x32xbf16>
    %c0_212 = arith.constant 0 : index
    %c2_213 = arith.constant 2 : index
    %c0_214 = arith.constant 0 : index
    %c0_215 = arith.constant 0 : index
    %216 = vector.load %arg8[%c0_212, %c2_213, %c0_214, %c0_215] : memref<2x10x10x32xf32, #tpu.memory_space<vmem>>, vector<2x8x8x32xf32>
    %217 = arith.truncf %216 : vector<2x8x8x32xf32> to vector<2x8x8x32xbf16>
    %218 = vector.shape_cast %217 : vector<2x8x8x32xbf16> to vector<128x32xbf16>
    %c0_216 = arith.constant 0 : index
    %c2_217 = arith.constant 2 : index
    %c1_218 = arith.constant 1 : index
    %c0_219 = arith.constant 0 : index
    %219 = vector.load %arg8[%c0_216, %c2_217, %c1_218, %c0_219] : memref<2x10x10x32xf32, #tpu.memory_space<vmem>>, vector<2x8x8x32xf32>
    %220 = arith.truncf %219 : vector<2x8x8x32xf32> to vector<2x8x8x32xbf16>
    %221 = vector.shape_cast %220 : vector<2x8x8x32xbf16> to vector<128x32xbf16>
    %c0_220 = arith.constant 0 : index
    %c2_221 = arith.constant 2 : index
    %c2_222 = arith.constant 2 : index
    %c0_223 = arith.constant 0 : index
    %222 = vector.load %arg8[%c0_220, %c2_221, %c2_222, %c0_223] : memref<2x10x10x32xf32, #tpu.memory_space<vmem>>, vector<2x8x8x32xf32>
    %223 = arith.truncf %222 : vector<2x8x8x32xf32> to vector<2x8x8x32xbf16>
    %224 = vector.shape_cast %223 : vector<2x8x8x32xbf16> to vector<128x32xbf16>
    %225 = tpu.concatenate %200, %203, %206, %209, %212, %215, %218, %221, %224 in 1 : vector<128x32xbf16>, vector<128x32xbf16>, vector<128x32xbf16>, vector<128x32xbf16>, vector<128x32xbf16>, vector<128x32xbf16>, vector<128x32xbf16>, vector<128x32xbf16>, vector<128x32xbf16> -> vector<128x288xbf16>
    %c3 = arith.constant 3 : index
    %c0_224 = arith.constant 0 : index
    %c0_225 = arith.constant 0 : index
    %226 = vector.load %arg1[%c3, %c0_224, %c0_225] : memref<5x288x32xbf16, #tpu.memory_space<vmem>>, vector<1x288x32xbf16>
    %227 = vector.shape_cast %226 : vector<1x288x32xbf16> to vector<288x32xbf16>
    %c3_226 = arith.constant 3 : index
    %c0_227 = arith.constant 0 : index
    %c0_228 = arith.constant 0 : index
    %228 = vector.load %arg2[%c3_226, %c0_227, %c0_228] : memref<5x1x32xf32, #tpu.memory_space<vmem>>, vector<1x1x32xf32>
    %229 = vector.shape_cast %228 : vector<1x1x32xf32> to vector<1x32xf32>
    %c3_229 = arith.constant 3 : index
    %c0_230 = arith.constant 0 : index
    %c0_231 = arith.constant 0 : index
    %230 = vector.load %arg3[%c3_229, %c0_230, %c0_231] : memref<5x1x32xf32, #tpu.memory_space<vmem>>, vector<1x1x32xf32>
    %231 = vector.shape_cast %230 : vector<1x1x32xf32> to vector<1x32xf32>
    %cst_232 = arith.constant dense<0.000000e+00> : vector<128x32xf32>
    %232 = tpu.matmul %225, %227, %cst_232 {dimension_numbers = #tpu.dot_dimension_numbers<[1], [0], [0], [1], [0, 0, 1, 1], [], []>} : vector<128x288xbf16>, vector<288x32xbf16>, vector<128x32xf32> -> vector<128x32xf32>
    %cst_233 = arith.constant dense<0.000000e+00> : vector<32xf32>
    %233 = vector.multi_reduction <add>, %232, %cst_233 [0] : vector<128x32xf32> to vector<32xf32>
    %234 = vector.shape_cast %233 : vector<32xf32> to vector<1x32xf32>
    %cst_234 = arith.constant 1.280000e+02 : f32
    %235 = vector.broadcast %cst_234 : f32 to vector<1x32xf32>
    %236 = arith.divf %234, %235 : vector<1x32xf32>
    %237 = arith.mulf %232, %232 : vector<128x32xf32>
    %cst_235 = arith.constant dense<0.000000e+00> : vector<32xf32>
    %238 = vector.multi_reduction <add>, %237, %cst_235 [0] : vector<128x32xf32> to vector<32xf32>
    %239 = vector.shape_cast %238 : vector<32xf32> to vector<1x32xf32>
    %cst_236 = arith.constant 1.280000e+02 : f32
    %240 = vector.broadcast %cst_236 : f32 to vector<1x32xf32>
    %241 = arith.divf %239, %240 : vector<1x32xf32>
    %242 = arith.mulf %236, %236 : vector<1x32xf32>
    %243 = arith.subf %241, %242 : vector<1x32xf32>
    %cst_237 = arith.constant 0.000000e+00 : f32
    %244 = vector.broadcast %cst_237 : f32 to vector<1x32xf32>
    %245 = arith.maximumf %243, %244 : vector<1x32xf32>
    %246 = vector.broadcast %236 : vector<1x32xf32> to vector<128x32xf32>
    %247 = arith.subf %232, %246 : vector<128x32xf32>
    %cst_238 = arith.constant 9.99999974E-6 : f32
    %248 = vector.broadcast %cst_238 : f32 to vector<1x32xf32>
    %249 = arith.addf %245, %248 : vector<1x32xf32>
    %250 = math.rsqrt %249 : vector<1x32xf32>
    %251 = vector.broadcast %250 : vector<1x32xf32> to vector<128x32xf32>
    %252 = arith.mulf %247, %251 : vector<128x32xf32>
    %253 = vector.broadcast %229 : vector<1x32xf32> to vector<128x32xf32>
    %254 = arith.mulf %252, %253 : vector<128x32xf32>
    %255 = vector.broadcast %231 : vector<1x32xf32> to vector<128x32xf32>
    %256 = arith.addf %254, %255 : vector<128x32xf32>
    %cst_239 = arith.constant 0.000000e+00 : f32
    %257 = vector.broadcast %cst_239 : f32 to vector<128x32xf32>
    %258 = arith.maximumf %256, %257 : vector<128x32xf32>
    %259 = vector.shape_cast %258 : vector<128x32xf32> to vector<2x8x8x32xf32>
    %c0_240 = arith.constant 0 : index
    %c1_241 = arith.constant 1 : index
    %c1_242 = arith.constant 1 : index
    %c0_243 = arith.constant 0 : index
    %260 = vector.load %arg8[%c0_240, %c1_241, %c1_242, %c0_243] : memref<2x10x10x32xf32, #tpu.memory_space<vmem>>, vector<2x8x8x32xf32>
    tpu.vector_store %arg8[%c0_240, %c1_241, %c1_242, %c0_243], %259 {strides = array<i32>} : memref<2x10x10x32xf32, #tpu.memory_space<vmem>>, vector<2x8x8x32xf32>,
    %c0_244 = arith.constant 0 : index
    %c0_245 = arith.constant 0 : index
    %c0_246 = arith.constant 0 : index
    %c0_247 = arith.constant 0 : index
    %261 = vector.load %arg8[%c0_244, %c0_245, %c0_246, %c0_247] : memref<2x10x10x32xf32, #tpu.memory_space<vmem>>, vector<2x8x8x32xf32>
    %262 = arith.truncf %261 : vector<2x8x8x32xf32> to vector<2x8x8x32xbf16>
    %263 = vector.shape_cast %262 : vector<2x8x8x32xbf16> to vector<128x32xbf16>
    %c0_248 = arith.constant 0 : index
    %c0_249 = arith.constant 0 : index
    %c1_250 = arith.constant 1 : index
    %c0_251 = arith.constant 0 : index
    %264 = vector.load %arg8[%c0_248, %c0_249, %c1_250, %c0_251] : memref<2x10x10x32xf32, #tpu.memory_space<vmem>>, vector<2x8x8x32xf32>
    %265 = arith.truncf %264 : vector<2x8x8x32xf32> to vector<2x8x8x32xbf16>
    %266 = vector.shape_cast %265 : vector<2x8x8x32xbf16> to vector<128x32xbf16>
    %c0_252 = arith.constant 0 : index
    %c0_253 = arith.constant 0 : index
    %c2_254 = arith.constant 2 : index
    %c0_255 = arith.constant 0 : index
    %267 = vector.load %arg8[%c0_252, %c0_253, %c2_254, %c0_255] : memref<2x10x10x32xf32, #tpu.memory_space<vmem>>, vector<2x8x8x32xf32>
    %268 = arith.truncf %267 : vector<2x8x8x32xf32> to vector<2x8x8x32xbf16>
    %269 = vector.shape_cast %268 : vector<2x8x8x32xbf16> to vector<128x32xbf16>
    %c0_256 = arith.constant 0 : index
    %c1_257 = arith.constant 1 : index
    %c0_258 = arith.constant 0 : index
    %c0_259 = arith.constant 0 : index
    %270 = vector.load %arg8[%c0_256, %c1_257, %c0_258, %c0_259] : memref<2x10x10x32xf32, #tpu.memory_space<vmem>>, vector<2x8x8x32xf32>
    %271 = arith.truncf %270 : vector<2x8x8x32xf32> to vector<2x8x8x32xbf16>
    %272 = vector.shape_cast %271 : vector<2x8x8x32xbf16> to vector<128x32xbf16>
    %c0_260 = arith.constant 0 : index
    %c1_261 = arith.constant 1 : index
    %c1_262 = arith.constant 1 : index
    %c0_263 = arith.constant 0 : index
    %273 = vector.load %arg8[%c0_260, %c1_261, %c1_262, %c0_263] : memref<2x10x10x32xf32, #tpu.memory_space<vmem>>, vector<2x8x8x32xf32>
    %274 = arith.truncf %273 : vector<2x8x8x32xf32> to vector<2x8x8x32xbf16>
    %275 = vector.shape_cast %274 : vector<2x8x8x32xbf16> to vector<128x32xbf16>
    %c0_264 = arith.constant 0 : index
    %c1_265 = arith.constant 1 : index
    %c2_266 = arith.constant 2 : index
    %c0_267 = arith.constant 0 : index
    %276 = vector.load %arg8[%c0_264, %c1_265, %c2_266, %c0_267] : memref<2x10x10x32xf32, #tpu.memory_space<vmem>>, vector<2x8x8x32xf32>
    %277 = arith.truncf %276 : vector<2x8x8x32xf32> to vector<2x8x8x32xbf16>
    %278 = vector.shape_cast %277 : vector<2x8x8x32xbf16> to vector<128x32xbf16>
    %c0_268 = arith.constant 0 : index
    %c2_269 = arith.constant 2 : index
    %c0_270 = arith.constant 0 : index
    %c0_271 = arith.constant 0 : index
    %279 = vector.load %arg8[%c0_268, %c2_269, %c0_270, %c0_271] : memref<2x10x10x32xf32, #tpu.memory_space<vmem>>, vector<2x8x8x32xf32>
    %280 = arith.truncf %279 : vector<2x8x8x32xf32> to vector<2x8x8x32xbf16>
    %281 = vector.shape_cast %280 : vector<2x8x8x32xbf16> to vector<128x32xbf16>
    %c0_272 = arith.constant 0 : index
    %c2_273 = arith.constant 2 : index
    %c1_274 = arith.constant 1 : index
    %c0_275 = arith.constant 0 : index
    %282 = vector.load %arg8[%c0_272, %c2_273, %c1_274, %c0_275] : memref<2x10x10x32xf32, #tpu.memory_space<vmem>>, vector<2x8x8x32xf32>
    %283 = arith.truncf %282 : vector<2x8x8x32xf32> to vector<2x8x8x32xbf16>
    %284 = vector.shape_cast %283 : vector<2x8x8x32xbf16> to vector<128x32xbf16>
    %c0_276 = arith.constant 0 : index
    %c2_277 = arith.constant 2 : index
    %c2_278 = arith.constant 2 : index
    %c0_279 = arith.constant 0 : index
    %285 = vector.load %arg8[%c0_276, %c2_277, %c2_278, %c0_279] : memref<2x10x10x32xf32, #tpu.memory_space<vmem>>, vector<2x8x8x32xf32>
    %286 = arith.truncf %285 : vector<2x8x8x32xf32> to vector<2x8x8x32xbf16>
    %287 = vector.shape_cast %286 : vector<2x8x8x32xbf16> to vector<128x32xbf16>
    %288 = tpu.concatenate %263, %266, %269, %272, %275, %278, %281, %284, %287 in 1 : vector<128x32xbf16>, vector<128x32xbf16>, vector<128x32xbf16>, vector<128x32xbf16>, vector<128x32xbf16>, vector<128x32xbf16>, vector<128x32xbf16>, vector<128x32xbf16>, vector<128x32xbf16> -> vector<128x288xbf16>
    %c4 = arith.constant 4 : index
    %c0_280 = arith.constant 0 : index
    %c0_281 = arith.constant 0 : index
    %289 = vector.load %arg1[%c4, %c0_280, %c0_281] : memref<5x288x32xbf16, #tpu.memory_space<vmem>>, vector<1x288x32xbf16>
    %290 = vector.shape_cast %289 : vector<1x288x32xbf16> to vector<288x32xbf16>
    %c4_282 = arith.constant 4 : index
    %c0_283 = arith.constant 0 : index
    %c0_284 = arith.constant 0 : index
    %291 = vector.load %arg2[%c4_282, %c0_283, %c0_284] : memref<5x1x32xf32, #tpu.memory_space<vmem>>, vector<1x1x32xf32>
    %292 = vector.shape_cast %291 : vector<1x1x32xf32> to vector<1x32xf32>
    %c4_285 = arith.constant 4 : index
    %c0_286 = arith.constant 0 : index
    %c0_287 = arith.constant 0 : index
    %293 = vector.load %arg3[%c4_285, %c0_286, %c0_287] : memref<5x1x32xf32, #tpu.memory_space<vmem>>, vector<1x1x32xf32>
    %294 = vector.shape_cast %293 : vector<1x1x32xf32> to vector<1x32xf32>
    %cst_288 = arith.constant dense<0.000000e+00> : vector<128x32xf32>
    %295 = tpu.matmul %288, %290, %cst_288 {dimension_numbers = #tpu.dot_dimension_numbers<[1], [0], [0], [1], [0, 0, 1, 1], [], []>} : vector<128x288xbf16>, vector<288x32xbf16>, vector<128x32xf32> -> vector<128x32xf32>
    %cst_289 = arith.constant dense<0.000000e+00> : vector<32xf32>
    %296 = vector.multi_reduction <add>, %295, %cst_289 [0] : vector<128x32xf32> to vector<32xf32>
    %297 = vector.shape_cast %296 : vector<32xf32> to vector<1x32xf32>
    %cst_290 = arith.constant 1.280000e+02 : f32
    %298 = vector.broadcast %cst_290 : f32 to vector<1x32xf32>
    %299 = arith.divf %297, %298 : vector<1x32xf32>
    %300 = arith.mulf %295, %295 : vector<128x32xf32>
    %cst_291 = arith.constant dense<0.000000e+00> : vector<32xf32>
    %301 = vector.multi_reduction <add>, %300, %cst_291 [0] : vector<128x32xf32> to vector<32xf32>
    %302 = vector.shape_cast %301 : vector<32xf32> to vector<1x32xf32>
    %cst_292 = arith.constant 1.280000e+02 : f32
    %303 = vector.broadcast %cst_292 : f32 to vector<1x32xf32>
    %304 = arith.divf %302, %303 : vector<1x32xf32>
    %305 = arith.mulf %299, %299 : vector<1x32xf32>
    %306 = arith.subf %304, %305 : vector<1x32xf32>
    %cst_293 = arith.constant 0.000000e+00 : f32
    %307 = vector.broadcast %cst_293 : f32 to vector<1x32xf32>
    %308 = arith.maximumf %306, %307 : vector<1x32xf32>
    %309 = vector.broadcast %299 : vector<1x32xf32> to vector<128x32xf32>
    %310 = arith.subf %295, %309 : vector<128x32xf32>
    %cst_294 = arith.constant 9.99999974E-6 : f32
    %311 = vector.broadcast %cst_294 : f32 to vector<1x32xf32>
    %312 = arith.addf %308, %311 : vector<1x32xf32>
    %313 = math.rsqrt %312 : vector<1x32xf32>
    %314 = vector.broadcast %313 : vector<1x32xf32> to vector<128x32xf32>
    %315 = arith.mulf %310, %314 : vector<128x32xf32>
    %316 = vector.broadcast %292 : vector<1x32xf32> to vector<128x32xf32>
    %317 = arith.mulf %315, %316 : vector<128x32xf32>
    %318 = vector.broadcast %294 : vector<1x32xf32> to vector<128x32xf32>
    %319 = arith.addf %317, %318 : vector<128x32xf32>
    %320 = arith.addf %319, %197 : vector<128x32xf32>
    %cst_295 = arith.constant 0.000000e+00 : f32
    %321 = vector.broadcast %cst_295 : f32 to vector<128x32xf32>
    %322 = arith.maximumf %320, %321 : vector<128x32xf32>
    %323 = vector.shape_cast %322 : vector<128x32xf32> to vector<2x8x8x32xf32>
    %c0_296 = arith.constant 0 : index
    %c1_297 = arith.constant 1 : index
    %c1_298 = arith.constant 1 : index
    %c0_299 = arith.constant 0 : index
    %324 = vector.load %arg8[%c0_296, %c1_297, %c1_298, %c0_299] : memref<2x10x10x32xf32, #tpu.memory_space<vmem>>, vector<2x8x8x32xf32>
    tpu.vector_store %arg8[%c0_296, %c1_297, %c1_298, %c0_299], %323 {strides = array<i32>} : memref<2x10x10x32xf32, #tpu.memory_space<vmem>>, vector<2x8x8x32xf32>,
    %c0_300 = arith.constant 0 : index
    %c0_301 = arith.constant 0 : index
    %c0_302 = arith.constant 0 : index
    %c0_303 = arith.constant 0 : index
    %325 = vector.load %arg8[%c0_300, %c0_301, %c0_302, %c0_303] : memref<2x10x10x32xf32, #tpu.memory_space<vmem>>, vector<2x8x8x32xf32>
    %326 = arith.truncf %325 : vector<2x8x8x32xf32> to vector<2x8x8x32xbf16>
    %327 = vector.shape_cast %326 : vector<2x8x8x32xbf16> to vector<128x32xbf16>
    %c0_304 = arith.constant 0 : index
    %c0_305 = arith.constant 0 : index
    %c1_306 = arith.constant 1 : index
    %c0_307 = arith.constant 0 : index
    %328 = vector.load %arg8[%c0_304, %c0_305, %c1_306, %c0_307] : memref<2x10x10x32xf32, #tpu.memory_space<vmem>>, vector<2x8x8x32xf32>
    %329 = arith.truncf %328 : vector<2x8x8x32xf32> to vector<2x8x8x32xbf16>
    %330 = vector.shape_cast %329 : vector<2x8x8x32xbf16> to vector<128x32xbf16>
    %c0_308 = arith.constant 0 : index
    %c0_309 = arith.constant 0 : index
    %c2_310 = arith.constant 2 : index
    %c0_311 = arith.constant 0 : index
    %331 = vector.load %arg8[%c0_308, %c0_309, %c2_310, %c0_311] : memref<2x10x10x32xf32, #tpu.memory_space<vmem>>, vector<2x8x8x32xf32>
    %332 = arith.truncf %331 : vector<2x8x8x32xf32> to vector<2x8x8x32xbf16>
    %333 = vector.shape_cast %332 : vector<2x8x8x32xbf16> to vector<128x32xbf16>
    %c0_312 = arith.constant 0 : index
    %c1_313 = arith.constant 1 : index
    %c0_314 = arith.constant 0 : index
    %c0_315 = arith.constant 0 : index
    %334 = vector.load %arg8[%c0_312, %c1_313, %c0_314, %c0_315] : memref<2x10x10x32xf32, #tpu.memory_space<vmem>>, vector<2x8x8x32xf32>
    %335 = arith.truncf %334 : vector<2x8x8x32xf32> to vector<2x8x8x32xbf16>
    %336 = vector.shape_cast %335 : vector<2x8x8x32xbf16> to vector<128x32xbf16>
    %c0_316 = arith.constant 0 : index
    %c1_317 = arith.constant 1 : index
    %c1_318 = arith.constant 1 : index
    %c0_319 = arith.constant 0 : index
    %337 = vector.load %arg8[%c0_316, %c1_317, %c1_318, %c0_319] : memref<2x10x10x32xf32, #tpu.memory_space<vmem>>, vector<2x8x8x32xf32>
    %338 = arith.truncf %337 : vector<2x8x8x32xf32> to vector<2x8x8x32xbf16>
    %339 = vector.shape_cast %338 : vector<2x8x8x32xbf16> to vector<128x32xbf16>
    %c0_320 = arith.constant 0 : index
    %c1_321 = arith.constant 1 : index
    %c2_322 = arith.constant 2 : index
    %c0_323 = arith.constant 0 : index
    %340 = vector.load %arg8[%c0_320, %c1_321, %c2_322, %c0_323] : memref<2x10x10x32xf32, #tpu.memory_space<vmem>>, vector<2x8x8x32xf32>
    %341 = arith.truncf %340 : vector<2x8x8x32xf32> to vector<2x8x8x32xbf16>
    %342 = vector.shape_cast %341 : vector<2x8x8x32xbf16> to vector<128x32xbf16>
    %c0_324 = arith.constant 0 : index
    %c2_325 = arith.constant 2 : index
    %c0_326 = arith.constant 0 : index
    %c0_327 = arith.constant 0 : index
    %343 = vector.load %arg8[%c0_324, %c2_325, %c0_326, %c0_327] : memref<2x10x10x32xf32, #tpu.memory_space<vmem>>, vector<2x8x8x32xf32>
    %344 = arith.truncf %343 : vector<2x8x8x32xf32> to vector<2x8x8x32xbf16>
    %345 = vector.shape_cast %344 : vector<2x8x8x32xbf16> to vector<128x32xbf16>
    %c0_328 = arith.constant 0 : index
    %c2_329 = arith.constant 2 : index
    %c1_330 = arith.constant 1 : index
    %c0_331 = arith.constant 0 : index
    %346 = vector.load %arg8[%c0_328, %c2_329, %c1_330, %c0_331] : memref<2x10x10x32xf32, #tpu.memory_space<vmem>>, vector<2x8x8x32xf32>
    %347 = arith.truncf %346 : vector<2x8x8x32xf32> to vector<2x8x8x32xbf16>
    %348 = vector.shape_cast %347 : vector<2x8x8x32xbf16> to vector<128x32xbf16>
    %c0_332 = arith.constant 0 : index
    %c2_333 = arith.constant 2 : index
    %c2_334 = arith.constant 2 : index
    %c0_335 = arith.constant 0 : index
    %349 = vector.load %arg8[%c0_332, %c2_333, %c2_334, %c0_335] : memref<2x10x10x32xf32, #tpu.memory_space<vmem>>, vector<2x8x8x32xf32>
    %350 = arith.truncf %349 : vector<2x8x8x32xf32> to vector<2x8x8x32xbf16>
    %351 = vector.shape_cast %350 : vector<2x8x8x32xbf16> to vector<128x32xbf16>
    %352 = tpu.concatenate %327, %330, %333, %336, %339, %342, %345, %348, %351 in 1 : vector<128x32xbf16>, vector<128x32xbf16>, vector<128x32xbf16>, vector<128x32xbf16>, vector<128x32xbf16>, vector<128x32xbf16>, vector<128x32xbf16>, vector<128x32xbf16>, vector<128x32xbf16> -> vector<128x288xbf16>
    %c0_336 = arith.constant 0 : index
    %c0_337 = arith.constant 0 : index
    %353 = vector.load %arg4[%c0_336, %c0_337] : memref<288x128xbf16, #tpu.memory_space<vmem>>, vector<288x128xbf16>
    %c0_338 = arith.constant 0 : index
    %c0_339 = arith.constant 0 : index
    %354 = vector.load %arg5[%c0_338, %c0_339] : memref<1x128xf32, #tpu.memory_space<vmem>>, vector<1x128xf32>
    %c0_340 = arith.constant 0 : index
    %c0_341 = arith.constant 0 : index
    %355 = vector.load %arg6[%c0_340, %c0_341] : memref<1x128xf32, #tpu.memory_space<vmem>>, vector<1x128xf32>
    %cst_342 = arith.constant dense<0.000000e+00> : vector<128x128xf32>
    %356 = tpu.matmul %352, %353, %cst_342 {dimension_numbers = #tpu.dot_dimension_numbers<[1], [0], [0], [1], [0, 0, 1, 1], [], []>} : vector<128x288xbf16>, vector<288x128xbf16>, vector<128x128xf32> -> vector<128x128xf32>
    %cst_343 = arith.constant dense<0.000000e+00> : vector<128xf32>
    %357 = vector.multi_reduction <add>, %356, %cst_343 [0] : vector<128x128xf32> to vector<128xf32>
    %358 = vector.shape_cast %357 : vector<128xf32> to vector<1x128xf32>
    %cst_344 = arith.constant 1.280000e+02 : f32
    %359 = vector.broadcast %cst_344 : f32 to vector<1x128xf32>
    %360 = arith.divf %358, %359 : vector<1x128xf32>
    %361 = arith.mulf %356, %356 : vector<128x128xf32>
    %cst_345 = arith.constant dense<0.000000e+00> : vector<128xf32>
    %362 = vector.multi_reduction <add>, %361, %cst_345 [0] : vector<128x128xf32> to vector<128xf32>
    %363 = vector.shape_cast %362 : vector<128xf32> to vector<1x128xf32>
    %cst_346 = arith.constant 1.280000e+02 : f32
    %364 = vector.broadcast %cst_346 : f32 to vector<1x128xf32>
    %365 = arith.divf %363, %364 : vector<1x128xf32>
    %366 = arith.mulf %360, %360 : vector<1x128xf32>
    %367 = arith.subf %365, %366 : vector<1x128xf32>
    %cst_347 = arith.constant 0.000000e+00 : f32
    %368 = vector.broadcast %cst_347 : f32 to vector<1x128xf32>
    %369 = arith.maximumf %367, %368 : vector<1x128xf32>
    %370 = vector.broadcast %360 : vector<1x128xf32> to vector<128x128xf32>
    %371 = arith.subf %356, %370 : vector<128x128xf32>
    %cst_348 = arith.constant 9.99999974E-6 : f32
    %372 = vector.broadcast %cst_348 : f32 to vector<1x128xf32>
    %373 = arith.addf %369, %372 : vector<1x128xf32>
    %374 = math.rsqrt %373 : vector<1x128xf32>
    %375 = vector.broadcast %374 : vector<1x128xf32> to vector<128x128xf32>
    %376 = arith.mulf %371, %375 : vector<128x128xf32>
    %377 = vector.broadcast %354 : vector<1x128xf32> to vector<128x128xf32>
    %378 = arith.mulf %376, %377 : vector<128x128xf32>
    %379 = vector.broadcast %355 : vector<1x128xf32> to vector<128x128xf32>
    %380 = arith.addf %378, %379 : vector<128x128xf32>
    %cst_349 = arith.constant 0.000000e+00 : f32
    %381 = vector.broadcast %cst_349 : f32 to vector<128x128xf32>
    %382 = arith.maximumf %380, %381 : vector<128x128xf32>
    %383 = arith.truncf %382 : vector<128x128xf32> to vector<128x128xbf16>
    %c0_350 = arith.constant 0 : index
    %c0_351 = arith.constant 0 : index
    %384 = vector.load %arg7[%c0_350, %c0_351] : memref<128x128xbf16, #tpu.memory_space<vmem>>, vector<128x128xbf16>
    tpu.vector_store %arg7[%c0_350, %c0_351], %383 {strides = array<i32>} : memref<128x128xbf16, #tpu.memory_space<vmem>>, vector<128x128xbf16>,
    return
  }
}

module attributes {stable_mosaic.version = 11 : i64} {
  func.func @_heads_fc_kernel(%arg0: memref<2x4096xbf16, #tpu.memory_space<vmem>>, %arg1: memref<2x384xbf16, #tpu.memory_space<vmem>>, %arg2: memref<4096x256xbf16, #tpu.memory_space<vmem>>, %arg3: memref<1x256xf32, #tpu.memory_space<vmem>>, %arg4: memref<384x1xbf16, #tpu.memory_space<vmem>>, %arg5: memref<1x1xf32, #tpu.memory_space<vmem>>, %arg6: memref<2x256xf32, #tpu.memory_space<vmem>>, %arg7: memref<2x1xf32, #tpu.memory_space<vmem>>) attributes {dimension_semantics = [], scalar_prefetch = 0 : i64, scratch_operands = 0 : i64, tpu.core_type = #tpu.core_type<tc>} {
    %c0 = arith.constant 0 : index
    %c0_0 = arith.constant 0 : index
    %0 = vector.load %arg0[%c0, %c0_0] : memref<2x4096xbf16, #tpu.memory_space<vmem>>, vector<2x4096xbf16>
    %c0_1 = arith.constant 0 : index
    %c0_2 = arith.constant 0 : index
    %1 = vector.load %arg2[%c0_1, %c0_2] : memref<4096x256xbf16, #tpu.memory_space<vmem>>, vector<4096x256xbf16>
    %cst = arith.constant dense<0.000000e+00> : vector<2x256xf32>
    %2 = tpu.matmul %0, %1, %cst {dimension_numbers = #tpu.dot_dimension_numbers<[1], [0], [0], [1], [0, 0, 1, 1], [], []>} : vector<2x4096xbf16>, vector<4096x256xbf16>, vector<2x256xf32> -> vector<2x256xf32>
    %c0_3 = arith.constant 0 : index
    %c0_4 = arith.constant 0 : index
    %3 = vector.load %arg3[%c0_3, %c0_4] : memref<1x256xf32, #tpu.memory_space<vmem>>, vector<1x256xf32>
    %4 = vector.broadcast %3 : vector<1x256xf32> to vector<2x256xf32>
    %5 = arith.addf %2, %4 : vector<2x256xf32>
    %c0_5 = arith.constant 0 : index
    %c0_6 = arith.constant 0 : index
    %6 = vector.load %arg6[%c0_5, %c0_6] : memref<2x256xf32, #tpu.memory_space<vmem>>, vector<2x256xf32>
    tpu.vector_store %arg6[%c0_5, %c0_6], %5 {strides = array<i32>} : memref<2x256xf32, #tpu.memory_space<vmem>>, vector<2x256xf32>,
    %c0_7 = arith.constant 0 : index
    %c0_8 = arith.constant 0 : index
    %7 = vector.load %arg1[%c0_7, %c0_8] : memref<2x384xbf16, #tpu.memory_space<vmem>>, vector<2x384xbf16>
    %c0_9 = arith.constant 0 : index
    %c0_10 = arith.constant 0 : index
    %8 = vector.load %arg4[%c0_9, %c0_10] : memref<384x1xbf16, #tpu.memory_space<vmem>>, vector<384x1xbf16>
    %cst_11 = arith.constant dense<0.000000e+00> : vector<2x1xf32>
    %9 = tpu.matmul %7, %8, %cst_11 {dimension_numbers = #tpu.dot_dimension_numbers<[1], [0], [0], [1], [0, 0, 1, 1], [], []>} : vector<2x384xbf16>, vector<384x1xbf16>, vector<2x1xf32> -> vector<2x1xf32>
    %c0_12 = arith.constant 0 : index
    %c0_13 = arith.constant 0 : index
    %10 = vector.load %arg5[%c0_12, %c0_13] : memref<1x1xf32, #tpu.memory_space<vmem>>, vector<1x1xf32>
    %11 = vector.broadcast %10 : vector<1x1xf32> to vector<2x1xf32>
    %12 = arith.addf %9, %11 : vector<2x1xf32>
    %13 = math.tanh %12 : vector<2x1xf32>
    %c0_14 = arith.constant 0 : index
    %c0_15 = arith.constant 0 : index
    %14 = vector.load %arg7[%c0_14, %c0_15] : memref<2x1xf32, #tpu.memory_space<vmem>>, vector<2x1xf32>
    tpu.vector_store %arg7[%c0_14, %c0_15], %13 {strides = array<i32>} : memref<2x1xf32, #tpu.memory_space<vmem>>, vector<2x1xf32>,
    return
  }
}

</mosaic_0001>

<llo_original>
// kernel: resnet_forward.3
$region0: #{resnet_forward.3}
  #allocation0 [shape = 'u32[]', space=smem, size = 0x4, offset = 0x4, fixed_abs, tag = 'smem constant byte address 0x4 - core index']
  #allocation1 [shape = 'u32[144,128]{1,0:T(1,128)}', space=vmem, size = 0x12000, scoped, tag = 'internal scratch']
  #allocation2 [shape = 'f32[1,1]{1,0:T(1,128)S(1)}', space=vmem, size = 0x200, scoped, tag = 'scoped memory for resnet_forward.3']
  %s0 = inlined_call_operand.vmem [shape: bf16[2,4096], index: 0, kind: input, shape index: {}]
  %s1 = inlined_call_operand.vmem [shape: bf16[2,384], index: 1, kind: input, shape index: {}]
  %s2 = inlined_call_operand.hbm [shape: bf16[4096,256], index: 2, kind: input, shape index: {}]
  %s3 = inlined_call_operand.hbm [shape: f32[1,256], index: 3, kind: input, shape index: {}]
  %s4 = inlined_call_operand.vmem [shape: bf16[384,1], index: 4, kind: input, shape index: {}]
  %s5 = inlined_call_operand.<no memory space> [shape: f32[1,1], index: 5, kind: input, shape index: {}]
  %s6 = inlined_call_operand.vmem [shape: f32[2,256], index: 6, kind: output, shape index: {0}]
  %s7 = inlined_call_operand.vmem [shape: f32[2,1], index: 7, kind: output, shape index: {1}]
  %8 = xla_tuple %s6, %s7
  %s9 = sld [smem:[#allocation0]]
  $region50: #{resnet_forward.3} parent=0
    _
  %s11 = ssub.s32 1, %s9
  %s12 = scalar_select 0, %s11, %s9
  %v13 = vstv %s5
  %14 = vst [vmem:[#allocation2] sm:$0x1] %v13
  $region1: #{resnet_forward.3} parent=0
    #allocation3 [shape = 'u8[2097152]{0}', space=vmem, size = 0x200000, scoped, tag = 'input window, operand 2, single buffered']
    #allocation4 [shape = 's32[1]{0}', space=sflag, size = 0x4, scoped, tag = 'scoped memory for resnet_forward.3']
    #allocation5 [shape = 'u8[1024]{0}', space=vmem, size = 0x400, scoped, tag = 'input window, operand 3, single buffered']
    #allocation6 [shape = 's32[1]{0}', space=sflag, size = 0x4, scoped, tag = 'scoped memory for resnet_forward.3']
    %15 = vsyncpa [#allocation4], 0
    %16 = vsyncpa [#allocation6], 0
    // Predicated region
    $region2: #{resnet_forward.3} parent=1 // pred_check
      _
    $region3: #{resnet_forward.3} parent=1 // pred_check_branch
      %18 = sbr.rel (0) target = $region5
    $region4: #{resnet_forward.3} parent=1 // pred_region
      _
    $region5: #{resnet_forward.3} parent=1 // pred_fallthru
      _
    // Predicated region
    $region6: #{resnet_forward.3} parent=1 // pred_check
      _
    $region7: #{resnet_forward.3} parent=1 // pred_check_branch
      %20 = sbr.rel (0) target = $region9
    $region8: #{resnet_forward.3} parent=1 // pred_region
      _
    $region9: #{resnet_forward.3} parent=1 // pred_fallthru
      _
    // Predicated region
    $region10: #{resnet_forward.3} parent=1 // pred_check
      _
    $region11: #{resnet_forward.3} parent=1 // pred_check_branch
      %22 = sbr.rel (0) target = $region13
    $region12: #{resnet_forward.3} parent=1 // pred_region
      %s24 = ssub.s32 65536, 65536
      %25 = vsyncadd [#allocation4], %s24
      %s26 = sshll.u32 [#allocation3], 4
      %s27 = int_to_ptr.vmem [resolvable:$true] %s26
      %32 = dma.hbm_to_vmem [thread:$0]  %s2, 65536, %s27, [#allocation4], 128, 128, 8
    $region13: #{resnet_forward.3} parent=1 // pred_fallthru
      _
    // Predicated region
    $region14: #{resnet_forward.3} parent=1 // pred_check
      _
    $region15: #{resnet_forward.3} parent=1 // pred_check_branch
      %34 = sbr.rel (0) target = $region17
    $region16: #{resnet_forward.3} parent=1 // pred_region
      %s36 = ssub.s32 32, 32
      %37 = vsyncadd [#allocation6], %s36
      %s39 = sshll.u32 [#allocation5], 4
      %s40 = int_to_ptr.vmem [resolvable:$true] %s39
      %42 = dma.hbm_to_vmem [thread:$0]  %s3, 32, %s40, [#allocation6]
    $region17: #{resnet_forward.3} parent=1 // pred_fallthru
      _
    // Predicated region
    $region18: #{resnet_forward.3} parent=1 // pred_check
      _
    $region19: #{resnet_forward.3} parent=1 // pred_check_branch
      %44 = sbr.rel (0) target = $region21
    $region20: #{resnet_forward.3} parent=1 // pred_region
      _
    $region21: #{resnet_forward.3} parent=1 // pred_fallthru
      _
    // Predicated region
    $region22: #{resnet_forward.3} parent=1 // pred_check
      _
    $region23: #{resnet_forward.3} parent=1 // pred_check_branch
      %46 = sbr.rel (0) target = $region25
    $region24: #{resnet_forward.3} parent=1 // pred_region
      _
    $region25: #{resnet_forward.3} parent=1 // pred_fallthru
      _
    // Predicated region
    $region26: #{resnet_forward.3} parent=1 // pred_check
      _
    $region27: #{resnet_forward.3} parent=1 // pred_check_branch
      %48 = sbr.rel (0) target = $region29
    $region28: #{resnet_forward.3} parent=1 // pred_region
      %49 = dma.done [#allocation4], 65536
    $region29: #{resnet_forward.3} parent=1 // pred_fallthru
      _
    // Predicated region
    $region30: #{resnet_forward.3} parent=1 // pred_check
      _
    $region31: #{resnet_forward.3} parent=1 // pred_check_branch
      %51 = sbr.rel (0) target = $region33
    $region32: #{resnet_forward.3} parent=1 // pred_region
      %52 = dma.done [#allocation6], 32
    $region33: #{resnet_forward.3} parent=1 // pred_fallthru
      _
    %v54 = vld [vmem:[%s0] sm:$0xff]
    %v55 = vld [vmem:[%s0 + $0x8] sm:$0xff]
    %v56 = vld [vmem:[%s0 + $0x10] sm:$0xff]
    %v57 = vld [vmem:[%s0 + $0x18] sm:$0xff]
    %v58 = vld [vmem:[#allocation3] sm:$0xff]
    %v59 = vld [vmem:[#allocation3 + $0x8] sm:$0xff]
    %v60 = vld [vmem:[#allocation3 + $0x10] sm:$0xff]
    %v61 = vld [vmem:[#allocation3 + $0x18] sm:$0xff]
    %v62 = vld [vmem:[#allocation3 + $0x20] sm:$0xff]
    %v63 = vld [vmem:[#allocation3 + $0x28] sm:$0xff]
    %v64 = vld [vmem:[#allocation3 + $0x30] sm:$0xff]
    %v65 = vld [vmem:[#allocation3 + $0x38] sm:$0xff]
    %v66 = vld [vmem:[#allocation3 + $0x40] sm:$0xff]
    %v67 = vld [vmem:[#allocation3 + $0x48] sm:$0xff]
    %v68 = vld [vmem:[#allocation3 + $0x50] sm:$0xff]
    %v69 = vld [vmem:[#allocation3 + $0x58] sm:$0xff]
    %v70 = vld [vmem:[#allocation3 + $0x60] sm:$0xff]
    %v71 = vld [vmem:[#allocation3 + $0x68] sm:$0xff]
    %v72 = vld [vmem:[#allocation3 + $0x70] sm:$0xff]
    %v73 = vld [vmem:[#allocation3 + $0x78] sm:$0xff]
    %v74 = vld [vmem:[#allocation3 + $0x80] sm:$0xff]
    %v75 = vld [vmem:[#allocation3 + $0x88] sm:$0xff]
    %v76 = vld [vmem:[#allocation3 + $0x90] sm:$0xff]
    %v77 = vld [vmem:[#allocation3 + $0x98] sm:$0xff]
    %v78 = vld [vmem:[#allocation3 + $0xa0] sm:$0xff]
    %v79 = vld [vmem:[#allocation3 + $0xa8] sm:$0xff]
    %v80 = vld [vmem:[#allocation3 + $0xb0] sm:$0xff]
    %v81 = vld [vmem:[#allocation3 + $0xb8] sm:$0xff]
    %v82 = vld [vmem:[#allocation3 + $0xc0] sm:$0xff]
    %v83 = vld [vmem:[#allocation3 + $0xc8] sm:$0xff]
    %v84 = vld [vmem:[#allocation3 + $0xd0] sm:$0xff]
    %v85 = vld [vmem:[#allocation3 + $0xd8] sm:$0xff]
    %v86 = vld [vmem:[#allocation3 + $0xe0] sm:$0xff]
    %v87 = vld [vmem:[#allocation3 + $0xe8] sm:$0xff]
    %v88 = vld [vmem:[#allocation3 + $0xf0] sm:$0xff]
    %v89 = vld [vmem:[#allocation3 + $0xf8] sm:$0xff]
    %v90 = vld [vmem:[#allocation3 + $0x100] sm:$0xff]
    %v91 = vld [vmem:[#allocation3 + $0x108] sm:$0xff]
    %v92 = vld [vmem:[#allocation3 + $0x110] sm:$0xff]
    %v93 = vld [vmem:[#allocation3 + $0x118] sm:$0xff]
    %v94 = vld [vmem:[#allocation3 + $0x120] sm:$0xff]
    %v95 = vld [vmem:[#allocation3 + $0x128] sm:$0xff]
    %v96 = vld [vmem:[#allocation3 + $0x130] sm:$0xff]
    %v97 = vld [vmem:[#allocation3 + $0x138] sm:$0xff]
    %v98 = vld [vmem:[#allocation3 + $0x140] sm:$0xff]
    %v99 = vld [vmem:[#allocation3 + $0x148] sm:$0xff]
    %v100 = vld [vmem:[#allocation3 + $0x150] sm:$0xff]
    %v101 = vld [vmem:[#allocation3 + $0x158] sm:$0xff]
    %v102 = vld [vmem:[#allocation3 + $0x160] sm:$0xff]
    %v103 = vld [vmem:[#allocation3 + $0x168] sm:$0xff]
    %v104 = vld [vmem:[#allocation3 + $0x170] sm:$0xff]
    %v105 = vld [vmem:[#allocation3 + $0x178] sm:$0xff]
    %v106 = vld [vmem:[#allocation3 + $0x180] sm:$0xff]
    %v107 = vld [vmem:[#allocation3 + $0x188] sm:$0xff]
    %v108 = vld [vmem:[#allocation3 + $0x190] sm:$0xff]
    %v109 = vld [vmem:[#allocation3 + $0x198] sm:$0xff]
    %v110 = vld [vmem:[#allocation3 + $0x1a0] sm:$0xff]
    %v111 = vld [vmem:[#allocation3 + $0x1a8] sm:$0xff]
    %v112 = vld [vmem:[#allocation3 + $0x1b0] sm:$0xff]
    %v113 = vld [vmem:[#allocation3 + $0x1b8] sm:$0xff]
    %v114 = vld [vmem:[#allocation3 + $0x1c0] sm:$0xff]
    %v115 = vld [vmem:[#allocation3 + $0x1c8] sm:$0xff]
    %v116 = vld [vmem:[#allocation3 + $0x1d0] sm:$0xff]
    %v117 = vld [vmem:[#allocation3 + $0x1d8] sm:$0xff]
    %v118 = vld [vmem:[#allocation3 + $0x1e0] sm:$0xff]
    %v119 = vld [vmem:[#allocation3 + $0x1e8] sm:$0xff]
    %v120 = vld [vmem:[#allocation3 + $0x1f0] sm:$0xff]
    %v121 = vld [vmem:[#allocation3 + $0x1f8] sm:$0xff]
    %v122 = vld [vmem:[#allocation3 + $0x200] sm:$0xff]
    %v123 = vld [vmem:[#allocation3 + $0x208] sm:$0xff]
    %v124 = vld [vmem:[#allocation3 + $0x210] sm:$0xff]
    %v125 = vld [vmem:[#allocation3 + $0x218] sm:$0xff]
    %v126 = vld [vmem:[#allocation3 + $0x220] sm:$0xff]
    %v127 = vld [vmem:[#allocation3 + $0x228] sm:$0xff]
    %v128 = vld [vmem:[#allocation3 + $0x230] sm:$0xff]
    %v129 = vld [vmem:[#allocation3 + $0x238] sm:$0xff]
    %v130 = vld [vmem:[#allocation3 + $0x240] sm:$0xff]
    %v131 = vld [vmem:[#allocation3 + $0x248] sm:$0xff]
    %v132 = vld [vmem:[#allocation3 + $0x250] sm:$0xff]
    %v133 = vld [vmem:[#allocation3 + $0x258] sm:$0xff]
    %v134 = vld [vmem:[#allocation3 + $0x260] sm:$0xff]
    %v135 = vld [vmem:[#allocation3 + $0x268] sm:$0xff]
    %v136 = vld [vmem:[#allocation3 + $0x270] sm:$0xff]
    %v137 = vld [vmem:[#allocation3 + $0x278] sm:$0xff]
    %v138 = vld [vmem:[#allocation3 + $0x280] sm:$0xff]
    %v139 = vld [vmem:[#allocation3 + $0x288] sm:$0xff]
    %v140 = vld [vmem:[#allocation3 + $0x290] sm:$0xff]
    %v141 = vld [vmem:[#allocation3 + $0x298] sm:$0xff]
    %v142 = vld [vmem:[#allocation3 + $0x2a0] sm:$0xff]
    %v143 = vld [vmem:[#allocation3 + $0x2a8] sm:$0xff]
    %v144 = vld [vmem:[#allocation3 + $0x2b0] sm:$0xff]
    %v145 = vld [vmem:[#allocation3 + $0x2b8] sm:$0xff]
    %v146 = vld [vmem:[#allocation3 + $0x2c0] sm:$0xff]
    %v147 = vld [vmem:[#allocation3 + $0x2c8] sm:$0xff]
    %v148 = vld [vmem:[#allocation3 + $0x2d0] sm:$0xff]
    %v149 = vld [vmem:[#allocation3 + $0x2d8] sm:$0xff]
    %v150 = vld [vmem:[#allocation3 + $0x2e0] sm:$0xff]
    %v151 = vld [vmem:[#allocation3 + $0x2e8] sm:$0xff]
    %v152 = vld [vmem:[#allocation3 + $0x2f0] sm:$0xff]
    %v153 = vld [vmem:[#allocation3 + $0x2f8] sm:$0xff]
    %v154 = vld [vmem:[#allocation3 + $0x300] sm:$0xff]
    %v155 = vld [vmem:[#allocation3 + $0x308] sm:$0xff]
    %v156 = vld [vmem:[#allocation3 + $0x310] sm:$0xff]
    %v157 = vld [vmem:[#allocation3 + $0x318] sm:$0xff]
    %v158 = vld [vmem:[#allocation3 + $0x320] sm:$0xff]
    %v159 = vld [vmem:[#allocation3 + $0x328] sm:$0xff]
    %v160 = vld [vmem:[#allocation3 + $0x330] sm:$0xff]
    %v161 = vld [vmem:[#allocation3 + $0x338] sm:$0xff]
    %v162 = vld [vmem:[#allocation3 + $0x340] sm:$0xff]
    %v163 = vld [vmem:[#allocation3 + $0x348] sm:$0xff]
    %v164 = vld [vmem:[#allocation3 + $0x350] sm:$0xff]
    %v165 = vld [vmem:[#allocation3 + $0x358] sm:$0xff]
    %v166 = vld [vmem:[#allocation3 + $0x360] sm:$0xff]
    %v167 = vld [vmem:[#allocation3 + $0x368] sm:$0xff]
    %v168 = vld [vmem:[#allocation3 + $0x370] sm:$0xff]
    %v169 = vld [vmem:[#allocation3 + $0x378] sm:$0xff]
    %v170 = vld [vmem:[#allocation3 + $0x380] sm:$0xff]
    %v171 = vld [vmem:[#allocation3 + $0x388] sm:$0xff]
    %v172 = vld [vmem:[#allocation3 + $0x390] sm:$0xff]
    %v173 = vld [vmem:[#allocation3 + $0x398] sm:$0xff]
    %v174 = vld [vmem:[#allocation3 + $0x3a0] sm:$0xff]
    %v175 = vld [vmem:[#allocation3 + $0x3a8] sm:$0xff]
    %v176 = vld [vmem:[#allocation3 + $0x3b0] sm:$0xff]
    %v177 = vld [vmem:[#allocation3 + $0x3b8] sm:$0xff]
    %v178 = vld [vmem:[#allocation3 + $0x3c0] sm:$0xff]
    %v179 = vld [vmem:[#allocation3 + $0x3c8] sm:$0xff]
    %v180 = vld [vmem:[#allocation3 + $0x3d0] sm:$0xff]
    %v181 = vld [vmem:[#allocation3 + $0x3d8] sm:$0xff]
    %v182 = vld [vmem:[#allocation3 + $0x3e0] sm:$0xff]
    %v183 = vld [vmem:[#allocation3 + $0x3e8] sm:$0xff]
    %v184 = vld [vmem:[#allocation3 + $0x3f0] sm:$0xff]
    %v185 = vld [vmem:[#allocation3 + $0x3f8] sm:$0xff]
    %v186 = vld [vmem:[#allocation3 + $0x400] sm:$0xff]
    %v187 = vld [vmem:[#allocation3 + $0x408] sm:$0xff]
    %v188 = vld [vmem:[#allocation3 + $0x410] sm:$0xff]
    %v189 = vld [vmem:[#allocation3 + $0x418] sm:$0xff]
    %v190 = vld [vmem:[#allocation3 + $0x420] sm:$0xff]
    %v191 = vld [vmem:[#allocation3 + $0x428] sm:$0xff]
    %v192 = vld [vmem:[#allocation3 + $0x430] sm:$0xff]
    %v193 = vld [vmem:[#allocation3 + $0x438] sm:$0xff]
    %v194 = vld [vmem:[#allocation3 + $0x440] sm:$0xff]
    %v195 = vld [vmem:[#allocation3 + $0x448] sm:$0xff]
    %v196 = vld [vmem:[#allocation3 + $0x450] sm:$0xff]
    %v197 = vld [vmem:[#allocation3 + $0x458] sm:$0xff]
    %v198 = vld [vmem:[#allocation3 + $0x460] sm:$0xff]
    %v199 = vld [vmem:[#allocation3 + $0x468] sm:$0xff]
    %v200 = vld [vmem:[#allocation3 + $0x470] sm:$0xff]
    %v201 = vld [vmem:[#allocation3 + $0x478] sm:$0xff]
    %v202 = vld [vmem:[#allocation3 + $0x480] sm:$0xff]
    %v203 = vld [vmem:[#allocation3 + $0x488] sm:$0xff]
    %v204 = vld [vmem:[#allocation3 + $0x490] sm:$0xff]
    %v205 = vld [vmem:[#allocation3 + $0x498] sm:$0xff]
    %v206 = vld [vmem:[#allocation3 + $0x4a0] sm:$0xff]
    %v207 = vld [vmem:[#allocation3 + $0x4a8] sm:$0xff]
    %v208 = vld [vmem:[#allocation3 + $0x4b0] sm:$0xff]
    %v209 = vld [vmem:[#allocation3 + $0x4b8] sm:$0xff]
    %v210 = vld [vmem:[#allocation3 + $0x4c0] sm:$0xff]
    %v211 = vld [vmem:[#allocation3 + $0x4c8] sm:$0xff]
    %v212 = vld [vmem:[#allocation3 + $0x4d0] sm:$0xff]
    %v213 = vld [vmem:[#allocation3 + $0x4d8] sm:$0xff]
    %v214 = vld [vmem:[#allocation3 + $0x4e0] sm:$0xff]
    %v215 = vld [vmem:[#allocation3 + $0x4e8] sm:$0xff]
    %v216 = vld [vmem:[#allocation3 + $0x4f0] sm:$0xff]
    %v217 = vld [vmem:[#allocation3 + $0x4f8] sm:$0xff]
    %v218 = vld [vmem:[#allocation3 + $0x500] sm:$0xff]
    %v219 = vld [vmem:[#allocation3 + $0x508] sm:$0xff]
    %v220 = vld [vmem:[#allocation3 + $0x510] sm:$0xff]
    %v221 = vld [vmem:[#allocation3 + $0x518] sm:$0xff]
    %v222 = vld [vmem:[#allocation3 + $0x520] sm:$0xff]
    %v223 = vld [vmem:[#allocation3 + $0x528] sm:$0xff]
    %v224 = vld [vmem:[#allocation3 + $0x530] sm:$0xff]
    %v225 = vld [vmem:[#allocation3 + $0x538] sm:$0xff]
    %v226 = vld [vmem:[#allocation3 + $0x540] sm:$0xff]
    %v227 = vld [vmem:[#allocation3 + $0x548] sm:$0xff]
    %v228 = vld [vmem:[#allocation3 + $0x550] sm:$0xff]
    %v229 = vld [vmem:[#allocation3 + $0x558] sm:$0xff]
    %v230 = vld [vmem:[#allocation3 + $0x560] sm:$0xff]
    %v231 = vld [vmem:[#allocation3 + $0x568] sm:$0xff]
    %v232 = vld [vmem:[#allocation3 + $0x570] sm:$0xff]
    %v233 = vld [vmem:[#allocation3 + $0x578] sm:$0xff]
    %v234 = vld [vmem:[#allocation3 + $0x580] sm:$0xff]
    %v235 = vld [vmem:[#allocation3 + $0x588] sm:$0xff]
    %v236 = vld [vmem:[#allocation3 + $0x590] sm:$0xff]
    %v237 = vld [vmem:[#allocation3 + $0x598] sm:$0xff]
    %v238 = vld [vmem:[#allocation3 + $0x5a0] sm:$0xff]
    %v239 = vld [vmem:[#allocation3 + $0x5a8] sm:$0xff]
    %v240 = vld [vmem:[#allocation3 + $0x5b0] sm:$0xff]
    %v241 = vld [vmem:[#allocation3 + $0x5b8] sm:$0xff]
    %v242 = vld [vmem:[#allocation3 + $0x5c0] sm:$0xff]
    %v243 = vld [vmem:[#allocation3 + $0x5c8] sm:$0xff]
    %v244 = vld [vmem:[#allocation3 + $0x5d0] sm:$0xff]
    %v245 = vld [vmem:[#allocation3 + $0x5d8] sm:$0xff]
    %v246 = vld [vmem:[#allocation3 + $0x5e0] sm:$0xff]
    %v247 = vld [vmem:[#allocation3 + $0x5e8] sm:$0xff]
    %v248 = vld [vmem:[#allocation3 + $0x5f0] sm:$0xff]
    %v249 = vld [vmem:[#allocation3 + $0x5f8] sm:$0xff]
    %v250 = vld [vmem:[#allocation3 + $0x600] sm:$0xff]
    %v251 = vld [vmem:[#allocation3 + $0x608] sm:$0xff]
    %v252 = vld [vmem:[#allocation3 + $0x610] sm:$0xff]
    %v253 = vld [vmem:[#allocation3 + $0x618] sm:$0xff]
    %v254 = vld [vmem:[#allocation3 + $0x620] sm:$0xff]
    %v255 = vld [vmem:[#allocation3 + $0x628] sm:$0xff]
    %v256 = vld [vmem:[#allocation3 + $0x630] sm:$0xff]
    %v257 = vld [vmem:[#allocation3 + $0x638] sm:$0xff]
    %v258 = vld [vmem:[#allocation3 + $0x640] sm:$0xff]
    %v259 = vld [vmem:[#allocation3 + $0x648] sm:$0xff]
    %v260 = vld [vmem:[#allocation3 + $0x650] sm:$0xff]
    %v261 = vld [vmem:[#allocation3 + $0x658] sm:$0xff]
    %v262 = vld [vmem:[#allocation3 + $0x660] sm:$0xff]
    %v263 = vld [vmem:[#allocation3 + $0x668] sm:$0xff]
    %v264 = vld [vmem:[#allocation3 + $0x670] sm:$0xff]
    %v265 = vld [vmem:[#allocation3 + $0x678] sm:$0xff]
    %v266 = vld [vmem:[#allocation3 + $0x680] sm:$0xff]
    %v267 = vld [vmem:[#allocation3 + $0x688] sm:$0xff]
    %v268 = vld [vmem:[#allocation3 + $0x690] sm:$0xff]
    %v269 = vld [vmem:[#allocation3 + $0x698] sm:$0xff]
    %v270 = vld [vmem:[#allocation3 + $0x6a0] sm:$0xff]
    %v271 = vld [vmem:[#allocation3 + $0x6a8] sm:$0xff]
    %v272 = vld [vmem:[#allocation3 + $0x6b0] sm:$0xff]
    %v273 = vld [vmem:[#allocation3 + $0x6b8] sm:$0xff]
    %v274 = vld [vmem:[#allocation3 + $0x6c0] sm:$0xff]
    %v275 = vld [vmem:[#allocation3 + $0x6c8] sm:$0xff]
    %v276 = vld [vmem:[#allocation3 + $0x6d0] sm:$0xff]
    %v277 = vld [vmem:[#allocation3 + $0x6d8] sm:$0xff]
    %v278 = vld [vmem:[#allocation3 + $0x6e0] sm:$0xff]
    %v279 = vld [vmem:[#allocation3 + $0x6e8] sm:$0xff]
    %v280 = vld [vmem:[#allocation3 + $0x6f0] sm:$0xff]
    %v281 = vld [vmem:[#allocation3 + $0x6f8] sm:$0xff]
    %v282 = vld [vmem:[#allocation3 + $0x700] sm:$0xff]
    %v283 = vld [vmem:[#allocation3 + $0x708] sm:$0xff]
    %v284 = vld [vmem:[#allocation3 + $0x710] sm:$0xff]
    %v285 = vld [vmem:[#allocation3 + $0x718] sm:$0xff]
    %v286 = vld [vmem:[#allocation3 + $0x720] sm:$0xff]
    %v287 = vld [vmem:[#allocation3 + $0x728] sm:$0xff]
    %v288 = vld [vmem:[#allocation3 + $0x730] sm:$0xff]
    %v289 = vld [vmem:[#allocation3 + $0x738] sm:$0xff]
    %v290 = vld [vmem:[#allocation3 + $0x740] sm:$0xff]
    %v291 = vld [vmem:[#allocation3 + $0x748] sm:$0xff]
    %v292 = vld [vmem:[#allocation3 + $0x750] sm:$0xff]
    %v293 = vld [vmem:[#allocation3 + $0x758] sm:$0xff]
    %v294 = vld [vmem:[#allocation3 + $0x760] sm:$0xff]
    %v295 = vld [vmem:[#allocation3 + $0x768] sm:$0xff]
    %v296 = vld [vmem:[#allocation3 + $0x770] sm:$0xff]
    %v297 = vld [vmem:[#allocation3 + $0x778] sm:$0xff]
    %v298 = vld [vmem:[#allocation3 + $0x780] sm:$0xff]
    %v299 = vld [vmem:[#allocation3 + $0x788] sm:$0xff]
    %v300 = vld [vmem:[#allocation3 + $0x790] sm:$0xff]
    %v301 = vld [vmem:[#allocation3 + $0x798] sm:$0xff]
    %v302 = vld [vmem:[#allocation3 + $0x7a0] sm:$0xff]
    %v303 = vld [vmem:[#allocation3 + $0x7a8] sm:$0xff]
    %v304 = vld [vmem:[#allocation3 + $0x7b0] sm:$0xff]
    %v305 = vld [vmem:[#allocation3 + $0x7b8] sm:$0xff]
    %v306 = vld [vmem:[#allocation3 + $0x7c0] sm:$0xff]
    %v307 = vld [vmem:[#allocation3 + $0x7c8] sm:$0xff]
    %v308 = vld [vmem:[#allocation3 + $0x7d0] sm:$0xff]
    %v309 = vld [vmem:[#allocation3 + $0x7d8] sm:$0xff]
    %v310 = vld [vmem:[#allocation3 + $0x7e0] sm:$0xff]
    %v311 = vld [vmem:[#allocation3 + $0x7e8] sm:$0xff]
    %v312 = vld [vmem:[#allocation3 + $0x7f0] sm:$0xff]
    %v313 = vld [vmem:[#allocation3 + $0x7f8] sm:$0xff]
    %v314 = vld [vmem:[#allocation3 + $0x800] sm:$0xff]
    %v315 = vld [vmem:[#allocation3 + $0x808] sm:$0xff]
    %v316 = vld [vmem:[#allocation3 + $0x810] sm:$0xff]
    %v317 = vld [vmem:[#allocation3 + $0x818] sm:$0xff]
    %v318 = vld [vmem:[#allocation3 + $0x820] sm:$0xff]
    %v319 = vld [vmem:[#allocation3 + $0x828] sm:$0xff]
    %v320 = vld [vmem:[#allocation3 + $0x830] sm:$0xff]
    %v321 = vld [vmem:[#allocation3 + $0x838] sm:$0xff]
    %v322 = vld [vmem:[#allocation3 + $0x840] sm:$0xff]
    %v323 = vld [vmem:[#allocation3 + $0x848] sm:$0xff]
    %v324 = vld [vmem:[#allocation3 + $0x850] sm:$0xff]
    %v325 = vld [vmem:[#allocation3 + $0x858] sm:$0xff]
    %v326 = vld [vmem:[#allocation3 + $0x860] sm:$0xff]
    %v327 = vld [vmem:[#allocation3 + $0x868] sm:$0xff]
    %v328 = vld [vmem:[#allocation3 + $0x870] sm:$0xff]
    %v329 = vld [vmem:[#allocation3 + $0x878] sm:$0xff]
    %v330 = vld [vmem:[#allocation3 + $0x880] sm:$0xff]
    %v331 = vld [vmem:[#allocation3 + $0x888] sm:$0xff]
    %v332 = vld [vmem:[#allocation3 + $0x890] sm:$0xff]
    %v333 = vld [vmem:[#allocation3 + $0x898] sm:$0xff]
    %v334 = vld [vmem:[#allocation3 + $0x8a0] sm:$0xff]
    %v335 = vld [vmem:[#allocation3 + $0x8a8] sm:$0xff]
    %v336 = vld [vmem:[#allocation3 + $0x8b0] sm:$0xff]
    %v337 = vld [vmem:[#allocation3 + $0x8b8] sm:$0xff]
    %v338 = vld [vmem:[#allocation3 + $0x8c0] sm:$0xff]
    %v339 = vld [vmem:[#allocation3 + $0x8c8] sm:$0xff]
    %v340 = vld [vmem:[#allocation3 + $0x8d0] sm:$0xff]
    %v341 = vld [vmem:[#allocation3 + $0x8d8] sm:$0xff]
    %v342 = vld [vmem:[#allocation3 + $0x8e0] sm:$0xff]
    %v343 = vld [vmem:[#allocation3 + $0x8e8] sm:$0xff]
    %v344 = vld [vmem:[#allocation3 + $0x8f0] sm:$0xff]
    %v345 = vld [vmem:[#allocation3 + $0x8f8] sm:$0xff]
    %v346 = vld [vmem:[#allocation3 + $0x900] sm:$0xff]
    %v347 = vld [vmem:[#allocation3 + $0x908] sm:$0xff]
    %v348 = vld [vmem:[#allocation3 + $0x910] sm:$0xff]
    %v349 = vld [vmem:[#allocation3 + $0x918] sm:$0xff]
    %v350 = vld [vmem:[#allocation3 + $0x920] sm:$0xff]
    %v351 = vld [vmem:[#allocation3 + $0x928] sm:$0xff]
    %v352 = vld [vmem:[#allocation3 + $0x930] sm:$0xff]
    %v353 = vld [vmem:[#allocation3 + $0x938] sm:$0xff]
    %v354 = vld [vmem:[#allocation3 + $0x940] sm:$0xff]
    %v355 = vld [vmem:[#allocation3 + $0x948] sm:$0xff]
    %v356 = vld [vmem:[#allocation3 + $0x950] sm:$0xff]
    %v357 = vld [vmem:[#allocation3 + $0x958] sm:$0xff]
    %v358 = vld [vmem:[#allocation3 + $0x960] sm:$0xff]
    %v359 = vld [vmem:[#allocation3 + $0x968] sm:$0xff]
    %v360 = vld [vmem:[#allocation3 + $0x970] sm:$0xff]
    %v361 = vld [vmem:[#allocation3 + $0x978] sm:$0xff]
    %v362 = vld [vmem:[#allocation3 + $0x980] sm:$0xff]
    %v363 = vld [vmem:[#allocation3 + $0x988] sm:$0xff]
    %v364 = vld [vmem:[#allocation3 + $0x990] sm:$0xff]
    %v365 = vld [vmem:[#allocation3 + $0x998] sm:$0xff]
    %v366 = vld [vmem:[#allocation3 + $0x9a0] sm:$0xff]
    %v367 = vld [vmem:[#allocation3 + $0x9a8] sm:$0xff]
    %v368 = vld [vmem:[#allocation3 + $0x9b0] sm:$0xff]
    %v369 = vld [vmem:[#allocation3 + $0x9b8] sm:$0xff]
    %v370 = vld [vmem:[#allocation3 + $0x9c0] sm:$0xff]
    %v371 = vld [vmem:[#allocation3 + $0x9c8] sm:$0xff]
    %v372 = vld [vmem:[#allocation3 + $0x9d0] sm:$0xff]
    %v373 = vld [vmem:[#allocation3 + $0x9d8] sm:$0xff]
    %v374 = vld [vmem:[#allocation3 + $0x9e0] sm:$0xff]
    %v375 = vld [vmem:[#allocation3 + $0x9e8] sm:$0xff]
    %v376 = vld [vmem:[#allocation3 + $0x9f0] sm:$0xff]
    %v377 = vld [vmem:[#allocation3 + $0x9f8] sm:$0xff]
    %v378 = vld [vmem:[#allocation3 + $0xa00] sm:$0xff]
    %v379 = vld [vmem:[#allocation3 + $0xa08] sm:$0xff]
    %v380 = vld [vmem:[#allocation3 + $0xa10] sm:$0xff]
    %v381 = vld [vmem:[#allocation3 + $0xa18] sm:$0xff]
    %v382 = vld [vmem:[#allocation3 + $0xa20] sm:$0xff]
    %v383 = vld [vmem:[#allocation3 + $0xa28] sm:$0xff]
    %v384 = vld [vmem:[#allocation3 + $0xa30] sm:$0xff]
    %v385 = vld [vmem:[#allocation3 + $0xa38] sm:$0xff]
    %v386 = vld [vmem:[#allocation3 + $0xa40] sm:$0xff]
    %v387 = vld [vmem:[#allocation3 + $0xa48] sm:$0xff]
    %v388 = vld [vmem:[#allocation3 + $0xa50] sm:$0xff]
    %v389 = vld [vmem:[#allocation3 + $0xa58] sm:$0xff]
    %v390 = vld [vmem:[#allocation3 + $0xa60] sm:$0xff]
    %v391 = vld [vmem:[#allocation3 + $0xa68] sm:$0xff]
    %v392 = vld [vmem:[#allocation3 + $0xa70] sm:$0xff]
    %v393 = vld [vmem:[#allocation3 + $0xa78] sm:$0xff]
    %v394 = vld [vmem:[#allocation3 + $0xa80] sm:$0xff]
    %v395 = vld [vmem:[#allocation3 + $0xa88] sm:$0xff]
    %v396 = vld [vmem:[#allocation3 + $0xa90] sm:$0xff]
    %v397 = vld [vmem:[#allocation3 + $0xa98] sm:$0xff]
    %v398 = vld [vmem:[#allocation3 + $0xaa0] sm:$0xff]
    %v399 = vld [vmem:[#allocation3 + $0xaa8] sm:$0xff]
    %v400 = vld [vmem:[#allocation3 + $0xab0] sm:$0xff]
    %v401 = vld [vmem:[#allocation3 + $0xab8] sm:$0xff]
    %v402 = vld [vmem:[#allocation3 + $0xac0] sm:$0xff]
    %v403 = vld [vmem:[#allocation3 + $0xac8] sm:$0xff]
    %v404 = vld [vmem:[#allocation3 + $0xad0] sm:$0xff]
    %v405 = vld [vmem:[#allocation3 + $0xad8] sm:$0xff]
    %v406 = vld [vmem:[#allocation3 + $0xae0] sm:$0xff]
    %v407 = vld [vmem:[#allocation3 + $0xae8] sm:$0xff]
    %v408 = vld [vmem:[#allocation3 + $0xaf0] sm:$0xff]
    %v409 = vld [vmem:[#allocation3 + $0xaf8] sm:$0xff]
    %v410 = vld [vmem:[#allocation3 + $0xb00] sm:$0xff]
    %v411 = vld [vmem:[#allocation3 + $0xb08] sm:$0xff]
    %v412 = vld [vmem:[#allocation3 + $0xb10] sm:$0xff]
    %v413 = vld [vmem:[#allocation3 + $0xb18] sm:$0xff]
    %v414 = vld [vmem:[#allocation3 + $0xb20] sm:$0xff]
    %v415 = vld [vmem:[#allocation3 + $0xb28] sm:$0xff]
    %v416 = vld [vmem:[#allocation3 + $0xb30] sm:$0xff]
    %v417 = vld [vmem:[#allocation3 + $0xb38] sm:$0xff]
    %v418 = vld [vmem:[#allocation3 + $0xb40] sm:$0xff]
    %v419 = vld [vmem:[#allocation3 + $0xb48] sm:$0xff]
    %v420 = vld [vmem:[#allocation3 + $0xb50] sm:$0xff]
    %v421 = vld [vmem:[#allocation3 + $0xb58] sm:$0xff]
    %v422 = vld [vmem:[#allocation3 + $0xb60] sm:$0xff]
    %v423 = vld [vmem:[#allocation3 + $0xb68] sm:$0xff]
    %v424 = vld [vmem:[#allocation3 + $0xb70] sm:$0xff]
    %v425 = vld [vmem:[#allocation3 + $0xb78] sm:$0xff]
    %v426 = vld [vmem:[#allocation3 + $0xb80] sm:$0xff]
    %v427 = vld [vmem:[#allocation3 + $0xb88] sm:$0xff]
    %v428 = vld [vmem:[#allocation3 + $0xb90] sm:$0xff]
    %v429 = vld [vmem:[#allocation3 + $0xb98] sm:$0xff]
    %v430 = vld [vmem:[#allocation3 + $0xba0] sm:$0xff]
    %v431 = vld [vmem:[#allocation3 + $0xba8] sm:$0xff]
    %v432 = vld [vmem:[#allocation3 + $0xbb0] sm:$0xff]
    %v433 = vld [vmem:[#allocation3 + $0xbb8] sm:$0xff]
    %v434 = vld [vmem:[#allocation3 + $0xbc0] sm:$0xff]
    %v435 = vld [vmem:[#allocation3 + $0xbc8] sm:$0xff]
    %v436 = vld [vmem:[#allocation3 + $0xbd0] sm:$0xff]
    %v437 = vld [vmem:[#allocation3 + $0xbd8] sm:$0xff]
    %v438 = vld [vmem:[#allocation3 + $0xbe0] sm:$0xff]
    %v439 = vld [vmem:[#allocation3 + $0xbe8] sm:$0xff]
    %v440 = vld [vmem:[#allocation3 + $0xbf0] sm:$0xff]
    %v441 = vld [vmem:[#allocation3 + $0xbf8] sm:$0xff]
    %v442 = vld [vmem:[#allocation3 + $0xc00] sm:$0xff]
    %v443 = vld [vmem:[#allocation3 + $0xc08] sm:$0xff]
    %v444 = vld [vmem:[#allocation3 + $0xc10] sm:$0xff]
    %v445 = vld [vmem:[#allocation3 + $0xc18] sm:$0xff]
    %v446 = vld [vmem:[#allocation3 + $0xc20] sm:$0xff]
    %v447 = vld [vmem:[#allocation3 + $0xc28] sm:$0xff]
    %v448 = vld [vmem:[#allocation3 + $0xc30] sm:$0xff]
    %v449 = vld [vmem:[#allocation3 + $0xc38] sm:$0xff]
    %v450 = vld [vmem:[#allocation3 + $0xc40] sm:$0xff]
    %v451 = vld [vmem:[#allocation3 + $0xc48] sm:$0xff]
    %v452 = vld [vmem:[#allocation3 + $0xc50] sm:$0xff]
    %v453 = vld [vmem:[#allocation3 + $0xc58] sm:$0xff]
    %v454 = vld [vmem:[#allocation3 + $0xc60] sm:$0xff]
    %v455 = vld [vmem:[#allocation3 + $0xc68] sm:$0xff]
    %v456 = vld [vmem:[#allocation3 + $0xc70] sm:$0xff]
    %v457 = vld [vmem:[#allocation3 + $0xc78] sm:$0xff]
    %v458 = vld [vmem:[#allocation3 + $0xc80] sm:$0xff]
    %v459 = vld [vmem:[#allocation3 + $0xc88] sm:$0xff]
    %v460 = vld [vmem:[#allocation3 + $0xc90] sm:$0xff]
    %v461 = vld [vmem:[#allocation3 + $0xc98] sm:$0xff]
    %v462 = vld [vmem:[#allocation3 + $0xca0] sm:$0xff]
    %v463 = vld [vmem:[#allocation3 + $0xca8] sm:$0xff]
    %v464 = vld [vmem:[#allocation3 + $0xcb0] sm:$0xff]
    %v465 = vld [vmem:[#allocation3 + $0xcb8] sm:$0xff]
    %v466 = vld [vmem:[#allocation3 + $0xcc0] sm:$0xff]
    %v467 = vld [vmem:[#allocation3 + $0xcc8] sm:$0xff]
    %v468 = vld [vmem:[#allocation3 + $0xcd0] sm:$0xff]
    %v469 = vld [vmem:[#allocation3 + $0xcd8] sm:$0xff]
    %v470 = vld [vmem:[#allocation3 + $0xce0] sm:$0xff]
    %v471 = vld [vmem:[#allocation3 + $0xce8] sm:$0xff]
    %v472 = vld [vmem:[#allocation3 + $0xcf0] sm:$0xff]
    %v473 = vld [vmem:[#allocation3 + $0xcf8] sm:$0xff]
    %v474 = vld [vmem:[#allocation3 + $0xd00] sm:$0xff]
    %v475 = vld [vmem:[#allocation3 + $0xd08] sm:$0xff]
    %v476 = vld [vmem:[#allocation3 + $0xd10] sm:$0xff]
    %v477 = vld [vmem:[#allocation3 + $0xd18] sm:$0xff]
    %v478 = vld [vmem:[#allocation3 + $0xd20] sm:$0xff]
    %v479 = vld [vmem:[#allocation3 + $0xd28] sm:$0xff]
    %v480 = vld [vmem:[#allocation3 + $0xd30] sm:$0xff]
    %v481 = vld [vmem:[#allocation3 + $0xd38] sm:$0xff]
    %v482 = vld [vmem:[#allocation3 + $0xd40] sm:$0xff]
    %v483 = vld [vmem:[#allocation3 + $0xd48] sm:$0xff]
    %v484 = vld [vmem:[#allocation3 + $0xd50] sm:$0xff]
    %v485 = vld [vmem:[#allocation3 + $0xd58] sm:$0xff]
    %v486 = vld [vmem:[#allocation3 + $0xd60] sm:$0xff]
    %v487 = vld [vmem:[#allocation3 + $0xd68] sm:$0xff]
    %v488 = vld [vmem:[#allocation3 + $0xd70] sm:$0xff]
    %v489 = vld [vmem:[#allocation3 + $0xd78] sm:$0xff]
    %v490 = vld [vmem:[#allocation3 + $0xd80] sm:$0xff]
    %v491 = vld [vmem:[#allocation3 + $0xd88] sm:$0xff]
    %v492 = vld [vmem:[#allocation3 + $0xd90] sm:$0xff]
    %v493 = vld [vmem:[#allocation3 + $0xd98] sm:$0xff]
    %v494 = vld [vmem:[#allocation3 + $0xda0] sm:$0xff]
    %v495 = vld [vmem:[#allocation3 + $0xda8] sm:$0xff]
    %v496 = vld [vmem:[#allocation3 + $0xdb0] sm:$0xff]
    %v497 = vld [vmem:[#allocation3 + $0xdb8] sm:$0xff]
    %v498 = vld [vmem:[#allocation3 + $0xdc0] sm:$0xff]
    %v499 = vld [vmem:[#allocation3 + $0xdc8] sm:$0xff]
    %v500 = vld [vmem:[#allocation3 + $0xdd0] sm:$0xff]
    %v501 = vld [vmem:[#allocation3 + $0xdd8] sm:$0xff]
    %v502 = vld [vmem:[#allocation3 + $0xde0] sm:$0xff]
    %v503 = vld [vmem:[#allocation3 + $0xde8] sm:$0xff]
    %v504 = vld [vmem:[#allocation3 + $0xdf0] sm:$0xff]
    %v505 = vld [vmem:[#allocation3 + $0xdf8] sm:$0xff]
    %v506 = vld [vmem:[#allocation3 + $0xe00] sm:$0xff]
    %v507 = vld [vmem:[#allocation3 + $0xe08] sm:$0xff]
    %v508 = vld [vmem:[#allocation3 + $0xe10] sm:$0xff]
    %v509 = vld [vmem:[#allocation3 + $0xe18] sm:$0xff]
    %v510 = vld [vmem:[#allocation3 + $0xe20] sm:$0xff]
    %v511 = vld [vmem:[#allocation3 + $0xe28] sm:$0xff]
    %v512 = vld [vmem:[#allocation3 + $0xe30] sm:$0xff]
    %v513 = vld [vmem:[#allocation3 + $0xe38] sm:$0xff]
    %v514 = vld [vmem:[#allocation3 + $0xe40] sm:$0xff]
    %v515 = vld [vmem:[#allocation3 + $0xe48] sm:$0xff]
    %v516 = vld [vmem:[#allocation3 + $0xe50] sm:$0xff]
    %v517 = vld [vmem:[#allocation3 + $0xe58] sm:$0xff]
    %v518 = vld [vmem:[#allocation3 + $0xe60] sm:$0xff]
    %v519 = vld [vmem:[#allocation3 + $0xe68] sm:$0xff]
    %v520 = vld [vmem:[#allocation3 + $0xe70] sm:$0xff]
    %v521 = vld [vmem:[#allocation3 + $0xe78] sm:$0xff]
    %v522 = vld [vmem:[#allocation3 + $0xe80] sm:$0xff]
    %v523 = vld [vmem:[#allocation3 + $0xe88] sm:$0xff]
    %v524 = vld [vmem:[#allocation3 + $0xe90] sm:$0xff]
    %v525 = vld [vmem:[#allocation3 + $0xe98] sm:$0xff]
    %v526 = vld [vmem:[#allocation3 + $0xea0] sm:$0xff]
    %v527 = vld [vmem:[#allocation3 + $0xea8] sm:$0xff]
    %v528 = vld [vmem:[#allocation3 + $0xeb0] sm:$0xff]
    %v529 = vld [vmem:[#allocation3 + $0xeb8] sm:$0xff]
    %v530 = vld [vmem:[#allocation3 + $0xec0] sm:$0xff]
    %v531 = vld [vmem:[#allocation3 + $0xec8] sm:$0xff]
    %v532 = vld [vmem:[#allocation3 + $0xed0] sm:$0xff]
    %v533 = vld [vmem:[#allocation3 + $0xed8] sm:$0xff]
    %v534 = vld [vmem:[#allocation3 + $0xee0] sm:$0xff]
    %v535 = vld [vmem:[#allocation3 + $0xee8] sm:$0xff]
    %v536 = vld [vmem:[#allocation3 + $0xef0] sm:$0xff]
    %v537 = vld [vmem:[#allocation3 + $0xef8] sm:$0xff]
    %v538 = vld [vmem:[#allocation3 + $0xf00] sm:$0xff]
    %v539 = vld [vmem:[#allocation3 + $0xf08] sm:$0xff]
    %v540 = vld [vmem:[#allocation3 + $0xf10] sm:$0xff]
    %v541 = vld [vmem:[#allocation3 + $0xf18] sm:$0xff]
    %v542 = vld [vmem:[#allocation3 + $0xf20] sm:$0xff]
    %v543 = vld [vmem:[#allocation3 + $0xf28] sm:$0xff]
    %v544 = vld [vmem:[#allocation3 + $0xf30] sm:$0xff]
    %v545 = vld [vmem:[#allocation3 + $0xf38] sm:$0xff]
    %v546 = vld [vmem:[#allocation3 + $0xf40] sm:$0xff]
    %v547 = vld [vmem:[#allocation3 + $0xf48] sm:$0xff]
    %v548 = vld [vmem:[#allocation3 + $0xf50] sm:$0xff]
    %v549 = vld [vmem:[#allocation3 + $0xf58] sm:$0xff]
    %v550 = vld [vmem:[#allocation3 + $0xf60] sm:$0xff]
    %v551 = vld [vmem:[#allocation3 + $0xf68] sm:$0xff]
    %v552 = vld [vmem:[#allocation3 + $0xf70] sm:$0xff]
    %v553 = vld [vmem:[#allocation3 + $0xf78] sm:$0xff]
    %v554 = vld [vmem:[#allocation3 + $0xf80] sm:$0xff]
    %v555 = vld [vmem:[#allocation3 + $0xf88] sm:$0xff]
    %v556 = vld [vmem:[#allocation3 + $0xf90] sm:$0xff]
    %v557 = vld [vmem:[#allocation3 + $0xf98] sm:$0xff]
    %v558 = vld [vmem:[#allocation3 + $0xfa0] sm:$0xff]
    %v559 = vld [vmem:[#allocation3 + $0xfa8] sm:$0xff]
    %v560 = vld [vmem:[#allocation3 + $0xfb0] sm:$0xff]
    %v561 = vld [vmem:[#allocation3 + $0xfb8] sm:$0xff]
    %v562 = vld [vmem:[#allocation3 + $0xfc0] sm:$0xff]
    %v563 = vld [vmem:[#allocation3 + $0xfc8] sm:$0xff]
    %v564 = vld [vmem:[#allocation3 + $0xfd0] sm:$0xff]
    %v565 = vld [vmem:[#allocation3 + $0xfd8] sm:$0xff]
    %v566 = vld [vmem:[#allocation3 + $0xfe0] sm:$0xff]
    %v567 = vld [vmem:[#allocation3 + $0xfe8] sm:$0xff]
    %v568 = vld [vmem:[#allocation3 + $0xff0] sm:$0xff]
    %v569 = vld [vmem:[#allocation3 + $0xff8] sm:$0xff]
    %v570 = vld [vmem:[#allocation5] sm:$0x3]
    %v572 = vlaneseq
    %v573 = vshrl.u32 %v572, 7
    %v574 = vsub.s32 0, %v573
    %v575 = vrot.slane %v570, %v574
    %v576 = vlaneseq
    %v577 = vshrl.u32 %v576, 7
    %v578 = vsub.s32 1, %v577
    %v579 = vrot.slane %v570, %v578
    %v586 = vcombine.high %v54, %v54
    %v588 = vunpack.c.l.s4 1966171168
    %v589 = vunpack.c.0.s8 %v588
    %v590 = vlaneseq
    %v591 = vshrl.u32 %v590, 7
    %v592 = vsub.s32 %v589, %v591
    %v593 = vrot.slane %v54, %v592
    %v595 = vunpack.c.l.s4 1966171168
    %v596 = vunpack.c.0.s8 %v595
    %v597 = vlaneseq
    %v598 = vshrl.u32 %v597, 7
    %v599 = vsub.s32 %v596, %v598
    %v600 = vrot.slane %v586, %v599
    %v601 = vcombine.high %v593, %v593
    %v602 = vcombine.high %v600, %v600
    %v604 = vunpack.c.l.s4 1966171168
    %v605 = vunpack.c.0.s8 %v604
    %v606 = vlaneseq
    %v607 = vshrl.u32 %v606, 7
    %v608 = vsub.s32 %v605, %v607
    %v609 = vrot.slane %v593, %v608
    %v611 = vunpack.c.l.s4 1966171168
    %v612 = vunpack.c.0.s8 %v611
    %v613 = vlaneseq
    %v614 = vshrl.u32 %v613, 7
    %v615 = vsub.s32 %v612, %v614
    %v616 = vrot.slane %v600, %v615
    %v618 = vunpack.c.l.s4 1966171168
    %v619 = vunpack.c.0.s8 %v618
    %v620 = vlaneseq
    %v621 = vshrl.u32 %v620, 7
    %v622 = vsub.s32 %v619, %v621
    %v623 = vrot.slane %v601, %v622
    %v625 = vunpack.c.l.s4 1966171168
    %v626 = vunpack.c.0.s8 %v625
    %v627 = vlaneseq
    %v628 = vshrl.u32 %v627, 7
    %v629 = vsub.s32 %v626, %v628
    %v630 = vrot.slane %v602, %v629
    %v631 = vcombine.high %v609, %v609
    %v632 = vcombine.high %v616, %v616
    %v633 = vcombine.high %v623, %v623
    %v634 = vcombine.high %v630, %v630
    %v635 = vcombine.high %v55, %v55
    %v637 = vunpack.c.l.s4 1966171168
    %v638 = vunpack.c.0.s8 %v637
    %v639 = vlaneseq
    %v640 = vshrl.u32 %v639, 7
    %v641 = vsub.s32 %v638, %v640
    %v642 = vrot.slane %v55, %v641
    %v644 = vunpack.c.l.s4 1966171168
    %v645 = vunpack.c.0.s8 %v644
    %v646 = vlaneseq
    %v647 = vshrl.u32 %v646, 7
    %v648 = vsub.s32 %v645, %v647
    %v649 = vrot.slane %v635, %v648
    %v650 = vcombine.high %v642, %v642
    %v651 = vcombine.high %v649, %v649
    %v653 = vunpack.c.l.s4 1966171168
    %v654 = vunpack.c.0.s8 %v653
    %v655 = vlaneseq
    %v656 = vshrl.u32 %v655, 7
    %v657 = vsub.s32 %v654, %v656
    %v658 = vrot.slane %v642, %v657
    %v660 = vunpack.c.l.s4 1966171168
    %v661 = vunpack.c.0.s8 %v660
    %v662 = vlaneseq
    %v663 = vshrl.u32 %v662, 7
    %v664 = vsub.s32 %v661, %v663
    %v665 = vrot.slane %v649, %v664
    %v667 = vunpack.c.l.s4 1966171168
    %v668 = vunpack.c.0.s8 %v667
    %v669 = vlaneseq
    %v670 = vshrl.u32 %v669, 7
    %v671 = vsub.s32 %v668, %v670
    %v672 = vrot.slane %v650, %v671
    %v674 = vunpack.c.l.s4 1966171168
    %v675 = vunpack.c.0.s8 %v674
    %v676 = vlaneseq
    %v677 = vshrl.u32 %v676, 7
    %v678 = vsub.s32 %v675, %v677
    %v679 = vrot.slane %v651, %v678
    %v680 = vcombine.high %v658, %v658
    %v681 = vcombine.high %v665, %v665
    %v682 = vcombine.high %v672, %v672
    %v683 = vcombine.high %v679, %v679
    %v684 = vcombine.high %v56, %v56
    %v686 = vunpack.c.l.s4 1966171168
    %v687 = vunpack.c.0.s8 %v686
    %v688 = vlaneseq
    %v689 = vshrl.u32 %v688, 7
    %v690 = vsub.s32 %v687, %v689
    %v691 = vrot.slane %v56, %v690
    %v693 = vunpack.c.l.s4 1966171168
    %v694 = vunpack.c.0.s8 %v693
    %v695 = vlaneseq
    %v696 = vshrl.u32 %v695, 7
    %v697 = vsub.s32 %v694, %v696
    %v698 = vrot.slane %v684, %v697
    %v699 = vcombine.high %v691, %v691
    %v700 = vcombine.high %v698, %v698
    %v702 = vunpack.c.l.s4 1966171168
    %v703 = vunpack.c.0.s8 %v702
    %v704 = vlaneseq
    %v705 = vshrl.u32 %v704, 7
    %v706 = vsub.s32 %v703, %v705
    %v707 = vrot.slane %v691, %v706
    %v709 = vunpack.c.l.s4 1966171168
    %v710 = vunpack.c.0.s8 %v709
    %v711 = vlaneseq
    %v712 = vshrl.u32 %v711, 7
    %v713 = vsub.s32 %v710, %v712
    %v714 = vrot.slane %v698, %v713
    %v716 = vunpack.c.l.s4 1966171168
    %v717 = vunpack.c.0.s8 %v716
    %v718 = vlaneseq
    %v719 = vshrl.u32 %v718, 7
    %v720 = vsub.s32 %v717, %v719
    %v721 = vrot.slane %v699, %v720
    %v723 = vunpack.c.l.s4 1966171168
    %v724 = vunpack.c.0.s8 %v723
    %v725 = vlaneseq
    %v726 = vshrl.u32 %v725, 7
    %v727 = vsub.s32 %v724, %v726
    %v728 = vrot.slane %v700, %v727
    %v729 = vcombine.high %v707, %v707
    %v730 = vcombine.high %v714, %v714
    %v731 = vcombine.high %v721, %v721
    %v732 = vcombine.high %v728, %v728
    %v733 = vcombine.high %v57, %v57
    %v735 = vunpack.c.l.s4 1966171168
    %v736 = vunpack.c.0.s8 %v735
    %v737 = vlaneseq
    %v738 = vshrl.u32 %v737, 7
    %v739 = vsub.s32 %v736, %v738
    %v740 = vrot.slane %v57, %v739
    %v742 = vunpack.c.l.s4 1966171168
    %v743 = vunpack.c.0.s8 %v742
    %v744 = vlaneseq
    %v745 = vshrl.u32 %v744, 7
    %v746 = vsub.s32 %v743, %v745
    %v747 = vrot.slane %v733, %v746
    %v748 = vcombine.high %v740, %v740
    %v749 = vcombine.high %v747, %v747
    %v751 = vunpack.c.l.s4 1966171168
    %v752 = vunpack.c.0.s8 %v751
    %v753 = vlaneseq
    %v754 = vshrl.u32 %v753, 7
    %v755 = vsub.s32 %v752, %v754
    %v756 = vrot.slane %v740, %v755
    %v758 = vunpack.c.l.s4 1966171168
    %v759 = vunpack.c.0.s8 %v758
    %v760 = vlaneseq
    %v761 = vshrl.u32 %v760, 7
    %v762 = vsub.s32 %v759, %v761
    %v763 = vrot.slane %v747, %v762
    %v765 = vunpack.c.l.s4 1966171168
    %v766 = vunpack.c.0.s8 %v765
    %v767 = vlaneseq
    %v768 = vshrl.u32 %v767, 7
    %v769 = vsub.s32 %v766, %v768
    %v770 = vrot.slane %v748, %v769
    %v772 = vunpack.c.l.s4 1966171168
    %v773 = vunpack.c.0.s8 %v772
    %v774 = vlaneseq
    %v775 = vshrl.u32 %v774, 7
    %v776 = vsub.s32 %v773, %v775
    %v777 = vrot.slane %v749, %v776
    %v778 = vcombine.high %v756, %v756
    %v779 = vcombine.high %v763, %v763
    %v780 = vcombine.high %v770, %v770
    %v781 = vcombine.high %v777, %v777
    %v1326 = vunpack.c.l.b16 %v58
    %v1327 = vunpack.c.h.b16 %v58
    %v1328 = vunpack.c.l.b16 %v59
    %v1329 = vunpack.c.h.b16 %v59
    %v1330 = vunpack.c.l.b16 %v60
    %v1331 = vunpack.c.h.b16 %v60
    %v1332 = vunpack.c.l.b16 %v61
    %v1333 = vunpack.c.h.b16 %v61
    %v1334 = vunpack.c.l.b16 %v62
    %v1335 = vunpack.c.h.b16 %v62
    %v1336 = vunpack.c.l.b16 %v63
    %v1337 = vunpack.c.h.b16 %v63
    %v1338 = vunpack.c.l.b16 %v64
    %v1339 = vunpack.c.h.b16 %v64
    %v1340 = vunpack.c.l.b16 %v65
    %v1341 = vunpack.c.h.b16 %v65
    %v1342 = vunpack.c.l.b16 %v66
    %v1343 = vunpack.c.h.b16 %v66
    %v1344 = vunpack.c.l.b16 %v67
    %v1345 = vunpack.c.h.b16 %v67
    %v1346 = vunpack.c.l.b16 %v68
    %v1347 = vunpack.c.h.b16 %v68
    %v1348 = vunpack.c.l.b16 %v69
    %v1349 = vunpack.c.h.b16 %v69
    %v1350 = vunpack.c.l.b16 %v70
    %v1351 = vunpack.c.h.b16 %v70
    %v1352 = vunpack.c.l.b16 %v71
    %v1353 = vunpack.c.h.b16 %v71
    %v1354 = vunpack.c.l.b16 %v72
    %v1355 = vunpack.c.h.b16 %v72
    %v1356 = vunpack.c.l.b16 %v73
    %v1357 = vunpack.c.h.b16 %v73
    %v1358 = vunpack.c.l.b16 %v74
    %v1359 = vunpack.c.h.b16 %v74
    %v1360 = vunpack.c.l.b16 %v75
    %v1361 = vunpack.c.h.b16 %v75
    %v1362 = vunpack.c.l.b16 %v76
    %v1363 = vunpack.c.h.b16 %v76
    %v1364 = vunpack.c.l.b16 %v77
    %v1365 = vunpack.c.h.b16 %v77
    %v1366 = vunpack.c.l.b16 %v78
    %v1367 = vunpack.c.h.b16 %v78
    %v1368 = vunpack.c.l.b16 %v79
    %v1369 = vunpack.c.h.b16 %v79
    %v1370 = vunpack.c.l.b16 %v80
    %v1371 = vunpack.c.h.b16 %v80
    %v1372 = vunpack.c.l.b16 %v81
    %v1373 = vunpack.c.h.b16 %v81
    %v1374 = vunpack.c.l.b16 %v82
    %v1375 = vunpack.c.h.b16 %v82
    %v1376 = vunpack.c.l.b16 %v83
    %v1377 = vunpack.c.h.b16 %v83
    %v1378 = vunpack.c.l.b16 %v84
    %v1379 = vunpack.c.h.b16 %v84
    %v1380 = vunpack.c.l.b16 %v85
    %v1381 = vunpack.c.h.b16 %v85
    %v1382 = vunpack.c.l.b16 %v86
    %v1383 = vunpack.c.h.b16 %v86
    %v1384 = vunpack.c.l.b16 %v87
    %v1385 = vunpack.c.h.b16 %v87
    %v1386 = vunpack.c.l.b16 %v88
    %v1387 = vunpack.c.h.b16 %v88
    %v1388 = vunpack.c.l.b16 %v89
    %v1389 = vunpack.c.h.b16 %v89
    %v1390 = vunpack.c.l.b16 %v90
    %v1391 = vunpack.c.h.b16 %v90
    %v1392 = vunpack.c.l.b16 %v91
    %v1393 = vunpack.c.h.b16 %v91
    %v1394 = vunpack.c.l.b16 %v92
    %v1395 = vunpack.c.h.b16 %v92
    %v1396 = vunpack.c.l.b16 %v93
    %v1397 = vunpack.c.h.b16 %v93
    %v1398 = vunpack.c.l.b16 %v94
    %v1399 = vunpack.c.h.b16 %v94
    %v1400 = vunpack.c.l.b16 %v95
    %v1401 = vunpack.c.h.b16 %v95
    %v1402 = vunpack.c.l.b16 %v96
    %v1403 = vunpack.c.h.b16 %v96
    %v1404 = vunpack.c.l.b16 %v97
    %v1405 = vunpack.c.h.b16 %v97
    %v1406 = vunpack.c.l.b16 %v98
    %v1407 = vunpack.c.h.b16 %v98
    %v1408 = vunpack.c.l.b16 %v99
    %v1409 = vunpack.c.h.b16 %v99
    %v1410 = vunpack.c.l.b16 %v100
    %v1411 = vunpack.c.h.b16 %v100
    %v1412 = vunpack.c.l.b16 %v101
    %v1413 = vunpack.c.h.b16 %v101
    %v1414 = vunpack.c.l.b16 %v102
    %v1415 = vunpack.c.h.b16 %v102
    %v1416 = vunpack.c.l.b16 %v103
    %v1417 = vunpack.c.h.b16 %v103
    %v1418 = vunpack.c.l.b16 %v104
    %v1419 = vunpack.c.h.b16 %v104
    %v1420 = vunpack.c.l.b16 %v105
    %v1421 = vunpack.c.h.b16 %v105
    %v1422 = vunpack.c.l.b16 %v106
    %v1423 = vunpack.c.h.b16 %v106
    %v1424 = vunpack.c.l.b16 %v107
    %v1425 = vunpack.c.h.b16 %v107
    %v1426 = vunpack.c.l.b16 %v108
    %v1427 = vunpack.c.h.b16 %v108
    %v1428 = vunpack.c.l.b16 %v109
    %v1429 = vunpack.c.h.b16 %v109
    %v1430 = vunpack.c.l.b16 %v110
    %v1431 = vunpack.c.h.b16 %v110
    %v1432 = vunpack.c.l.b16 %v111
    %v1433 = vunpack.c.h.b16 %v111
    %v1434 = vunpack.c.l.b16 %v112
    %v1435 = vunpack.c.h.b16 %v112
    %v1436 = vunpack.c.l.b16 %v113
    %v1437 = vunpack.c.h.b16 %v113
    %v1438 = vunpack.c.l.b16 %v114
    %v1439 = vunpack.c.h.b16 %v114
    %v1440 = vunpack.c.l.b16 %v115
    %v1441 = vunpack.c.h.b16 %v115
    %v1442 = vunpack.c.l.b16 %v116
    %v1443 = vunpack.c.h.b16 %v116
    %v1444 = vunpack.c.l.b16 %v117
    %v1445 = vunpack.c.h.b16 %v117
    %v1446 = vunpack.c.l.b16 %v118
    %v1447 = vunpack.c.h.b16 %v118
    %v1448 = vunpack.c.l.b16 %v119
    %v1449 = vunpack.c.h.b16 %v119
    %v1450 = vunpack.c.l.b16 %v120
    %v1451 = vunpack.c.h.b16 %v120
    %v1452 = vunpack.c.l.b16 %v121
    %v1453 = vunpack.c.h.b16 %v121
    %v1454 = vunpack.c.l.b16 %v122
    %v1455 = vunpack.c.h.b16 %v122
    %v1456 = vunpack.c.l.b16 %v123
    %v1457 = vunpack.c.h.b16 %v123
    %v1458 = vunpack.c.l.b16 %v124
    %v1459 = vunpack.c.h.b16 %v124
    %v1460 = vunpack.c.l.b16 %v125
    %v1461 = vunpack.c.h.b16 %v125
    %v1462 = vunpack.c.l.b16 %v126
    %v1463 = vunpack.c.h.b16 %v126
    %v1464 = vunpack.c.l.b16 %v127
    %v1465 = vunpack.c.h.b16 %v127
    %v1466 = vunpack.c.l.b16 %v128
    %v1467 = vunpack.c.h.b16 %v128
    %v1468 = vunpack.c.l.b16 %v129
    %v1469 = vunpack.c.h.b16 %v129
    %v1470 = vunpack.c.l.b16 %v130
    %v1471 = vunpack.c.h.b16 %v130
    %v1472 = vunpack.c.l.b16 %v131
    %v1473 = vunpack.c.h.b16 %v131
    %v1474 = vunpack.c.l.b16 %v132
    %v1475 = vunpack.c.h.b16 %v132
    %v1476 = vunpack.c.l.b16 %v133
    %v1477 = vunpack.c.h.b16 %v133
    %v1478 = vunpack.c.l.b16 %v134
    %v1479 = vunpack.c.h.b16 %v134
    %v1480 = vunpack.c.l.b16 %v135
    %v1481 = vunpack.c.h.b16 %v135
    %v1482 = vunpack.c.l.b16 %v136
    %v1483 = vunpack.c.h.b16 %v136
    %v1484 = vunpack.c.l.b16 %v137
    %v1485 = vunpack.c.h.b16 %v137
    %v1486 = vunpack.c.l.b16 %v138
    %v1487 = vunpack.c.h.b16 %v138
    %v1488 = vunpack.c.l.b16 %v139
    %v1489 = vunpack.c.h.b16 %v139
    %v1490 = vunpack.c.l.b16 %v140
    %v1491 = vunpack.c.h.b16 %v140
    %v1492 = vunpack.c.l.b16 %v141
    %v1493 = vunpack.c.h.b16 %v141
    %v1494 = vunpack.c.l.b16 %v142
    %v1495 = vunpack.c.h.b16 %v142
    %v1496 = vunpack.c.l.b16 %v143
    %v1497 = vunpack.c.h.b16 %v143
    %v1498 = vunpack.c.l.b16 %v144
    %v1499 = vunpack.c.h.b16 %v144
    %v1500 = vunpack.c.l.b16 %v145
    %v1501 = vunpack.c.h.b16 %v145
    %v1502 = vunpack.c.l.b16 %v146
    %v1503 = vunpack.c.h.b16 %v146
    %v1504 = vunpack.c.l.b16 %v147
    %v1505 = vunpack.c.h.b16 %v147
    %v1506 = vunpack.c.l.b16 %v148
    %v1507 = vunpack.c.h.b16 %v148
    %v1508 = vunpack.c.l.b16 %v149
    %v1509 = vunpack.c.h.b16 %v149
    %v1510 = vunpack.c.l.b16 %v150
    %v1511 = vunpack.c.h.b16 %v150
    %v1512 = vunpack.c.l.b16 %v151
    %v1513 = vunpack.c.h.b16 %v151
    %v1514 = vunpack.c.l.b16 %v152
    %v1515 = vunpack.c.h.b16 %v152
    %v1516 = vunpack.c.l.b16 %v153
    %v1517 = vunpack.c.h.b16 %v153
    %v1518 = vunpack.c.l.b16 %v154
    %v1519 = vunpack.c.h.b16 %v154
    %v1520 = vunpack.c.l.b16 %v155
    %v1521 = vunpack.c.h.b16 %v155
    %v1522 = vunpack.c.l.b16 %v156
    %v1523 = vunpack.c.h.b16 %v156
    %v1524 = vunpack.c.l.b16 %v157
    %v1525 = vunpack.c.h.b16 %v157
    %v1526 = vunpack.c.l.b16 %v158
    %v1527 = vunpack.c.h.b16 %v158
    %v1528 = vunpack.c.l.b16 %v159
    %v1529 = vunpack.c.h.b16 %v159
    %v1530 = vunpack.c.l.b16 %v160
    %v1531 = vunpack.c.h.b16 %v160
    %v1532 = vunpack.c.l.b16 %v161
    %v1533 = vunpack.c.h.b16 %v161
    %v1534 = vunpack.c.l.b16 %v162
    %v1535 = vunpack.c.h.b16 %v162
    %v1536 = vunpack.c.l.b16 %v163
    %v1537 = vunpack.c.h.b16 %v163
    %v1538 = vunpack.c.l.b16 %v164
    %v1539 = vunpack.c.h.b16 %v164
    %v1540 = vunpack.c.l.b16 %v165
    %v1541 = vunpack.c.h.b16 %v165
    %v1542 = vunpack.c.l.b16 %v166
    %v1543 = vunpack.c.h.b16 %v166
    %v1544 = vunpack.c.l.b16 %v167
    %v1545 = vunpack.c.h.b16 %v167
    %v1546 = vunpack.c.l.b16 %v168
    %v1547 = vunpack.c.h.b16 %v168
    %v1548 = vunpack.c.l.b16 %v169
    %v1549 = vunpack.c.h.b16 %v169
    %v1550 = vunpack.c.l.b16 %v170
    %v1551 = vunpack.c.h.b16 %v170
    %v1552 = vunpack.c.l.b16 %v171
    %v1553 = vunpack.c.h.b16 %v171
    %v1554 = vunpack.c.l.b16 %v172
    %v1555 = vunpack.c.h.b16 %v172
    %v1556 = vunpack.c.l.b16 %v173
    %v1557 = vunpack.c.h.b16 %v173
    %v1558 = vunpack.c.l.b16 %v174
    %v1559 = vunpack.c.h.b16 %v174
    %v1560 = vunpack.c.l.b16 %v175
    %v1561 = vunpack.c.h.b16 %v175
    %v1562 = vunpack.c.l.b16 %v176
    %v1563 = vunpack.c.h.b16 %v176
    %v1564 = vunpack.c.l.b16 %v177
    %v1565 = vunpack.c.h.b16 %v177
    %v1566 = vunpack.c.l.b16 %v178
    %v1567 = vunpack.c.h.b16 %v178
    %v1568 = vunpack.c.l.b16 %v179
    %v1569 = vunpack.c.h.b16 %v179
    %v1570 = vunpack.c.l.b16 %v180
    %v1571 = vunpack.c.h.b16 %v180
    %v1572 = vunpack.c.l.b16 %v181
    %v1573 = vunpack.c.h.b16 %v181
    %v1574 = vunpack.c.l.b16 %v182
    %v1575 = vunpack.c.h.b16 %v182
    %v1576 = vunpack.c.l.b16 %v183
    %v1577 = vunpack.c.h.b16 %v183
    %v1578 = vunpack.c.l.b16 %v184
    %v1579 = vunpack.c.h.b16 %v184
    %v1580 = vunpack.c.l.b16 %v185
    %v1581 = vunpack.c.h.b16 %v185
    %v1582 = vunpack.c.l.b16 %v186
    %v1583 = vunpack.c.h.b16 %v186
    %v1584 = vunpack.c.l.b16 %v187
    %v1585 = vunpack.c.h.b16 %v187
    %v1586 = vunpack.c.l.b16 %v188
    %v1587 = vunpack.c.h.b16 %v188
    %v1588 = vunpack.c.l.b16 %v189
    %v1589 = vunpack.c.h.b16 %v189
    %v1590 = vunpack.c.l.b16 %v190
    %v1591 = vunpack.c.h.b16 %v190
    %v1592 = vunpack.c.l.b16 %v191
    %v1593 = vunpack.c.h.b16 %v191
    %v1594 = vunpack.c.l.b16 %v192
    %v1595 = vunpack.c.h.b16 %v192
    %v1596 = vunpack.c.l.b16 %v193
    %v1597 = vunpack.c.h.b16 %v193
    %v1598 = vunpack.c.l.b16 %v194
    %v1599 = vunpack.c.h.b16 %v194
    %v1600 = vunpack.c.l.b16 %v195
    %v1601 = vunpack.c.h.b16 %v195
    %v1602 = vunpack.c.l.b16 %v196
    %v1603 = vunpack.c.h.b16 %v196
    %v1604 = vunpack.c.l.b16 %v197
    %v1605 = vunpack.c.h.b16 %v197
    %v1606 = vunpack.c.l.b16 %v198
    %v1607 = vunpack.c.h.b16 %v198
    %v1608 = vunpack.c.l.b16 %v199
    %v1609 = vunpack.c.h.b16 %v199
    %v1610 = vunpack.c.l.b16 %v200
    %v1611 = vunpack.c.h.b16 %v200
    %v1612 = vunpack.c.l.b16 %v201
    %v1613 = vunpack.c.h.b16 %v201
    %v1614 = vunpack.c.l.b16 %v202
    %v1615 = vunpack.c.h.b16 %v202
    %v1616 = vunpack.c.l.b16 %v203
    %v1617 = vunpack.c.h.b16 %v203
    %v1618 = vunpack.c.l.b16 %v204
    %v1619 = vunpack.c.h.b16 %v204
    %v1620 = vunpack.c.l.b16 %v205
    %v1621 = vunpack.c.h.b16 %v205
    %v1622 = vunpack.c.l.b16 %v206
    %v1623 = vunpack.c.h.b16 %v206
    %v1624 = vunpack.c.l.b16 %v207
    %v1625 = vunpack.c.h.b16 %v207
    %v1626 = vunpack.c.l.b16 %v208
    %v1627 = vunpack.c.h.b16 %v208
    %v1628 = vunpack.c.l.b16 %v209
    %v1629 = vunpack.c.h.b16 %v209
    %v1630 = vunpack.c.l.b16 %v210
    %v1631 = vunpack.c.h.b16 %v210
    %v1632 = vunpack.c.l.b16 %v211
    %v1633 = vunpack.c.h.b16 %v211
    %v1634 = vunpack.c.l.b16 %v212
    %v1635 = vunpack.c.h.b16 %v212
    %v1636 = vunpack.c.l.b16 %v213
    %v1637 = vunpack.c.h.b16 %v213
    %v1638 = vunpack.c.l.b16 %v214
    %v1639 = vunpack.c.h.b16 %v214
    %v1640 = vunpack.c.l.b16 %v215
    %v1641 = vunpack.c.h.b16 %v215
    %v1642 = vunpack.c.l.b16 %v216
    %v1643 = vunpack.c.h.b16 %v216
    %v1644 = vunpack.c.l.b16 %v217
    %v1645 = vunpack.c.h.b16 %v217
    %v1646 = vunpack.c.l.b16 %v218
    %v1647 = vunpack.c.h.b16 %v218
    %v1648 = vunpack.c.l.b16 %v219
    %v1649 = vunpack.c.h.b16 %v219
    %v1650 = vunpack.c.l.b16 %v220
    %v1651 = vunpack.c.h.b16 %v220
    %v1652 = vunpack.c.l.b16 %v221
    %v1653 = vunpack.c.h.b16 %v221
    %v1654 = vunpack.c.l.b16 %v222
    %v1655 = vunpack.c.h.b16 %v222
    %v1656 = vunpack.c.l.b16 %v223
    %v1657 = vunpack.c.h.b16 %v223
    %v1658 = vunpack.c.l.b16 %v224
    %v1659 = vunpack.c.h.b16 %v224
    %v1660 = vunpack.c.l.b16 %v225
    %v1661 = vunpack.c.h.b16 %v225
    %v1662 = vunpack.c.l.b16 %v226
    %v1663 = vunpack.c.h.b16 %v226
    %v1664 = vunpack.c.l.b16 %v227
    %v1665 = vunpack.c.h.b16 %v227
    %v1666 = vunpack.c.l.b16 %v228
    %v1667 = vunpack.c.h.b16 %v228
    %v1668 = vunpack.c.l.b16 %v229
    %v1669 = vunpack.c.h.b16 %v229
    %v1670 = vunpack.c.l.b16 %v230
    %v1671 = vunpack.c.h.b16 %v230
    %v1672 = vunpack.c.l.b16 %v231
    %v1673 = vunpack.c.h.b16 %v231
    %v1674 = vunpack.c.l.b16 %v232
    %v1675 = vunpack.c.h.b16 %v232
    %v1676 = vunpack.c.l.b16 %v233
    %v1677 = vunpack.c.h.b16 %v233
    %v1678 = vunpack.c.l.b16 %v234
    %v1679 = vunpack.c.h.b16 %v234
    %v1680 = vunpack.c.l.b16 %v235
    %v1681 = vunpack.c.h.b16 %v235
    %v1682 = vunpack.c.l.b16 %v236
    %v1683 = vunpack.c.h.b16 %v236
    %v1684 = vunpack.c.l.b16 %v237
    %v1685 = vunpack.c.h.b16 %v237
    %v1686 = vunpack.c.l.b16 %v238
    %v1687 = vunpack.c.h.b16 %v238
    %v1688 = vunpack.c.l.b16 %v239
    %v1689 = vunpack.c.h.b16 %v239
    %v1690 = vunpack.c.l.b16 %v240
    %v1691 = vunpack.c.h.b16 %v240
    %v1692 = vunpack.c.l.b16 %v241
    %v1693 = vunpack.c.h.b16 %v241
    %v1694 = vunpack.c.l.b16 %v242
    %v1695 = vunpack.c.h.b16 %v242
    %v1696 = vunpack.c.l.b16 %v243
    %v1697 = vunpack.c.h.b16 %v243
    %v1698 = vunpack.c.l.b16 %v244
    %v1699 = vunpack.c.h.b16 %v244
    %v1700 = vunpack.c.l.b16 %v245
    %v1701 = vunpack.c.h.b16 %v245
    %v1702 = vunpack.c.l.b16 %v246
    %v1703 = vunpack.c.h.b16 %v246
    %v1704 = vunpack.c.l.b16 %v247
    %v1705 = vunpack.c.h.b16 %v247
    %v1706 = vunpack.c.l.b16 %v248
    %v1707 = vunpack.c.h.b16 %v248
    %v1708 = vunpack.c.l.b16 %v249
    %v1709 = vunpack.c.h.b16 %v249
    %v1710 = vunpack.c.l.b16 %v250
    %v1711 = vunpack.c.h.b16 %v250
    %v1712 = vunpack.c.l.b16 %v251
    %v1713 = vunpack.c.h.b16 %v251
    %v1714 = vunpack.c.l.b16 %v252
    %v1715 = vunpack.c.h.b16 %v252
    %v1716 = vunpack.c.l.b16 %v253
    %v1717 = vunpack.c.h.b16 %v253
    %v1718 = vunpack.c.l.b16 %v254
    %v1719 = vunpack.c.h.b16 %v254
    %v1720 = vunpack.c.l.b16 %v255
    %v1721 = vunpack.c.h.b16 %v255
    %v1722 = vunpack.c.l.b16 %v256
    %v1723 = vunpack.c.h.b16 %v256
    %v1724 = vunpack.c.l.b16 %v257
    %v1725 = vunpack.c.h.b16 %v257
    %v1726 = vunpack.c.l.b16 %v258
    %v1727 = vunpack.c.h.b16 %v258
    %v1728 = vunpack.c.l.b16 %v259
    %v1729 = vunpack.c.h.b16 %v259
    %v1730 = vunpack.c.l.b16 %v260
    %v1731 = vunpack.c.h.b16 %v260
    %v1732 = vunpack.c.l.b16 %v261
    %v1733 = vunpack.c.h.b16 %v261
    %v1734 = vunpack.c.l.b16 %v262
    %v1735 = vunpack.c.h.b16 %v262
    %v1736 = vunpack.c.l.b16 %v263
    %v1737 = vunpack.c.h.b16 %v263
    %v1738 = vunpack.c.l.b16 %v264
    %v1739 = vunpack.c.h.b16 %v264
    %v1740 = vunpack.c.l.b16 %v265
    %v1741 = vunpack.c.h.b16 %v265
    %v1742 = vunpack.c.l.b16 %v266
    %v1743 = vunpack.c.h.b16 %v266
    %v1744 = vunpack.c.l.b16 %v267
    %v1745 = vunpack.c.h.b16 %v267
    %v1746 = vunpack.c.l.b16 %v268
    %v1747 = vunpack.c.h.b16 %v268
    %v1748 = vunpack.c.l.b16 %v269
    %v1749 = vunpack.c.h.b16 %v269
    %v1750 = vunpack.c.l.b16 %v270
    %v1751 = vunpack.c.h.b16 %v270
    %v1752 = vunpack.c.l.b16 %v271
    %v1753 = vunpack.c.h.b16 %v271
    %v1754 = vunpack.c.l.b16 %v272
    %v1755 = vunpack.c.h.b16 %v272
    %v1756 = vunpack.c.l.b16 %v273
    %v1757 = vunpack.c.h.b16 %v273
    %v1758 = vunpack.c.l.b16 %v274
    %v1759 = vunpack.c.h.b16 %v274
    %v1760 = vunpack.c.l.b16 %v275
    %v1761 = vunpack.c.h.b16 %v275
    %v1762 = vunpack.c.l.b16 %v276
    %v1763 = vunpack.c.h.b16 %v276
    %v1764 = vunpack.c.l.b16 %v277
    %v1765 = vunpack.c.h.b16 %v277
    %v1766 = vunpack.c.l.b16 %v278
    %v1767 = vunpack.c.h.b16 %v278
    %v1768 = vunpack.c.l.b16 %v279
    %v1769 = vunpack.c.h.b16 %v279
    %v1770 = vunpack.c.l.b16 %v280
    %v1771 = vunpack.c.h.b16 %v280
    %v1772 = vunpack.c.l.b16 %v281
    %v1773 = vunpack.c.h.b16 %v281
    %v1774 = vunpack.c.l.b16 %v282
    %v1775 = vunpack.c.h.b16 %v282
    %v1776 = vunpack.c.l.b16 %v283
    %v1777 = vunpack.c.h.b16 %v283
    %v1778 = vunpack.c.l.b16 %v284
    %v1779 = vunpack.c.h.b16 %v284
    %v1780 = vunpack.c.l.b16 %v285
    %v1781 = vunpack.c.h.b16 %v285
    %v1782 = vunpack.c.l.b16 %v286
    %v1783 = vunpack.c.h.b16 %v286
    %v1784 = vunpack.c.l.b16 %v287
    %v1785 = vunpack.c.h.b16 %v287
    %v1786 = vunpack.c.l.b16 %v288
    %v1787 = vunpack.c.h.b16 %v288
    %v1788 = vunpack.c.l.b16 %v289
    %v1789 = vunpack.c.h.b16 %v289
    %v1790 = vunpack.c.l.b16 %v290
    %v1791 = vunpack.c.h.b16 %v290
    %v1792 = vunpack.c.l.b16 %v291
    %v1793 = vunpack.c.h.b16 %v291
    %v1794 = vunpack.c.l.b16 %v292
    %v1795 = vunpack.c.h.b16 %v292
    %v1796 = vunpack.c.l.b16 %v293
    %v1797 = vunpack.c.h.b16 %v293
    %v1798 = vunpack.c.l.b16 %v294
    %v1799 = vunpack.c.h.b16 %v294
    %v1800 = vunpack.c.l.b16 %v295
    %v1801 = vunpack.c.h.b16 %v295
    %v1802 = vunpack.c.l.b16 %v296
    %v1803 = vunpack.c.h.b16 %v296
    %v1804 = vunpack.c.l.b16 %v297
    %v1805 = vunpack.c.h.b16 %v297
    %v1806 = vunpack.c.l.b16 %v298
    %v1807 = vunpack.c.h.b16 %v298
    %v1808 = vunpack.c.l.b16 %v299
    %v1809 = vunpack.c.h.b16 %v299
    %v1810 = vunpack.c.l.b16 %v300
    %v1811 = vunpack.c.h.b16 %v300
    %v1812 = vunpack.c.l.b16 %v301
    %v1813 = vunpack.c.h.b16 %v301
    %v1814 = vunpack.c.l.b16 %v302
    %v1815 = vunpack.c.h.b16 %v302
    %v1816 = vunpack.c.l.b16 %v303
    %v1817 = vunpack.c.h.b16 %v303
    %v1818 = vunpack.c.l.b16 %v304
    %v1819 = vunpack.c.h.b16 %v304
    %v1820 = vunpack.c.l.b16 %v305
    %v1821 = vunpack.c.h.b16 %v305
    %v1822 = vunpack.c.l.b16 %v306
    %v1823 = vunpack.c.h.b16 %v306
    %v1824 = vunpack.c.l.b16 %v307
    %v1825 = vunpack.c.h.b16 %v307
    %v1826 = vunpack.c.l.b16 %v308
    %v1827 = vunpack.c.h.b16 %v308
    %v1828 = vunpack.c.l.b16 %v309
    %v1829 = vunpack.c.h.b16 %v309
    %v1830 = vunpack.c.l.b16 %v310
    %v1831 = vunpack.c.h.b16 %v310
    %v1832 = vunpack.c.l.b16 %v311
    %v1833 = vunpack.c.h.b16 %v311
    %v1834 = vunpack.c.l.b16 %v312
    %v1835 = vunpack.c.h.b16 %v312
    %v1836 = vunpack.c.l.b16 %v313
    %v1837 = vunpack.c.h.b16 %v313
    %v1838 = vunpack.c.l.b16 %v314
    %v1839 = vunpack.c.h.b16 %v314
    %v1840 = vunpack.c.l.b16 %v315
    %v1841 = vunpack.c.h.b16 %v315
    %v1842 = vunpack.c.l.b16 %v316
    %v1843 = vunpack.c.h.b16 %v316
    %v1844 = vunpack.c.l.b16 %v317
    %v1845 = vunpack.c.h.b16 %v317
    %v1846 = vunpack.c.l.b16 %v318
    %v1847 = vunpack.c.h.b16 %v318
    %v1848 = vunpack.c.l.b16 %v319
    %v1849 = vunpack.c.h.b16 %v319
    %v1850 = vunpack.c.l.b16 %v320
    %v1851 = vunpack.c.h.b16 %v320
    %v1852 = vunpack.c.l.b16 %v321
    %v1853 = vunpack.c.h.b16 %v321
    %v1854 = vunpack.c.l.b16 %v322
    %v1855 = vunpack.c.h.b16 %v322
    %v1856 = vunpack.c.l.b16 %v323
    %v1857 = vunpack.c.h.b16 %v323
    %v1858 = vunpack.c.l.b16 %v324
    %v1859 = vunpack.c.h.b16 %v324
    %v1860 = vunpack.c.l.b16 %v325
    %v1861 = vunpack.c.h.b16 %v325
    %v1862 = vunpack.c.l.b16 %v326
    %v1863 = vunpack.c.h.b16 %v326
    %v1864 = vunpack.c.l.b16 %v327
    %v1865 = vunpack.c.h.b16 %v327
    %v1866 = vunpack.c.l.b16 %v328
    %v1867 = vunpack.c.h.b16 %v328
    %v1868 = vunpack.c.l.b16 %v329
    %v1869 = vunpack.c.h.b16 %v329
    %v1870 = vunpack.c.l.b16 %v330
    %v1871 = vunpack.c.h.b16 %v330
    %v1872 = vunpack.c.l.b16 %v331
    %v1873 = vunpack.c.h.b16 %v331
    %v1874 = vunpack.c.l.b16 %v332
    %v1875 = vunpack.c.h.b16 %v332
    %v1876 = vunpack.c.l.b16 %v333
    %v1877 = vunpack.c.h.b16 %v333
    %v1878 = vunpack.c.l.b16 %v334
    %v1879 = vunpack.c.h.b16 %v334
    %v1880 = vunpack.c.l.b16 %v335
    %v1881 = vunpack.c.h.b16 %v335
    %v1882 = vunpack.c.l.b16 %v336
    %v1883 = vunpack.c.h.b16 %v336
    %v1884 = vunpack.c.l.b16 %v337
    %v1885 = vunpack.c.h.b16 %v337
    %v1886 = vunpack.c.l.b16 %v338
    %v1887 = vunpack.c.h.b16 %v338
    %v1888 = vunpack.c.l.b16 %v339
    %v1889 = vunpack.c.h.b16 %v339
    %v1890 = vunpack.c.l.b16 %v340
    %v1891 = vunpack.c.h.b16 %v340
    %v1892 = vunpack.c.l.b16 %v341
    %v1893 = vunpack.c.h.b16 %v341
    %v1894 = vunpack.c.l.b16 %v342
    %v1895 = vunpack.c.h.b16 %v342
    %v1896 = vunpack.c.l.b16 %v343
    %v1897 = vunpack.c.h.b16 %v343
    %v1898 = vunpack.c.l.b16 %v344
    %v1899 = vunpack.c.h.b16 %v344
    %v1900 = vunpack.c.l.b16 %v345
    %v1901 = vunpack.c.h.b16 %v345
    %v1902 = vunpack.c.l.b16 %v346
    %v1903 = vunpack.c.h.b16 %v346
    %v1904 = vunpack.c.l.b16 %v347
    %v1905 = vunpack.c.h.b16 %v347
    %v1906 = vunpack.c.l.b16 %v348
    %v1907 = vunpack.c.h.b16 %v348
    %v1908 = vunpack.c.l.b16 %v349
    %v1909 = vunpack.c.h.b16 %v349
    %v1910 = vunpack.c.l.b16 %v350
    %v1911 = vunpack.c.h.b16 %v350
    %v1912 = vunpack.c.l.b16 %v351
    %v1913 = vunpack.c.h.b16 %v351
    %v1914 = vunpack.c.l.b16 %v352
    %v1915 = vunpack.c.h.b16 %v352
    %v1916 = vunpack.c.l.b16 %v353
    %v1917 = vunpack.c.h.b16 %v353
    %v1918 = vunpack.c.l.b16 %v354
    %v1919 = vunpack.c.h.b16 %v354
    %v1920 = vunpack.c.l.b16 %v355
    %v1921 = vunpack.c.h.b16 %v355
    %v1922 = vunpack.c.l.b16 %v356
    %v1923 = vunpack.c.h.b16 %v356
    %v1924 = vunpack.c.l.b16 %v357
    %v1925 = vunpack.c.h.b16 %v357
    %v1926 = vunpack.c.l.b16 %v358
    %v1927 = vunpack.c.h.b16 %v358
    %v1928 = vunpack.c.l.b16 %v359
    %v1929 = vunpack.c.h.b16 %v359
    %v1930 = vunpack.c.l.b16 %v360
    %v1931 = vunpack.c.h.b16 %v360
    %v1932 = vunpack.c.l.b16 %v361
    %v1933 = vunpack.c.h.b16 %v361
    %v1934 = vunpack.c.l.b16 %v362
    %v1935 = vunpack.c.h.b16 %v362
    %v1936 = vunpack.c.l.b16 %v363
    %v1937 = vunpack.c.h.b16 %v363
    %v1938 = vunpack.c.l.b16 %v364
    %v1939 = vunpack.c.h.b16 %v364
    %v1940 = vunpack.c.l.b16 %v365
    %v1941 = vunpack.c.h.b16 %v365
    %v1942 = vunpack.c.l.b16 %v366
    %v1943 = vunpack.c.h.b16 %v366
    %v1944 = vunpack.c.l.b16 %v367
    %v1945 = vunpack.c.h.b16 %v367
    %v1946 = vunpack.c.l.b16 %v368
    %v1947 = vunpack.c.h.b16 %v368
    %v1948 = vunpack.c.l.b16 %v369
    %v1949 = vunpack.c.h.b16 %v369
    %v1950 = vunpack.c.l.b16 %v370
    %v1951 = vunpack.c.h.b16 %v370
    %v1952 = vunpack.c.l.b16 %v371
    %v1953 = vunpack.c.h.b16 %v371
    %v1954 = vunpack.c.l.b16 %v372
    %v1955 = vunpack.c.h.b16 %v372
    %v1956 = vunpack.c.l.b16 %v373
    %v1957 = vunpack.c.h.b16 %v373
    %v1958 = vunpack.c.l.b16 %v374
    %v1959 = vunpack.c.h.b16 %v374
    %v1960 = vunpack.c.l.b16 %v375
    %v1961 = vunpack.c.h.b16 %v375
    %v1962 = vunpack.c.l.b16 %v376
    %v1963 = vunpack.c.h.b16 %v376
    %v1964 = vunpack.c.l.b16 %v377
    %v1965 = vunpack.c.h.b16 %v377
    %v1966 = vunpack.c.l.b16 %v378
    %v1967 = vunpack.c.h.b16 %v378
    %v1968 = vunpack.c.l.b16 %v379
    %v1969 = vunpack.c.h.b16 %v379
    %v1970 = vunpack.c.l.b16 %v380
    %v1971 = vunpack.c.h.b16 %v380
    %v1972 = vunpack.c.l.b16 %v381
    %v1973 = vunpack.c.h.b16 %v381
    %v1974 = vunpack.c.l.b16 %v382
    %v1975 = vunpack.c.h.b16 %v382
    %v1976 = vunpack.c.l.b16 %v383
    %v1977 = vunpack.c.h.b16 %v383
    %v1978 = vunpack.c.l.b16 %v384
    %v1979 = vunpack.c.h.b16 %v384
    %v1980 = vunpack.c.l.b16 %v385
    %v1981 = vunpack.c.h.b16 %v385
    %v1982 = vunpack.c.l.b16 %v386
    %v1983 = vunpack.c.h.b16 %v386
    %v1984 = vunpack.c.l.b16 %v387
    %v1985 = vunpack.c.h.b16 %v387
    %v1986 = vunpack.c.l.b16 %v388
    %v1987 = vunpack.c.h.b16 %v388
    %v1988 = vunpack.c.l.b16 %v389
    %v1989 = vunpack.c.h.b16 %v389
    %v1990 = vunpack.c.l.b16 %v390
    %v1991 = vunpack.c.h.b16 %v390
    %v1992 = vunpack.c.l.b16 %v391
    %v1993 = vunpack.c.h.b16 %v391
    %v1994 = vunpack.c.l.b16 %v392
    %v1995 = vunpack.c.h.b16 %v392
    %v1996 = vunpack.c.l.b16 %v393
    %v1997 = vunpack.c.h.b16 %v393
    %v1998 = vunpack.c.l.b16 %v394
    %v1999 = vunpack.c.h.b16 %v394
    %v2000 = vunpack.c.l.b16 %v395
    %v2001 = vunpack.c.h.b16 %v395
    %v2002 = vunpack.c.l.b16 %v396
    %v2003 = vunpack.c.h.b16 %v396
    %v2004 = vunpack.c.l.b16 %v397
    %v2005 = vunpack.c.h.b16 %v397
    %v2006 = vunpack.c.l.b16 %v398
    %v2007 = vunpack.c.h.b16 %v398
    %v2008 = vunpack.c.l.b16 %v399
    %v2009 = vunpack.c.h.b16 %v399
    %v2010 = vunpack.c.l.b16 %v400
    %v2011 = vunpack.c.h.b16 %v400
    %v2012 = vunpack.c.l.b16 %v401
    %v2013 = vunpack.c.h.b16 %v401
    %v2014 = vunpack.c.l.b16 %v402
    %v2015 = vunpack.c.h.b16 %v402
    %v2016 = vunpack.c.l.b16 %v403
    %v2017 = vunpack.c.h.b16 %v403
    %v2018 = vunpack.c.l.b16 %v404
    %v2019 = vunpack.c.h.b16 %v404
    %v2020 = vunpack.c.l.b16 %v405
    %v2021 = vunpack.c.h.b16 %v405
    %v2022 = vunpack.c.l.b16 %v406
    %v2023 = vunpack.c.h.b16 %v406
    %v2024 = vunpack.c.l.b16 %v407
    %v2025 = vunpack.c.h.b16 %v407
    %v2026 = vunpack.c.l.b16 %v408
    %v2027 = vunpack.c.h.b16 %v408
    %v2028 = vunpack.c.l.b16 %v409
    %v2029 = vunpack.c.h.b16 %v409
    %v2030 = vunpack.c.l.b16 %v410
    %v2031 = vunpack.c.h.b16 %v410
    %v2032 = vunpack.c.l.b16 %v411
    %v2033 = vunpack.c.h.b16 %v411
    %v2034 = vunpack.c.l.b16 %v412
    %v2035 = vunpack.c.h.b16 %v412
    %v2036 = vunpack.c.l.b16 %v413
    %v2037 = vunpack.c.h.b16 %v413
    %v2038 = vunpack.c.l.b16 %v414
    %v2039 = vunpack.c.h.b16 %v414
    %v2040 = vunpack.c.l.b16 %v415
    %v2041 = vunpack.c.h.b16 %v415
    %v2042 = vunpack.c.l.b16 %v416
    %v2043 = vunpack.c.h.b16 %v416
    %v2044 = vunpack.c.l.b16 %v417
    %v2045 = vunpack.c.h.b16 %v417
    %v2046 = vunpack.c.l.b16 %v418
    %v2047 = vunpack.c.h.b16 %v418
    %v2048 = vunpack.c.l.b16 %v419
    %v2049 = vunpack.c.h.b16 %v419
    %v2050 = vunpack.c.l.b16 %v420
    %v2051 = vunpack.c.h.b16 %v420
    %v2052 = vunpack.c.l.b16 %v421
    %v2053 = vunpack.c.h.b16 %v421
    %v2054 = vunpack.c.l.b16 %v422
    %v2055 = vunpack.c.h.b16 %v422
    %v2056 = vunpack.c.l.b16 %v423
    %v2057 = vunpack.c.h.b16 %v423
    %v2058 = vunpack.c.l.b16 %v424
    %v2059 = vunpack.c.h.b16 %v424
    %v2060 = vunpack.c.l.b16 %v425
    %v2061 = vunpack.c.h.b16 %v425
    %v2062 = vunpack.c.l.b16 %v426
    %v2063 = vunpack.c.h.b16 %v426
    %v2064 = vunpack.c.l.b16 %v427
    %v2065 = vunpack.c.h.b16 %v427
    %v2066 = vunpack.c.l.b16 %v428
    %v2067 = vunpack.c.h.b16 %v428
    %v2068 = vunpack.c.l.b16 %v429
    %v2069 = vunpack.c.h.b16 %v429
    %v2070 = vunpack.c.l.b16 %v430
    %v2071 = vunpack.c.h.b16 %v430
    %v2072 = vunpack.c.l.b16 %v431
    %v2073 = vunpack.c.h.b16 %v431
    %v2074 = vunpack.c.l.b16 %v432
    %v2075 = vunpack.c.h.b16 %v432
    %v2076 = vunpack.c.l.b16 %v433
    %v2077 = vunpack.c.h.b16 %v433
    %v2078 = vunpack.c.l.b16 %v434
    %v2079 = vunpack.c.h.b16 %v434
    %v2080 = vunpack.c.l.b16 %v435
    %v2081 = vunpack.c.h.b16 %v435
    %v2082 = vunpack.c.l.b16 %v436
    %v2083 = vunpack.c.h.b16 %v436
    %v2084 = vunpack.c.l.b16 %v437
    %v2085 = vunpack.c.h.b16 %v437
    %v2086 = vunpack.c.l.b16 %v438
    %v2087 = vunpack.c.h.b16 %v438
    %v2088 = vunpack.c.l.b16 %v439
    %v2089 = vunpack.c.h.b16 %v439
    %v2090 = vunpack.c.l.b16 %v440
    %v2091 = vunpack.c.h.b16 %v440
    %v2092 = vunpack.c.l.b16 %v441
    %v2093 = vunpack.c.h.b16 %v441
    %v2094 = vunpack.c.l.b16 %v442
    %v2095 = vunpack.c.h.b16 %v442
    %v2096 = vunpack.c.l.b16 %v443
    %v2097 = vunpack.c.h.b16 %v443
    %v2098 = vunpack.c.l.b16 %v444
    %v2099 = vunpack.c.h.b16 %v444
    %v2100 = vunpack.c.l.b16 %v445
    %v2101 = vunpack.c.h.b16 %v445
    %v2102 = vunpack.c.l.b16 %v446
    %v2103 = vunpack.c.h.b16 %v446
    %v2104 = vunpack.c.l.b16 %v447
    %v2105 = vunpack.c.h.b16 %v447
    %v2106 = vunpack.c.l.b16 %v448
    %v2107 = vunpack.c.h.b16 %v448
    %v2108 = vunpack.c.l.b16 %v449
    %v2109 = vunpack.c.h.b16 %v449
    %v2110 = vunpack.c.l.b16 %v450
    %v2111 = vunpack.c.h.b16 %v450
    %v2112 = vunpack.c.l.b16 %v451
    %v2113 = vunpack.c.h.b16 %v451
    %v2114 = vunpack.c.l.b16 %v452
    %v2115 = vunpack.c.h.b16 %v452
    %v2116 = vunpack.c.l.b16 %v453
    %v2117 = vunpack.c.h.b16 %v453
    %v2118 = vunpack.c.l.b16 %v454
    %v2119 = vunpack.c.h.b16 %v454
    %v2120 = vunpack.c.l.b16 %v455
    %v2121 = vunpack.c.h.b16 %v455
    %v2122 = vunpack.c.l.b16 %v456
    %v2123 = vunpack.c.h.b16 %v456
    %v2124 = vunpack.c.l.b16 %v457
    %v2125 = vunpack.c.h.b16 %v457
    %v2126 = vunpack.c.l.b16 %v458
    %v2127 = vunpack.c.h.b16 %v458
    %v2128 = vunpack.c.l.b16 %v459
    %v2129 = vunpack.c.h.b16 %v459
    %v2130 = vunpack.c.l.b16 %v460
    %v2131 = vunpack.c.h.b16 %v460
    %v2132 = vunpack.c.l.b16 %v461
    %v2133 = vunpack.c.h.b16 %v461
    %v2134 = vunpack.c.l.b16 %v462
    %v2135 = vunpack.c.h.b16 %v462
    %v2136 = vunpack.c.l.b16 %v463
    %v2137 = vunpack.c.h.b16 %v463
    %v2138 = vunpack.c.l.b16 %v464
    %v2139 = vunpack.c.h.b16 %v464
    %v2140 = vunpack.c.l.b16 %v465
    %v2141 = vunpack.c.h.b16 %v465
    %v2142 = vunpack.c.l.b16 %v466
    %v2143 = vunpack.c.h.b16 %v466
    %v2144 = vunpack.c.l.b16 %v467
    %v2145 = vunpack.c.h.b16 %v467
    %v2146 = vunpack.c.l.b16 %v468
    %v2147 = vunpack.c.h.b16 %v468
    %v2148 = vunpack.c.l.b16 %v469
    %v2149 = vunpack.c.h.b16 %v469
    %v2150 = vunpack.c.l.b16 %v470
    %v2151 = vunpack.c.h.b16 %v470
    %v2152 = vunpack.c.l.b16 %v471
    %v2153 = vunpack.c.h.b16 %v471
    %v2154 = vunpack.c.l.b16 %v472
    %v2155 = vunpack.c.h.b16 %v472
    %v2156 = vunpack.c.l.b16 %v473
    %v2157 = vunpack.c.h.b16 %v473
    %v2158 = vunpack.c.l.b16 %v474
    %v2159 = vunpack.c.h.b16 %v474
    %v2160 = vunpack.c.l.b16 %v475
    %v2161 = vunpack.c.h.b16 %v475
    %v2162 = vunpack.c.l.b16 %v476
    %v2163 = vunpack.c.h.b16 %v476
    %v2164 = vunpack.c.l.b16 %v477
    %v2165 = vunpack.c.h.b16 %v477
    %v2166 = vunpack.c.l.b16 %v478
    %v2167 = vunpack.c.h.b16 %v478
    %v2168 = vunpack.c.l.b16 %v479
    %v2169 = vunpack.c.h.b16 %v479
    %v2170 = vunpack.c.l.b16 %v480
    %v2171 = vunpack.c.h.b16 %v480
    %v2172 = vunpack.c.l.b16 %v481
    %v2173 = vunpack.c.h.b16 %v481
    %v2174 = vunpack.c.l.b16 %v482
    %v2175 = vunpack.c.h.b16 %v482
    %v2176 = vunpack.c.l.b16 %v483
    %v2177 = vunpack.c.h.b16 %v483
    %v2178 = vunpack.c.l.b16 %v484
    %v2179 = vunpack.c.h.b16 %v484
    %v2180 = vunpack.c.l.b16 %v485
    %v2181 = vunpack.c.h.b16 %v485
    %v2182 = vunpack.c.l.b16 %v486
    %v2183 = vunpack.c.h.b16 %v486
    %v2184 = vunpack.c.l.b16 %v487
    %v2185 = vunpack.c.h.b16 %v487
    %v2186 = vunpack.c.l.b16 %v488
    %v2187 = vunpack.c.h.b16 %v488
    %v2188 = vunpack.c.l.b16 %v489
    %v2189 = vunpack.c.h.b16 %v489
    %v2190 = vunpack.c.l.b16 %v490
    %v2191 = vunpack.c.h.b16 %v490
    %v2192 = vunpack.c.l.b16 %v491
    %v2193 = vunpack.c.h.b16 %v491
    %v2194 = vunpack.c.l.b16 %v492
    %v2195 = vunpack.c.h.b16 %v492
    %v2196 = vunpack.c.l.b16 %v493
    %v2197 = vunpack.c.h.b16 %v493
    %v2198 = vunpack.c.l.b16 %v494
    %v2199 = vunpack.c.h.b16 %v494
    %v2200 = vunpack.c.l.b16 %v495
    %v2201 = vunpack.c.h.b16 %v495
    %v2202 = vunpack.c.l.b16 %v496
    %v2203 = vunpack.c.h.b16 %v496
    %v2204 = vunpack.c.l.b16 %v497
    %v2205 = vunpack.c.h.b16 %v497
    %v2206 = vunpack.c.l.b16 %v498
    %v2207 = vunpack.c.h.b16 %v498
    %v2208 = vunpack.c.l.b16 %v499
    %v2209 = vunpack.c.h.b16 %v499
    %v2210 = vunpack.c.l.b16 %v500
    %v2211 = vunpack.c.h.b16 %v500
    %v2212 = vunpack.c.l.b16 %v501
    %v2213 = vunpack.c.h.b16 %v501
    %v2214 = vunpack.c.l.b16 %v502
    %v2215 = vunpack.c.h.b16 %v502
    %v2216 = vunpack.c.l.b16 %v503
    %v2217 = vunpack.c.h.b16 %v503
    %v2218 = vunpack.c.l.b16 %v504
    %v2219 = vunpack.c.h.b16 %v504
    %v2220 = vunpack.c.l.b16 %v505
    %v2221 = vunpack.c.h.b16 %v505
    %v2222 = vunpack.c.l.b16 %v506
    %v2223 = vunpack.c.h.b16 %v506
    %v2224 = vunpack.c.l.b16 %v507
    %v2225 = vunpack.c.h.b16 %v507
    %v2226 = vunpack.c.l.b16 %v508
    %v2227 = vunpack.c.h.b16 %v508
    %v2228 = vunpack.c.l.b16 %v509
    %v2229 = vunpack.c.h.b16 %v509
    %v2230 = vunpack.c.l.b16 %v510
    %v2231 = vunpack.c.h.b16 %v510
    %v2232 = vunpack.c.l.b16 %v511
    %v2233 = vunpack.c.h.b16 %v511
    %v2234 = vunpack.c.l.b16 %v512
    %v2235 = vunpack.c.h.b16 %v512
    %v2236 = vunpack.c.l.b16 %v513
    %v2237 = vunpack.c.h.b16 %v513
    %v2238 = vunpack.c.l.b16 %v514
    %v2239 = vunpack.c.h.b16 %v514
    %v2240 = vunpack.c.l.b16 %v515
    %v2241 = vunpack.c.h.b16 %v515
    %v2242 = vunpack.c.l.b16 %v516
    %v2243 = vunpack.c.h.b16 %v516
    %v2244 = vunpack.c.l.b16 %v517
    %v2245 = vunpack.c.h.b16 %v517
    %v2246 = vunpack.c.l.b16 %v518
    %v2247 = vunpack.c.h.b16 %v518
    %v2248 = vunpack.c.l.b16 %v519
    %v2249 = vunpack.c.h.b16 %v519
    %v2250 = vunpack.c.l.b16 %v520
    %v2251 = vunpack.c.h.b16 %v520
    %v2252 = vunpack.c.l.b16 %v521
    %v2253 = vunpack.c.h.b16 %v521
    %v2254 = vunpack.c.l.b16 %v522
    %v2255 = vunpack.c.h.b16 %v522
    %v2256 = vunpack.c.l.b16 %v523
    %v2257 = vunpack.c.h.b16 %v523
    %v2258 = vunpack.c.l.b16 %v524
    %v2259 = vunpack.c.h.b16 %v524
    %v2260 = vunpack.c.l.b16 %v525
    %v2261 = vunpack.c.h.b16 %v525
    %v2262 = vunpack.c.l.b16 %v526
    %v2263 = vunpack.c.h.b16 %v526
    %v2264 = vunpack.c.l.b16 %v527
    %v2265 = vunpack.c.h.b16 %v527
    %v2266 = vunpack.c.l.b16 %v528
    %v2267 = vunpack.c.h.b16 %v528
    %v2268 = vunpack.c.l.b16 %v529
    %v2269 = vunpack.c.h.b16 %v529
    %v2270 = vunpack.c.l.b16 %v530
    %v2271 = vunpack.c.h.b16 %v530
    %v2272 = vunpack.c.l.b16 %v531
    %v2273 = vunpack.c.h.b16 %v531
    %v2274 = vunpack.c.l.b16 %v532
    %v2275 = vunpack.c.h.b16 %v532
    %v2276 = vunpack.c.l.b16 %v533
    %v2277 = vunpack.c.h.b16 %v533
    %v2278 = vunpack.c.l.b16 %v534
    %v2279 = vunpack.c.h.b16 %v534
    %v2280 = vunpack.c.l.b16 %v535
    %v2281 = vunpack.c.h.b16 %v535
    %v2282 = vunpack.c.l.b16 %v536
    %v2283 = vunpack.c.h.b16 %v536
    %v2284 = vunpack.c.l.b16 %v537
    %v2285 = vunpack.c.h.b16 %v537
    %v2286 = vunpack.c.l.b16 %v538
    %v2287 = vunpack.c.h.b16 %v538
    %v2288 = vunpack.c.l.b16 %v539
    %v2289 = vunpack.c.h.b16 %v539
    %v2290 = vunpack.c.l.b16 %v540
    %v2291 = vunpack.c.h.b16 %v540
    %v2292 = vunpack.c.l.b16 %v541
    %v2293 = vunpack.c.h.b16 %v541
    %v2294 = vunpack.c.l.b16 %v542
    %v2295 = vunpack.c.h.b16 %v542
    %v2296 = vunpack.c.l.b16 %v543
    %v2297 = vunpack.c.h.b16 %v543
    %v2298 = vunpack.c.l.b16 %v544
    %v2299 = vunpack.c.h.b16 %v544
    %v2300 = vunpack.c.l.b16 %v545
    %v2301 = vunpack.c.h.b16 %v545
    %v2302 = vunpack.c.l.b16 %v546
    %v2303 = vunpack.c.h.b16 %v546
    %v2304 = vunpack.c.l.b16 %v547
    %v2305 = vunpack.c.h.b16 %v547
    %v2306 = vunpack.c.l.b16 %v548
    %v2307 = vunpack.c.h.b16 %v548
    %v2308 = vunpack.c.l.b16 %v549
    %v2309 = vunpack.c.h.b16 %v549
    %v2310 = vunpack.c.l.b16 %v550
    %v2311 = vunpack.c.h.b16 %v550
    %v2312 = vunpack.c.l.b16 %v551
    %v2313 = vunpack.c.h.b16 %v551
    %v2314 = vunpack.c.l.b16 %v552
    %v2315 = vunpack.c.h.b16 %v552
    %v2316 = vunpack.c.l.b16 %v553
    %v2317 = vunpack.c.h.b16 %v553
    %v2318 = vunpack.c.l.b16 %v554
    %v2319 = vunpack.c.h.b16 %v554
    %v2320 = vunpack.c.l.b16 %v555
    %v2321 = vunpack.c.h.b16 %v555
    %v2322 = vunpack.c.l.b16 %v556
    %v2323 = vunpack.c.h.b16 %v556
    %v2324 = vunpack.c.l.b16 %v557
    %v2325 = vunpack.c.h.b16 %v557
    %v2326 = vunpack.c.l.b16 %v558
    %v2327 = vunpack.c.h.b16 %v558
    %v2328 = vunpack.c.l.b16 %v559
    %v2329 = vunpack.c.h.b16 %v559
    %v2330 = vunpack.c.l.b16 %v560
    %v2331 = vunpack.c.h.b16 %v560
    %v2332 = vunpack.c.l.b16 %v561
    %v2333 = vunpack.c.h.b16 %v561
    %v2334 = vunpack.c.l.b16 %v562
    %v2335 = vunpack.c.h.b16 %v562
    %v2336 = vunpack.c.l.b16 %v563
    %v2337 = vunpack.c.h.b16 %v563
    %v2338 = vunpack.c.l.b16 %v564
    %v2339 = vunpack.c.h.b16 %v564
    %v2340 = vunpack.c.l.b16 %v565
    %v2341 = vunpack.c.h.b16 %v565
    %v2342 = vunpack.c.l.b16 %v566
    %v2343 = vunpack.c.h.b16 %v566
    %v2344 = vunpack.c.l.b16 %v567
    %v2345 = vunpack.c.h.b16 %v567
    %v2346 = vunpack.c.l.b16 %v568
    %v2347 = vunpack.c.h.b16 %v568
    %v2348 = vunpack.c.l.b16 %v569
    %v2349 = vunpack.c.h.b16 %v569
    %v2350 = vpack.c.b16 %v1328, %v1326
    %v2351 = vpack.c.b16 %v1329, %v1327
    %v2352 = vpack.c.b16 %v1332, %v1330
    %v2353 = vpack.c.b16 %v1333, %v1331
    %v2354 = vpack.c.b16 %v1336, %v1334
    %v2355 = vpack.c.b16 %v1337, %v1335
    %v2356 = vpack.c.b16 %v1340, %v1338
    %v2357 = vpack.c.b16 %v1341, %v1339
    %v2358 = vpack.c.b16 %v1344, %v1342
    %v2359 = vpack.c.b16 %v1345, %v1343
    %v2360 = vpack.c.b16 %v1348, %v1346
    %v2361 = vpack.c.b16 %v1349, %v1347
    %v2362 = vpack.c.b16 %v1352, %v1350
    %v2363 = vpack.c.b16 %v1353, %v1351
    %v2364 = vpack.c.b16 %v1356, %v1354
    %v2365 = vpack.c.b16 %v1357, %v1355
    %v2366 = vpack.c.b16 %v1360, %v1358
    %v2367 = vpack.c.b16 %v1361, %v1359
    %v2368 = vpack.c.b16 %v1364, %v1362
    %v2369 = vpack.c.b16 %v1365, %v1363
    %v2370 = vpack.c.b16 %v1368, %v1366
    %v2371 = vpack.c.b16 %v1369, %v1367
    %v2372 = vpack.c.b16 %v1372, %v1370
    %v2373 = vpack.c.b16 %v1373, %v1371
    %v2374 = vpack.c.b16 %v1376, %v1374
    %v2375 = vpack.c.b16 %v1377, %v1375
    %v2376 = vpack.c.b16 %v1380, %v1378
    %v2377 = vpack.c.b16 %v1381, %v1379
    %v2378 = vpack.c.b16 %v1384, %v1382
    %v2379 = vpack.c.b16 %v1385, %v1383
    %v2380 = vpack.c.b16 %v1388, %v1386
    %v2381 = vpack.c.b16 %v1389, %v1387
    %v2382 = vpack.c.b16 %v1392, %v1390
    %v2383 = vpack.c.b16 %v1393, %v1391
    %v2384 = vpack.c.b16 %v1396, %v1394
    %v2385 = vpack.c.b16 %v1397, %v1395
    %v2386 = vpack.c.b16 %v1400, %v1398
    %v2387 = vpack.c.b16 %v1401, %v1399
    %v2388 = vpack.c.b16 %v1404, %v1402
    %v2389 = vpack.c.b16 %v1405, %v1403
    %v2390 = vpack.c.b16 %v1408, %v1406
    %v2391 = vpack.c.b16 %v1409, %v1407
    %v2392 = vpack.c.b16 %v1412, %v1410
    %v2393 = vpack.c.b16 %v1413, %v1411
    %v2394 = vpack.c.b16 %v1416, %v1414
    %v2395 = vpack.c.b16 %v1417, %v1415
    %v2396 = vpack.c.b16 %v1420, %v1418
    %v2397 = vpack.c.b16 %v1421, %v1419
    %v2398 = vpack.c.b16 %v1424, %v1422
    %v2399 = vpack.c.b16 %v1425, %v1423
    %v2400 = vpack.c.b16 %v1428, %v1426
    %v2401 = vpack.c.b16 %v1429, %v1427
    %v2402 = vpack.c.b16 %v1432, %v1430
    %v2403 = vpack.c.b16 %v1433, %v1431
    %v2404 = vpack.c.b16 %v1436, %v1434
    %v2405 = vpack.c.b16 %v1437, %v1435
    %v2406 = vpack.c.b16 %v1440, %v1438
    %v2407 = vpack.c.b16 %v1441, %v1439
    %v2408 = vpack.c.b16 %v1444, %v1442
    %v2409 = vpack.c.b16 %v1445, %v1443
    %v2410 = vpack.c.b16 %v1448, %v1446
    %v2411 = vpack.c.b16 %v1449, %v1447
    %v2412 = vpack.c.b16 %v1452, %v1450
    %v2413 = vpack.c.b16 %v1453, %v1451
    %v2414 = vpack.c.b16 %v1456, %v1454
    %v2415 = vpack.c.b16 %v1457, %v1455
    %v2416 = vpack.c.b16 %v1460, %v1458
    %v2417 = vpack.c.b16 %v1461, %v1459
    %v2418 = vpack.c.b16 %v1464, %v1462
    %v2419 = vpack.c.b16 %v1465, %v1463
    %v2420 = vpack.c.b16 %v1468, %v1466
    %v2421 = vpack.c.b16 %v1469, %v1467
    %v2422 = vpack.c.b16 %v1472, %v1470
    %v2423 = vpack.c.b16 %v1473, %v1471
    %v2424 = vpack.c.b16 %v1476, %v1474
    %v2425 = vpack.c.b16 %v1477, %v1475
    %v2426 = vpack.c.b16 %v1480, %v1478
    %v2427 = vpack.c.b16 %v1481, %v1479
    %v2428 = vpack.c.b16 %v1484, %v1482
    %v2429 = vpack.c.b16 %v1485, %v1483
    %v2430 = vpack.c.b16 %v1488, %v1486
    %v2431 = vpack.c.b16 %v1489, %v1487
    %v2432 = vpack.c.b16 %v1492, %v1490
    %v2433 = vpack.c.b16 %v1493, %v1491
    %v2434 = vpack.c.b16 %v1496, %v1494
    %v2435 = vpack.c.b16 %v1497, %v1495
    %v2436 = vpack.c.b16 %v1500, %v1498
    %v2437 = vpack.c.b16 %v1501, %v1499
    %v2438 = vpack.c.b16 %v1504, %v1502
    %v2439 = vpack.c.b16 %v1505, %v1503
    %v2440 = vpack.c.b16 %v1508, %v1506
    %v2441 = vpack.c.b16 %v1509, %v1507
    %v2442 = vpack.c.b16 %v1512, %v1510
    %v2443 = vpack.c.b16 %v1513, %v1511
    %v2444 = vpack.c.b16 %v1516, %v1514
    %v2445 = vpack.c.b16 %v1517, %v1515
    %v2446 = vpack.c.b16 %v1520, %v1518
    %v2447 = vpack.c.b16 %v1521, %v1519
    %v2448 = vpack.c.b16 %v1524, %v1522
    %v2449 = vpack.c.b16 %v1525, %v1523
    %v2450 = vpack.c.b16 %v1528, %v1526
    %v2451 = vpack.c.b16 %v1529, %v1527
    %v2452 = vpack.c.b16 %v1532, %v1530
    %v2453 = vpack.c.b16 %v1533, %v1531
    %v2454 = vpack.c.b16 %v1536, %v1534
    %v2455 = vpack.c.b16 %v1537, %v1535
    %v2456 = vpack.c.b16 %v1540, %v1538
    %v2457 = vpack.c.b16 %v1541, %v1539
    %v2458 = vpack.c.b16 %v1544, %v1542
    %v2459 = vpack.c.b16 %v1545, %v1543
    %v2460 = vpack.c.b16 %v1548, %v1546
    %v2461 = vpack.c.b16 %v1549, %v1547
    %v2462 = vpack.c.b16 %v1552, %v1550
    %v2463 = vpack.c.b16 %v1553, %v1551
    %v2464 = vpack.c.b16 %v1556, %v1554
    %v2465 = vpack.c.b16 %v1557, %v1555
    %v2466 = vpack.c.b16 %v1560, %v1558
    %v2467 = vpack.c.b16 %v1561, %v1559
    %v2468 = vpack.c.b16 %v1564, %v1562
    %v2469 = vpack.c.b16 %v1565, %v1563
    %v2470 = vpack.c.b16 %v1568, %v1566
    %v2471 = vpack.c.b16 %v1569, %v1567
    %v2472 = vpack.c.b16 %v1572, %v1570
    %v2473 = vpack.c.b16 %v1573, %v1571
    %v2474 = vpack.c.b16 %v1576, %v1574
    %v2475 = vpack.c.b16 %v1577, %v1575
    %v2476 = vpack.c.b16 %v1580, %v1578
    %v2477 = vpack.c.b16 %v1581, %v1579
    %v2478 = vpack.c.b16 %v1584, %v1582
    %v2479 = vpack.c.b16 %v1585, %v1583
    %v2480 = vpack.c.b16 %v1588, %v1586
    %v2481 = vpack.c.b16 %v1589, %v1587
    %v2482 = vpack.c.b16 %v1592, %v1590
    %v2483 = vpack.c.b16 %v1593, %v1591
    %v2484 = vpack.c.b16 %v1596, %v1594
    %v2485 = vpack.c.b16 %v1597, %v1595
    %v2486 = vpack.c.b16 %v1600, %v1598
    %v2487 = vpack.c.b16 %v1601, %v1599
    %v2488 = vpack.c.b16 %v1604, %v1602
    %v2489 = vpack.c.b16 %v1605, %v1603
    %v2490 = vpack.c.b16 %v1608, %v1606
    %v2491 = vpack.c.b16 %v1609, %v1607
    %v2492 = vpack.c.b16 %v1612, %v1610
    %v2493 = vpack.c.b16 %v1613, %v1611
    %v2494 = vpack.c.b16 %v1616, %v1614
    %v2495 = vpack.c.b16 %v1617, %v1615
    %v2496 = vpack.c.b16 %v1620, %v1618
    %v2497 = vpack.c.b16 %v1621, %v1619
    %v2498 = vpack.c.b16 %v1624, %v1622
    %v2499 = vpack.c.b16 %v1625, %v1623
    %v2500 = vpack.c.b16 %v1628, %v1626
    %v2501 = vpack.c.b16 %v1629, %v1627
    %v2502 = vpack.c.b16 %v1632, %v1630
    %v2503 = vpack.c.b16 %v1633, %v1631
    %v2504 = vpack.c.b16 %v1636, %v1634
    %v2505 = vpack.c.b16 %v1637, %v1635
    %v2506 = vpack.c.b16 %v1640, %v1638
    %v2507 = vpack.c.b16 %v1641, %v1639
    %v2508 = vpack.c.b16 %v1644, %v1642
    %v2509 = vpack.c.b16 %v1645, %v1643
    %v2510 = vpack.c.b16 %v1648, %v1646
    %v2511 = vpack.c.b16 %v1649, %v1647
    %v2512 = vpack.c.b16 %v1652, %v1650
    %v2513 = vpack.c.b16 %v1653, %v1651
    %v2514 = vpack.c.b16 %v1656, %v1654
    %v2515 = vpack.c.b16 %v1657, %v1655
    %v2516 = vpack.c.b16 %v1660, %v1658
    %v2517 = vpack.c.b16 %v1661, %v1659
    %v2518 = vpack.c.b16 %v1664, %v1662
    %v2519 = vpack.c.b16 %v1665, %v1663
    %v2520 = vpack.c.b16 %v1668, %v1666
    %v2521 = vpack.c.b16 %v1669, %v1667
    %v2522 = vpack.c.b16 %v1672, %v1670
    %v2523 = vpack.c.b16 %v1673, %v1671
    %v2524 = vpack.c.b16 %v1676, %v1674
    %v2525 = vpack.c.b16 %v1677, %v1675
    %v2526 = vpack.c.b16 %v1680, %v1678
    %v2527 = vpack.c.b16 %v1681, %v1679
    %v2528 = vpack.c.b16 %v1684, %v1682
    %v2529 = vpack.c.b16 %v1685, %v1683
    %v2530 = vpack.c.b16 %v1688, %v1686
    %v2531 = vpack.c.b16 %v1689, %v1687
    %v2532 = vpack.c.b16 %v1692, %v1690
    %v2533 = vpack.c.b16 %v1693, %v1691
    %v2534 = vpack.c.b16 %v1696, %v1694
    %v2535 = vpack.c.b16 %v1697, %v1695
    %v2536 = vpack.c.b16 %v1700, %v1698
    %v2537 = vpack.c.b16 %v1701, %v1699
    %v2538 = vpack.c.b16 %v1704, %v1702
    %v2539 = vpack.c.b16 %v1705, %v1703
    %v2540 = vpack.c.b16 %v1708, %v1706
    %v2541 = vpack.c.b16 %v1709, %v1707
    %v2542 = vpack.c.b16 %v1712, %v1710
    %v2543 = vpack.c.b16 %v1713, %v1711
    %v2544 = vpack.c.b16 %v1716, %v1714
    %v2545 = vpack.c.b16 %v1717, %v1715
    %v2546 = vpack.c.b16 %v1720, %v1718
    %v2547 = vpack.c.b16 %v1721, %v1719
    %v2548 = vpack.c.b16 %v1724, %v1722
    %v2549 = vpack.c.b16 %v1725, %v1723
    %v2550 = vpack.c.b16 %v1728, %v1726
    %v2551 = vpack.c.b16 %v1729, %v1727
    %v2552 = vpack.c.b16 %v1732, %v1730
    %v2553 = vpack.c.b16 %v1733, %v1731
    %v2554 = vpack.c.b16 %v1736, %v1734
    %v2555 = vpack.c.b16 %v1737, %v1735
    %v2556 = vpack.c.b16 %v1740, %v1738
    %v2557 = vpack.c.b16 %v1741, %v1739
    %v2558 = vpack.c.b16 %v1744, %v1742
    %v2559 = vpack.c.b16 %v1745, %v1743
    %v2560 = vpack.c.b16 %v1748, %v1746
    %v2561 = vpack.c.b16 %v1749, %v1747
    %v2562 = vpack.c.b16 %v1752, %v1750
    %v2563 = vpack.c.b16 %v1753, %v1751
    %v2564 = vpack.c.b16 %v1756, %v1754
    %v2565 = vpack.c.b16 %v1757, %v1755
    %v2566 = vpack.c.b16 %v1760, %v1758
    %v2567 = vpack.c.b16 %v1761, %v1759
    %v2568 = vpack.c.b16 %v1764, %v1762
    %v2569 = vpack.c.b16 %v1765, %v1763
    %v2570 = vpack.c.b16 %v1768, %v1766
    %v2571 = vpack.c.b16 %v1769, %v1767
    %v2572 = vpack.c.b16 %v1772, %v1770
    %v2573 = vpack.c.b16 %v1773, %v1771
    %v2574 = vpack.c.b16 %v1776, %v1774
    %v2575 = vpack.c.b16 %v1777, %v1775
    %v2576 = vpack.c.b16 %v1780, %v1778
    %v2577 = vpack.c.b16 %v1781, %v1779
    %v2578 = vpack.c.b16 %v1784, %v1782
    %v2579 = vpack.c.b16 %v1785, %v1783
    %v2580 = vpack.c.b16 %v1788, %v1786
    %v2581 = vpack.c.b16 %v1789, %v1787
    %v2582 = vpack.c.b16 %v1792, %v1790
    %v2583 = vpack.c.b16 %v1793, %v1791
    %v2584 = vpack.c.b16 %v1796, %v1794
    %v2585 = vpack.c.b16 %v1797, %v1795
    %v2586 = vpack.c.b16 %v1800, %v1798
    %v2587 = vpack.c.b16 %v1801, %v1799
    %v2588 = vpack.c.b16 %v1804, %v1802
    %v2589 = vpack.c.b16 %v1805, %v1803
    %v2590 = vpack.c.b16 %v1808, %v1806
    %v2591 = vpack.c.b16 %v1809, %v1807
    %v2592 = vpack.c.b16 %v1812, %v1810
    %v2593 = vpack.c.b16 %v1813, %v1811
    %v2594 = vpack.c.b16 %v1816, %v1814
    %v2595 = vpack.c.b16 %v1817, %v1815
    %v2596 = vpack.c.b16 %v1820, %v1818
    %v2597 = vpack.c.b16 %v1821, %v1819
    %v2598 = vpack.c.b16 %v1824, %v1822
    %v2599 = vpack.c.b16 %v1825, %v1823
    %v2600 = vpack.c.b16 %v1828, %v1826
    %v2601 = vpack.c.b16 %v1829, %v1827
    %v2602 = vpack.c.b16 %v1832, %v1830
    %v2603 = vpack.c.b16 %v1833, %v1831
    %v2604 = vpack.c.b16 %v1836, %v1834
    %v2605 = vpack.c.b16 %v1837, %v1835
    %v2606 = vpack.c.b16 %v1840, %v1838
    %v2607 = vpack.c.b16 %v1841, %v1839
    %v2608 = vpack.c.b16 %v1844, %v1842
    %v2609 = vpack.c.b16 %v1845, %v1843
    %v2610 = vpack.c.b16 %v1848, %v1846
    %v2611 = vpack.c.b16 %v1849, %v1847
    %v2612 = vpack.c.b16 %v1852, %v1850
    %v2613 = vpack.c.b16 %v1853, %v1851
    %v2614 = vpack.c.b16 %v1856, %v1854
    %v2615 = vpack.c.b16 %v1857, %v1855
    %v2616 = vpack.c.b16 %v1860, %v1858
    %v2617 = vpack.c.b16 %v1861, %v1859
    %v2618 = vpack.c.b16 %v1864, %v1862
    %v2619 = vpack.c.b16 %v1865, %v1863
    %v2620 = vpack.c.b16 %v1868, %v1866
    %v2621 = vpack.c.b16 %v1869, %v1867
    %v2622 = vpack.c.b16 %v1872, %v1870
    %v2623 = vpack.c.b16 %v1873, %v1871
    %v2624 = vpack.c.b16 %v1876, %v1874
    %v2625 = vpack.c.b16 %v1877, %v1875
    %v2626 = vpack.c.b16 %v1880, %v1878
    %v2627 = vpack.c.b16 %v1881, %v1879
    %v2628 = vpack.c.b16 %v1884, %v1882
    %v2629 = vpack.c.b16 %v1885, %v1883
    %v2630 = vpack.c.b16 %v1888, %v1886
    %v2631 = vpack.c.b16 %v1889, %v1887
    %v2632 = vpack.c.b16 %v1892, %v1890
    %v2633 = vpack.c.b16 %v1893, %v1891
    %v2634 = vpack.c.b16 %v1896, %v1894
    %v2635 = vpack.c.b16 %v1897, %v1895
    %v2636 = vpack.c.b16 %v1900, %v1898
    %v2637 = vpack.c.b16 %v1901, %v1899
    %v2638 = vpack.c.b16 %v1904, %v1902
    %v2639 = vpack.c.b16 %v1905, %v1903
    %v2640 = vpack.c.b16 %v1908, %v1906
    %v2641 = vpack.c.b16 %v1909, %v1907
    %v2642 = vpack.c.b16 %v1912, %v1910
    %v2643 = vpack.c.b16 %v1913, %v1911
    %v2644 = vpack.c.b16 %v1916, %v1914
    %v2645 = vpack.c.b16 %v1917, %v1915
    %v2646 = vpack.c.b16 %v1920, %v1918
    %v2647 = vpack.c.b16 %v1921, %v1919
    %v2648 = vpack.c.b16 %v1924, %v1922
    %v2649 = vpack.c.b16 %v1925, %v1923
    %v2650 = vpack.c.b16 %v1928, %v1926
    %v2651 = vpack.c.b16 %v1929, %v1927
    %v2652 = vpack.c.b16 %v1932, %v1930
    %v2653 = vpack.c.b16 %v1933, %v1931
    %v2654 = vpack.c.b16 %v1936, %v1934
    %v2655 = vpack.c.b16 %v1937, %v1935
    %v2656 = vpack.c.b16 %v1940, %v1938
    %v2657 = vpack.c.b16 %v1941, %v1939
    %v2658 = vpack.c.b16 %v1944, %v1942
    %v2659 = vpack.c.b16 %v1945, %v1943
    %v2660 = vpack.c.b16 %v1948, %v1946
    %v2661 = vpack.c.b16 %v1949, %v1947
    %v2662 = vpack.c.b16 %v1952, %v1950
    %v2663 = vpack.c.b16 %v1953, %v1951
    %v2664 = vpack.c.b16 %v1956, %v1954
    %v2665 = vpack.c.b16 %v1957, %v1955
    %v2666 = vpack.c.b16 %v1960, %v1958
    %v2667 = vpack.c.b16 %v1961, %v1959
    %v2668 = vpack.c.b16 %v1964, %v1962
    %v2669 = vpack.c.b16 %v1965, %v1963
    %v2670 = vpack.c.b16 %v1968, %v1966
    %v2671 = vpack.c.b16 %v1969, %v1967
    %v2672 = vpack.c.b16 %v1972, %v1970
    %v2673 = vpack.c.b16 %v1973, %v1971
    %v2674 = vpack.c.b16 %v1976, %v1974
    %v2675 = vpack.c.b16 %v1977, %v1975
    %v2676 = vpack.c.b16 %v1980, %v1978
    %v2677 = vpack.c.b16 %v1981, %v1979
    %v2678 = vpack.c.b16 %v1984, %v1982
    %v2679 = vpack.c.b16 %v1985, %v1983
    %v2680 = vpack.c.b16 %v1988, %v1986
    %v2681 = vpack.c.b16 %v1989, %v1987
    %v2682 = vpack.c.b16 %v1992, %v1990
    %v2683 = vpack.c.b16 %v1993, %v1991
    %v2684 = vpack.c.b16 %v1996, %v1994
    %v2685 = vpack.c.b16 %v1997, %v1995
    %v2686 = vpack.c.b16 %v2000, %v1998
    %v2687 = vpack.c.b16 %v2001, %v1999
    %v2688 = vpack.c.b16 %v2004, %v2002
    %v2689 = vpack.c.b16 %v2005, %v2003
    %v2690 = vpack.c.b16 %v2008, %v2006
    %v2691 = vpack.c.b16 %v2009, %v2007
    %v2692 = vpack.c.b16 %v2012, %v2010
    %v2693 = vpack.c.b16 %v2013, %v2011
    %v2694 = vpack.c.b16 %v2016, %v2014
    %v2695 = vpack.c.b16 %v2017, %v2015
    %v2696 = vpack.c.b16 %v2020, %v2018
    %v2697 = vpack.c.b16 %v2021, %v2019
    %v2698 = vpack.c.b16 %v2024, %v2022
    %v2699 = vpack.c.b16 %v2025, %v2023
    %v2700 = vpack.c.b16 %v2028, %v2026
    %v2701 = vpack.c.b16 %v2029, %v2027
    %v2702 = vpack.c.b16 %v2032, %v2030
    %v2703 = vpack.c.b16 %v2033, %v2031
    %v2704 = vpack.c.b16 %v2036, %v2034
    %v2705 = vpack.c.b16 %v2037, %v2035
    %v2706 = vpack.c.b16 %v2040, %v2038
    %v2707 = vpack.c.b16 %v2041, %v2039
    %v2708 = vpack.c.b16 %v2044, %v2042
    %v2709 = vpack.c.b16 %v2045, %v2043
    %v2710 = vpack.c.b16 %v2048, %v2046
    %v2711 = vpack.c.b16 %v2049, %v2047
    %v2712 = vpack.c.b16 %v2052, %v2050
    %v2713 = vpack.c.b16 %v2053, %v2051
    %v2714 = vpack.c.b16 %v2056, %v2054
    %v2715 = vpack.c.b16 %v2057, %v2055
    %v2716 = vpack.c.b16 %v2060, %v2058
    %v2717 = vpack.c.b16 %v2061, %v2059
    %v2718 = vpack.c.b16 %v2064, %v2062
    %v2719 = vpack.c.b16 %v2065, %v2063
    %v2720 = vpack.c.b16 %v2068, %v2066
    %v2721 = vpack.c.b16 %v2069, %v2067
    %v2722 = vpack.c.b16 %v2072, %v2070
    %v2723 = vpack.c.b16 %v2073, %v2071
    %v2724 = vpack.c.b16 %v2076, %v2074
    %v2725 = vpack.c.b16 %v2077, %v2075
    %v2726 = vpack.c.b16 %v2080, %v2078
    %v2727 = vpack.c.b16 %v2081, %v2079
    %v2728 = vpack.c.b16 %v2084, %v2082
    %v2729 = vpack.c.b16 %v2085, %v2083
    %v2730 = vpack.c.b16 %v2088, %v2086
    %v2731 = vpack.c.b16 %v2089, %v2087
    %v2732 = vpack.c.b16 %v2092, %v2090
    %v2733 = vpack.c.b16 %v2093, %v2091
    %v2734 = vpack.c.b16 %v2096, %v2094
    %v2735 = vpack.c.b16 %v2097, %v2095
    %v2736 = vpack.c.b16 %v2100, %v2098
    %v2737 = vpack.c.b16 %v2101, %v2099
    %v2738 = vpack.c.b16 %v2104, %v2102
    %v2739 = vpack.c.b16 %v2105, %v2103
    %v2740 = vpack.c.b16 %v2108, %v2106
    %v2741 = vpack.c.b16 %v2109, %v2107
    %v2742 = vpack.c.b16 %v2112, %v2110
    %v2743 = vpack.c.b16 %v2113, %v2111
    %v2744 = vpack.c.b16 %v2116, %v2114
    %v2745 = vpack.c.b16 %v2117, %v2115
    %v2746 = vpack.c.b16 %v2120, %v2118
    %v2747 = vpack.c.b16 %v2121, %v2119
    %v2748 = vpack.c.b16 %v2124, %v2122
    %v2749 = vpack.c.b16 %v2125, %v2123
    %v2750 = vpack.c.b16 %v2128, %v2126
    %v2751 = vpack.c.b16 %v2129, %v2127
    %v2752 = vpack.c.b16 %v2132, %v2130
    %v2753 = vpack.c.b16 %v2133, %v2131
    %v2754 = vpack.c.b16 %v2136, %v2134
    %v2755 = vpack.c.b16 %v2137, %v2135
    %v2756 = vpack.c.b16 %v2140, %v2138
    %v2757 = vpack.c.b16 %v2141, %v2139
    %v2758 = vpack.c.b16 %v2144, %v2142
    %v2759 = vpack.c.b16 %v2145, %v2143
    %v2760 = vpack.c.b16 %v2148, %v2146
    %v2761 = vpack.c.b16 %v2149, %v2147
    %v2762 = vpack.c.b16 %v2152, %v2150
    %v2763 = vpack.c.b16 %v2153, %v2151
    %v2764 = vpack.c.b16 %v2156, %v2154
    %v2765 = vpack.c.b16 %v2157, %v2155
    %v2766 = vpack.c.b16 %v2160, %v2158
    %v2767 = vpack.c.b16 %v2161, %v2159
    %v2768 = vpack.c.b16 %v2164, %v2162
    %v2769 = vpack.c.b16 %v2165, %v2163
    %v2770 = vpack.c.b16 %v2168, %v2166
    %v2771 = vpack.c.b16 %v2169, %v2167
    %v2772 = vpack.c.b16 %v2172, %v2170
    %v2773 = vpack.c.b16 %v2173, %v2171
    %v2774 = vpack.c.b16 %v2176, %v2174
    %v2775 = vpack.c.b16 %v2177, %v2175
    %v2776 = vpack.c.b16 %v2180, %v2178
    %v2777 = vpack.c.b16 %v2181, %v2179
    %v2778 = vpack.c.b16 %v2184, %v2182
    %v2779 = vpack.c.b16 %v2185, %v2183
    %v2780 = vpack.c.b16 %v2188, %v2186
    %v2781 = vpack.c.b16 %v2189, %v2187
    %v2782 = vpack.c.b16 %v2192, %v2190
    %v2783 = vpack.c.b16 %v2193, %v2191
    %v2784 = vpack.c.b16 %v2196, %v2194
    %v2785 = vpack.c.b16 %v2197, %v2195
    %v2786 = vpack.c.b16 %v2200, %v2198
    %v2787 = vpack.c.b16 %v2201, %v2199
    %v2788 = vpack.c.b16 %v2204, %v2202
    %v2789 = vpack.c.b16 %v2205, %v2203
    %v2790 = vpack.c.b16 %v2208, %v2206
    %v2791 = vpack.c.b16 %v2209, %v2207
    %v2792 = vpack.c.b16 %v2212, %v2210
    %v2793 = vpack.c.b16 %v2213, %v2211
    %v2794 = vpack.c.b16 %v2216, %v2214
    %v2795 = vpack.c.b16 %v2217, %v2215
    %v2796 = vpack.c.b16 %v2220, %v2218
    %v2797 = vpack.c.b16 %v2221, %v2219
    %v2798 = vpack.c.b16 %v2224, %v2222
    %v2799 = vpack.c.b16 %v2225, %v2223
    %v2800 = vpack.c.b16 %v2228, %v2226
    %v2801 = vpack.c.b16 %v2229, %v2227
    %v2802 = vpack.c.b16 %v2232, %v2230
    %v2803 = vpack.c.b16 %v2233, %v2231
    %v2804 = vpack.c.b16 %v2236, %v2234
    %v2805 = vpack.c.b16 %v2237, %v2235
    %v2806 = vpack.c.b16 %v2240, %v2238
    %v2807 = vpack.c.b16 %v2241, %v2239
    %v2808 = vpack.c.b16 %v2244, %v2242
    %v2809 = vpack.c.b16 %v2245, %v2243
    %v2810 = vpack.c.b16 %v2248, %v2246
    %v2811 = vpack.c.b16 %v2249, %v2247
    %v2812 = vpack.c.b16 %v2252, %v2250
    %v2813 = vpack.c.b16 %v2253, %v2251
    %v2814 = vpack.c.b16 %v2256, %v2254
    %v2815 = vpack.c.b16 %v2257, %v2255
    %v2816 = vpack.c.b16 %v2260, %v2258
    %v2817 = vpack.c.b16 %v2261, %v2259
    %v2818 = vpack.c.b16 %v2264, %v2262
    %v2819 = vpack.c.b16 %v2265, %v2263
    %v2820 = vpack.c.b16 %v2268, %v2266
    %v2821 = vpack.c.b16 %v2269, %v2267
    %v2822 = vpack.c.b16 %v2272, %v2270
    %v2823 = vpack.c.b16 %v2273, %v2271
    %v2824 = vpack.c.b16 %v2276, %v2274
    %v2825 = vpack.c.b16 %v2277, %v2275
    %v2826 = vpack.c.b16 %v2280, %v2278
    %v2827 = vpack.c.b16 %v2281, %v2279
    %v2828 = vpack.c.b16 %v2284, %v2282
    %v2829 = vpack.c.b16 %v2285, %v2283
    %v2830 = vpack.c.b16 %v2288, %v2286
    %v2831 = vpack.c.b16 %v2289, %v2287
    %v2832 = vpack.c.b16 %v2292, %v2290
    %v2833 = vpack.c.b16 %v2293, %v2291
    %v2834 = vpack.c.b16 %v2296, %v2294
    %v2835 = vpack.c.b16 %v2297, %v2295
    %v2836 = vpack.c.b16 %v2300, %v2298
    %v2837 = vpack.c.b16 %v2301, %v2299
    %v2838 = vpack.c.b16 %v2304, %v2302
    %v2839 = vpack.c.b16 %v2305, %v2303
    %v2840 = vpack.c.b16 %v2308, %v2306
    %v2841 = vpack.c.b16 %v2309, %v2307
    %v2842 = vpack.c.b16 %v2312, %v2310
    %v2843 = vpack.c.b16 %v2313, %v2311
    %v2844 = vpack.c.b16 %v2316, %v2314
    %v2845 = vpack.c.b16 %v2317, %v2315
    %v2846 = vpack.c.b16 %v2320, %v2318
    %v2847 = vpack.c.b16 %v2321, %v2319
    %v2848 = vpack.c.b16 %v2324, %v2322
    %v2849 = vpack.c.b16 %v2325, %v2323
    %v2850 = vpack.c.b16 %v2328, %v2326
    %v2851 = vpack.c.b16 %v2329, %v2327
    %v2852 = vpack.c.b16 %v2332, %v2330
    %v2853 = vpack.c.b16 %v2333, %v2331
    %v2854 = vpack.c.b16 %v2336, %v2334
    %v2855 = vpack.c.b16 %v2337, %v2335
    %v2856 = vpack.c.b16 %v2340, %v2338
    %v2857 = vpack.c.b16 %v2341, %v2339
    %v2858 = vpack.c.b16 %v2344, %v2342
    %v2859 = vpack.c.b16 %v2345, %v2343
    %v2860 = vpack.c.b16 %v2348, %v2346
    %v2861 = vpack.c.b16 %v2349, %v2347
    %3374 = vmatprep.subr.bf16.mxu0 %v2351
    %3375 = vmatpush1.bf16.msra.mxu0 %v2350
    %3376 = vmatprep.subr.bf16.mxu0 %v2353
    %3377 = vmatpush1.bf16.msra.mxu0 %v2352
    %3378 = vmatprep.subr.bf16.mxu0 %v2355
    %3379 = vmatpush1.bf16.msra.mxu0 %v2354
    %3380 = vmatprep.subr.bf16.mxu0 %v2357
    %3381 = vmatpush1.bf16.msra.mxu0 %v2356
    %3382 = vmatprep.subr.bf16.mxu0 %v2359
    %3383 = vmatpush1.bf16.msra.mxu0 %v2358
    %3384 = vmatprep.subr.bf16.mxu0 %v2361
    %3385 = vmatpush1.bf16.msra.mxu0 %v2360
    %3386 = vmatprep.subr.bf16.mxu0 %v2363
    %3387 = vmatpush1.bf16.msra.mxu0 %v2362
    %3388 = vmatprep.subr.bf16.mxu0 %v2365
    %3389 = vmatpush1.bf16.msra.mxu0 %v2364
    %3390 = vmatprep.subr.bf16.mxu0 %v2367
    %3391 = vmatpush1.bf16.msra.mxu0 %v2366
    %3392 = vmatprep.subr.bf16.mxu0 %v2369
    %3393 = vmatpush1.bf16.msra.mxu0 %v2368
    %3394 = vmatprep.subr.bf16.mxu0 %v2371
    %3395 = vmatpush1.bf16.msra.mxu0 %v2370
    %3396 = vmatprep.subr.bf16.mxu0 %v2373
    %3397 = vmatpush1.bf16.msra.mxu0 %v2372
    %3398 = vmatprep.subr.bf16.mxu0 %v2375
    %3399 = vmatpush1.bf16.msra.mxu0 %v2374
    %3400 = vmatprep.subr.bf16.mxu0 %v2377
    %3401 = vmatpush1.bf16.msra.mxu0 %v2376
    %3402 = vmatprep.subr.bf16.mxu0 %v2379
    %3403 = vmatpush1.bf16.msra.mxu0 %v2378
    %3404 = vmatprep.subr.bf16.mxu0 %v2381
    %3405 = vmatpush1.bf16.msra.mxu0 %v2380
    %3406 = vmatprep.mubr.bf16.mxu0 %v623
    %3407 = vmatmul.mubr.bf16.gmra.mrb[0].mxu0 %v609
    %v3408 = vpop.f32.mrb[0].mxu0
    %v3409 = vadd.f32 %v575, %v3408
    %v3410 = vpop.f32.mrb[0].mxu0
    %v3411 = vadd.f32 %v579, %v3410
    %v3412 = vpop.f32.mrb[0].mxu0
    %v3413 = vpop.f32.mrb[0].mxu0
    %3414 = vdwg.mxu0
    %3415 = vmatprep.subr.bf16.mxu0 %v2383
    %3416 = vmatpush1.bf16.msra.mxu0 %v2382
    %3417 = vmatprep.subr.bf16.mxu0 %v2385
    %3418 = vmatpush1.bf16.msra.mxu0 %v2384
    %3419 = vmatprep.subr.bf16.mxu0 %v2387
    %3420 = vmatpush1.bf16.msra.mxu0 %v2386
    %3421 = vmatprep.subr.bf16.mxu0 %v2389
    %3422 = vmatpush1.bf16.msra.mxu0 %v2388
    %3423 = vmatprep.subr.bf16.mxu0 %v2391
    %3424 = vmatpush1.bf16.msra.mxu0 %v2390
    %3425 = vmatprep.subr.bf16.mxu0 %v2393
    %3426 = vmatpush1.bf16.msra.mxu0 %v2392
    %3427 = vmatprep.subr.bf16.mxu0 %v2395
    %3428 = vmatpush1.bf16.msra.mxu0 %v2394
    %3429 = vmatprep.subr.bf16.mxu0 %v2397
    %3430 = vmatpush1.bf16.msra.mxu0 %v2396
    %3431 = vmatprep.subr.bf16.mxu0 %v2399
    %3432 = vmatpush1.bf16.msra.mxu0 %v2398
    %3433 = vmatprep.subr.bf16.mxu0 %v2401
    %3434 = vmatpush1.bf16.msra.mxu0 %v2400
    %3435 = vmatprep.subr.bf16.mxu0 %v2403
    %3436 = vmatpush1.bf16.msra.mxu0 %v2402
    %3437 = vmatprep.subr.bf16.mxu0 %v2405
    %3438 = vmatpush1.bf16.msra.mxu0 %v2404
    %3439 = vmatprep.subr.bf16.mxu0 %v2407
    %3440 = vmatpush1.bf16.msra.mxu0 %v2406
    %3441 = vmatprep.subr.bf16.mxu0 %v2409
    %3442 = vmatpush1.bf16.msra.mxu0 %v2408
    %3443 = vmatprep.subr.bf16.mxu0 %v2411
    %3444 = vmatpush1.bf16.msra.mxu0 %v2410
    %3445 = vmatprep.subr.bf16.mxu0 %v2413
    %3446 = vmatpush1.bf16.msra.mxu0 %v2412
    %3447 = vmatprep.mubr.bf16.mxu0 %v633
    %3448 = vmatmul.mubr.bf16.gmra.mrb[0].mxu0 %v631
    %v3449 = vpop.f32.mrb[0].mxu0
    %v3450 = vadd.f32 %v3409, %v3449
    %v3451 = vpop.f32.mrb[0].mxu0
    %v3452 = vadd.f32 %v3411, %v3451
    %v3453 = vpop.f32.mrb[0].mxu0
    %v3454 = vpop.f32.mrb[0].mxu0
    %3455 = vdwg.mxu0
    %3456 = vmatprep.subr.bf16.mxu0 %v2415
    %3457 = vmatpush1.bf16.msra.mxu0 %v2414
    %3458 = vmatprep.subr.bf16.mxu0 %v2417
    %3459 = vmatpush1.bf16.msra.mxu0 %v2416
    %3460 = vmatprep.subr.bf16.mxu0 %v2419
    %3461 = vmatpush1.bf16.msra.mxu0 %v2418
    %3462 = vmatprep.subr.bf16.mxu0 %v2421
    %3463 = vmatpush1.bf16.msra.mxu0 %v2420
    %3464 = vmatprep.subr.bf16.mxu0 %v2423
    %3465 = vmatpush1.bf16.msra.mxu0 %v2422
    %3466 = vmatprep.subr.bf16.mxu0 %v2425
    %3467 = vmatpush1.bf16.msra.mxu0 %v2424
    %3468 = vmatprep.subr.bf16.mxu0 %v2427
    %3469 = vmatpush1.bf16.msra.mxu0 %v2426
    %3470 = vmatprep.subr.bf16.mxu0 %v2429
    %3471 = vmatpush1.bf16.msra.mxu0 %v2428
    %3472 = vmatprep.subr.bf16.mxu0 %v2431
    %3473 = vmatpush1.bf16.msra.mxu0 %v2430
    %3474 = vmatprep.subr.bf16.mxu0 %v2433
    %3475 = vmatpush1.bf16.msra.mxu0 %v2432
    %3476 = vmatprep.subr.bf16.mxu0 %v2435
    %3477 = vmatpush1.bf16.msra.mxu0 %v2434
    %3478 = vmatprep.subr.bf16.mxu0 %v2437
    %3479 = vmatpush1.bf16.msra.mxu0 %v2436
    %3480 = vmatprep.subr.bf16.mxu0 %v2439
    %3481 = vmatpush1.bf16.msra.mxu0 %v2438
    %3482 = vmatprep.subr.bf16.mxu0 %v2441
    %3483 = vmatpush1.bf16.msra.mxu0 %v2440
    %3484 = vmatprep.subr.bf16.mxu0 %v2443
    %3485 = vmatpush1.bf16.msra.mxu0 %v2442
    %3486 = vmatprep.subr.bf16.mxu0 %v2445
    %3487 = vmatpush1.bf16.msra.mxu0 %v2444
    %3488 = vmatprep.mubr.bf16.mxu0 %v630
    %3489 = vmatmul.mubr.bf16.gmra.mrb[0].mxu0 %v616
    %v3490 = vpop.f32.mrb[0].mxu0
    %v3491 = vadd.f32 %v3450, %v3490
    %v3492 = vpop.f32.mrb[0].mxu0
    %v3493 = vadd.f32 %v3452, %v3492
    %v3494 = vpop.f32.mrb[0].mxu0
    %v3495 = vpop.f32.mrb[0].mxu0
    %3496 = vdwg.mxu0
    %3497 = vmatprep.subr.bf16.mxu0 %v2447
    %3498 = vmatpush1.bf16.msra.mxu0 %v2446
    %3499 = vmatprep.subr.bf16.mxu0 %v2449
    %3500 = vmatpush1.bf16.msra.mxu0 %v2448
    %3501 = vmatprep.subr.bf16.mxu0 %v2451
    %3502 = vmatpush1.bf16.msra.mxu0 %v2450
    %3503 = vmatprep.subr.bf16.mxu0 %v2453
    %3504 = vmatpush1.bf16.msra.mxu0 %v2452
    %3505 = vmatprep.subr.bf16.mxu0 %v2455
    %3506 = vmatpush1.bf16.msra.mxu0 %v2454
    %3507 = vmatprep.subr.bf16.mxu0 %v2457
    %3508 = vmatpush1.bf16.msra.mxu0 %v2456
    %3509 = vmatprep.subr.bf16.mxu0 %v2459
    %3510 = vmatpush1.bf16.msra.mxu0 %v2458
    %3511 = vmatprep.subr.bf16.mxu0 %v2461
    %3512 = vmatpush1.bf16.msra.mxu0 %v2460
    %3513 = vmatprep.subr.bf16.mxu0 %v2463
    %3514 = vmatpush1.bf16.msra.mxu0 %v2462
    %3515 = vmatprep.subr.bf16.mxu0 %v2465
    %3516 = vmatpush1.bf16.msra.mxu0 %v2464
    %3517 = vmatprep.subr.bf16.mxu0 %v2467
    %3518 = vmatpush1.bf16.msra.mxu0 %v2466
    %3519 = vmatprep.subr.bf16.mxu0 %v2469
    %3520 = vmatpush1.bf16.msra.mxu0 %v2468
    %3521 = vmatprep.subr.bf16.mxu0 %v2471
    %3522 = vmatpush1.bf16.msra.mxu0 %v2470
    %3523 = vmatprep.subr.bf16.mxu0 %v2473
    %3524 = vmatpush1.bf16.msra.mxu0 %v2472
    %3525 = vmatprep.subr.bf16.mxu0 %v2475
    %3526 = vmatpush1.bf16.msra.mxu0 %v2474
    %3527 = vmatprep.subr.bf16.mxu0 %v2477
    %3528 = vmatpush1.bf16.msra.mxu0 %v2476
    %3529 = vmatprep.mubr.bf16.mxu0 %v634
    %3530 = vmatmul.mubr.bf16.gmra.mrb[0].mxu0 %v632
    %v3531 = vpop.f32.mrb[0].mxu0
    %v3532 = vadd.f32 %v3491, %v3531
    %v3533 = vpop.f32.mrb[0].mxu0
    %v3534 = vadd.f32 %v3493, %v3533
    %v3535 = vpop.f32.mrb[0].mxu0
    %v3536 = vpop.f32.mrb[0].mxu0
    %3537 = vdwg.mxu0
    %3538 = vmatprep.subr.bf16.mxu0 %v2479
    %3539 = vmatpush1.bf16.msra.mxu0 %v2478
    %3540 = vmatprep.subr.bf16.mxu0 %v2481
    %3541 = vmatpush1.bf16.msra.mxu0 %v2480
    %3542 = vmatprep.subr.bf16.mxu0 %v2483
    %3543 = vmatpush1.bf16.msra.mxu0 %v2482
    %3544 = vmatprep.subr.bf16.mxu0 %v2485
    %3545 = vmatpush1.bf16.msra.mxu0 %v2484
    %3546 = vmatprep.subr.bf16.mxu0 %v2487
    %3547 = vmatpush1.bf16.msra.mxu0 %v2486
    %3548 = vmatprep.subr.bf16.mxu0 %v2489
    %3549 = vmatpush1.bf16.msra.mxu0 %v2488
    %3550 = vmatprep.subr.bf16.mxu0 %v2491
    %3551 = vmatpush1.bf16.msra.mxu0 %v2490
    %3552 = vmatprep.subr.bf16.mxu0 %v2493
    %3553 = vmatpush1.bf16.msra.mxu0 %v2492
    %3554 = vmatprep.subr.bf16.mxu0 %v2495
    %3555 = vmatpush1.bf16.msra.mxu0 %v2494
    %3556 = vmatprep.subr.bf16.mxu0 %v2497
    %3557 = vmatpush1.bf16.msra.mxu0 %v2496
    %3558 = vmatprep.subr.bf16.mxu0 %v2499
    %3559 = vmatpush1.bf16.msra.mxu0 %v2498
    %3560 = vmatprep.subr.bf16.mxu0 %v2501
    %3561 = vmatpush1.bf16.msra.mxu0 %v2500
    %3562 = vmatprep.subr.bf16.mxu0 %v2503
    %3563 = vmatpush1.bf16.msra.mxu0 %v2502
    %3564 = vmatprep.subr.bf16.mxu0 %v2505
    %3565 = vmatpush1.bf16.msra.mxu0 %v2504
    %3566 = vmatprep.subr.bf16.mxu0 %v2507
    %3567 = vmatpush1.bf16.msra.mxu0 %v2506
    %3568 = vmatprep.subr.bf16.mxu0 %v2509
    %3569 = vmatpush1.bf16.msra.mxu0 %v2508
    %3570 = vmatprep.mubr.bf16.mxu0 %v672
    %3571 = vmatmul.mubr.bf16.gmra.mrb[0].mxu0 %v658
    %v3572 = vpop.f32.mrb[0].mxu0
    %v3573 = vadd.f32 %v3532, %v3572
    %v3574 = vpop.f32.mrb[0].mxu0
    %v3575 = vadd.f32 %v3534, %v3574
    %v3576 = vpop.f32.mrb[0].mxu0
    %v3577 = vpop.f32.mrb[0].mxu0
    %3578 = vdwg.mxu0
    %3579 = vmatprep.subr.bf16.mxu0 %v2511
    %3580 = vmatpush1.bf16.msra.mxu0 %v2510
    %3581 = vmatprep.subr.bf16.mxu0 %v2513
    %3582 = vmatpush1.bf16.msra.mxu0 %v2512
    %3583 = vmatprep.subr.bf16.mxu0 %v2515
    %3584 = vmatpush1.bf16.msra.mxu0 %v2514
    %3585 = vmatprep.subr.bf16.mxu0 %v2517
    %3586 = vmatpush1.bf16.msra.mxu0 %v2516
    %3587 = vmatprep.subr.bf16.mxu0 %v2519
    %3588 = vmatpush1.bf16.msra.mxu0 %v2518
    %3589 = vmatprep.subr.bf16.mxu0 %v2521
    %3590 = vmatpush1.bf16.msra.mxu0 %v2520
    %3591 = vmatprep.subr.bf16.mxu0 %v2523
    %3592 = vmatpush1.bf16.msra.mxu0 %v2522
    %3593 = vmatprep.subr.bf16.mxu0 %v2525
    %3594 = vmatpush1.bf16.msra.mxu0 %v2524
    %3595 = vmatprep.subr.bf16.mxu0 %v2527
    %3596 = vmatpush1.bf16.msra.mxu0 %v2526
    %3597 = vmatprep.subr.bf16.mxu0 %v2529
    %3598 = vmatpush1.bf16.msra.mxu0 %v2528
    %3599 = vmatprep.subr.bf16.mxu0 %v2531
    %3600 = vmatpush1.bf16.msra.mxu0 %v2530
    %3601 = vmatprep.subr.bf16.mxu0 %v2533
    %3602 = vmatpush1.bf16.msra.mxu0 %v2532
    %3603 = vmatprep.subr.bf16.mxu0 %v2535
    %3604 = vmatpush1.bf16.msra.mxu0 %v2534
    %3605 = vmatprep.subr.bf16.mxu0 %v2537
    %3606 = vmatpush1.bf16.msra.mxu0 %v2536
    %3607 = vmatprep.subr.bf16.mxu0 %v2539
    %3608 = vmatpush1.bf16.msra.mxu0 %v2538
    %3609 = vmatprep.subr.bf16.mxu0 %v2541
    %3610 = vmatpush1.bf16.msra.mxu0 %v2540
    %3611 = vmatprep.mubr.bf16.mxu0 %v682
    %3612 = vmatmul.mubr.bf16.gmra.mrb[0].mxu0 %v680
    %v3613 = vpop.f32.mrb[0].mxu0
    %v3614 = vadd.f32 %v3573, %v3613
    %v3615 = vpop.f32.mrb[0].mxu0
    %v3616 = vadd.f32 %v3575, %v3615
    %v3617 = vpop.f32.mrb[0].mxu0
    %v3618 = vpop.f32.mrb[0].mxu0
    %3619 = vdwg.mxu0
    %3620 = vmatprep.subr.bf16.mxu0 %v2543
    %3621 = vmatpush1.bf16.msra.mxu0 %v2542
    %3622 = vmatprep.subr.bf16.mxu0 %v2545
    %3623 = vmatpush1.bf16.msra.mxu0 %v2544
    %3624 = vmatprep.subr.bf16.mxu0 %v2547
    %3625 = vmatpush1.bf16.msra.mxu0 %v2546
    %3626 = vmatprep.subr.bf16.mxu0 %v2549
    %3627 = vmatpush1.bf16.msra.mxu0 %v2548
    %3628 = vmatprep.subr.bf16.mxu0 %v2551
    %3629 = vmatpush1.bf16.msra.mxu0 %v2550
    %3630 = vmatprep.subr.bf16.mxu0 %v2553
    %3631 = vmatpush1.bf16.msra.mxu0 %v2552
    %3632 = vmatprep.subr.bf16.mxu0 %v2555
    %3633 = vmatpush1.bf16.msra.mxu0 %v2554
    %3634 = vmatprep.subr.bf16.mxu0 %v2557
    %3635 = vmatpush1.bf16.msra.mxu0 %v2556
    %3636 = vmatprep.subr.bf16.mxu0 %v2559
    %3637 = vmatpush1.bf16.msra.mxu0 %v2558
    %3638 = vmatprep.subr.bf16.mxu0 %v2561
    %3639 = vmatpush1.bf16.msra.mxu0 %v2560
    %3640 = vmatprep.subr.bf16.mxu0 %v2563
    %3641 = vmatpush1.bf16.msra.mxu0 %v2562
    %3642 = vmatprep.subr.bf16.mxu0 %v2565
    %3643 = vmatpush1.bf16.msra.mxu0 %v2564
    %3644 = vmatprep.subr.bf16.mxu0 %v2567
    %3645 = vmatpush1.bf16.msra.mxu0 %v2566
    %3646 = vmatprep.subr.bf16.mxu0 %v2569
    %3647 = vmatpush1.bf16.msra.mxu0 %v2568
    %3648 = vmatprep.subr.bf16.mxu0 %v2571
    %3649 = vmatpush1.bf16.msra.mxu0 %v2570
    %3650 = vmatprep.subr.bf16.mxu0 %v2573
    %3651 = vmatpush1.bf16.msra.mxu0 %v2572
    %3652 = vmatprep.mubr.bf16.mxu0 %v679
    %3653 = vmatmul.mubr.bf16.gmra.mrb[0].mxu0 %v665
    %v3654 = vpop.f32.mrb[0].mxu0
    %v3655 = vadd.f32 %v3614, %v3654
    %v3656 = vpop.f32.mrb[0].mxu0
    %v3657 = vadd.f32 %v3616, %v3656
    %v3658 = vpop.f32.mrb[0].mxu0
    %v3659 = vpop.f32.mrb[0].mxu0
    %3660 = vdwg.mxu0
    %3661 = vmatprep.subr.bf16.mxu0 %v2575
    %3662 = vmatpush1.bf16.msra.mxu0 %v2574
    %3663 = vmatprep.subr.bf16.mxu0 %v2577
    %3664 = vmatpush1.bf16.msra.mxu0 %v2576
    %3665 = vmatprep.subr.bf16.mxu0 %v2579
    %3666 = vmatpush1.bf16.msra.mxu0 %v2578
    %3667 = vmatprep.subr.bf16.mxu0 %v2581
    %3668 = vmatpush1.bf16.msra.mxu0 %v2580
    %3669 = vmatprep.subr.bf16.mxu0 %v2583
    %3670 = vmatpush1.bf16.msra.mxu0 %v2582
    %3671 = vmatprep.subr.bf16.mxu0 %v2585
    %3672 = vmatpush1.bf16.msra.mxu0 %v2584
    %3673 = vmatprep.subr.bf16.mxu0 %v2587
    %3674 = vmatpush1.bf16.msra.mxu0 %v2586
    %3675 = vmatprep.subr.bf16.mxu0 %v2589
    %3676 = vmatpush1.bf16.msra.mxu0 %v2588
    %3677 = vmatprep.subr.bf16.mxu0 %v2591
    %3678 = vmatpush1.bf16.msra.mxu0 %v2590
    %3679 = vmatprep.subr.bf16.mxu0 %v2593
    %3680 = vmatpush1.bf16.msra.mxu0 %v2592
    %3681 = vmatprep.subr.bf16.mxu0 %v2595
    %3682 = vmatpush1.bf16.msra.mxu0 %v2594
    %3683 = vmatprep.subr.bf16.mxu0 %v2597
    %3684 = vmatpush1.bf16.msra.mxu0 %v2596
    %3685 = vmatprep.subr.bf16.mxu0 %v2599
    %3686 = vmatpush1.bf16.msra.mxu0 %v2598
    %3687 = vmatprep.subr.bf16.mxu0 %v2601
    %3688 = vmatpush1.bf16.msra.mxu0 %v2600
    %3689 = vmatprep.subr.bf16.mxu0 %v2603
    %3690 = vmatpush1.bf16.msra.mxu0 %v2602
    %3691 = vmatprep.subr.bf16.mxu0 %v2605
    %3692 = vmatpush1.bf16.msra.mxu0 %v2604
    %3693 = vmatprep.mubr.bf16.mxu0 %v683
    %3694 = vmatmul.mubr.bf16.gmra.mrb[0].mxu0 %v681
    %v3695 = vpop.f32.mrb[0].mxu0
    %v3696 = vadd.f32 %v3655, %v3695
    %v3697 = vpop.f32.mrb[0].mxu0
    %v3698 = vadd.f32 %v3657, %v3697
    %v3699 = vpop.f32.mrb[0].mxu0
    %v3700 = vpop.f32.mrb[0].mxu0
    %3701 = vdwg.mxu0
    %3702 = vmatprep.subr.bf16.mxu0 %v2607
    %3703 = vmatpush1.bf16.msra.mxu0 %v2606
    %3704 = vmatprep.subr.bf16.mxu0 %v2609
    %3705 = vmatpush1.bf16.msra.mxu0 %v2608
    %3706 = vmatprep.subr.bf16.mxu0 %v2611
    %3707 = vmatpush1.bf16.msra.mxu0 %v2610
    %3708 = vmatprep.subr.bf16.mxu0 %v2613
    %3709 = vmatpush1.bf16.msra.mxu0 %v2612
    %3710 = vmatprep.subr.bf16.mxu0 %v2615
    %3711 = vmatpush1.bf16.msra.mxu0 %v2614
    %3712 = vmatprep.subr.bf16.mxu0 %v2617
    %3713 = vmatpush1.bf16.msra.mxu0 %v2616
    %3714 = vmatprep.subr.bf16.mxu0 %v2619
    %3715 = vmatpush1.bf16.msra.mxu0 %v2618
    %3716 = vmatprep.subr.bf16.mxu0 %v2621
    %3717 = vmatpush1.bf16.msra.mxu0 %v2620
    %3718 = vmatprep.subr.bf16.mxu0 %v2623
    %3719 = vmatpush1.bf16.msra.mxu0 %v2622
    %3720 = vmatprep.subr.bf16.mxu0 %v2625
    %3721 = vmatpush1.bf16.msra.mxu0 %v2624
    %3722 = vmatprep.subr.bf16.mxu0 %v2627
    %3723 = vmatpush1.bf16.msra.mxu0 %v2626
    %3724 = vmatprep.subr.bf16.mxu0 %v2629
    %3725 = vmatpush1.bf16.msra.mxu0 %v2628
    %3726 = vmatprep.subr.bf16.mxu0 %v2631
    %3727 = vmatpush1.bf16.msra.mxu0 %v2630
    %3728 = vmatprep.subr.bf16.mxu0 %v2633
    %3729 = vmatpush1.bf16.msra.mxu0 %v2632
    %3730 = vmatprep.subr.bf16.mxu0 %v2635
    %3731 = vmatpush1.bf16.msra.mxu0 %v2634
    %3732 = vmatprep.subr.bf16.mxu0 %v2637
    %3733 = vmatpush1.bf16.msra.mxu0 %v2636
    %3734 = vmatprep.mubr.bf16.mxu0 %v721
    %3735 = vmatmul.mubr.bf16.gmra.mrb[0].mxu0 %v707
    %v3736 = vpop.f32.mrb[0].mxu0
    %v3737 = vadd.f32 %v3696, %v3736
    %v3738 = vpop.f32.mrb[0].mxu0
    %v3739 = vadd.f32 %v3698, %v3738
    %v3740 = vpop.f32.mrb[0].mxu0
    %v3741 = vpop.f32.mrb[0].mxu0
    %3742 = vdwg.mxu0
    %3743 = vmatprep.subr.bf16.mxu0 %v2639
    %3744 = vmatpush1.bf16.msra.mxu0 %v2638
    %3745 = vmatprep.subr.bf16.mxu0 %v2641
    %3746 = vmatpush1.bf16.msra.mxu0 %v2640
    %3747 = vmatprep.subr.bf16.mxu0 %v2643
    %3748 = vmatpush1.bf16.msra.mxu0 %v2642
    %3749 = vmatprep.subr.bf16.mxu0 %v2645
    %3750 = vmatpush1.bf16.msra.mxu0 %v2644
    %3751 = vmatprep.subr.bf16.mxu0 %v2647
    %3752 = vmatpush1.bf16.msra.mxu0 %v2646
    %3753 = vmatprep.subr.bf16.mxu0 %v2649
    %3754 = vmatpush1.bf16.msra.mxu0 %v2648
    %3755 = vmatprep.subr.bf16.mxu0 %v2651
    %3756 = vmatpush1.bf16.msra.mxu0 %v2650
    %3757 = vmatprep.subr.bf16.mxu0 %v2653
    %3758 = vmatpush1.bf16.msra.mxu0 %v2652
    %3759 = vmatprep.subr.bf16.mxu0 %v2655
    %3760 = vmatpush1.bf16.msra.mxu0 %v2654
    %3761 = vmatprep.subr.bf16.mxu0 %v2657
    %3762 = vmatpush1.bf16.msra.mxu0 %v2656
    %3763 = vmatprep.subr.bf16.mxu0 %v2659
    %3764 = vmatpush1.bf16.msra.mxu0 %v2658
    %3765 = vmatprep.subr.bf16.mxu0 %v2661
    %3766 = vmatpush1.bf16.msra.mxu0 %v2660
    %3767 = vmatprep.subr.bf16.mxu0 %v2663
    %3768 = vmatpush1.bf16.msra.mxu0 %v2662
    %3769 = vmatprep.subr.bf16.mxu0 %v2665
    %3770 = vmatpush1.bf16.msra.mxu0 %v2664
    %3771 = vmatprep.subr.bf16.mxu0 %v2667
    %3772 = vmatpush1.bf16.msra.mxu0 %v2666
    %3773 = vmatprep.subr.bf16.mxu0 %v2669
    %3774 = vmatpush1.bf16.msra.mxu0 %v2668
    %3775 = vmatprep.mubr.bf16.mxu0 %v731
    %3776 = vmatmul.mubr.bf16.gmra.mrb[0].mxu0 %v729
    %v3777 = vpop.f32.mrb[0].mxu0
    %v3778 = vadd.f32 %v3737, %v3777
    %v3779 = vpop.f32.mrb[0].mxu0
    %v3780 = vadd.f32 %v3739, %v3779
    %v3781 = vpop.f32.mrb[0].mxu0
    %v3782 = vpop.f32.mrb[0].mxu0
    %3783 = vdwg.mxu0
    %3784 = vmatprep.subr.bf16.mxu0 %v2671
    %3785 = vmatpush1.bf16.msra.mxu0 %v2670
    %3786 = vmatprep.subr.bf16.mxu0 %v2673
    %3787 = vmatpush1.bf16.msra.mxu0 %v2672
    %3788 = vmatprep.subr.bf16.mxu0 %v2675
    %3789 = vmatpush1.bf16.msra.mxu0 %v2674
    %3790 = vmatprep.subr.bf16.mxu0 %v2677
    %3791 = vmatpush1.bf16.msra.mxu0 %v2676
    %3792 = vmatprep.subr.bf16.mxu0 %v2679
    %3793 = vmatpush1.bf16.msra.mxu0 %v2678
    %3794 = vmatprep.subr.bf16.mxu0 %v2681
    %3795 = vmatpush1.bf16.msra.mxu0 %v2680
    %3796 = vmatprep.subr.bf16.mxu0 %v2683
    %3797 = vmatpush1.bf16.msra.mxu0 %v2682
    %3798 = vmatprep.subr.bf16.mxu0 %v2685
    %3799 = vmatpush1.bf16.msra.mxu0 %v2684
    %3800 = vmatprep.subr.bf16.mxu0 %v2687
    %3801 = vmatpush1.bf16.msra.mxu0 %v2686
    %3802 = vmatprep.subr.bf16.mxu0 %v2689
    %3803 = vmatpush1.bf16.msra.mxu0 %v2688
    %3804 = vmatprep.subr.bf16.mxu0 %v2691
    %3805 = vmatpush1.bf16.msra.mxu0 %v2690
    %3806 = vmatprep.subr.bf16.mxu0 %v2693
    %3807 = vmatpush1.bf16.msra.mxu0 %v2692
    %3808 = vmatprep.subr.bf16.mxu0 %v2695
    %3809 = vmatpush1.bf16.msra.mxu0 %v2694
    %3810 = vmatprep.subr.bf16.mxu0 %v2697
    %3811 = vmatpush1.bf16.msra.mxu0 %v2696
    %3812 = vmatprep.subr.bf16.mxu0 %v2699
    %3813 = vmatpush1.bf16.msra.mxu0 %v2698
    %3814 = vmatprep.subr.bf16.mxu0 %v2701
    %3815 = vmatpush1.bf16.msra.mxu0 %v2700
    %3816 = vmatprep.mubr.bf16.mxu0 %v728
    %3817 = vmatmul.mubr.bf16.gmra.mrb[0].mxu0 %v714
    %v3818 = vpop.f32.mrb[0].mxu0
    %v3819 = vadd.f32 %v3778, %v3818
    %v3820 = vpop.f32.mrb[0].mxu0
    %v3821 = vadd.f32 %v3780, %v3820
    %v3822 = vpop.f32.mrb[0].mxu0
    %v3823 = vpop.f32.mrb[0].mxu0
    %3824 = vdwg.mxu0
    %3825 = vmatprep.subr.bf16.mxu0 %v2703
    %3826 = vmatpush1.bf16.msra.mxu0 %v2702
    %3827 = vmatprep.subr.bf16.mxu0 %v2705
    %3828 = vmatpush1.bf16.msra.mxu0 %v2704
    %3829 = vmatprep.subr.bf16.mxu0 %v2707
    %3830 = vmatpush1.bf16.msra.mxu0 %v2706
    %3831 = vmatprep.subr.bf16.mxu0 %v2709
    %3832 = vmatpush1.bf16.msra.mxu0 %v2708
    %3833 = vmatprep.subr.bf16.mxu0 %v2711
    %3834 = vmatpush1.bf16.msra.mxu0 %v2710
    %3835 = vmatprep.subr.bf16.mxu0 %v2713
    %3836 = vmatpush1.bf16.msra.mxu0 %v2712
    %3837 = vmatprep.subr.bf16.mxu0 %v2715
    %3838 = vmatpush1.bf16.msra.mxu0 %v2714
    %3839 = vmatprep.subr.bf16.mxu0 %v2717
    %3840 = vmatpush1.bf16.msra.mxu0 %v2716
    %3841 = vmatprep.subr.bf16.mxu0 %v2719
    %3842 = vmatpush1.bf16.msra.mxu0 %v2718
    %3843 = vmatprep.subr.bf16.mxu0 %v2721
    %3844 = vmatpush1.bf16.msra.mxu0 %v2720
    %3845 = vmatprep.subr.bf16.mxu0 %v2723
    %3846 = vmatpush1.bf16.msra.mxu0 %v2722
    %3847 = vmatprep.subr.bf16.mxu0 %v2725
    %3848 = vmatpush1.bf16.msra.mxu0 %v2724
    %3849 = vmatprep.subr.bf16.mxu0 %v2727
    %3850 = vmatpush1.bf16.msra.mxu0 %v2726
    %3851 = vmatprep.subr.bf16.mxu0 %v2729
    %3852 = vmatpush1.bf16.msra.mxu0 %v2728
    %3853 = vmatprep.subr.bf16.mxu0 %v2731
    %3854 = vmatpush1.bf16.msra.mxu0 %v2730
    %3855 = vmatprep.subr.bf16.mxu0 %v2733
    %3856 = vmatpush1.bf16.msra.mxu0 %v2732
    %3857 = vmatprep.mubr.bf16.mxu0 %v732
    %3858 = vmatmul.mubr.bf16.gmra.mrb[0].mxu0 %v730
    %v3859 = vpop.f32.mrb[0].mxu0
    %v3860 = vadd.f32 %v3819, %v3859
    %v3861 = vpop.f32.mrb[0].mxu0
    %v3862 = vadd.f32 %v3821, %v3861
    %v3863 = vpop.f32.mrb[0].mxu0
    %v3864 = vpop.f32.mrb[0].mxu0
    %3865 = vdwg.mxu0
    %3866 = vmatprep.subr.bf16.mxu0 %v2735
    %3867 = vmatpush1.bf16.msra.mxu0 %v2734
    %3868 = vmatprep.subr.bf16.mxu0 %v2737
    %3869 = vmatpush1.bf16.msra.mxu0 %v2736
    %3870 = vmatprep.subr.bf16.mxu0 %v2739
    %3871 = vmatpush1.bf16.msra.mxu0 %v2738
    %3872 = vmatprep.subr.bf16.mxu0 %v2741
    %3873 = vmatpush1.bf16.msra.mxu0 %v2740
    %3874 = vmatprep.subr.bf16.mxu0 %v2743
    %3875 = vmatpush1.bf16.msra.mxu0 %v2742
    %3876 = vmatprep.subr.bf16.mxu0 %v2745
    %3877 = vmatpush1.bf16.msra.mxu0 %v2744
    %3878 = vmatprep.subr.bf16.mxu0 %v2747
    %3879 = vmatpush1.bf16.msra.mxu0 %v2746
    %3880 = vmatprep.subr.bf16.mxu0 %v2749
    %3881 = vmatpush1.bf16.msra.mxu0 %v2748
    %3882 = vmatprep.subr.bf16.mxu0 %v2751
    %3883 = vmatpush1.bf16.msra.mxu0 %v2750
    %3884 = vmatprep.subr.bf16.mxu0 %v2753
    %3885 = vmatpush1.bf16.msra.mxu0 %v2752
    %3886 = vmatprep.subr.bf16.mxu0 %v2755
    %3887 = vmatpush1.bf16.msra.mxu0 %v2754
    %3888 = vmatprep.subr.bf16.mxu0 %v2757
    %3889 = vmatpush1.bf16.msra.mxu0 %v2756
    %3890 = vmatprep.subr.bf16.mxu0 %v2759
    %3891 = vmatpush1.bf16.msra.mxu0 %v2758
    %3892 = vmatprep.subr.bf16.mxu0 %v2761
    %3893 = vmatpush1.bf16.msra.mxu0 %v2760
    %3894 = vmatprep.subr.bf16.mxu0 %v2763
    %3895 = vmatpush1.bf16.msra.mxu0 %v2762
    %3896 = vmatprep.subr.bf16.mxu0 %v2765
    %3897 = vmatpush1.bf16.msra.mxu0 %v2764
    %3898 = vmatprep.mubr.bf16.mxu0 %v770
    %3899 = vmatmul.mubr.bf16.gmra.mrb[0].mxu0 %v756
    %v3900 = vpop.f32.mrb[0].mxu0
    %v3901 = vadd.f32 %v3860, %v3900
    %v3902 = vpop.f32.mrb[0].mxu0
    %v3903 = vadd.f32 %v3862, %v3902
    %v3904 = vpop.f32.mrb[0].mxu0
    %v3905 = vpop.f32.mrb[0].mxu0
    %3906 = vdwg.mxu0
    %3907 = vmatprep.subr.bf16.mxu0 %v2767
    %3908 = vmatpush1.bf16.msra.mxu0 %v2766
    %3909 = vmatprep.subr.bf16.mxu0 %v2769
    %3910 = vmatpush1.bf16.msra.mxu0 %v2768
    %3911 = vmatprep.subr.bf16.mxu0 %v2771
    %3912 = vmatpush1.bf16.msra.mxu0 %v2770
    %3913 = vmatprep.subr.bf16.mxu0 %v2773
    %3914 = vmatpush1.bf16.msra.mxu0 %v2772
    %3915 = vmatprep.subr.bf16.mxu0 %v2775
    %3916 = vmatpush1.bf16.msra.mxu0 %v2774
    %3917 = vmatprep.subr.bf16.mxu0 %v2777
    %3918 = vmatpush1.bf16.msra.mxu0 %v2776
    %3919 = vmatprep.subr.bf16.mxu0 %v2779
    %3920 = vmatpush1.bf16.msra.mxu0 %v2778
    %3921 = vmatprep.subr.bf16.mxu0 %v2781
    %3922 = vmatpush1.bf16.msra.mxu0 %v2780
    %3923 = vmatprep.subr.bf16.mxu0 %v2783
    %3924 = vmatpush1.bf16.msra.mxu0 %v2782
    %3925 = vmatprep.subr.bf16.mxu0 %v2785
    %3926 = vmatpush1.bf16.msra.mxu0 %v2784
    %3927 = vmatprep.subr.bf16.mxu0 %v2787
    %3928 = vmatpush1.bf16.msra.mxu0 %v2786
    %3929 = vmatprep.subr.bf16.mxu0 %v2789
    %3930 = vmatpush1.bf16.msra.mxu0 %v2788
    %3931 = vmatprep.subr.bf16.mxu0 %v2791
    %3932 = vmatpush1.bf16.msra.mxu0 %v2790
    %3933 = vmatprep.subr.bf16.mxu0 %v2793
    %3934 = vmatpush1.bf16.msra.mxu0 %v2792
    %3935 = vmatprep.subr.bf16.mxu0 %v2795
    %3936 = vmatpush1.bf16.msra.mxu0 %v2794
    %3937 = vmatprep.subr.bf16.mxu0 %v2797
    %3938 = vmatpush1.bf16.msra.mxu0 %v2796
    %3939 = vmatprep.mubr.bf16.mxu0 %v780
    %3940 = vmatmul.mubr.bf16.gmra.mrb[0].mxu0 %v778
    %v3941 = vpop.f32.mrb[0].mxu0
    %v3942 = vadd.f32 %v3901, %v3941
    %v3943 = vpop.f32.mrb[0].mxu0
    %v3944 = vadd.f32 %v3903, %v3943
    %v3945 = vpop.f32.mrb[0].mxu0
    %v3946 = vpop.f32.mrb[0].mxu0
    %3947 = vdwg.mxu0
    %3948 = vmatprep.subr.bf16.mxu0 %v2799
    %3949 = vmatpush1.bf16.msra.mxu0 %v2798
    %3950 = vmatprep.subr.bf16.mxu0 %v2801
    %3951 = vmatpush1.bf16.msra.mxu0 %v2800
    %3952 = vmatprep.subr.bf16.mxu0 %v2803
    %3953 = vmatpush1.bf16.msra.mxu0 %v2802
    %3954 = vmatprep.subr.bf16.mxu0 %v2805
    %3955 = vmatpush1.bf16.msra.mxu0 %v2804
    %3956 = vmatprep.subr.bf16.mxu0 %v2807
    %3957 = vmatpush1.bf16.msra.mxu0 %v2806
    %3958 = vmatprep.subr.bf16.mxu0 %v2809
    %3959 = vmatpush1.bf16.msra.mxu0 %v2808
    %3960 = vmatprep.subr.bf16.mxu0 %v2811
    %3961 = vmatpush1.bf16.msra.mxu0 %v2810
    %3962 = vmatprep.subr.bf16.mxu0 %v2813
    %3963 = vmatpush1.bf16.msra.mxu0 %v2812
    %3964 = vmatprep.subr.bf16.mxu0 %v2815
    %3965 = vmatpush1.bf16.msra.mxu0 %v2814
    %3966 = vmatprep.subr.bf16.mxu0 %v2817
    %3967 = vmatpush1.bf16.msra.mxu0 %v2816
    %3968 = vmatprep.subr.bf16.mxu0 %v2819
    %3969 = vmatpush1.bf16.msra.mxu0 %v2818
    %3970 = vmatprep.subr.bf16.mxu0 %v2821
    %3971 = vmatpush1.bf16.msra.mxu0 %v2820
    %3972 = vmatprep.subr.bf16.mxu0 %v2823
    %3973 = vmatpush1.bf16.msra.mxu0 %v2822
    %3974 = vmatprep.subr.bf16.mxu0 %v2825
    %3975 = vmatpush1.bf16.msra.mxu0 %v2824
    %3976 = vmatprep.subr.bf16.mxu0 %v2827
    %3977 = vmatpush1.bf16.msra.mxu0 %v2826
    %3978 = vmatprep.subr.bf16.mxu0 %v2829
    %3979 = vmatpush1.bf16.msra.mxu0 %v2828
    %3980 = vmatprep.mubr.bf16.mxu0 %v777
    %3981 = vmatmul.mubr.bf16.gmra.mrb[0].mxu0 %v763
    %v3982 = vpop.f32.mrb[0].mxu0
    %v3983 = vadd.f32 %v3942, %v3982
    %v3984 = vpop.f32.mrb[0].mxu0
    %v3985 = vadd.f32 %v3944, %v3984
    %v3986 = vpop.f32.mrb[0].mxu0
    %v3987 = vpop.f32.mrb[0].mxu0
    %3988 = vdwg.mxu0
    %3989 = vmatprep.subr.bf16.mxu0 %v2831
    %3990 = vmatpush1.bf16.msra.mxu0 %v2830
    %3991 = vmatprep.subr.bf16.mxu0 %v2833
    %3992 = vmatpush1.bf16.msra.mxu0 %v2832
    %3993 = vmatprep.subr.bf16.mxu0 %v2835
    %3994 = vmatpush1.bf16.msra.mxu0 %v2834
    %3995 = vmatprep.subr.bf16.mxu0 %v2837
    %3996 = vmatpush1.bf16.msra.mxu0 %v2836
    %3997 = vmatprep.subr.bf16.mxu0 %v2839
    %3998 = vmatpush1.bf16.msra.mxu0 %v2838
    %3999 = vmatprep.subr.bf16.mxu0 %v2841
    %4000 = vmatpush1.bf16.msra.mxu0 %v2840
    %4001 = vmatprep.subr.bf16.mxu0 %v2843
    %4002 = vmatpush1.bf16.msra.mxu0 %v2842
    %4003 = vmatprep.subr.bf16.mxu0 %v2845
    %4004 = vmatpush1.bf16.msra.mxu0 %v2844
    %4005 = vmatprep.subr.bf16.mxu0 %v2847
    %4006 = vmatpush1.bf16.msra.mxu0 %v2846
    %4007 = vmatprep.subr.bf16.mxu0 %v2849
    %4008 = vmatpush1.bf16.msra.mxu0 %v2848
    %4009 = vmatprep.subr.bf16.mxu0 %v2851
    %4010 = vmatpush1.bf16.msra.mxu0 %v2850
    %4011 = vmatprep.subr.bf16.mxu0 %v2853
    %4012 = vmatpush1.bf16.msra.mxu0 %v2852
    %4013 = vmatprep.subr.bf16.mxu0 %v2855
    %4014 = vmatpush1.bf16.msra.mxu0 %v2854
    %4015 = vmatprep.subr.bf16.mxu0 %v2857
    %4016 = vmatpush1.bf16.msra.mxu0 %v2856
    %4017 = vmatprep.subr.bf16.mxu0 %v2859
    %4018 = vmatpush1.bf16.msra.mxu0 %v2858
    %4019 = vmatprep.subr.bf16.mxu0 %v2861
    %4020 = vmatpush1.bf16.msra.mxu0 %v2860
    %4021 = vmatprep.mubr.bf16.mxu0 %v781
    %4022 = vmatmul.mubr.bf16.gmra.mrb[0].mxu0 %v779
    %v4023 = vpop.f32.mrb[0].mxu0
    %v4024 = vadd.f32 %v3983, %v4023
    %v4025 = vpop.f32.mrb[0].mxu0
    %v4026 = vadd.f32 %v3985, %v4025
    %v4027 = vpop.f32.mrb[0].mxu0
    %v4028 = vpop.f32.mrb[0].mxu0
    %4029 = vdwg.mxu0
    %v4032 = vcombine.low %v4024, %v4026
    %v4034 = vunpack.c.l.s4 1983009808
    %v4035 = vunpack.c.0.s8 %v4034
    %v4036 = vlaneseq
    %v4037 = vshrl.u32 %v4036, 7
    %v4038 = vsub.s32 %v4035, %v4037
    %v4039 = vrot.slane %v4032, %v4038
    %4041 = vst [vmem:[%s6] sm:$0xf] %v4039
    %v4042 = vld [vmem:[%s1] sm:$0x7]
    %v4043 = vld [vmem:[%s4] sm:$0xf]
    %v4044 = vld [vmem:[%s4 + $0x4] sm:$0xf]
    %v4045 = vld [vmem:[%s4 + $0x8] sm:$0xf]
    %v4046 = vld [vmem:[%s4 + $0xc] sm:$0xf]
    %v4047 = vld [vmem:[%s4 + $0x10] sm:$0xf]
    %v4048 = vld [vmem:[%s4 + $0x14] sm:$0xf]
    %v4049 = vld [vmem:[%s4 + $0x18] sm:$0xf]
    %v4050 = vld [vmem:[%s4 + $0x1c] sm:$0xf]
    %v4051 = vld [vmem:[%s4 + $0x20] sm:$0xf]
    %v4052 = vld [vmem:[%s4 + $0x24] sm:$0xf]
    %v4053 = vld [vmem:[%s4 + $0x28] sm:$0xf]
    %v4054 = vld [vmem:[%s4 + $0x2c] sm:$0xf]
    %v4055 = vld [vmem:[%s4 + $0x30] sm:$0xf]
    %v4056 = vld [vmem:[%s4 + $0x34] sm:$0xf]
    %v4057 = vld [vmem:[%s4 + $0x38] sm:$0xf]
    %v4058 = vld [vmem:[%s4 + $0x3c] sm:$0xf]
    %v4059 = vld [vmem:[%s4 + $0x40] sm:$0xf]
    %v4060 = vld [vmem:[%s4 + $0x44] sm:$0xf]
    %v4061 = vld [vmem:[%s4 + $0x48] sm:$0xf]
    %v4062 = vld [vmem:[%s4 + $0x4c] sm:$0xf]
    %v4063 = vld [vmem:[%s4 + $0x50] sm:$0xf]
    %v4064 = vld [vmem:[%s4 + $0x54] sm:$0xf]
    %v4065 = vld [vmem:[%s4 + $0x58] sm:$0xf]
    %v4066 = vld [vmem:[%s4 + $0x5c] sm:$0xf]
    %v4067 = vld [vmem:[%s4 + $0x60] sm:$0xf]
    %v4068 = vld [vmem:[%s4 + $0x64] sm:$0xf]
    %v4069 = vld [vmem:[%s4 + $0x68] sm:$0xf]
    %v4070 = vld [vmem:[%s4 + $0x6c] sm:$0xf]
    %v4071 = vld [vmem:[%s4 + $0x70] sm:$0xf]
    %v4072 = vld [vmem:[%s4 + $0x74] sm:$0xf]
    %v4073 = vld [vmem:[%s4 + $0x78] sm:$0xf]
    %v4074 = vld [vmem:[%s4 + $0x7c] sm:$0xf]
    %v4075 = vld [vmem:[%s4 + $0x80] sm:$0xf]
    %v4076 = vld [vmem:[%s4 + $0x84] sm:$0xf]
    %v4077 = vld [vmem:[%s4 + $0x88] sm:$0xf]
    %v4078 = vld [vmem:[%s4 + $0x8c] sm:$0xf]
    %v4079 = vld [vmem:[%s4 + $0x90] sm:$0xf]
    %v4080 = vld [vmem:[%s4 + $0x94] sm:$0xf]
    %v4081 = vld [vmem:[%s4 + $0x98] sm:$0xf]
    %v4082 = vld [vmem:[%s4 + $0x9c] sm:$0xf]
    %v4083 = vld [vmem:[%s4 + $0xa0] sm:$0xf]
    %v4084 = vld [vmem:[%s4 + $0xa4] sm:$0xf]
    %v4085 = vld [vmem:[%s4 + $0xa8] sm:$0xf]
    %v4086 = vld [vmem:[%s4 + $0xac] sm:$0xf]
    %v4087 = vld [vmem:[%s4 + $0xb0] sm:$0xf]
    %v4088 = vld [vmem:[%s4 + $0xb4] sm:$0xf]
    %v4089 = vld [vmem:[%s4 + $0xb8] sm:$0xf]
    %v4090 = vld [vmem:[%s4 + $0xbc] sm:$0xf]
    %v4091 = vld [vmem:[#allocation2] sm:$0x1]
    %v4093 = vlaneseq
    %v4094 = vshrl.u32 %v4093, 7
    %v4095 = vsub.s32 0, %v4094
    %v4096 = vrot.slane %v4091, %v4095
    %v4100 = vunpack.c.l.s4 1966171168
    %v4101 = vunpack.c.0.s8 %v4100
    %v4102 = vlaneseq
    %v4103 = vshrl.u32 %v4102, 7
    %v4104 = vsub.s32 %v4101, %v4103
    %v4105 = vrot.slane %v4042, %v4104
    %v4106 = vcombine.high %v4105, %v4105
    %v4108 = vunpack.c.l.s4 1966171168
    %v4109 = vunpack.c.0.s8 %v4108
    %v4110 = vlaneseq
    %v4111 = vshrl.u32 %v4110, 7
    %v4112 = vsub.s32 %v4109, %v4111
    %v4113 = vrot.slane %v4105, %v4112
    %v4115 = vunpack.c.l.s4 1966171168
    %v4116 = vunpack.c.0.s8 %v4115
    %v4117 = vlaneseq
    %v4118 = vshrl.u32 %v4117, 7
    %v4119 = vsub.s32 %v4116, %v4118
    %v4120 = vrot.slane %v4106, %v4119
    %v4121 = vcombine.high %v4113, %v4113
    %v4173 = vunpack.c.l.b16 %v4043
    %v4174 = vunpack.c.l.b16 %v4044
    %v4175 = vunpack.c.l.b16 %v4045
    %v4176 = vunpack.c.l.b16 %v4046
    %v4177 = vunpack.c.l.b16 %v4047
    %v4178 = vunpack.c.l.b16 %v4048
    %v4179 = vunpack.c.l.b16 %v4049
    %v4180 = vunpack.c.l.b16 %v4050
    %v4181 = vunpack.c.l.b16 %v4051
    %v4182 = vunpack.c.l.b16 %v4052
    %v4183 = vunpack.c.l.b16 %v4053
    %v4184 = vunpack.c.l.b16 %v4054
    %v4185 = vunpack.c.l.b16 %v4055
    %v4186 = vunpack.c.l.b16 %v4056
    %v4187 = vunpack.c.l.b16 %v4057
    %v4188 = vunpack.c.l.b16 %v4058
    %v4189 = vunpack.c.l.b16 %v4059
    %v4190 = vunpack.c.l.b16 %v4060
    %v4191 = vunpack.c.l.b16 %v4061
    %v4192 = vunpack.c.l.b16 %v4062
    %v4193 = vunpack.c.l.b16 %v4063
    %v4194 = vunpack.c.l.b16 %v4064
    %v4195 = vunpack.c.l.b16 %v4065
    %v4196 = vunpack.c.l.b16 %v4066
    %v4197 = vunpack.c.l.b16 %v4067
    %v4198 = vunpack.c.l.b16 %v4068
    %v4199 = vunpack.c.l.b16 %v4069
    %v4200 = vunpack.c.l.b16 %v4070
    %v4201 = vunpack.c.l.b16 %v4071
    %v4202 = vunpack.c.l.b16 %v4072
    %v4203 = vunpack.c.l.b16 %v4073
    %v4204 = vunpack.c.l.b16 %v4074
    %v4205 = vunpack.c.l.b16 %v4075
    %v4206 = vunpack.c.l.b16 %v4076
    %v4207 = vunpack.c.l.b16 %v4077
    %v4208 = vunpack.c.l.b16 %v4078
    %v4209 = vunpack.c.l.b16 %v4079
    %v4210 = vunpack.c.l.b16 %v4080
    %v4211 = vunpack.c.l.b16 %v4081
    %v4212 = vunpack.c.l.b16 %v4082
    %v4213 = vunpack.c.l.b16 %v4083
    %v4214 = vunpack.c.l.b16 %v4084
    %v4215 = vunpack.c.l.b16 %v4085
    %v4216 = vunpack.c.l.b16 %v4086
    %v4217 = vunpack.c.l.b16 %v4087
    %v4218 = vunpack.c.l.b16 %v4088
    %v4219 = vunpack.c.l.b16 %v4089
    %v4220 = vunpack.c.l.b16 %v4090
    %v4221 = vpack.c.b16 %v4174, %v4173
    %v4222 = vpack.c.b16 %v4176, %v4175
    %v4223 = vpack.c.b16 %v4178, %v4177
    %v4224 = vpack.c.b16 %v4180, %v4179
    %v4225 = vpack.c.b16 %v4182, %v4181
    %v4226 = vpack.c.b16 %v4184, %v4183
    %v4227 = vpack.c.b16 %v4186, %v4185
    %v4228 = vpack.c.b16 %v4188, %v4187
    %v4229 = vpack.c.b16 %v4190, %v4189
    %v4230 = vpack.c.b16 %v4192, %v4191
    %v4231 = vpack.c.b16 %v4194, %v4193
    %v4232 = vpack.c.b16 %v4196, %v4195
    %v4233 = vpack.c.b16 %v4198, %v4197
    %v4234 = vpack.c.b16 %v4200, %v4199
    %v4235 = vpack.c.b16 %v4202, %v4201
    %v4236 = vpack.c.b16 %v4204, %v4203
    %v4237 = vpack.c.b16 %v4206, %v4205
    %v4238 = vpack.c.b16 %v4208, %v4207
    %v4239 = vpack.c.b16 %v4210, %v4209
    %v4240 = vpack.c.b16 %v4212, %v4211
    %v4241 = vpack.c.b16 %v4214, %v4213
    %v4242 = vpack.c.b16 %v4216, %v4215
    %v4243 = vpack.c.b16 %v4218, %v4217
    %v4244 = vpack.c.b16 %v4220, %v4219
    %4269 = vmatprep.subr.bf16.mxu0 0
    %4270 = vmatpush1.bf16.msra.mxu0 %v4221
    %4271 = vmatprep.subr.bf16.mxu0 0
    %4272 = vmatpush1.bf16.msra.mxu0 %v4222
    %4273 = vmatprep.subr.bf16.mxu0 0
    %4274 = vmatpush1.bf16.msra.mxu0 %v4223
    %4275 = vmatprep.subr.bf16.mxu0 0
    %4276 = vmatpush1.bf16.msra.mxu0 %v4224
    %4277 = vmatprep.subr.bf16.mxu0 0
    %4278 = vmatpush1.bf16.msra.mxu0 %v4225
    %4279 = vmatprep.subr.bf16.mxu0 0
    %4280 = vmatpush1.bf16.msra.mxu0 %v4226
    %4281 = vmatprep.subr.bf16.mxu0 0
    %4282 = vmatpush1.bf16.msra.mxu0 %v4227
    %4283 = vmatprep.subr.bf16.mxu0 0
    %4284 = vmatpush1.bf16.msra.mxu0 %v4228
    %4285 = vmatprep.subr.bf16.mxu0 0
    %4286 = vmatpush1.bf16.msra.mxu0 %v4229
    %4287 = vmatprep.subr.bf16.mxu0 0
    %4288 = vmatpush1.bf16.msra.mxu0 %v4230
    %4289 = vmatprep.subr.bf16.mxu0 0
    %4290 = vmatpush1.bf16.msra.mxu0 %v4231
    %4291 = vmatprep.subr.bf16.mxu0 0
    %4292 = vmatpush1.bf16.msra.mxu0 %v4232
    %4293 = vmatprep.subr.bf16.mxu0 0
    %4294 = vmatpush1.bf16.msra.mxu0 %v4233
    %4295 = vmatprep.subr.bf16.mxu0 0
    %4296 = vmatpush1.bf16.msra.mxu0 %v4234
    %4297 = vmatprep.subr.bf16.mxu0 0
    %4298 = vmatpush1.bf16.msra.mxu0 %v4235
    %4299 = vmatprep.subr.bf16.mxu0 0
    %4300 = vmatpush1.bf16.msra.mxu0 %v4236
    %4301 = vmatprep.mubr.bf16.mxu0 %v4120
    %4302 = vmatmul.mubr.bf16.gmra.mrb[0].mxu0 %v4113
    %v4303 = vpop.f32.mrb[0].mxu0
    %v4304 = vadd.f32 %v4096, %v4303
    %v4305 = vpop.f32.mrb[0].mxu0
    %v4306 = vpop.f32.mrb[0].mxu0
    %v4307 = vpop.f32.mrb[0].mxu0
    %4308 = vdwg.mxu0
    %4309 = vmatprep.subr.bf16.mxu0 0
    %4310 = vmatpush1.bf16.msra.mxu0 %v4237
    %4311 = vmatprep.subr.bf16.mxu0 0
    %4312 = vmatpush1.bf16.msra.mxu0 %v4238
    %4313 = vmatprep.subr.bf16.mxu0 0
    %4314 = vmatpush1.bf16.msra.mxu0 %v4239
    %4315 = vmatprep.subr.bf16.mxu0 0
    %4316 = vmatpush1.bf16.msra.mxu0 %v4240
    %4317 = vmatprep.subr.bf16.mxu0 0
    %4318 = vmatpush1.bf16.msra.mxu0 %v4241
    %4319 = vmatprep.subr.bf16.mxu0 0
    %4320 = vmatpush1.bf16.msra.mxu0 %v4242
    %4321 = vmatprep.subr.bf16.mxu0 0
    %4322 = vmatpush1.bf16.msra.mxu0 %v4243
    %4323 = vmatprep.subr.bf16.mxu0 0
    %4324 = vmatpush1.bf16.msra.mxu0 %v4244
    %4325 = vmatprep.subr.bf16.mxu0 0
    %4326 = vmatpush1.bf16.msra.mxu0 0
    %4327 = vmatprep.subr.bf16.mxu0 0
    %4328 = vmatpush1.bf16.msra.mxu0 0
    %4329 = vmatprep.subr.bf16.mxu0 0
    %4330 = vmatpush1.bf16.msra.mxu0 0
    %4331 = vmatprep.subr.bf16.mxu0 0
    %4332 = vmatpush1.bf16.msra.mxu0 0
    %4333 = vmatprep.subr.bf16.mxu0 0
    %4334 = vmatpush1.bf16.msra.mxu0 0
    %4335 = vmatprep.subr.bf16.mxu0 0
    %4336 = vmatpush1.bf16.msra.mxu0 0
    %4337 = vmatprep.subr.bf16.mxu0 0
    %4338 = vmatpush1.bf16.msra.mxu0 0
    %4339 = vmatprep.subr.bf16.mxu0 0
    %4340 = vmatpush1.bf16.msra.mxu0 0
    %4341 = vmatprep.mubr.bf16.mxu0 0
    %4342 = vmatmul.mubr.bf16.gmra.mrb[0].mxu0 %v4121
    %v4343 = vpop.f32.mrb[0].mxu0
    %v4344 = vadd.f32 %v4304, %v4343
    %v4345 = vpop.f32.mrb[0].mxu0
    %v4346 = vpop.f32.mrb[0].mxu0
    %v4347 = vpop.f32.mrb[0].mxu0
    %4348 = vdwg.mxu0
    %v4349 = vtanh.pop %v4344
    %vm4350 = vcmask 1024
    %4351 = vst.msk [vmem:[%s7] sm:$0x3] %vm4350, %v4349
    // Predicated region
    $region34: #{resnet_forward.3} parent=1 // pred_check
      _
    $region35: #{resnet_forward.3} parent=1 // pred_check_branch
      %4353 = sbr.rel (0) target = $region37
    $region36: #{resnet_forward.3} parent=1 // pred_region
      _
    $region37: #{resnet_forward.3} parent=1 // pred_fallthru
      _
    // Predicated region
    $region38: #{resnet_forward.3} parent=1 // pred_check
      _
    $region39: #{resnet_forward.3} parent=1 // pred_check_branch
      %4355 = sbr.rel (0) target = $region41
    $region40: #{resnet_forward.3} parent=1 // pred_region
      _
    $region41: #{resnet_forward.3} parent=1 // pred_fallthru
      _
    // Predicated region
    $region42: #{resnet_forward.3} parent=1 // pred_check
      _
    $region43: #{resnet_forward.3} parent=1 // pred_check_branch
      %4357 = sbr.rel (0) target = $region45
    $region44: #{resnet_forward.3} parent=1 // pred_region
      _
    $region45: #{resnet_forward.3} parent=1 // pred_fallthru
      _
    // Predicated region
    $region46: #{resnet_forward.3} parent=1 // pred_check
      _
    $region47: #{resnet_forward.3} parent=1 // pred_check_branch
      %4359 = sbr.rel (0) target = $region49
    $region48: #{resnet_forward.3} parent=1 // pred_region
      _
    $region49: #{resnet_forward.3} parent=1 // pred_fallthru
      _
    %4360 = vsyncpa [#allocation4], 1
    %4361 = vsyncpa [#allocation6], 1

// kernel: resnet_forward.2
$region0: #{resnet_forward.2}
  #allocation0 [shape = 'u32[]', space=smem, size = 0x4, offset = 0x4, fixed_abs, tag = 'smem constant byte address 0x4 - core index']
  #allocation1 [shape = 'u32[144,128]{1,0:T(1,128)}', space=vmem, size = 0x12000, scoped, tag = 'internal scratch']
  #allocation2 [shape = 'f32[2,10,10,32]{3,2,1,0:T(8,128)}', space=vmem, size = 0x28000, scoped, tag = 'scratch operand']
  %s0 = inlined_call_operand.hbm [shape: f32[2,8,8,13], index: 0, kind: input, shape index: {}]
  %s1 = inlined_call_operand.vmem [shape: bf16[5,288,32], index: 1, kind: input, shape index: {}]
  %s2 = inlined_call_operand.hbm [shape: f32[5,1,32], index: 2, kind: input, shape index: {}]
  %s3 = inlined_call_operand.hbm [shape: f32[5,1,32], index: 3, kind: input, shape index: {}]
  %s4 = inlined_call_operand.hbm [shape: bf16[288,128], index: 4, kind: input, shape index: {}]
  %s5 = inlined_call_operand.hbm [shape: f32[1,128], index: 5, kind: input, shape index: {}]
  %s6 = inlined_call_operand.hbm [shape: f32[1,128], index: 6, kind: input, shape index: {}]
  %s7 = inlined_call_operand.vmem [shape: bf16[128,128], index: 7, kind: output, shape index: {}]
  %s8 = sld [smem:[#allocation0]]
  $region62: #{resnet_forward.2} parent=0
    _
  %s10 = ssub.s32 1, %s8
  %s11 = scalar_select 0, %s10, %s8
  $region1: #{resnet_forward.2} parent=0
    #allocation3 [shape = 'u8[65536]{0}', space=vmem, size = 0x10000, scoped, tag = 'input window, operand 0, single buffered']
    #allocation4 [shape = 's32[1]{0}', space=sflag, size = 0x4, scoped, tag = 'scoped memory for resnet_forward.2']
    #allocation5 [shape = 'u8[2560]{0}', space=vmem, size = 0xc00, scoped, tag = 'input window, operand 2, single buffered']
    #allocation6 [shape = 's32[1]{0}', space=sflag, size = 0x4, scoped, tag = 'scoped memory for resnet_forward.2']
    #allocation7 [shape = 'u8[2560]{0}', space=vmem, size = 0xc00, scoped, tag = 'input window, operand 3, single buffered']
    #allocation8 [shape = 'u8[73728]{0}', space=vmem, size = 0x12000, scoped, tag = 'input window, operand 4, single buffered']
    #allocation9 [shape = 's32[1]{0}', space=sflag, size = 0x4, scoped, tag = 'scoped memory for resnet_forward.2']
    #allocation10 [shape = 'u8[512]{0}', space=vmem, size = 0x400, scoped, tag = 'input window, operand 5, single buffered']
    #allocation11 [shape = 'u8[512]{0}', space=vmem, size = 0x400, scoped, tag = 'input window, operand 6, single buffered']
    #allocation12 [shape = 's32[1]{0}', space=sflag, size = 0x4, scoped, tag = 'scoped memory for resnet_forward.2']
    %12 = vsyncpa [#allocation4], 0
    %13 = vsyncpa [#allocation6], 0
    %14 = vsyncpa [#allocation9], 0
    %15 = vsyncpa [#allocation12], 0
    // Predicated region
    $region2: #{resnet_forward.2} parent=1 // pred_check
      _
    $region3: #{resnet_forward.2} parent=1 // pred_check_branch
      %17 = sbr.rel (0) target = $region5
    $region4: #{resnet_forward.2} parent=1 // pred_region
      %s19 = ssub.s32 2048, 2048
      %20 = vsyncadd [#allocation4], %s19
      %s21 = sshll.u32 [#allocation3], 4
      %s22 = int_to_ptr.vmem [resolvable:$true] %s21
      %27 = dma.hbm_to_vmem [thread:$0]  %s0, 2048, %s22, [#allocation4], 128, 128, 8
    $region5: #{resnet_forward.2} parent=1 // pred_fallthru
      _
    // Predicated region
    $region6: #{resnet_forward.2} parent=1 // pred_check
      _
    $region7: #{resnet_forward.2} parent=1 // pred_check_branch
      %29 = sbr.rel (0) target = $region9
    $region8: #{resnet_forward.2} parent=1 // pred_region
      _
    $region9: #{resnet_forward.2} parent=1 // pred_fallthru
      _
    // Predicated region
    $region10: #{resnet_forward.2} parent=1 // pred_check
      _
    $region11: #{resnet_forward.2} parent=1 // pred_check_branch
      %31 = sbr.rel (0) target = $region13
    $region12: #{resnet_forward.2} parent=1 // pred_region
      %s33 = ssub.s32 80, 80
      %34 = vsyncadd [#allocation6], %s33
      %s35 = sshll.u32 [#allocation5], 4
      %s36 = int_to_ptr.vmem [resolvable:$true] %s35
      %41 = dma.hbm_to_vmem [thread:$0]  %s2, 80, %s36, [#allocation6], 16, 16, 1
    $region13: #{resnet_forward.2} parent=1 // pred_fallthru
      _
    // Predicated region
    $region14: #{resnet_forward.2} parent=1 // pred_check
      _
    $region15: #{resnet_forward.2} parent=1 // pred_check_branch
      %43 = sbr.rel (0) target = $region17
    $region16: #{resnet_forward.2} parent=1 // pred_region
      %s45 = ssub.s32 80, 80
      %46 = vsyncadd [#allocation6], %s45
      %s47 = sshll.u32 [#allocation7], 4
      %s48 = int_to_ptr.vmem [resolvable:$true] %s47
      %53 = dma.hbm_to_vmem [thread:$0]  %s3, 80, %s48, [#allocation6], 16, 16, 1
    $region17: #{resnet_forward.2} parent=1 // pred_fallthru
      _
    // Predicated region
    $region18: #{resnet_forward.2} parent=1 // pred_check
      _
    $region19: #{resnet_forward.2} parent=1 // pred_check_branch
      %55 = sbr.rel (0) target = $region21
    $region20: #{resnet_forward.2} parent=1 // pred_region
      %s57 = ssub.s32 2304, 2304
      %58 = vsyncadd [#allocation9], %s57
      %s59 = sshll.u32 [#allocation8], 4
      %s60 = int_to_ptr.vmem [resolvable:$true] %s59
      %65 = dma.hbm_to_vmem [thread:$0]  %s4, 2304, %s60, [#allocation9], 64, 64, 4
    $region21: #{resnet_forward.2} parent=1 // pred_fallthru
      _
    // Predicated region
    $region22: #{resnet_forward.2} parent=1 // pred_check
      _
    $region23: #{resnet_forward.2} parent=1 // pred_check_branch
      %67 = sbr.rel (0) target = $region25
    $region24: #{resnet_forward.2} parent=1 // pred_region
      %s69 = ssub.s32 16, 16
      %70 = vsyncadd [#allocation9], %s69
      %s72 = sshll.u32 [#allocation10], 4
      %s73 = int_to_ptr.vmem [resolvable:$true] %s72
      %75 = dma.hbm_to_vmem [thread:$0]  %s5, 16, %s73, [#allocation9]
    $region25: #{resnet_forward.2} parent=1 // pred_fallthru
      _
    // Predicated region
    $region26: #{resnet_forward.2} parent=1 // pred_check
      _
    $region27: #{resnet_forward.2} parent=1 // pred_check_branch
      %77 = sbr.rel (0) target = $region29
    $region28: #{resnet_forward.2} parent=1 // pred_region
      %s79 = ssub.s32 16, 16
      %80 = vsyncadd [#allocation12], %s79
      %s82 = sshll.u32 [#allocation11], 4
      %s83 = int_to_ptr.vmem [resolvable:$true] %s82
      %85 = dma.hbm_to_vmem [thread:$0]  %s6, 16, %s83, [#allocation12]
    $region29: #{resnet_forward.2} parent=1 // pred_fallthru
      _
    // Predicated region
    $region30: #{resnet_forward.2} parent=1 // pred_check
      _
    $region31: #{resnet_forward.2} parent=1 // pred_check_branch
      %87 = sbr.rel (0) target = $region33
    $region32: #{resnet_forward.2} parent=1 // pred_region
      %88 = dma.done [#allocation4], 2048
    $region33: #{resnet_forward.2} parent=1 // pred_fallthru
      _
    // Predicated region
    $region34: #{resnet_forward.2} parent=1 // pred_check
      _
    $region35: #{resnet_forward.2} parent=1 // pred_check_branch
      %90 = sbr.rel (0) target = $region37
    $region36: #{resnet_forward.2} parent=1 // pred_region
      %91 = dma.done [#allocation6], 80
    $region37: #{resnet_forward.2} parent=1 // pred_fallthru
      _
    // Predicated region
    $region38: #{resnet_forward.2} parent=1 // pred_check
      _
    $region39: #{resnet_forward.2} parent=1 // pred_check_branch
      %93 = sbr.rel (0) target = $region41
    $region40: #{resnet_forward.2} parent=1 // pred_region
      %94 = dma.done [#allocation6], 80
    $region41: #{resnet_forward.2} parent=1 // pred_fallthru
      _
    // Predicated region
    $region42: #{resnet_forward.2} parent=1 // pred_check
      _
    $region43: #{resnet_forward.2} parent=1 // pred_check_branch
      %96 = sbr.rel (0) target = $region45
    $region44: #{resnet_forward.2} parent=1 // pred_region
      %97 = dma.done [#allocation9], 2304
    $region45: #{resnet_forward.2} parent=1 // pred_fallthru
      _
    // Predicated region
    $region46: #{resnet_forward.2} parent=1 // pred_check
      _
    $region47: #{resnet_forward.2} parent=1 // pred_check_branch
      %99 = sbr.rel (0) target = $region49
    $region48: #{resnet_forward.2} parent=1 // pred_region
      %100 = dma.done [#allocation9], 16
    $region49: #{resnet_forward.2} parent=1 // pred_fallthru
      _
    // Predicated region
    $region50: #{resnet_forward.2} parent=1 // pred_check
      _
    $region51: #{resnet_forward.2} parent=1 // pred_check_branch
      %102 = sbr.rel (0) target = $region53
    $region52: #{resnet_forward.2} parent=1 // pred_region
      %103 = dma.done [#allocation12], 16
    $region53: #{resnet_forward.2} parent=1 // pred_fallthru
      _
    %vm105 = vcmask 261120
    %106 = vst.msk [vmem:[#allocation2] sm:$0xff] %vm105, 0.0
    %vm107 = vcmask 254976
    %108 = vst.msk [vmem:[#allocation2 + $0x8] sm:$0x3] %vm107, 0.0
    %109 = vst.msk [vmem:[#allocation2 + $0x10] sm:$0xff] %vm105, 0.0
    %110 = vst.msk [vmem:[#allocation2 + $0x18] sm:$0x3] %vm107, 0.0
    %111 = vst.msk [vmem:[#allocation2 + $0x20] sm:$0xff] %vm105, 0.0
    %112 = vst.msk [vmem:[#allocation2 + $0x28] sm:$0x3] %vm107, 0.0
    %113 = vst.msk [vmem:[#allocation2 + $0x30] sm:$0xff] %vm105, 0.0
    %114 = vst.msk [vmem:[#allocation2 + $0x38] sm:$0x3] %vm107, 0.0
    %115 = vst.msk [vmem:[#allocation2 + $0x40] sm:$0xff] %vm105, 0.0
    %116 = vst.msk [vmem:[#allocation2 + $0x48] sm:$0x3] %vm107, 0.0
    %117 = vst.msk [vmem:[#allocation2 + $0x50] sm:$0xff] %vm105, 0.0
    %118 = vst.msk [vmem:[#allocation2 + $0x58] sm:$0x3] %vm107, 0.0
    %119 = vst.msk [vmem:[#allocation2 + $0x60] sm:$0xff] %vm105, 0.0
    %120 = vst.msk [vmem:[#allocation2 + $0x68] sm:$0x3] %vm107, 0.0
    %121 = vst.msk [vmem:[#allocation2 + $0x70] sm:$0xff] %vm105, 0.0
    %122 = vst.msk [vmem:[#allocation2 + $0x78] sm:$0x3] %vm107, 0.0
    %123 = vst.msk [vmem:[#allocation2 + $0x80] sm:$0xff] %vm105, 0.0
    %124 = vst.msk [vmem:[#allocation2 + $0x88] sm:$0x3] %vm107, 0.0
    %125 = vst.msk [vmem:[#allocation2 + $0x90] sm:$0xff] %vm105, 0.0
    %126 = vst.msk [vmem:[#allocation2 + $0x98] sm:$0x3] %vm107, 0.0
    %127 = vst.msk [vmem:[#allocation2 + $0xa0] sm:$0xff] %vm105, 0.0
    %128 = vst.msk [vmem:[#allocation2 + $0xa8] sm:$0x3] %vm107, 0.0
    %129 = vst.msk [vmem:[#allocation2 + $0xb0] sm:$0xff] %vm105, 0.0
    %130 = vst.msk [vmem:[#allocation2 + $0xb8] sm:$0x3] %vm107, 0.0
    %131 = vst.msk [vmem:[#allocation2 + $0xc0] sm:$0xff] %vm105, 0.0
    %132 = vst.msk [vmem:[#allocation2 + $0xc8] sm:$0x3] %vm107, 0.0
    %133 = vst.msk [vmem:[#allocation2 + $0xd0] sm:$0xff] %vm105, 0.0
    %134 = vst.msk [vmem:[#allocation2 + $0xd8] sm:$0x3] %vm107, 0.0
    %135 = vst.msk [vmem:[#allocation2 + $0xe0] sm:$0xff] %vm105, 0.0
    %136 = vst.msk [vmem:[#allocation2 + $0xe8] sm:$0x3] %vm107, 0.0
    %137 = vst.msk [vmem:[#allocation2 + $0xf0] sm:$0xff] %vm105, 0.0
    %138 = vst.msk [vmem:[#allocation2 + $0xf8] sm:$0x3] %vm107, 0.0
    %139 = vst.msk [vmem:[#allocation2 + $0x100] sm:$0xff] %vm105, 0.0
    %140 = vst.msk [vmem:[#allocation2 + $0x108] sm:$0x3] %vm107, 0.0
    %141 = vst.msk [vmem:[#allocation2 + $0x110] sm:$0xff] %vm105, 0.0
    %142 = vst.msk [vmem:[#allocation2 + $0x118] sm:$0x3] %vm107, 0.0
    %143 = vst.msk [vmem:[#allocation2 + $0x120] sm:$0xff] %vm105, 0.0
    %144 = vst.msk [vmem:[#allocation2 + $0x128] sm:$0x3] %vm107, 0.0
    %145 = vst.msk [vmem:[#allocation2 + $0x130] sm:$0xff] %vm105, 0.0
    %146 = vst.msk [vmem:[#allocation2 + $0x138] sm:$0x3] %vm107, 0.0
    %v147 = vld [vmem:[#allocation3] sm:$0xff]
    %v148 = vld [vmem:[#allocation3 + $0x8] sm:$0xff]
    %v149 = vld [vmem:[#allocation3 + $0x10] sm:$0xff]
    %v150 = vld [vmem:[#allocation3 + $0x18] sm:$0xff]
    %v151 = vld [vmem:[#allocation3 + $0x20] sm:$0xff]
    %v152 = vld [vmem:[#allocation3 + $0x28] sm:$0xff]
    %v153 = vld [vmem:[#allocation3 + $0x30] sm:$0xff]
    %v154 = vld [vmem:[#allocation3 + $0x38] sm:$0xff]
    %v155 = vld [vmem:[#allocation3 + $0x40] sm:$0xff]
    %v156 = vld [vmem:[#allocation3 + $0x48] sm:$0xff]
    %v157 = vld [vmem:[#allocation3 + $0x50] sm:$0xff]
    %v158 = vld [vmem:[#allocation3 + $0x58] sm:$0xff]
    %v159 = vld [vmem:[#allocation3 + $0x60] sm:$0xff]
    %v160 = vld [vmem:[#allocation3 + $0x68] sm:$0xff]
    %v161 = vld [vmem:[#allocation3 + $0x70] sm:$0xff]
    %v162 = vld [vmem:[#allocation3 + $0x78] sm:$0xff]
    %s163 = scalar_lea.vmem [#allocation2], 16
    %vm164 = vcmask 105472
    %165 = vst.msk [vmem:[%s163 + $0x1] sm:$0xff] %vm164, %v147
    %166 = vst.msk [vmem:[%s163 + $0x11] sm:$0xff] %vm164, %v148
    %167 = vst.msk [vmem:[%s163 + $0x21] sm:$0xff] %vm164, %v149
    %168 = vst.msk [vmem:[%s163 + $0x31] sm:$0xff] %vm164, %v150
    %169 = vst.msk [vmem:[%s163 + $0x41] sm:$0xff] %vm164, %v151
    %170 = vst.msk [vmem:[%s163 + $0x51] sm:$0xff] %vm164, %v152
    %171 = vst.msk [vmem:[%s163 + $0x61] sm:$0xff] %vm164, %v153
    %172 = vst.msk [vmem:[%s163 + $0x71] sm:$0xff] %vm164, %v154
    %173 = vst.msk [vmem:[%s163 + $0xa1] sm:$0xff] %vm164, %v155
    %174 = vst.msk [vmem:[%s163 + $0xb1] sm:$0xff] %vm164, %v156
    %175 = vst.msk [vmem:[%s163 + $0xc1] sm:$0xff] %vm164, %v157
    %176 = vst.msk [vmem:[%s163 + $0xd1] sm:$0xff] %vm164, %v158
    %177 = vst.msk [vmem:[%s163 + $0xe1] sm:$0xff] %vm164, %v159
    %178 = vst.msk [vmem:[%s163 + $0xf1] sm:$0xff] %vm164, %v160
    %179 = vst.msk [vmem:[%s163 + $0x101] sm:$0xff] %vm164, %v161
    %180 = vst.msk [vmem:[%s163 + $0x111] sm:$0xff] %vm164, %v162
    %v181 = vld [vmem:[#allocation2] sm:$0xff]
    %v182 = vld [vmem:[#allocation2 + $0x10] sm:$0xff]
    %v183 = vld [vmem:[#allocation2 + $0x20] sm:$0xff]
    %v184 = vld [vmem:[#allocation2 + $0x30] sm:$0xff]
    %v185 = vld [vmem:[#allocation2 + $0x40] sm:$0xff]
    %v186 = vld [vmem:[#allocation2 + $0x50] sm:$0xff]
    %v187 = vld [vmem:[#allocation2 + $0x60] sm:$0xff]
    %v188 = vld [vmem:[#allocation2 + $0x70] sm:$0xff]
    %v189 = vld [vmem:[#allocation2 + $0xa0] sm:$0xff]
    %v190 = vld [vmem:[#allocation2 + $0xb0] sm:$0xff]
    %v191 = vld [vmem:[#allocation2 + $0xc0] sm:$0xff]
    %v192 = vld [vmem:[#allocation2 + $0xd0] sm:$0xff]
    %v193 = vld [vmem:[#allocation2 + $0xe0] sm:$0xff]
    %v194 = vld [vmem:[#allocation2 + $0xf0] sm:$0xff]
    %v195 = vld [vmem:[#allocation2 + $0x100] sm:$0xff]
    %v196 = vld [vmem:[#allocation2 + $0x110] sm:$0xff]
    %v197 = vpack.c.bf16 %v181, %v181
    %v198 = vpack.c.bf16 %v182, %v182
    %v199 = vpack.c.bf16 %v183, %v183
    %v200 = vpack.c.bf16 %v184, %v184
    %v201 = vpack.c.bf16 %v185, %v185
    %v202 = vpack.c.bf16 %v186, %v186
    %v203 = vpack.c.bf16 %v187, %v187
    %v204 = vpack.c.bf16 %v188, %v188
    %v205 = vpack.c.bf16 %v189, %v189
    %v206 = vpack.c.bf16 %v190, %v190
    %v207 = vpack.c.bf16 %v191, %v191
    %v208 = vpack.c.bf16 %v192, %v192
    %v209 = vpack.c.bf16 %v193, %v193
    %v210 = vpack.c.bf16 %v194, %v194
    %v211 = vpack.c.bf16 %v195, %v195
    %v212 = vpack.c.bf16 %v196, %v196
    %v213 = vld [vmem:[#allocation2 + $0x1] sm:$0xff]
    %v214 = vld [vmem:[#allocation2 + $0x11] sm:$0xff]
    %v215 = vld [vmem:[#allocation2 + $0x21] sm:$0xff]
    %v216 = vld [vmem:[#allocation2 + $0x31] sm:$0xff]
    %v217 = vld [vmem:[#allocation2 + $0x41] sm:$0xff]
    %v218 = vld [vmem:[#allocation2 + $0x51] sm:$0xff]
    %v219 = vld [vmem:[#allocation2 + $0x61] sm:$0xff]
    %v220 = vld [vmem:[#allocation2 + $0x71] sm:$0xff]
    %v221 = vld [vmem:[#allocation2 + $0xa1] sm:$0xff]
    %v222 = vld [vmem:[#allocation2 + $0xb1] sm:$0xff]
    %v223 = vld [vmem:[#allocation2 + $0xc1] sm:$0xff]
    %v224 = vld [vmem:[#allocation2 + $0xd1] sm:$0xff]
    %v225 = vld [vmem:[#allocation2 + $0xe1] sm:$0xff]
    %v226 = vld [vmem:[#allocation2 + $0xf1] sm:$0xff]
    %v227 = vld [vmem:[#allocation2 + $0x101] sm:$0xff]
    %v228 = vld [vmem:[#allocation2 + $0x111] sm:$0xff]
    %v229 = vpack.c.bf16 %v213, %v213
    %v230 = vpack.c.bf16 %v214, %v214
    %v231 = vpack.c.bf16 %v215, %v215
    %v232 = vpack.c.bf16 %v216, %v216
    %v233 = vpack.c.bf16 %v217, %v217
    %v234 = vpack.c.bf16 %v218, %v218
    %v235 = vpack.c.bf16 %v219, %v219
    %v236 = vpack.c.bf16 %v220, %v220
    %v237 = vpack.c.bf16 %v221, %v221
    %v238 = vpack.c.bf16 %v222, %v222
    %v239 = vpack.c.bf16 %v223, %v223
    %v240 = vpack.c.bf16 %v224, %v224
    %v241 = vpack.c.bf16 %v225, %v225
    %v242 = vpack.c.bf16 %v226, %v226
    %v243 = vpack.c.bf16 %v227, %v227
    %v244 = vpack.c.bf16 %v228, %v228
    %v245 = vld [vmem:[#allocation2 + $0x2] sm:$0xff]
    %v246 = vld [vmem:[#allocation2 + $0x12] sm:$0xff]
    %v247 = vld [vmem:[#allocation2 + $0x22] sm:$0xff]
    %v248 = vld [vmem:[#allocation2 + $0x32] sm:$0xff]
    %v249 = vld [vmem:[#allocation2 + $0x42] sm:$0xff]
    %v250 = vld [vmem:[#allocation2 + $0x52] sm:$0xff]
    %v251 = vld [vmem:[#allocation2 + $0x62] sm:$0xff]
    %v252 = vld [vmem:[#allocation2 + $0x72] sm:$0xff]
    %v253 = vld [vmem:[#allocation2 + $0xa2] sm:$0xff]
    %v254 = vld [vmem:[#allocation2 + $0xb2] sm:$0xff]
    %v255 = vld [vmem:[#allocation2 + $0xc2] sm:$0xff]
    %v256 = vld [vmem:[#allocation2 + $0xd2] sm:$0xff]
    %v257 = vld [vmem:[#allocation2 + $0xe2] sm:$0xff]
    %v258 = vld [vmem:[#allocation2 + $0xf2] sm:$0xff]
    %v259 = vld [vmem:[#allocation2 + $0x102] sm:$0xff]
    %v260 = vld [vmem:[#allocation2 + $0x112] sm:$0xff]
    %v261 = vpack.c.bf16 %v245, %v245
    %v262 = vpack.c.bf16 %v246, %v246
    %v263 = vpack.c.bf16 %v247, %v247
    %v264 = vpack.c.bf16 %v248, %v248
    %v265 = vpack.c.bf16 %v249, %v249
    %v266 = vpack.c.bf16 %v250, %v250
    %v267 = vpack.c.bf16 %v251, %v251
    %v268 = vpack.c.bf16 %v252, %v252
    %v269 = vpack.c.bf16 %v253, %v253
    %v270 = vpack.c.bf16 %v254, %v254
    %v271 = vpack.c.bf16 %v255, %v255
    %v272 = vpack.c.bf16 %v256, %v256
    %v273 = vpack.c.bf16 %v257, %v257
    %v274 = vpack.c.bf16 %v258, %v258
    %v275 = vpack.c.bf16 %v259, %v259
    %v276 = vpack.c.bf16 %v260, %v260
    %v277 = vld [vmem:[%s163] sm:$0xff]
    %v278 = vld [vmem:[%s163 + $0x10] sm:$0xff]
    %v279 = vld [vmem:[%s163 + $0x20] sm:$0xff]
    %v280 = vld [vmem:[%s163 + $0x30] sm:$0xff]
    %v281 = vld [vmem:[%s163 + $0x40] sm:$0xff]
    %v282 = vld [vmem:[%s163 + $0x50] sm:$0xff]
    %v283 = vld [vmem:[%s163 + $0x60] sm:$0xff]
    %v284 = vld [vmem:[%s163 + $0x70] sm:$0xff]
    %v285 = vld [vmem:[%s163 + $0xa0] sm:$0xff]
    %v286 = vld [vmem:[%s163 + $0xb0] sm:$0xff]
    %v287 = vld [vmem:[%s163 + $0xc0] sm:$0xff]
    %v288 = vld [vmem:[%s163 + $0xd0] sm:$0xff]
    %v289 = vld [vmem:[%s163 + $0xe0] sm:$0xff]
    %v290 = vld [vmem:[%s163 + $0xf0] sm:$0xff]
    %v291 = vld [vmem:[%s163 + $0x100] sm:$0xff]
    %v292 = vld [vmem:[%s163 + $0x110] sm:$0xff]
    %v293 = vpack.c.bf16 %v277, %v277
    %v294 = vpack.c.bf16 %v278, %v278
    %v295 = vpack.c.bf16 %v279, %v279
    %v296 = vpack.c.bf16 %v280, %v280
    %v297 = vpack.c.bf16 %v281, %v281
    %v298 = vpack.c.bf16 %v282, %v282
    %v299 = vpack.c.bf16 %v283, %v283
    %v300 = vpack.c.bf16 %v284, %v284
    %v301 = vpack.c.bf16 %v285, %v285
    %v302 = vpack.c.bf16 %v286, %v286
    %v303 = vpack.c.bf16 %v287, %v287
    %v304 = vpack.c.bf16 %v288, %v288
    %v305 = vpack.c.bf16 %v289, %v289
    %v306 = vpack.c.bf16 %v290, %v290
    %v307 = vpack.c.bf16 %v291, %v291
    %v308 = vpack.c.bf16 %v292, %v292
    %v309 = vld [vmem:[%s163 + $0x1] sm:$0xff]
    %v310 = vld [vmem:[%s163 + $0x11] sm:$0xff]
    %v311 = vld [vmem:[%s163 + $0x21] sm:$0xff]
    %v312 = vld [vmem:[%s163 + $0x31] sm:$0xff]
    %v313 = vld [vmem:[%s163 + $0x41] sm:$0xff]
    %v314 = vld [vmem:[%s163 + $0x51] sm:$0xff]
    %v315 = vld [vmem:[%s163 + $0x61] sm:$0xff]
    %v316 = vld [vmem:[%s163 + $0x71] sm:$0xff]
    %v317 = vld [vmem:[%s163 + $0xa1] sm:$0xff]
    %v318 = vld [vmem:[%s163 + $0xb1] sm:$0xff]
    %v319 = vld [vmem:[%s163 + $0xc1] sm:$0xff]
    %v320 = vld [vmem:[%s163 + $0xd1] sm:$0xff]
    %v321 = vld [vmem:[%s163 + $0xe1] sm:$0xff]
    %v322 = vld [vmem:[%s163 + $0xf1] sm:$0xff]
    %v323 = vld [vmem:[%s163 + $0x101] sm:$0xff]
    %v324 = vld [vmem:[%s163 + $0x111] sm:$0xff]
    %v325 = vpack.c.bf16 %v309, %v309
    %v326 = vpack.c.bf16 %v310, %v310
    %v327 = vpack.c.bf16 %v311, %v311
    %v328 = vpack.c.bf16 %v312, %v312
    %v329 = vpack.c.bf16 %v313, %v313
    %v330 = vpack.c.bf16 %v314, %v314
    %v331 = vpack.c.bf16 %v315, %v315
    %v332 = vpack.c.bf16 %v316, %v316
    %v333 = vpack.c.bf16 %v317, %v317
    %v334 = vpack.c.bf16 %v318, %v318
    %v335 = vpack.c.bf16 %v319, %v319
    %v336 = vpack.c.bf16 %v320, %v320
    %v337 = vpack.c.bf16 %v321, %v321
    %v338 = vpack.c.bf16 %v322, %v322
    %v339 = vpack.c.bf16 %v323, %v323
    %v340 = vpack.c.bf16 %v324, %v324
    %v341 = vld [vmem:[%s163 + $0x2] sm:$0xff]
    %v342 = vld [vmem:[%s163 + $0x12] sm:$0xff]
    %v343 = vld [vmem:[%s163 + $0x22] sm:$0xff]
    %v344 = vld [vmem:[%s163 + $0x32] sm:$0xff]
    %v345 = vld [vmem:[%s163 + $0x42] sm:$0xff]
    %v346 = vld [vmem:[%s163 + $0x52] sm:$0xff]
    %v347 = vld [vmem:[%s163 + $0x62] sm:$0xff]
    %v348 = vld [vmem:[%s163 + $0x72] sm:$0xff]
    %v349 = vld [vmem:[%s163 + $0xa2] sm:$0xff]
    %v350 = vld [vmem:[%s163 + $0xb2] sm:$0xff]
    %v351 = vld [vmem:[%s163 + $0xc2] sm:$0xff]
    %v352 = vld [vmem:[%s163 + $0xd2] sm:$0xff]
    %v353 = vld [vmem:[%s163 + $0xe2] sm:$0xff]
    %v354 = vld [vmem:[%s163 + $0xf2] sm:$0xff]
    %v355 = vld [vmem:[%s163 + $0x102] sm:$0xff]
    %v356 = vld [vmem:[%s163 + $0x112] sm:$0xff]
    %v357 = vpack.c.bf16 %v341, %v341
    %v358 = vpack.c.bf16 %v342, %v342
    %v359 = vpack.c.bf16 %v343, %v343
    %v360 = vpack.c.bf16 %v344, %v344
    %v361 = vpack.c.bf16 %v345, %v345
    %v362 = vpack.c.bf16 %v346, %v346
    %v363 = vpack.c.bf16 %v347, %v347
    %v364 = vpack.c.bf16 %v348, %v348
    %v365 = vpack.c.bf16 %v349, %v349
    %v366 = vpack.c.bf16 %v350, %v350
    %v367 = vpack.c.bf16 %v351, %v351
    %v368 = vpack.c.bf16 %v352, %v352
    %v369 = vpack.c.bf16 %v353, %v353
    %v370 = vpack.c.bf16 %v354, %v354
    %v371 = vpack.c.bf16 %v355, %v355
    %v372 = vpack.c.bf16 %v356, %v356
    %s373 = scalar_lea.vmem [#allocation2], 32
    %v374 = vld [vmem:[%s373] sm:$0xff]
    %v375 = vld [vmem:[%s373 + $0x10] sm:$0xff]
    %v376 = vld [vmem:[%s373 + $0x20] sm:$0xff]
    %v377 = vld [vmem:[%s373 + $0x30] sm:$0xff]
    %v378 = vld [vmem:[%s373 + $0x40] sm:$0xff]
    %v379 = vld [vmem:[%s373 + $0x50] sm:$0xff]
    %v380 = vld [vmem:[%s373 + $0x60] sm:$0xff]
    %v381 = vld [vmem:[%s373 + $0x70] sm:$0xff]
    %v382 = vld [vmem:[%s373 + $0xa0] sm:$0xff]
    %v383 = vld [vmem:[%s373 + $0xb0] sm:$0xff]
    %v384 = vld [vmem:[%s373 + $0xc0] sm:$0xff]
    %v385 = vld [vmem:[%s373 + $0xd0] sm:$0xff]
    %v386 = vld [vmem:[%s373 + $0xe0] sm:$0xff]
    %v387 = vld [vmem:[%s373 + $0xf0] sm:$0xff]
    %v388 = vld [vmem:[%s373 + $0x100] sm:$0xff]
    %v389 = vld [vmem:[%s373 + $0x110] sm:$0xff]
    %v390 = vpack.c.bf16 %v374, %v374
    %v391 = vpack.c.bf16 %v375, %v375
    %v392 = vpack.c.bf16 %v376, %v376
    %v393 = vpack.c.bf16 %v377, %v377
    %v394 = vpack.c.bf16 %v378, %v378
    %v395 = vpack.c.bf16 %v379, %v379
    %v396 = vpack.c.bf16 %v380, %v380
    %v397 = vpack.c.bf16 %v381, %v381
    %v398 = vpack.c.bf16 %v382, %v382
    %v399 = vpack.c.bf16 %v383, %v383
    %v400 = vpack.c.bf16 %v384, %v384
    %v401 = vpack.c.bf16 %v385, %v385
    %v402 = vpack.c.bf16 %v386, %v386
    %v403 = vpack.c.bf16 %v387, %v387
    %v404 = vpack.c.bf16 %v388, %v388
    %v405 = vpack.c.bf16 %v389, %v389
    %v406 = vld [vmem:[%s373 + $0x1] sm:$0xff]
    %v407 = vld [vmem:[%s373 + $0x11] sm:$0xff]
    %v408 = vld [vmem:[%s373 + $0x21] sm:$0xff]
    %v409 = vld [vmem:[%s373 + $0x31] sm:$0xff]
    %v410 = vld [vmem:[%s373 + $0x41] sm:$0xff]
    %v411 = vld [vmem:[%s373 + $0x51] sm:$0xff]
    %v412 = vld [vmem:[%s373 + $0x61] sm:$0xff]
    %v413 = vld [vmem:[%s373 + $0x71] sm:$0xff]
    %v414 = vld [vmem:[%s373 + $0xa1] sm:$0xff]
    %v415 = vld [vmem:[%s373 + $0xb1] sm:$0xff]
    %v416 = vld [vmem:[%s373 + $0xc1] sm:$0xff]
    %v417 = vld [vmem:[%s373 + $0xd1] sm:$0xff]
    %v418 = vld [vmem:[%s373 + $0xe1] sm:$0xff]
    %v419 = vld [vmem:[%s373 + $0xf1] sm:$0xff]
    %v420 = vld [vmem:[%s373 + $0x101] sm:$0xff]
    %v421 = vld [vmem:[%s373 + $0x111] sm:$0xff]
    %v422 = vpack.c.bf16 %v406, %v406
    %v423 = vpack.c.bf16 %v407, %v407
    %v424 = vpack.c.bf16 %v408, %v408
    %v425 = vpack.c.bf16 %v409, %v409
    %v426 = vpack.c.bf16 %v410, %v410
    %v427 = vpack.c.bf16 %v411, %v411
    %v428 = vpack.c.bf16 %v412, %v412
    %v429 = vpack.c.bf16 %v413, %v413
    %v430 = vpack.c.bf16 %v414, %v414
    %v431 = vpack.c.bf16 %v415, %v415
    %v432 = vpack.c.bf16 %v416, %v416
    %v433 = vpack.c.bf16 %v417, %v417
    %v434 = vpack.c.bf16 %v418, %v418
    %v435 = vpack.c.bf16 %v419, %v419
    %v436 = vpack.c.bf16 %v420, %v420
    %v437 = vpack.c.bf16 %v421, %v421
    %v438 = vld [vmem:[%s373 + $0x2] sm:$0xff]
    %v439 = vld [vmem:[%s373 + $0x12] sm:$0xff]
    %v440 = vld [vmem:[%s373 + $0x22] sm:$0xff]
    %v441 = vld [vmem:[%s373 + $0x32] sm:$0xff]
    %v442 = vld [vmem:[%s373 + $0x42] sm:$0xff]
    %v443 = vld [vmem:[%s373 + $0x52] sm:$0xff]
    %v444 = vld [vmem:[%s373 + $0x62] sm:$0xff]
    %v445 = vld [vmem:[%s373 + $0x72] sm:$0xff]
    %v446 = vld [vmem:[%s373 + $0xa2] sm:$0xff]
    %v447 = vld [vmem:[%s373 + $0xb2] sm:$0xff]
    %v448 = vld [vmem:[%s373 + $0xc2] sm:$0xff]
    %v449 = vld [vmem:[%s373 + $0xd2] sm:$0xff]
    %v450 = vld [vmem:[%s373 + $0xe2] sm:$0xff]
    %v451 = vld [vmem:[%s373 + $0xf2] sm:$0xff]
    %v452 = vld [vmem:[%s373 + $0x102] sm:$0xff]
    %v453 = vld [vmem:[%s373 + $0x112] sm:$0xff]
    %v454 = vpack.c.bf16 %v438, %v438
    %v455 = vpack.c.bf16 %v439, %v439
    %v456 = vpack.c.bf16 %v440, %v440
    %v457 = vpack.c.bf16 %v441, %v441
    %v458 = vpack.c.bf16 %v442, %v442
    %v459 = vpack.c.bf16 %v443, %v443
    %v460 = vpack.c.bf16 %v444, %v444
    %v461 = vpack.c.bf16 %v445, %v445
    %v462 = vpack.c.bf16 %v446, %v446
    %v463 = vpack.c.bf16 %v447, %v447
    %v464 = vpack.c.bf16 %v448, %v448
    %v465 = vpack.c.bf16 %v449, %v449
    %v466 = vpack.c.bf16 %v450, %v450
    %v467 = vpack.c.bf16 %v451, %v451
    %v468 = vpack.c.bf16 %v452, %v452
    %v469 = vpack.c.bf16 %v453, %v453
    %v486 = vunpack.c.l.b16 %v197
    %v487 = vunpack.c.l.b16 %v198
    %v488 = vunpack.c.l.b16 %v199
    %v489 = vunpack.c.l.b16 %v200
    %v490 = vunpack.c.l.b16 %v201
    %v491 = vunpack.c.l.b16 %v202
    %v492 = vunpack.c.l.b16 %v203
    %v493 = vunpack.c.l.b16 %v204
    %v494 = vunpack.c.l.b16 %v205
    %v495 = vunpack.c.l.b16 %v206
    %v496 = vunpack.c.l.b16 %v207
    %v497 = vunpack.c.l.b16 %v208
    %v498 = vunpack.c.l.b16 %v209
    %v499 = vunpack.c.l.b16 %v210
    %v500 = vunpack.c.l.b16 %v211
    %v501 = vunpack.c.l.b16 %v212
    %v502 = vpack.c.b16 %v487, %v486
    %v503 = vpack.c.b16 %v489, %v488
    %v504 = vpack.c.b16 %v491, %v490
    %v505 = vpack.c.b16 %v493, %v492
    %v506 = vpack.c.b16 %v495, %v494
    %v507 = vpack.c.b16 %v497, %v496
    %v508 = vpack.c.b16 %v499, %v498
    %v509 = vpack.c.b16 %v501, %v500
    %v526 = vunpack.c.l.b16 %v229
    %v527 = vunpack.c.l.b16 %v230
    %v528 = vunpack.c.l.b16 %v231
    %v529 = vunpack.c.l.b16 %v232
    %v530 = vunpack.c.l.b16 %v233
    %v531 = vunpack.c.l.b16 %v234
    %v532 = vunpack.c.l.b16 %v235
    %v533 = vunpack.c.l.b16 %v236
    %v534 = vunpack.c.l.b16 %v237
    %v535 = vunpack.c.l.b16 %v238
    %v536 = vunpack.c.l.b16 %v239
    %v537 = vunpack.c.l.b16 %v240
    %v538 = vunpack.c.l.b16 %v241
    %v539 = vunpack.c.l.b16 %v242
    %v540 = vunpack.c.l.b16 %v243
    %v541 = vunpack.c.l.b16 %v244
    %v542 = vpack.c.b16 %v527, %v526
    %v543 = vpack.c.b16 %v529, %v528
    %v544 = vpack.c.b16 %v531, %v530
    %v545 = vpack.c.b16 %v533, %v532
    %v546 = vpack.c.b16 %v535, %v534
    %v547 = vpack.c.b16 %v537, %v536
    %v548 = vpack.c.b16 %v539, %v538
    %v549 = vpack.c.b16 %v541, %v540
    %550 = vrot.lane.b32.xlu0 %v542, 32
    %v551 = vpop.permute.xlu0 %550
    %552 = vrot.lane.b32.xlu0 %v543, 32
    %v553 = vpop.permute.xlu0 %552
    %554 = vrot.lane.b32.xlu0 %v544, 32
    %v555 = vpop.permute.xlu0 %554
    %556 = vrot.lane.b32.xlu0 %v545, 32
    %v557 = vpop.permute.xlu0 %556
    %558 = vrot.lane.b32.xlu0 %v546, 32
    %v559 = vpop.permute.xlu0 %558
    %560 = vrot.lane.b32.xlu0 %v547, 32
    %v561 = vpop.permute.xlu0 %560
    %562 = vrot.lane.b32.xlu0 %v548, 32
    %v563 = vpop.permute.xlu0 %562
    %564 = vrot.lane.b32.xlu0 %v549, 32
    %v565 = vpop.permute.xlu0 %564
    %v582 = vunpack.c.l.b16 %v261
    %v583 = vunpack.c.l.b16 %v262
    %v584 = vunpack.c.l.b16 %v263
    %v585 = vunpack.c.l.b16 %v264
    %v586 = vunpack.c.l.b16 %v265
    %v587 = vunpack.c.l.b16 %v266
    %v588 = vunpack.c.l.b16 %v267
    %v589 = vunpack.c.l.b16 %v268
    %v590 = vunpack.c.l.b16 %v269
    %v591 = vunpack.c.l.b16 %v270
    %v592 = vunpack.c.l.b16 %v271
    %v593 = vunpack.c.l.b16 %v272
    %v594 = vunpack.c.l.b16 %v273
    %v595 = vunpack.c.l.b16 %v274
    %v596 = vunpack.c.l.b16 %v275
    %v597 = vunpack.c.l.b16 %v276
    %v598 = vpack.c.b16 %v583, %v582
    %v599 = vpack.c.b16 %v585, %v584
    %v600 = vpack.c.b16 %v587, %v586
    %v601 = vpack.c.b16 %v589, %v588
    %v602 = vpack.c.b16 %v591, %v590
    %v603 = vpack.c.b16 %v593, %v592
    %v604 = vpack.c.b16 %v595, %v594
    %v605 = vpack.c.b16 %v597, %v596
    %606 = vrot.lane.b32.xlu0 %v598, 64
    %v607 = vpop.permute.xlu0 %606
    %608 = vrot.lane.b32.xlu0 %v599, 64
    %v609 = vpop.permute.xlu0 %608
    %610 = vrot.lane.b32.xlu0 %v600, 64
    %v611 = vpop.permute.xlu0 %610
    %612 = vrot.lane.b32.xlu0 %v601, 64
    %v613 = vpop.permute.xlu0 %612
    %614 = vrot.lane.b32.xlu0 %v602, 64
    %v615 = vpop.permute.xlu0 %614
    %616 = vrot.lane.b32.xlu0 %v603, 64
    %v617 = vpop.permute.xlu0 %616
    %618 = vrot.lane.b32.xlu0 %v604, 64
    %v619 = vpop.permute.xlu0 %618
    %620 = vrot.lane.b32.xlu0 %v605, 64
    %v621 = vpop.permute.xlu0 %620
    %v638 = vunpack.c.l.b16 %v293
    %v639 = vunpack.c.l.b16 %v294
    %v640 = vunpack.c.l.b16 %v295
    %v641 = vunpack.c.l.b16 %v296
    %v642 = vunpack.c.l.b16 %v297
    %v643 = vunpack.c.l.b16 %v298
    %v644 = vunpack.c.l.b16 %v299
    %v645 = vunpack.c.l.b16 %v300
    %v646 = vunpack.c.l.b16 %v301
    %v647 = vunpack.c.l.b16 %v302
    %v648 = vunpack.c.l.b16 %v303
    %v649 = vunpack.c.l.b16 %v304
    %v650 = vunpack.c.l.b16 %v305
    %v651 = vunpack.c.l.b16 %v306
    %v652 = vunpack.c.l.b16 %v307
    %v653 = vunpack.c.l.b16 %v308
    %v654 = vpack.c.b16 %v639, %v638
    %v655 = vpack.c.b16 %v641, %v640
    %v656 = vpack.c.b16 %v643, %v642
    %v657 = vpack.c.b16 %v645, %v644
    %v658 = vpack.c.b16 %v647, %v646
    %v659 = vpack.c.b16 %v649, %v648
    %v660 = vpack.c.b16 %v651, %v650
    %v661 = vpack.c.b16 %v653, %v652
    %662 = vrot.lane.b32.xlu0 %v654, 96
    %v663 = vpop.permute.xlu0 %662
    %664 = vrot.lane.b32.xlu0 %v655, 96
    %v665 = vpop.permute.xlu0 %664
    %666 = vrot.lane.b32.xlu0 %v656, 96
    %v667 = vpop.permute.xlu0 %666
    %668 = vrot.lane.b32.xlu0 %v657, 96
    %v669 = vpop.permute.xlu0 %668
    %670 = vrot.lane.b32.xlu0 %v658, 96
    %v671 = vpop.permute.xlu0 %670
    %672 = vrot.lane.b32.xlu0 %v659, 96
    %v673 = vpop.permute.xlu0 %672
    %674 = vrot.lane.b32.xlu0 %v660, 96
    %v675 = vpop.permute.xlu0 %674
    %676 = vrot.lane.b32.xlu0 %v661, 96
    %v677 = vpop.permute.xlu0 %676
    %v694 = vunpack.c.l.b16 %v325
    %v695 = vunpack.c.l.b16 %v326
    %v696 = vunpack.c.l.b16 %v327
    %v697 = vunpack.c.l.b16 %v328
    %v698 = vunpack.c.l.b16 %v329
    %v699 = vunpack.c.l.b16 %v330
    %v700 = vunpack.c.l.b16 %v331
    %v701 = vunpack.c.l.b16 %v332
    %v702 = vunpack.c.l.b16 %v333
    %v703 = vunpack.c.l.b16 %v334
    %v704 = vunpack.c.l.b16 %v335
    %v705 = vunpack.c.l.b16 %v336
    %v706 = vunpack.c.l.b16 %v337
    %v707 = vunpack.c.l.b16 %v338
    %v708 = vunpack.c.l.b16 %v339
    %v709 = vunpack.c.l.b16 %v340
    %v710 = vpack.c.b16 %v695, %v694
    %v711 = vpack.c.b16 %v697, %v696
    %v712 = vpack.c.b16 %v699, %v698
    %v713 = vpack.c.b16 %v701, %v700
    %v714 = vpack.c.b16 %v703, %v702
    %v715 = vpack.c.b16 %v705, %v704
    %v716 = vpack.c.b16 %v707, %v706
    %v717 = vpack.c.b16 %v709, %v708
    %v734 = vunpack.c.l.b16 %v357
    %v735 = vunpack.c.l.b16 %v358
    %v736 = vunpack.c.l.b16 %v359
    %v737 = vunpack.c.l.b16 %v360
    %v738 = vunpack.c.l.b16 %v361
    %v739 = vunpack.c.l.b16 %v362
    %v740 = vunpack.c.l.b16 %v363
    %v741 = vunpack.c.l.b16 %v364
    %v742 = vunpack.c.l.b16 %v365
    %v743 = vunpack.c.l.b16 %v366
    %v744 = vunpack.c.l.b16 %v367
    %v745 = vunpack.c.l.b16 %v368
    %v746 = vunpack.c.l.b16 %v369
    %v747 = vunpack.c.l.b16 %v370
    %v748 = vunpack.c.l.b16 %v371
    %v749 = vunpack.c.l.b16 %v372
    %v750 = vpack.c.b16 %v735, %v734
    %v751 = vpack.c.b16 %v737, %v736
    %v752 = vpack.c.b16 %v739, %v738
    %v753 = vpack.c.b16 %v741, %v740
    %v754 = vpack.c.b16 %v743, %v742
    %v755 = vpack.c.b16 %v745, %v744
    %v756 = vpack.c.b16 %v747, %v746
    %v757 = vpack.c.b16 %v749, %v748
    %758 = vrot.lane.b32.xlu0 %v750, 32
    %v759 = vpop.permute.xlu0 %758
    %760 = vrot.lane.b32.xlu0 %v751, 32
    %v761 = vpop.permute.xlu0 %760
    %762 = vrot.lane.b32.xlu0 %v752, 32
    %v763 = vpop.permute.xlu0 %762
    %764 = vrot.lane.b32.xlu0 %v753, 32
    %v765 = vpop.permute.xlu0 %764
    %766 = vrot.lane.b32.xlu0 %v754, 32
    %v767 = vpop.permute.xlu0 %766
    %768 = vrot.lane.b32.xlu0 %v755, 32
    %v769 = vpop.permute.xlu0 %768
    %770 = vrot.lane.b32.xlu0 %v756, 32
    %v771 = vpop.permute.xlu0 %770
    %772 = vrot.lane.b32.xlu0 %v757, 32
    %v773 = vpop.permute.xlu0 %772
    %v790 = vunpack.c.l.b16 %v390
    %v791 = vunpack.c.l.b16 %v391
    %v792 = vunpack.c.l.b16 %v392
    %v793 = vunpack.c.l.b16 %v393
    %v794 = vunpack.c.l.b16 %v394
    %v795 = vunpack.c.l.b16 %v395
    %v796 = vunpack.c.l.b16 %v396
    %v797 = vunpack.c.l.b16 %v397
    %v798 = vunpack.c.l.b16 %v398
    %v799 = vunpack.c.l.b16 %v399
    %v800 = vunpack.c.l.b16 %v400
    %v801 = vunpack.c.l.b16 %v401
    %v802 = vunpack.c.l.b16 %v402
    %v803 = vunpack.c.l.b16 %v403
    %v804 = vunpack.c.l.b16 %v404
    %v805 = vunpack.c.l.b16 %v405
    %v806 = vpack.c.b16 %v791, %v790
    %v807 = vpack.c.b16 %v793, %v792
    %v808 = vpack.c.b16 %v795, %v794
    %v809 = vpack.c.b16 %v797, %v796
    %v810 = vpack.c.b16 %v799, %v798
    %v811 = vpack.c.b16 %v801, %v800
    %v812 = vpack.c.b16 %v803, %v802
    %v813 = vpack.c.b16 %v805, %v804
    %814 = vrot.lane.b32.xlu0 %v806, 64
    %v815 = vpop.permute.xlu0 %814
    %816 = vrot.lane.b32.xlu0 %v807, 64
    %v817 = vpop.permute.xlu0 %816
    %818 = vrot.lane.b32.xlu0 %v808, 64
    %v819 = vpop.permute.xlu0 %818
    %820 = vrot.lane.b32.xlu0 %v809, 64
    %v821 = vpop.permute.xlu0 %820
    %822 = vrot.lane.b32.xlu0 %v810, 64
    %v823 = vpop.permute.xlu0 %822
    %824 = vrot.lane.b32.xlu0 %v811, 64
    %v825 = vpop.permute.xlu0 %824
    %826 = vrot.lane.b32.xlu0 %v812, 64
    %v827 = vpop.permute.xlu0 %826
    %828 = vrot.lane.b32.xlu0 %v813, 64
    %v829 = vpop.permute.xlu0 %828
    %v846 = vunpack.c.l.b16 %v422
    %v847 = vunpack.c.l.b16 %v423
    %v848 = vunpack.c.l.b16 %v424
    %v849 = vunpack.c.l.b16 %v425
    %v850 = vunpack.c.l.b16 %v426
    %v851 = vunpack.c.l.b16 %v427
    %v852 = vunpack.c.l.b16 %v428
    %v853 = vunpack.c.l.b16 %v429
    %v854 = vunpack.c.l.b16 %v430
    %v855 = vunpack.c.l.b16 %v431
    %v856 = vunpack.c.l.b16 %v432
    %v857 = vunpack.c.l.b16 %v433
    %v858 = vunpack.c.l.b16 %v434
    %v859 = vunpack.c.l.b16 %v435
    %v860 = vunpack.c.l.b16 %v436
    %v861 = vunpack.c.l.b16 %v437
    %v862 = vpack.c.b16 %v847, %v846
    %v863 = vpack.c.b16 %v849, %v848
    %v864 = vpack.c.b16 %v851, %v850
    %v865 = vpack.c.b16 %v853, %v852
    %v866 = vpack.c.b16 %v855, %v854
    %v867 = vpack.c.b16 %v857, %v856
    %v868 = vpack.c.b16 %v859, %v858
    %v869 = vpack.c.b16 %v861, %v860
    %870 = vrot.lane.b32.xlu0 %v862, 96
    %v871 = vpop.permute.xlu0 %870
    %872 = vrot.lane.b32.xlu0 %v863, 96
    %v873 = vpop.permute.xlu0 %872
    %874 = vrot.lane.b32.xlu0 %v864, 96
    %v875 = vpop.permute.xlu0 %874
    %876 = vrot.lane.b32.xlu0 %v865, 96
    %v877 = vpop.permute.xlu0 %876
    %878 = vrot.lane.b32.xlu0 %v866, 96
    %v879 = vpop.permute.xlu0 %878
    %880 = vrot.lane.b32.xlu0 %v867, 96
    %v881 = vpop.permute.xlu0 %880
    %882 = vrot.lane.b32.xlu0 %v868, 96
    %v883 = vpop.permute.xlu0 %882
    %884 = vrot.lane.b32.xlu0 %v869, 96
    %v885 = vpop.permute.xlu0 %884
    %v902 = vunpack.c.l.b16 %v454
    %v903 = vunpack.c.l.b16 %v455
    %v904 = vunpack.c.l.b16 %v456
    %v905 = vunpack.c.l.b16 %v457
    %v906 = vunpack.c.l.b16 %v458
    %v907 = vunpack.c.l.b16 %v459
    %v908 = vunpack.c.l.b16 %v460
    %v909 = vunpack.c.l.b16 %v461
    %v910 = vunpack.c.l.b16 %v462
    %v911 = vunpack.c.l.b16 %v463
    %v912 = vunpack.c.l.b16 %v464
    %v913 = vunpack.c.l.b16 %v465
    %v914 = vunpack.c.l.b16 %v466
    %v915 = vunpack.c.l.b16 %v467
    %v916 = vunpack.c.l.b16 %v468
    %v917 = vunpack.c.l.b16 %v469
    %v918 = vpack.c.b16 %v903, %v902
    %v919 = vpack.c.b16 %v905, %v904
    %v920 = vpack.c.b16 %v907, %v906
    %v921 = vpack.c.b16 %v909, %v908
    %v922 = vpack.c.b16 %v911, %v910
    %v923 = vpack.c.b16 %v913, %v912
    %v924 = vpack.c.b16 %v915, %v914
    %v925 = vpack.c.b16 %v917, %v916
    %v928 = vsel %vm105, %v502, %v551
    %v931 = vsel %vm105, %v503, %v553
    %v934 = vsel %vm105, %v504, %v555
    %v937 = vsel %vm105, %v505, %v557
    %v940 = vsel %vm105, %v506, %v559
    %v943 = vsel %vm105, %v507, %v561
    %v946 = vsel %vm105, %v508, %v563
    %v949 = vsel %vm105, %v509, %v565
    %vm950 = vcmask 523264
    %v952 = vsel %vm950, %v928, %v607
    %v954 = vsel %vm950, %v931, %v609
    %v956 = vsel %vm950, %v934, %v611
    %v958 = vsel %vm950, %v937, %v613
    %v960 = vsel %vm950, %v940, %v615
    %v962 = vsel %vm950, %v943, %v617
    %v964 = vsel %vm950, %v946, %v619
    %v966 = vsel %vm950, %v949, %v621
    %vm967 = vcmask 785408
    %v969 = vsel %vm967, %v952, %v663
    %v972 = vsel %vm967, %v954, %v665
    %v975 = vsel %vm967, %v956, %v667
    %v978 = vsel %vm967, %v958, %v669
    %v981 = vsel %vm967, %v960, %v671
    %v984 = vsel %vm967, %v962, %v673
    %v987 = vsel %vm967, %v964, %v675
    %v990 = vsel %vm967, %v966, %v677
    %v994 = vsel %vm105, %v710, %v759
    %v997 = vsel %vm105, %v711, %v761
    %v1000 = vsel %vm105, %v712, %v763
    %v1003 = vsel %vm105, %v713, %v765
    %v1006 = vsel %vm105, %v714, %v767
    %v1009 = vsel %vm105, %v715, %v769
    %v1012 = vsel %vm105, %v716, %v771
    %v1015 = vsel %vm105, %v717, %v773
    %v1017 = vsel %vm950, %v994, %v815
    %v1019 = vsel %vm950, %v997, %v817
    %v1021 = vsel %vm950, %v1000, %v819
    %v1023 = vsel %vm950, %v1003, %v821
    %v1025 = vsel %vm950, %v1006, %v823
    %v1027 = vsel %vm950, %v1009, %v825
    %v1029 = vsel %vm950, %v1012, %v827
    %v1031 = vsel %vm950, %v1015, %v829
    %v1033 = vsel %vm967, %v1017, %v871
    %v1036 = vsel %vm967, %v1019, %v873
    %v1039 = vsel %vm967, %v1021, %v875
    %v1042 = vsel %vm967, %v1023, %v877
    %v1045 = vsel %vm967, %v1025, %v879
    %v1048 = vsel %vm967, %v1027, %v881
    %v1051 = vsel %vm967, %v1029, %v883
    %v1054 = vsel %vm967, %v1031, %v885
    %v1056 = vld [vmem:[%s1] sm:$0xf]
    %v1057 = vld [vmem:[%s1 + $0x4] sm:$0xf]
    %v1058 = vld [vmem:[%s1 + $0x8] sm:$0xf]
    %v1059 = vld [vmem:[%s1 + $0xc] sm:$0xf]
    %v1060 = vld [vmem:[%s1 + $0x10] sm:$0xf]
    %v1061 = vld [vmem:[%s1 + $0x14] sm:$0xf]
    %v1062 = vld [vmem:[%s1 + $0x18] sm:$0xf]
    %v1063 = vld [vmem:[%s1 + $0x1c] sm:$0xf]
    %v1064 = vld [vmem:[%s1 + $0x20] sm:$0xf]
    %v1065 = vld [vmem:[%s1 + $0x24] sm:$0xf]
    %v1066 = vld [vmem:[%s1 + $0x28] sm:$0xf]
    %v1067 = vld [vmem:[%s1 + $0x2c] sm:$0xf]
    %v1068 = vld [vmem:[%s1 + $0x30] sm:$0xf]
    %v1069 = vld [vmem:[%s1 + $0x34] sm:$0xf]
    %v1070 = vld [vmem:[%s1 + $0x38] sm:$0xf]
    %v1071 = vld [vmem:[%s1 + $0x3c] sm:$0xf]
    %v1072 = vld [vmem:[%s1 + $0x40] sm:$0xf]
    %v1073 = vld [vmem:[%s1 + $0x44] sm:$0xf]
    %v1074 = vld [vmem:[%s1 + $0x48] sm:$0xf]
    %v1075 = vld [vmem:[%s1 + $0x4c] sm:$0xf]
    %v1076 = vld [vmem:[%s1 + $0x50] sm:$0xf]
    %v1077 = vld [vmem:[%s1 + $0x54] sm:$0xf]
    %v1078 = vld [vmem:[%s1 + $0x58] sm:$0xf]
    %v1079 = vld [vmem:[%s1 + $0x5c] sm:$0xf]
    %v1080 = vld [vmem:[%s1 + $0x60] sm:$0xf]
    %v1081 = vld [vmem:[%s1 + $0x64] sm:$0xf]
    %v1082 = vld [vmem:[%s1 + $0x68] sm:$0xf]
    %v1083 = vld [vmem:[%s1 + $0x6c] sm:$0xf]
    %v1084 = vld [vmem:[%s1 + $0x70] sm:$0xf]
    %v1085 = vld [vmem:[%s1 + $0x74] sm:$0xf]
    %v1086 = vld [vmem:[%s1 + $0x78] sm:$0xf]
    %v1087 = vld [vmem:[%s1 + $0x7c] sm:$0xf]
    %v1088 = vld [vmem:[%s1 + $0x80] sm:$0xf]
    %v1089 = vld [vmem:[%s1 + $0x84] sm:$0xf]
    %v1090 = vld [vmem:[%s1 + $0x88] sm:$0xf]
    %v1091 = vld [vmem:[%s1 + $0x8c] sm:$0xf]
    %v1092 = vld [vmem:[#allocation5] sm:$0x1]
    %v1093 = vld [vmem:[#allocation7] sm:$0x1]
    %v1130 = vunpack.c.l.b16 %v1056
    %v1131 = vunpack.c.l.b16 %v1057
    %v1132 = vunpack.c.l.b16 %v1058
    %v1133 = vunpack.c.l.b16 %v1059
    %v1134 = vunpack.c.l.b16 %v1060
    %v1135 = vunpack.c.l.b16 %v1061
    %v1136 = vunpack.c.l.b16 %v1062
    %v1137 = vunpack.c.l.b16 %v1063
    %v1138 = vunpack.c.l.b16 %v1064
    %v1139 = vunpack.c.l.b16 %v1065
    %v1140 = vunpack.c.l.b16 %v1066
    %v1141 = vunpack.c.l.b16 %v1067
    %v1142 = vunpack.c.l.b16 %v1068
    %v1143 = vunpack.c.l.b16 %v1069
    %v1144 = vunpack.c.l.b16 %v1070
    %v1145 = vunpack.c.l.b16 %v1071
    %v1146 = vunpack.c.l.b16 %v1072
    %v1147 = vunpack.c.l.b16 %v1073
    %v1148 = vunpack.c.l.b16 %v1074
    %v1149 = vunpack.c.l.b16 %v1075
    %v1150 = vunpack.c.l.b16 %v1076
    %v1151 = vunpack.c.l.b16 %v1077
    %v1152 = vunpack.c.l.b16 %v1078
    %v1153 = vunpack.c.l.b16 %v1079
    %v1154 = vunpack.c.l.b16 %v1080
    %v1155 = vunpack.c.l.b16 %v1081
    %v1156 = vunpack.c.l.b16 %v1082
    %v1157 = vunpack.c.l.b16 %v1083
    %v1158 = vunpack.c.l.b16 %v1084
    %v1159 = vunpack.c.l.b16 %v1085
    %v1160 = vunpack.c.l.b16 %v1086
    %v1161 = vunpack.c.l.b16 %v1087
    %v1162 = vunpack.c.l.b16 %v1088
    %v1163 = vunpack.c.l.b16 %v1089
    %v1164 = vunpack.c.l.b16 %v1090
    %v1165 = vunpack.c.l.b16 %v1091
    %v1166 = vpack.c.b16 %v1131, %v1130
    %v1167 = vpack.c.b16 %v1133, %v1132
    %v1168 = vpack.c.b16 %v1135, %v1134
    %v1169 = vpack.c.b16 %v1137, %v1136
    %v1170 = vpack.c.b16 %v1139, %v1138
    %v1171 = vpack.c.b16 %v1141, %v1140
    %v1172 = vpack.c.b16 %v1143, %v1142
    %v1173 = vpack.c.b16 %v1145, %v1144
    %v1174 = vpack.c.b16 %v1147, %v1146
    %v1175 = vpack.c.b16 %v1149, %v1148
    %v1176 = vpack.c.b16 %v1151, %v1150
    %v1177 = vpack.c.b16 %v1153, %v1152
    %v1178 = vpack.c.b16 %v1155, %v1154
    %v1179 = vpack.c.b16 %v1157, %v1156
    %v1180 = vpack.c.b16 %v1159, %v1158
    %v1181 = vpack.c.b16 %v1161, %v1160
    %v1182 = vpack.c.b16 %v1163, %v1162
    %v1183 = vpack.c.b16 %v1165, %v1164
    %v1203 = vsel %vm105, %v918, 0
    %v1206 = vsel %vm105, %v919, 0
    %v1209 = vsel %vm105, %v920, 0
    %v1212 = vsel %vm105, %v921, 0
    %v1215 = vsel %vm105, %v922, 0
    %v1218 = vsel %vm105, %v923, 0
    %v1221 = vsel %vm105, %v924, 0
    %v1224 = vsel %vm105, %v925, 0
    %1226 = vmatprep.subr.bf16.mxu0 0
    %1227 = vmatpush1.bf16.msra.mxu0 %v1166
    %1228 = vmatprep.subr.bf16.mxu0 0
    %1229 = vmatpush1.bf16.msra.mxu0 %v1167
    %1230 = vmatprep.subr.bf16.mxu0 0
    %1231 = vmatpush1.bf16.msra.mxu0 %v1168
    %1232 = vmatprep.subr.bf16.mxu0 0
    %1233 = vmatpush1.bf16.msra.mxu0 %v1169
    %1234 = vmatprep.subr.bf16.mxu0 0
    %1235 = vmatpush1.bf16.msra.mxu0 %v1170
    %1236 = vmatprep.subr.bf16.mxu0 0
    %1237 = vmatpush1.bf16.msra.mxu0 %v1171
    %1238 = vmatprep.subr.bf16.mxu0 0
    %1239 = vmatpush1.bf16.msra.mxu0 %v1172
    %1240 = vmatprep.subr.bf16.mxu0 0
    %1241 = vmatpush1.bf16.msra.mxu0 %v1173
    %1242 = vmatprep.subr.bf16.mxu0 0
    %1243 = vmatpush1.bf16.msra.mxu0 %v1174
    %1244 = vmatprep.subr.bf16.mxu0 0
    %1245 = vmatpush1.bf16.msra.mxu0 %v1175
    %1246 = vmatprep.subr.bf16.mxu0 0
    %1247 = vmatpush1.bf16.msra.mxu0 %v1176
    %1248 = vmatprep.subr.bf16.mxu0 0
    %1249 = vmatpush1.bf16.msra.mxu0 %v1177
    %1250 = vmatprep.subr.bf16.mxu0 0
    %1251 = vmatpush1.bf16.msra.mxu0 %v1178
    %1252 = vmatprep.subr.bf16.mxu0 0
    %1253 = vmatpush1.bf16.msra.mxu0 %v1179
    %1254 = vmatprep.subr.bf16.mxu0 0
    %1255 = vmatpush1.bf16.msra.mxu0 %v1180
    %1256 = vmatprep.subr.bf16.mxu0 0
    %1257 = vmatpush1.bf16.msra.mxu0 %v1181
    %1258 = vmatprep.mubr.bf16.mxu0 %v1033
    %1259 = vmatmul.mubr.bf16.gmra.mrb[0].mxu0 %v969
    %v1260 = vpop.f32.mrb[0].mxu0
    %v1261 = vadd.f32 0.0, %v1260
    %v1262 = vpop.f32.mrb[0].mxu0
    %v1263 = vpop.f32.mrb[0].mxu0
    %v1264 = vadd.f32 0.0, %v1263
    %v1265 = vpop.f32.mrb[0].mxu0
    %1266 = vmatprep.mubr.bf16.mxu0 %v1036
    %1267 = vmatmul.mubr.bf16.gmra.mrb[0].mxu0 %v972
    %v1268 = vpop.f32.mrb[0].mxu0
    %v1269 = vadd.f32 0.0, %v1268
    %v1270 = vpop.f32.mrb[0].mxu0
    %v1271 = vpop.f32.mrb[0].mxu0
    %v1272 = vadd.f32 0.0, %v1271
    %v1273 = vpop.f32.mrb[0].mxu0
    %1274 = vmatprep.mubr.bf16.mxu0 %v1039
    %1275 = vmatmul.mubr.bf16.gmra.mrb[0].mxu0 %v975
    %v1276 = vpop.f32.mrb[0].mxu0
    %v1277 = vadd.f32 0.0, %v1276
    %v1278 = vpop.f32.mrb[0].mxu0
    %v1279 = vpop.f32.mrb[0].mxu0
    %v1280 = vadd.f32 0.0, %v1279
    %v1281 = vpop.f32.mrb[0].mxu0
    %1282 = vmatprep.mubr.bf16.mxu0 %v1042
    %1283 = vmatmul.mubr.bf16.gmra.mrb[0].mxu0 %v978
    %v1284 = vpop.f32.mrb[0].mxu0
    %v1285 = vadd.f32 0.0, %v1284
    %v1286 = vpop.f32.mrb[0].mxu0
    %v1287 = vpop.f32.mrb[0].mxu0
    %v1288 = vadd.f32 0.0, %v1287
    %v1289 = vpop.f32.mrb[0].mxu0
    %1290 = vmatprep.mubr.bf16.mxu0 %v1045
    %1291 = vmatmul.mubr.bf16.gmra.mrb[0].mxu0 %v981
    %v1292 = vpop.f32.mrb[0].mxu0
    %v1293 = vadd.f32 0.0, %v1292
    %v1294 = vpop.f32.mrb[0].mxu0
    %v1295 = vpop.f32.mrb[0].mxu0
    %v1296 = vadd.f32 0.0, %v1295
    %v1297 = vpop.f32.mrb[0].mxu0
    %1298 = vmatprep.mubr.bf16.mxu0 %v1048
    %1299 = vmatmul.mubr.bf16.gmra.mrb[0].mxu0 %v984
    %v1300 = vpop.f32.mrb[0].mxu0
    %v1301 = vadd.f32 0.0, %v1300
    %v1302 = vpop.f32.mrb[0].mxu0
    %v1303 = vpop.f32.mrb[0].mxu0
    %v1304 = vadd.f32 0.0, %v1303
    %v1305 = vpop.f32.mrb[0].mxu0
    %1306 = vmatprep.mubr.bf16.mxu0 %v1051
    %1307 = vmatmul.mubr.bf16.gmra.mrb[0].mxu0 %v987
    %v1308 = vpop.f32.mrb[0].mxu0
    %v1309 = vadd.f32 0.0, %v1308
    %v1310 = vpop.f32.mrb[0].mxu0
    %v1311 = vpop.f32.mrb[0].mxu0
    %v1312 = vadd.f32 0.0, %v1311
    %v1313 = vpop.f32.mrb[0].mxu0
    %1314 = vmatprep.mubr.bf16.mxu0 %v1054
    %1315 = vmatmul.mubr.bf16.gmra.mrb[0].mxu0 %v990
    %v1316 = vpop.f32.mrb[0].mxu0
    %v1317 = vadd.f32 0.0, %v1316
    %v1318 = vpop.f32.mrb[0].mxu0
    %v1319 = vpop.f32.mrb[0].mxu0
    %v1320 = vadd.f32 0.0, %v1319
    %v1321 = vpop.f32.mrb[0].mxu0
    %1322 = vdwg.mxu0
    %1323 = vmatprep.subr.bf16.mxu0 0
    %1324 = vmatpush1.bf16.msra.mxu0 %v1182
    %1325 = vmatprep.subr.bf16.mxu0 0
    %1326 = vmatpush1.bf16.msra.mxu0 %v1183
    %1327 = vmatprep.subr.bf16.mxu0 0
    %1328 = vmatpush1.bf16.msra.mxu0 0
    %1329 = vmatprep.subr.bf16.mxu0 0
    %1330 = vmatpush1.bf16.msra.mxu0 0
    %1331 = vmatprep.subr.bf16.mxu0 0
    %1332 = vmatpush1.bf16.msra.mxu0 0
    %1333 = vmatprep.subr.bf16.mxu0 0
    %1334 = vmatpush1.bf16.msra.mxu0 0
    %1335 = vmatprep.subr.bf16.mxu0 0
    %1336 = vmatpush1.bf16.msra.mxu0 0
    %1337 = vmatprep.subr.bf16.mxu0 0
    %1338 = vmatpush1.bf16.msra.mxu0 0
    %1339 = vmatprep.subr.bf16.mxu0 0
    %1340 = vmatpush1.bf16.msra.mxu0 0
    %1341 = vmatprep.subr.bf16.mxu0 0
    %1342 = vmatpush1.bf16.msra.mxu0 0
    %1343 = vmatprep.subr.bf16.mxu0 0
    %1344 = vmatpush1.bf16.msra.mxu0 0
    %1345 = vmatprep.subr.bf16.mxu0 0
    %1346 = vmatpush1.bf16.msra.mxu0 0
    %1347 = vmatprep.subr.bf16.mxu0 0
    %1348 = vmatpush1.bf16.msra.mxu0 0
    %1349 = vmatprep.subr.bf16.mxu0 0
    %1350 = vmatpush1.bf16.msra.mxu0 0
    %1351 = vmatprep.subr.bf16.mxu0 0
    %1352 = vmatpush1.bf16.msra.mxu0 0
    %1353 = vmatprep.subr.bf16.mxu0 0
    %1354 = vmatpush1.bf16.msra.mxu0 0
    %1355 = vmatprep.mubr.bf16.mxu0 0
    %1356 = vmatmul.mubr.bf16.gmra.mrb[0].mxu0 %v1203
    %v1357 = vpop.f32.mrb[0].mxu0
    %v1358 = vadd.f32 %v1261, %v1357
    %v1359 = vpop.f32.mrb[0].mxu0
    %v1360 = vpop.f32.mrb[0].mxu0
    %v1361 = vadd.f32 %v1264, %v1360
    %v1362 = vpop.f32.mrb[0].mxu0
    %1363 = vmatprep.mubr.bf16.mxu0 0
    %1364 = vmatmul.mubr.bf16.gmra.mrb[0].mxu0 %v1206
    %v1365 = vpop.f32.mrb[0].mxu0
    %v1366 = vadd.f32 %v1269, %v1365
    %v1367 = vpop.f32.mrb[0].mxu0
    %v1368 = vpop.f32.mrb[0].mxu0
    %v1369 = vadd.f32 %v1272, %v1368
    %v1370 = vpop.f32.mrb[0].mxu0
    %1371 = vmatprep.mubr.bf16.mxu0 0
    %1372 = vmatmul.mubr.bf16.gmra.mrb[0].mxu0 %v1209
    %v1373 = vpop.f32.mrb[0].mxu0
    %v1374 = vadd.f32 %v1277, %v1373
    %v1375 = vpop.f32.mrb[0].mxu0
    %v1376 = vpop.f32.mrb[0].mxu0
    %v1377 = vadd.f32 %v1280, %v1376
    %v1378 = vpop.f32.mrb[0].mxu0
    %1379 = vmatprep.mubr.bf16.mxu0 0
    %1380 = vmatmul.mubr.bf16.gmra.mrb[0].mxu0 %v1212
    %v1381 = vpop.f32.mrb[0].mxu0
    %v1382 = vadd.f32 %v1285, %v1381
    %v1383 = vpop.f32.mrb[0].mxu0
    %v1384 = vpop.f32.mrb[0].mxu0
    %v1385 = vadd.f32 %v1288, %v1384
    %v1386 = vpop.f32.mrb[0].mxu0
    %1387 = vmatprep.mubr.bf16.mxu0 0
    %1388 = vmatmul.mubr.bf16.gmra.mrb[0].mxu0 %v1215
    %v1389 = vpop.f32.mrb[0].mxu0
    %v1390 = vadd.f32 %v1293, %v1389
    %v1391 = vpop.f32.mrb[0].mxu0
    %v1392 = vpop.f32.mrb[0].mxu0
    %v1393 = vadd.f32 %v1296, %v1392
    %v1394 = vpop.f32.mrb[0].mxu0
    %1395 = vmatprep.mubr.bf16.mxu0 0
    %1396 = vmatmul.mubr.bf16.gmra.mrb[0].mxu0 %v1218
    %v1397 = vpop.f32.mrb[0].mxu0
    %v1398 = vadd.f32 %v1301, %v1397
    %v1399 = vpop.f32.mrb[0].mxu0
    %v1400 = vpop.f32.mrb[0].mxu0
    %v1401 = vadd.f32 %v1304, %v1400
    %v1402 = vpop.f32.mrb[0].mxu0
    %1403 = vmatprep.mubr.bf16.mxu0 0
    %1404 = vmatmul.mubr.bf16.gmra.mrb[0].mxu0 %v1221
    %v1405 = vpop.f32.mrb[0].mxu0
    %v1406 = vadd.f32 %v1309, %v1405
    %v1407 = vpop.f32.mrb[0].mxu0
    %v1408 = vpop.f32.mrb[0].mxu0
    %v1409 = vadd.f32 %v1312, %v1408
    %v1410 = vpop.f32.mrb[0].mxu0
    %1411 = vmatprep.mubr.bf16.mxu0 0
    %1412 = vmatmul.mubr.bf16.gmra.mrb[0].mxu0 %v1224
    %v1413 = vpop.f32.mrb[0].mxu0
    %v1414 = vadd.f32 %v1317, %v1413
    %v1415 = vpop.f32.mrb[0].mxu0
    %v1416 = vpop.f32.mrb[0].mxu0
    %v1417 = vadd.f32 %v1320, %v1416
    %v1418 = vpop.f32.mrb[0].mxu0
    %1419 = vdwg.mxu0
    %v1420 = vsel %vm105, %v1358, 0.0
    %v1421 = vsel %vm105, %v1361, 0.0
    %v1422 = vadd.f32 %v1420, %v1421
    %v1423 = vsel %vm105, %v1366, 0.0
    %v1424 = vadd.f32 %v1422, %v1423
    %v1425 = vsel %vm105, %v1369, 0.0
    %v1426 = vadd.f32 %v1424, %v1425
    %v1427 = vsel %vm105, %v1374, 0.0
    %v1428 = vadd.f32 %v1426, %v1427
    %v1429 = vsel %vm105, %v1377, 0.0
    %v1430 = vadd.f32 %v1428, %v1429
    %v1431 = vsel %vm105, %v1382, 0.0
    %v1432 = vadd.f32 %v1430, %v1431
    %v1433 = vsel %vm105, %v1385, 0.0
    %v1434 = vadd.f32 %v1432, %v1433
    %v1435 = vsel %vm105, %v1390, 0.0
    %v1436 = vadd.f32 %v1434, %v1435
    %v1437 = vsel %vm105, %v1393, 0.0
    %v1438 = vadd.f32 %v1436, %v1437
    %v1439 = vsel %vm105, %v1398, 0.0
    %v1440 = vadd.f32 %v1438, %v1439
    %v1441 = vsel %vm105, %v1401, 0.0
    %v1442 = vadd.f32 %v1440, %v1441
    %v1443 = vsel %vm105, %v1406, 0.0
    %v1444 = vadd.f32 %v1442, %v1443
    %v1445 = vsel %vm105, %v1409, 0.0
    %v1446 = vadd.f32 %v1444, %v1445
    %v1447 = vsel %vm105, %v1414, 0.0
    %v1448 = vadd.f32 %v1446, %v1447
    %v1449 = vsel %vm105, %v1417, 0.0
    %v1450 = vadd.f32 %v1448, %v1449
    %v1451 = vrot.slane %v1450, 4
    %v1452 = vadd.f32 %v1450, %v1451
    %v1453 = vrot.slane %v1452, 2
    %v1454 = vadd.f32 %v1452, %v1453
    %v1455 = vrot.slane %v1454, 1
    %v1456 = vadd.f32 %v1454, %v1455
    %v1457 = vrcp.pop 128.0
    %v1458 = vmul.f32 %v1456, %v1457
    %v1459 = vmul.f32 %v1358, %v1358
    %v1460 = vmul.f32 %v1361, %v1361
    %v1461 = vmul.f32 %v1366, %v1366
    %v1462 = vmul.f32 %v1369, %v1369
    %v1463 = vmul.f32 %v1374, %v1374
    %v1464 = vmul.f32 %v1377, %v1377
    %v1465 = vmul.f32 %v1382, %v1382
    %v1466 = vmul.f32 %v1385, %v1385
    %v1467 = vmul.f32 %v1390, %v1390
    %v1468 = vmul.f32 %v1393, %v1393
    %v1469 = vmul.f32 %v1398, %v1398
    %v1470 = vmul.f32 %v1401, %v1401
    %v1471 = vmul.f32 %v1406, %v1406
    %v1472 = vmul.f32 %v1409, %v1409
    %v1473 = vmul.f32 %v1414, %v1414
    %v1474 = vmul.f32 %v1417, %v1417
    %v1475 = vsel %vm105, %v1459, 0.0
    %v1476 = vsel %vm105, %v1460, 0.0
    %v1477 = vadd.f32 %v1475, %v1476
    %v1478 = vsel %vm105, %v1461, 0.0
    %v1479 = vadd.f32 %v1477, %v1478
    %v1480 = vsel %vm105, %v1462, 0.0
    %v1481 = vadd.f32 %v1479, %v1480
    %v1482 = vsel %vm105, %v1463, 0.0
    %v1483 = vadd.f32 %v1481, %v1482
    %v1484 = vsel %vm105, %v1464, 0.0
    %v1485 = vadd.f32 %v1483, %v1484
    %v1486 = vsel %vm105, %v1465, 0.0
    %v1487 = vadd.f32 %v1485, %v1486
    %v1488 = vsel %vm105, %v1466, 0.0
    %v1489 = vadd.f32 %v1487, %v1488
    %v1490 = vsel %vm105, %v1467, 0.0
    %v1491 = vadd.f32 %v1489, %v1490
    %v1492 = vsel %vm105, %v1468, 0.0
    %v1493 = vadd.f32 %v1491, %v1492
    %v1494 = vsel %vm105, %v1469, 0.0
    %v1495 = vadd.f32 %v1493, %v1494
    %v1496 = vsel %vm105, %v1470, 0.0
    %v1497 = vadd.f32 %v1495, %v1496
    %v1498 = vsel %vm105, %v1471, 0.0
    %v1499 = vadd.f32 %v1497, %v1498
    %v1500 = vsel %vm105, %v1472, 0.0
    %v1501 = vadd.f32 %v1499, %v1500
    %v1502 = vsel %vm105, %v1473, 0.0
    %v1503 = vadd.f32 %v1501, %v1502
    %v1504 = vsel %vm105, %v1474, 0.0
    %v1505 = vadd.f32 %v1503, %v1504
    %v1506 = vrot.slane %v1505, 4
    %v1507 = vadd.f32 %v1505, %v1506
    %v1508 = vrot.slane %v1507, 2
    %v1509 = vadd.f32 %v1507, %v1508
    %v1510 = vrot.slane %v1509, 1
    %v1511 = vadd.f32 %v1509, %v1510
    %v1512 = vmul.f32 %v1511, %v1457
    %v1513 = vmul.f32 %v1458, %v1458
    %v1514 = vsub.f32 %v1512, %v1513
    %v1515 = vmax.f32 %v1514, 0.0
    %v1516 = vsub.f32 %v1358, %v1458
    %v1517 = vsub.f32 %v1361, %v1458
    %v1518 = vsub.f32 %v1366, %v1458
    %v1519 = vsub.f32 %v1369, %v1458
    %v1520 = vsub.f32 %v1374, %v1458
    %v1521 = vsub.f32 %v1377, %v1458
    %v1522 = vsub.f32 %v1382, %v1458
    %v1523 = vsub.f32 %v1385, %v1458
    %v1524 = vsub.f32 %v1390, %v1458
    %v1525 = vsub.f32 %v1393, %v1458
    %v1526 = vsub.f32 %v1398, %v1458
    %v1527 = vsub.f32 %v1401, %v1458
    %v1528 = vsub.f32 %v1406, %v1458
    %v1529 = vsub.f32 %v1409, %v1458
    %v1530 = vsub.f32 %v1414, %v1458
    %v1531 = vsub.f32 %v1417, %v1458
    %v1532 = vadd.f32 %v1515, 1e-05
    %v1533 = vrsqrt.pop %v1532
    %v1534 = vmul.f32 %v1516, %v1533
    %v1535 = vmul.f32 %v1517, %v1533
    %v1536 = vmul.f32 %v1518, %v1533
    %v1537 = vmul.f32 %v1519, %v1533
    %v1538 = vmul.f32 %v1520, %v1533
    %v1539 = vmul.f32 %v1521, %v1533
    %v1540 = vmul.f32 %v1522, %v1533
    %v1541 = vmul.f32 %v1523, %v1533
    %v1542 = vmul.f32 %v1524, %v1533
    %v1543 = vmul.f32 %v1525, %v1533
    %v1544 = vmul.f32 %v1526, %v1533
    %v1545 = vmul.f32 %v1527, %v1533
    %v1546 = vmul.f32 %v1528, %v1533
    %v1547 = vmul.f32 %v1529, %v1533
    %v1548 = vmul.f32 %v1530, %v1533
    %v1549 = vmul.f32 %v1531, %v1533
    %v1551 = vlaneseq
    %v1552 = vshrl.u32 %v1551, 7
    %v1553 = vsub.s32 0, %v1552
    %v1554 = vrot.slane %v1092, %v1553
    %v1556 = vmul.f32 %v1534, %v1554
    %v1557 = vmul.f32 %v1535, %v1554
    %v1558 = vmul.f32 %v1536, %v1554
    %v1559 = vmul.f32 %v1537, %v1554
    %v1560 = vmul.f32 %v1538, %v1554
    %v1561 = vmul.f32 %v1539, %v1554
    %v1562 = vmul.f32 %v1540, %v1554
    %v1563 = vmul.f32 %v1541, %v1554
    %v1564 = vmul.f32 %v1542, %v1554
    %v1565 = vmul.f32 %v1543, %v1554
    %v1566 = vmul.f32 %v1544, %v1554
    %v1567 = vmul.f32 %v1545, %v1554
    %v1568 = vmul.f32 %v1546, %v1554
    %v1569 = vmul.f32 %v1547, %v1554
    %v1570 = vmul.f32 %v1548, %v1554
    %v1571 = vmul.f32 %v1549, %v1554
    %v1573 = vlaneseq
    %v1574 = vshrl.u32 %v1573, 7
    %v1575 = vsub.s32 0, %v1574
    %v1576 = vrot.slane %v1093, %v1575
    %v1578 = vadd.f32 %v1556, %v1576
    %v1579 = vadd.f32 %v1557, %v1576
    %v1580 = vadd.f32 %v1558, %v1576
    %v1581 = vadd.f32 %v1559, %v1576
    %v1582 = vadd.f32 %v1560, %v1576
    %v1583 = vadd.f32 %v1561, %v1576
    %v1584 = vadd.f32 %v1562, %v1576
    %v1585 = vadd.f32 %v1563, %v1576
    %v1586 = vadd.f32 %v1564, %v1576
    %v1587 = vadd.f32 %v1565, %v1576
    %v1588 = vadd.f32 %v1566, %v1576
    %v1589 = vadd.f32 %v1567, %v1576
    %v1590 = vadd.f32 %v1568, %v1576
    %v1591 = vadd.f32 %v1569, %v1576
    %v1592 = vadd.f32 %v1570, %v1576
    %v1593 = vadd.f32 %v1571, %v1576
    %v1594 = vmax.f32 %v1578, 0.0
    %v1595 = vmax.f32 %v1579, 0.0
    %v1596 = vmax.f32 %v1580, 0.0
    %v1597 = vmax.f32 %v1581, 0.0
    %v1598 = vmax.f32 %v1582, 0.0
    %v1599 = vmax.f32 %v1583, 0.0
    %v1600 = vmax.f32 %v1584, 0.0
    %v1601 = vmax.f32 %v1585, 0.0
    %v1602 = vmax.f32 %v1586, 0.0
    %v1603 = vmax.f32 %v1587, 0.0
    %v1604 = vmax.f32 %v1588, 0.0
    %v1605 = vmax.f32 %v1589, 0.0
    %v1606 = vmax.f32 %v1590, 0.0
    %v1607 = vmax.f32 %v1591, 0.0
    %v1608 = vmax.f32 %v1592, 0.0
    %v1609 = vmax.f32 %v1593, 0.0
    %1610 = vst.msk [vmem:[%s163 + $0x1] sm:$0xff] %vm105, %v1594
    %1611 = vst.msk [vmem:[%s163 + $0x11] sm:$0xff] %vm105, %v1595
    %1612 = vst.msk [vmem:[%s163 + $0x21] sm:$0xff] %vm105, %v1596
    %1613 = vst.msk [vmem:[%s163 + $0x31] sm:$0xff] %vm105, %v1597
    %1614 = vst.msk [vmem:[%s163 + $0x41] sm:$0xff] %vm105, %v1598
    %1615 = vst.msk [vmem:[%s163 + $0x51] sm:$0xff] %vm105, %v1599
    %1616 = vst.msk [vmem:[%s163 + $0x61] sm:$0xff] %vm105, %v1600
    %1617 = vst.msk [vmem:[%s163 + $0x71] sm:$0xff] %vm105, %v1601
    %1618 = vst.msk [vmem:[%s163 + $0xa1] sm:$0xff] %vm105, %v1602
    %1619 = vst.msk [vmem:[%s163 + $0xb1] sm:$0xff] %vm105, %v1603
    %1620 = vst.msk [vmem:[%s163 + $0xc1] sm:$0xff] %vm105, %v1604
    %1621 = vst.msk [vmem:[%s163 + $0xd1] sm:$0xff] %vm105, %v1605
    %1622 = vst.msk [vmem:[%s163 + $0xe1] sm:$0xff] %vm105, %v1606
    %1623 = vst.msk [vmem:[%s163 + $0xf1] sm:$0xff] %vm105, %v1607
    %1624 = vst.msk [vmem:[%s163 + $0x101] sm:$0xff] %vm105, %v1608
    %1625 = vst.msk [vmem:[%s163 + $0x111] sm:$0xff] %vm105, %v1609
    %v1626 = vld [vmem:[%s163 + $0x1] sm:$0xff]
    %v1627 = vld [vmem:[%s163 + $0x11] sm:$0xff]
    %v1628 = vld [vmem:[%s163 + $0x21] sm:$0xff]
    %v1629 = vld [vmem:[%s163 + $0x31] sm:$0xff]
    %v1630 = vld [vmem:[%s163 + $0x41] sm:$0xff]
    %v1631 = vld [vmem:[%s163 + $0x51] sm:$0xff]
    %v1632 = vld [vmem:[%s163 + $0x61] sm:$0xff]
    %v1633 = vld [vmem:[%s163 + $0x71] sm:$0xff]
    %v1634 = vld [vmem:[%s163 + $0xa1] sm:$0xff]
    %v1635 = vld [vmem:[%s163 + $0xb1] sm:$0xff]
    %v1636 = vld [vmem:[%s163 + $0xc1] sm:$0xff]
    %v1637 = vld [vmem:[%s163 + $0xd1] sm:$0xff]
    %v1638 = vld [vmem:[%s163 + $0xe1] sm:$0xff]
    %v1639 = vld [vmem:[%s163 + $0xf1] sm:$0xff]
    %v1640 = vld [vmem:[%s163 + $0x101] sm:$0xff]
    %v1641 = vld [vmem:[%s163 + $0x111] sm:$0xff]
    %v1642 = vld [vmem:[#allocation2] sm:$0xff]
    %v1643 = vld [vmem:[#allocation2 + $0x10] sm:$0xff]
    %v1644 = vld [vmem:[#allocation2 + $0x20] sm:$0xff]
    %v1645 = vld [vmem:[#allocation2 + $0x30] sm:$0xff]
    %v1646 = vld [vmem:[#allocation2 + $0x40] sm:$0xff]
    %v1647 = vld [vmem:[#allocation2 + $0x50] sm:$0xff]
    %v1648 = vld [vmem:[#allocation2 + $0x60] sm:$0xff]
    %v1649 = vld [vmem:[#allocation2 + $0x70] sm:$0xff]
    %v1650 = vld [vmem:[#allocation2 + $0xa0] sm:$0xff]
    %v1651 = vld [vmem:[#allocation2 + $0xb0] sm:$0xff]
    %v1652 = vld [vmem:[#allocation2 + $0xc0] sm:$0xff]
    %v1653 = vld [vmem:[#allocation2 + $0xd0] sm:$0xff]
    %v1654 = vld [vmem:[#allocation2 + $0xe0] sm:$0xff]
    %v1655 = vld [vmem:[#allocation2 + $0xf0] sm:$0xff]
    %v1656 = vld [vmem:[#allocation2 + $0x100] sm:$0xff]
    %v1657 = vld [vmem:[#allocation2 + $0x110] sm:$0xff]
    %v1658 = vpack.c.bf16 %v1642, %v1642
    %v1659 = vpack.c.bf16 %v1643, %v1643
    %v1660 = vpack.c.bf16 %v1644, %v1644
    %v1661 = vpack.c.bf16 %v1645, %v1645
    %v1662 = vpack.c.bf16 %v1646, %v1646
    %v1663 = vpack.c.bf16 %v1647, %v1647
    %v1664 = vpack.c.bf16 %v1648, %v1648
    %v1665 = vpack.c.bf16 %v1649, %v1649
    %v1666 = vpack.c.bf16 %v1650, %v1650
    %v1667 = vpack.c.bf16 %v1651, %v1651
    %v1668 = vpack.c.bf16 %v1652, %v1652
    %v1669 = vpack.c.bf16 %v1653, %v1653
    %v1670 = vpack.c.bf16 %v1654, %v1654
    %v1671 = vpack.c.bf16 %v1655, %v1655
    %v1672 = vpack.c.bf16 %v1656, %v1656
    %v1673 = vpack.c.bf16 %v1657, %v1657
    %v1674 = vld [vmem:[#allocation2 + $0x1] sm:$0xff]
    %v1675 = vld [vmem:[#allocation2 + $0x11] sm:$0xff]
    %v1676 = vld [vmem:[#allocation2 + $0x21] sm:$0xff]
    %v1677 = vld [vmem:[#allocation2 + $0x31] sm:$0xff]
    %v1678 = vld [vmem:[#allocation2 + $0x41] sm:$0xff]
    %v1679 = vld [vmem:[#allocation2 + $0x51] sm:$0xff]
    %v1680 = vld [vmem:[#allocation2 + $0x61] sm:$0xff]
    %v1681 = vld [vmem:[#allocation2 + $0x71] sm:$0xff]
    %v1682 = vld [vmem:[#allocation2 + $0xa1] sm:$0xff]
    %v1683 = vld [vmem:[#allocation2 + $0xb1] sm:$0xff]
    %v1684 = vld [vmem:[#allocation2 + $0xc1] sm:$0xff]
    %v1685 = vld [vmem:[#allocation2 + $0xd1] sm:$0xff]
    %v1686 = vld [vmem:[#allocation2 + $0xe1] sm:$0xff]
    %v1687 = vld [vmem:[#allocation2 + $0xf1] sm:$0xff]
    %v1688 = vld [vmem:[#allocation2 + $0x101] sm:$0xff]
    %v1689 = vld [vmem:[#allocation2 + $0x111] sm:$0xff]
    %v1690 = vpack.c.bf16 %v1674, %v1674
    %v1691 = vpack.c.bf16 %v1675, %v1675
    %v1692 = vpack.c.bf16 %v1676, %v1676
    %v1693 = vpack.c.bf16 %v1677, %v1677
    %v1694 = vpack.c.bf16 %v1678, %v1678
    %v1695 = vpack.c.bf16 %v1679, %v1679
    %v1696 = vpack.c.bf16 %v1680, %v1680
    %v1697 = vpack.c.bf16 %v1681, %v1681
    %v1698 = vpack.c.bf16 %v1682, %v1682
    %v1699 = vpack.c.bf16 %v1683, %v1683
    %v1700 = vpack.c.bf16 %v1684, %v1684
    %v1701 = vpack.c.bf16 %v1685, %v1685
    %v1702 = vpack.c.bf16 %v1686, %v1686
    %v1703 = vpack.c.bf16 %v1687, %v1687
    %v1704 = vpack.c.bf16 %v1688, %v1688
    %v1705 = vpack.c.bf16 %v1689, %v1689
    %v1706 = vld [vmem:[#allocation2 + $0x2] sm:$0xff]
    %v1707 = vld [vmem:[#allocation2 + $0x12] sm:$0xff]
    %v1708 = vld [vmem:[#allocation2 + $0x22] sm:$0xff]
    %v1709 = vld [vmem:[#allocation2 + $0x32] sm:$0xff]
    %v1710 = vld [vmem:[#allocation2 + $0x42] sm:$0xff]
    %v1711 = vld [vmem:[#allocation2 + $0x52] sm:$0xff]
    %v1712 = vld [vmem:[#allocation2 + $0x62] sm:$0xff]
    %v1713 = vld [vmem:[#allocation2 + $0x72] sm:$0xff]
    %v1714 = vld [vmem:[#allocation2 + $0xa2] sm:$0xff]
    %v1715 = vld [vmem:[#allocation2 + $0xb2] sm:$0xff]
    %v1716 = vld [vmem:[#allocation2 + $0xc2] sm:$0xff]
    %v1717 = vld [vmem:[#allocation2 + $0xd2] sm:$0xff]
    %v1718 = vld [vmem:[#allocation2 + $0xe2] sm:$0xff]
    %v1719 = vld [vmem:[#allocation2 + $0xf2] sm:$0xff]
    %v1720 = vld [vmem:[#allocation2 + $0x102] sm:$0xff]
    %v1721 = vld [vmem:[#allocation2 + $0x112] sm:$0xff]
    %v1722 = vpack.c.bf16 %v1706, %v1706
    %v1723 = vpack.c.bf16 %v1707, %v1707
    %v1724 = vpack.c.bf16 %v1708, %v1708
    %v1725 = vpack.c.bf16 %v1709, %v1709
    %v1726 = vpack.c.bf16 %v1710, %v1710
    %v1727 = vpack.c.bf16 %v1711, %v1711
    %v1728 = vpack.c.bf16 %v1712, %v1712
    %v1729 = vpack.c.bf16 %v1713, %v1713
    %v1730 = vpack.c.bf16 %v1714, %v1714
    %v1731 = vpack.c.bf16 %v1715, %v1715
    %v1732 = vpack.c.bf16 %v1716, %v1716
    %v1733 = vpack.c.bf16 %v1717, %v1717
    %v1734 = vpack.c.bf16 %v1718, %v1718
    %v1735 = vpack.c.bf16 %v1719, %v1719
    %v1736 = vpack.c.bf16 %v1720, %v1720
    %v1737 = vpack.c.bf16 %v1721, %v1721
    %v1738 = vld [vmem:[%s163] sm:$0xff]
    %v1739 = vld [vmem:[%s163 + $0x10] sm:$0xff]
    %v1740 = vld [vmem:[%s163 + $0x20] sm:$0xff]
    %v1741 = vld [vmem:[%s163 + $0x30] sm:$0xff]
    %v1742 = vld [vmem:[%s163 + $0x40] sm:$0xff]
    %v1743 = vld [vmem:[%s163 + $0x50] sm:$0xff]
    %v1744 = vld [vmem:[%s163 + $0x60] sm:$0xff]
    %v1745 = vld [vmem:[%s163 + $0x70] sm:$0xff]
    %v1746 = vld [vmem:[%s163 + $0xa0] sm:$0xff]
    %v1747 = vld [vmem:[%s163 + $0xb0] sm:$0xff]
    %v1748 = vld [vmem:[%s163 + $0xc0] sm:$0xff]
    %v1749 = vld [vmem:[%s163 + $0xd0] sm:$0xff]
    %v1750 = vld [vmem:[%s163 + $0xe0] sm:$0xff]
    %v1751 = vld [vmem:[%s163 + $0xf0] sm:$0xff]
    %v1752 = vld [vmem:[%s163 + $0x100] sm:$0xff]
    %v1753 = vld [vmem:[%s163 + $0x110] sm:$0xff]
    %v1754 = vpack.c.bf16 %v1738, %v1738
    %v1755 = vpack.c.bf16 %v1739, %v1739
    %v1756 = vpack.c.bf16 %v1740, %v1740
    %v1757 = vpack.c.bf16 %v1741, %v1741
    %v1758 = vpack.c.bf16 %v1742, %v1742
    %v1759 = vpack.c.bf16 %v1743, %v1743
    %v1760 = vpack.c.bf16 %v1744, %v1744
    %v1761 = vpack.c.bf16 %v1745, %v1745
    %v1762 = vpack.c.bf16 %v1746, %v1746
    %v1763 = vpack.c.bf16 %v1747, %v1747
    %v1764 = vpack.c.bf16 %v1748, %v1748
    %v1765 = vpack.c.bf16 %v1749, %v1749
    %v1766 = vpack.c.bf16 %v1750, %v1750
    %v1767 = vpack.c.bf16 %v1751, %v1751
    %v1768 = vpack.c.bf16 %v1752, %v1752
    %v1769 = vpack.c.bf16 %v1753, %v1753
    %v1770 = vpack.c.bf16 %v1626, %v1626
    %v1771 = vpack.c.bf16 %v1627, %v1627
    %v1772 = vpack.c.bf16 %v1628, %v1628
    %v1773 = vpack.c.bf16 %v1629, %v1629
    %v1774 = vpack.c.bf16 %v1630, %v1630
    %v1775 = vpack.c.bf16 %v1631, %v1631
    %v1776 = vpack.c.bf16 %v1632, %v1632
    %v1777 = vpack.c.bf16 %v1633, %v1633
    %v1778 = vpack.c.bf16 %v1634, %v1634
    %v1779 = vpack.c.bf16 %v1635, %v1635
    %v1780 = vpack.c.bf16 %v1636, %v1636
    %v1781 = vpack.c.bf16 %v1637, %v1637
    %v1782 = vpack.c.bf16 %v1638, %v1638
    %v1783 = vpack.c.bf16 %v1639, %v1639
    %v1784 = vpack.c.bf16 %v1640, %v1640
    %v1785 = vpack.c.bf16 %v1641, %v1641
    %v1786 = vld [vmem:[%s163 + $0x2] sm:$0xff]
    %v1787 = vld [vmem:[%s163 + $0x12] sm:$0xff]
    %v1788 = vld [vmem:[%s163 + $0x22] sm:$0xff]
    %v1789 = vld [vmem:[%s163 + $0x32] sm:$0xff]
    %v1790 = vld [vmem:[%s163 + $0x42] sm:$0xff]
    %v1791 = vld [vmem:[%s163 + $0x52] sm:$0xff]
    %v1792 = vld [vmem:[%s163 + $0x62] sm:$0xff]
    %v1793 = vld [vmem:[%s163 + $0x72] sm:$0xff]
    %v1794 = vld [vmem:[%s163 + $0xa2] sm:$0xff]
    %v1795 = vld [vmem:[%s163 + $0xb2] sm:$0xff]
    %v1796 = vld [vmem:[%s163 + $0xc2] sm:$0xff]
    %v1797 = vld [vmem:[%s163 + $0xd2] sm:$0xff]
    %v1798 = vld [vmem:[%s163 + $0xe2] sm:$0xff]
    %v1799 = vld [vmem:[%s163 + $0xf2] sm:$0xff]
    %v1800 = vld [vmem:[%s163 + $0x102] sm:$0xff]
    %v1801 = vld [vmem:[%s163 + $0x112] sm:$0xff]
    %v1802 = vpack.c.bf16 %v1786, %v1786
    %v1803 = vpack.c.bf16 %v1787, %v1787
    %v1804 = vpack.c.bf16 %v1788, %v1788
    %v1805 = vpack.c.bf16 %v1789, %v1789
    %v1806 = vpack.c.bf16 %v1790, %v1790
    %v1807 = vpack.c.bf16 %v1791, %v1791
    %v1808 = vpack.c.bf16 %v1792, %v1792
    %v1809 = vpack.c.bf16 %v1793, %v1793
    %v1810 = vpack.c.bf16 %v1794, %v1794
    %v1811 = vpack.c.bf16 %v1795, %v1795
    %v1812 = vpack.c.bf16 %v1796, %v1796
    %v1813 = vpack.c.bf16 %v1797, %v1797
    %v1814 = vpack.c.bf16 %v1798, %v1798
    %v1815 = vpack.c.bf16 %v1799, %v1799
    %v1816 = vpack.c.bf16 %v1800, %v1800
    %v1817 = vpack.c.bf16 %v1801, %v1801
    %v1818 = vld [vmem:[%s373] sm:$0xff]
    %v1819 = vld [vmem:[%s373 + $0x10] sm:$0xff]
    %v1820 = vld [vmem:[%s373 + $0x20] sm:$0xff]
    %v1821 = vld [vmem:[%s373 + $0x30] sm:$0xff]
    %v1822 = vld [vmem:[%s373 + $0x40] sm:$0xff]
    %v1823 = vld [vmem:[%s373 + $0x50] sm:$0xff]
    %v1824 = vld [vmem:[%s373 + $0x60] sm:$0xff]
    %v1825 = vld [vmem:[%s373 + $0x70] sm:$0xff]
    %v1826 = vld [vmem:[%s373 + $0xa0] sm:$0xff]
    %v1827 = vld [vmem:[%s373 + $0xb0] sm:$0xff]
    %v1828 = vld [vmem:[%s373 + $0xc0] sm:$0xff]
    %v1829 = vld [vmem:[%s373 + $0xd0] sm:$0xff]
    %v1830 = vld [vmem:[%s373 + $0xe0] sm:$0xff]
    %v1831 = vld [vmem:[%s373 + $0xf0] sm:$0xff]
    %v1832 = vld [vmem:[%s373 + $0x100] sm:$0xff]
    %v1833 = vld [vmem:[%s373 + $0x110] sm:$0xff]
    %v1834 = vpack.c.bf16 %v1818, %v1818
    %v1835 = vpack.c.bf16 %v1819, %v1819
    %v1836 = vpack.c.bf16 %v1820, %v1820
    %v1837 = vpack.c.bf16 %v1821, %v1821
    %v1838 = vpack.c.bf16 %v1822, %v1822
    %v1839 = vpack.c.bf16 %v1823, %v1823
    %v1840 = vpack.c.bf16 %v1824, %v1824
    %v1841 = vpack.c.bf16 %v1825, %v1825
    %v1842 = vpack.c.bf16 %v1826, %v1826
    %v1843 = vpack.c.bf16 %v1827, %v1827
    %v1844 = vpack.c.bf16 %v1828, %v1828
    %v1845 = vpack.c.bf16 %v1829, %v1829
    %v1846 = vpack.c.bf16 %v1830, %v1830
    %v1847 = vpack.c.bf16 %v1831, %v1831
    %v1848 = vpack.c.bf16 %v1832, %v1832
    %v1849 = vpack.c.bf16 %v1833, %v1833
    %v1850 = vld [vmem:[%s373 + $0x1] sm:$0xff]
    %v1851 = vld [vmem:[%s373 + $0x11] sm:$0xff]
    %v1852 = vld [vmem:[%s373 + $0x21] sm:$0xff]
    %v1853 = vld [vmem:[%s373 + $0x31] sm:$0xff]
    %v1854 = vld [vmem:[%s373 + $0x41] sm:$0xff]
    %v1855 = vld [vmem:[%s373 + $0x51] sm:$0xff]
    %v1856 = vld [vmem:[%s373 + $0x61] sm:$0xff]
    %v1857 = vld [vmem:[%s373 + $0x71] sm:$0xff]
    %v1858 = vld [vmem:[%s373 + $0xa1] sm:$0xff]
    %v1859 = vld [vmem:[%s373 + $0xb1] sm:$0xff]
    %v1860 = vld [vmem:[%s373 + $0xc1] sm:$0xff]
    %v1861 = vld [vmem:[%s373 + $0xd1] sm:$0xff]
    %v1862 = vld [vmem:[%s373 + $0xe1] sm:$0xff]
    %v1863 = vld [vmem:[%s373 + $0xf1] sm:$0xff]
    %v1864 = vld [vmem:[%s373 + $0x101] sm:$0xff]
    %v1865 = vld [vmem:[%s373 + $0x111] sm:$0xff]
    %v1866 = vpack.c.bf16 %v1850, %v1850
    %v1867 = vpack.c.bf16 %v1851, %v1851
    %v1868 = vpack.c.bf16 %v1852, %v1852
    %v1869 = vpack.c.bf16 %v1853, %v1853
    %v1870 = vpack.c.bf16 %v1854, %v1854
    %v1871 = vpack.c.bf16 %v1855, %v1855
    %v1872 = vpack.c.bf16 %v1856, %v1856
    %v1873 = vpack.c.bf16 %v1857, %v1857
    %v1874 = vpack.c.bf16 %v1858, %v1858
    %v1875 = vpack.c.bf16 %v1859, %v1859
    %v1876 = vpack.c.bf16 %v1860, %v1860
    %v1877 = vpack.c.bf16 %v1861, %v1861
    %v1878 = vpack.c.bf16 %v1862, %v1862
    %v1879 = vpack.c.bf16 %v1863, %v1863
    %v1880 = vpack.c.bf16 %v1864, %v1864
    %v1881 = vpack.c.bf16 %v1865, %v1865
    %v1882 = vld [vmem:[%s373 + $0x2] sm:$0xff]
    %v1883 = vld [vmem:[%s373 + $0x12] sm:$0xff]
    %v1884 = vld [vmem:[%s373 + $0x22] sm:$0xff]
    %v1885 = vld [vmem:[%s373 + $0x32] sm:$0xff]
    %v1886 = vld [vmem:[%s373 + $0x42] sm:$0xff]
    %v1887 = vld [vmem:[%s373 + $0x52] sm:$0xff]
    %v1888 = vld [vmem:[%s373 + $0x62] sm:$0xff]
    %v1889 = vld [vmem:[%s373 + $0x72] sm:$0xff]
    %v1890 = vld [vmem:[%s373 + $0xa2] sm:$0xff]
    %v1891 = vld [vmem:[%s373 + $0xb2] sm:$0xff]
    %v1892 = vld [vmem:[%s373 + $0xc2] sm:$0xff]
    %v1893 = vld [vmem:[%s373 + $0xd2] sm:$0xff]
    %v1894 = vld [vmem:[%s373 + $0xe2] sm:$0xff]
    %v1895 = vld [vmem:[%s373 + $0xf2] sm:$0xff]
    %v1896 = vld [vmem:[%s373 + $0x102] sm:$0xff]
    %v1897 = vld [vmem:[%s373 + $0x112] sm:$0xff]
    %v1898 = vpack.c.bf16 %v1882, %v1882
    %v1899 = vpack.c.bf16 %v1883, %v1883
    %v1900 = vpack.c.bf16 %v1884, %v1884
    %v1901 = vpack.c.bf16 %v1885, %v1885
    %v1902 = vpack.c.bf16 %v1886, %v1886
    %v1903 = vpack.c.bf16 %v1887, %v1887
    %v1904 = vpack.c.bf16 %v1888, %v1888
    %v1905 = vpack.c.bf16 %v1889, %v1889
    %v1906 = vpack.c.bf16 %v1890, %v1890
    %v1907 = vpack.c.bf16 %v1891, %v1891
    %v1908 = vpack.c.bf16 %v1892, %v1892
    %v1909 = vpack.c.bf16 %v1893, %v1893
    %v1910 = vpack.c.bf16 %v1894, %v1894
    %v1911 = vpack.c.bf16 %v1895, %v1895
    %v1912 = vpack.c.bf16 %v1896, %v1896
    %v1913 = vpack.c.bf16 %v1897, %v1897
    %v1930 = vunpack.c.l.b16 %v1658
    %v1931 = vunpack.c.l.b16 %v1659
    %v1932 = vunpack.c.l.b16 %v1660
    %v1933 = vunpack.c.l.b16 %v1661
    %v1934 = vunpack.c.l.b16 %v1662
    %v1935 = vunpack.c.l.b16 %v1663
    %v1936 = vunpack.c.l.b16 %v1664
    %v1937 = vunpack.c.l.b16 %v1665
    %v1938 = vunpack.c.l.b16 %v1666
    %v1939 = vunpack.c.l.b16 %v1667
    %v1940 = vunpack.c.l.b16 %v1668
    %v1941 = vunpack.c.l.b16 %v1669
    %v1942 = vunpack.c.l.b16 %v1670
    %v1943 = vunpack.c.l.b16 %v1671
    %v1944 = vunpack.c.l.b16 %v1672
    %v1945 = vunpack.c.l.b16 %v1673
    %v1946 = vpack.c.b16 %v1931, %v1930
    %v1947 = vpack.c.b16 %v1933, %v1932
    %v1948 = vpack.c.b16 %v1935, %v1934
    %v1949 = vpack.c.b16 %v1937, %v1936
    %v1950 = vpack.c.b16 %v1939, %v1938
    %v1951 = vpack.c.b16 %v1941, %v1940
    %v1952 = vpack.c.b16 %v1943, %v1942
    %v1953 = vpack.c.b16 %v1945, %v1944
    %v1970 = vunpack.c.l.b16 %v1690
    %v1971 = vunpack.c.l.b16 %v1691
    %v1972 = vunpack.c.l.b16 %v1692
    %v1973 = vunpack.c.l.b16 %v1693
    %v1974 = vunpack.c.l.b16 %v1694
    %v1975 = vunpack.c.l.b16 %v1695
    %v1976 = vunpack.c.l.b16 %v1696
    %v1977 = vunpack.c.l.b16 %v1697
    %v1978 = vunpack.c.l.b16 %v1698
    %v1979 = vunpack.c.l.b16 %v1699
    %v1980 = vunpack.c.l.b16 %v1700
    %v1981 = vunpack.c.l.b16 %v1701
    %v1982 = vunpack.c.l.b16 %v1702
    %v1983 = vunpack.c.l.b16 %v1703
    %v1984 = vunpack.c.l.b16 %v1704
    %v1985 = vunpack.c.l.b16 %v1705
    %v1986 = vpack.c.b16 %v1971, %v1970
    %v1987 = vpack.c.b16 %v1973, %v1972
    %v1988 = vpack.c.b16 %v1975, %v1974
    %v1989 = vpack.c.b16 %v1977, %v1976
    %v1990 = vpack.c.b16 %v1979, %v1978
    %v1991 = vpack.c.b16 %v1981, %v1980
    %v1992 = vpack.c.b16 %v1983, %v1982
    %v1993 = vpack.c.b16 %v1985, %v1984
    %1994 = vrot.lane.b32.xlu0 %v1986, 32
    %v1995 = vpop.permute.xlu0 %1994
    %1996 = vrot.lane.b32.xlu0 %v1987, 32
    %v1997 = vpop.permute.xlu0 %1996
    %1998 = vrot.lane.b32.xlu0 %v1988, 32
    %v1999 = vpop.permute.xlu0 %1998
    %2000 = vrot.lane.b32.xlu0 %v1989, 32
    %v2001 = vpop.permute.xlu0 %2000
    %2002 = vrot.lane.b32.xlu0 %v1990, 32
    %v2003 = vpop.permute.xlu0 %2002
    %2004 = vrot.lane.b32.xlu0 %v1991, 32
    %v2005 = vpop.permute.xlu0 %2004
    %2006 = vrot.lane.b32.xlu0 %v1992, 32
    %v2007 = vpop.permute.xlu0 %2006
    %2008 = vrot.lane.b32.xlu0 %v1993, 32
    %v2009 = vpop.permute.xlu0 %2008
    %v2026 = vunpack.c.l.b16 %v1722
    %v2027 = vunpack.c.l.b16 %v1723
    %v2028 = vunpack.c.l.b16 %v1724
    %v2029 = vunpack.c.l.b16 %v1725
    %v2030 = vunpack.c.l.b16 %v1726
    %v2031 = vunpack.c.l.b16 %v1727
    %v2032 = vunpack.c.l.b16 %v1728
    %v2033 = vunpack.c.l.b16 %v1729
    %v2034 = vunpack.c.l.b16 %v1730
    %v2035 = vunpack.c.l.b16 %v1731
    %v2036 = vunpack.c.l.b16 %v1732
    %v2037 = vunpack.c.l.b16 %v1733
    %v2038 = vunpack.c.l.b16 %v1734
    %v2039 = vunpack.c.l.b16 %v1735
    %v2040 = vunpack.c.l.b16 %v1736
    %v2041 = vunpack.c.l.b16 %v1737
    %v2042 = vpack.c.b16 %v2027, %v2026
    %v2043 = vpack.c.b16 %v2029, %v2028
    %v2044 = vpack.c.b16 %v2031, %v2030
    %v2045 = vpack.c.b16 %v2033, %v2032
    %v2046 = vpack.c.b16 %v2035, %v2034
    %v2047 = vpack.c.b16 %v2037, %v2036
    %v2048 = vpack.c.b16 %v2039, %v2038
    %v2049 = vpack.c.b16 %v2041, %v2040
    %2050 = vrot.lane.b32.xlu0 %v2042, 64
    %v2051 = vpop.permute.xlu0 %2050
    %2052 = vrot.lane.b32.xlu0 %v2043, 64
    %v2053 = vpop.permute.xlu0 %2052
    %2054 = vrot.lane.b32.xlu0 %v2044, 64
    %v2055 = vpop.permute.xlu0 %2054
    %2056 = vrot.lane.b32.xlu0 %v2045, 64
    %v2057 = vpop.permute.xlu0 %2056
    %2058 = vrot.lane.b32.xlu0 %v2046, 64
    %v2059 = vpop.permute.xlu0 %2058
    %2060 = vrot.lane.b32.xlu0 %v2047, 64
    %v2061 = vpop.permute.xlu0 %2060
    %2062 = vrot.lane.b32.xlu0 %v2048, 64
    %v2063 = vpop.permute.xlu0 %2062
    %2064 = vrot.lane.b32.xlu0 %v2049, 64
    %v2065 = vpop.permute.xlu0 %2064
    %v2082 = vunpack.c.l.b16 %v1754
    %v2083 = vunpack.c.l.b16 %v1755
    %v2084 = vunpack.c.l.b16 %v1756
    %v2085 = vunpack.c.l.b16 %v1757
    %v2086 = vunpack.c.l.b16 %v1758
    %v2087 = vunpack.c.l.b16 %v1759
    %v2088 = vunpack.c.l.b16 %v1760
    %v2089 = vunpack.c.l.b16 %v1761
    %v2090 = vunpack.c.l.b16 %v1762
    %v2091 = vunpack.c.l.b16 %v1763
    %v2092 = vunpack.c.l.b16 %v1764
    %v2093 = vunpack.c.l.b16 %v1765
    %v2094 = vunpack.c.l.b16 %v1766
    %v2095 = vunpack.c.l.b16 %v1767
    %v2096 = vunpack.c.l.b16 %v1768
    %v2097 = vunpack.c.l.b16 %v1769
    %v2098 = vpack.c.b16 %v2083, %v2082
    %v2099 = vpack.c.b16 %v2085, %v2084
    %v2100 = vpack.c.b16 %v2087, %v2086
    %v2101 = vpack.c.b16 %v2089, %v2088
    %v2102 = vpack.c.b16 %v2091, %v2090
    %v2103 = vpack.c.b16 %v2093, %v2092
    %v2104 = vpack.c.b16 %v2095, %v2094
    %v2105 = vpack.c.b16 %v2097, %v2096
    %2106 = vrot.lane.b32.xlu0 %v2098, 96
    %v2107 = vpop.permute.xlu0 %2106
    %2108 = vrot.lane.b32.xlu0 %v2099, 96
    %v2109 = vpop.permute.xlu0 %2108
    %2110 = vrot.lane.b32.xlu0 %v2100, 96
    %v2111 = vpop.permute.xlu0 %2110
    %2112 = vrot.lane.b32.xlu0 %v2101, 96
    %v2113 = vpop.permute.xlu0 %2112
    %2114 = vrot.lane.b32.xlu0 %v2102, 96
    %v2115 = vpop.permute.xlu0 %2114
    %2116 = vrot.lane.b32.xlu0 %v2103, 96
    %v2117 = vpop.permute.xlu0 %2116
    %2118 = vrot.lane.b32.xlu0 %v2104, 96
    %v2119 = vpop.permute.xlu0 %2118
    %2120 = vrot.lane.b32.xlu0 %v2105, 96
    %v2121 = vpop.permute.xlu0 %2120
    %v2138 = vunpack.c.l.b16 %v1770
    %v2139 = vunpack.c.l.b16 %v1771
    %v2140 = vunpack.c.l.b16 %v1772
    %v2141 = vunpack.c.l.b16 %v1773
    %v2142 = vunpack.c.l.b16 %v1774
    %v2143 = vunpack.c.l.b16 %v1775
    %v2144 = vunpack.c.l.b16 %v1776
    %v2145 = vunpack.c.l.b16 %v1777
    %v2146 = vunpack.c.l.b16 %v1778
    %v2147 = vunpack.c.l.b16 %v1779
    %v2148 = vunpack.c.l.b16 %v1780
    %v2149 = vunpack.c.l.b16 %v1781
    %v2150 = vunpack.c.l.b16 %v1782
    %v2151 = vunpack.c.l.b16 %v1783
    %v2152 = vunpack.c.l.b16 %v1784
    %v2153 = vunpack.c.l.b16 %v1785
    %v2154 = vpack.c.b16 %v2139, %v2138
    %v2155 = vpack.c.b16 %v2141, %v2140
    %v2156 = vpack.c.b16 %v2143, %v2142
    %v2157 = vpack.c.b16 %v2145, %v2144
    %v2158 = vpack.c.b16 %v2147, %v2146
    %v2159 = vpack.c.b16 %v2149, %v2148
    %v2160 = vpack.c.b16 %v2151, %v2150
    %v2161 = vpack.c.b16 %v2153, %v2152
    %v2178 = vunpack.c.l.b16 %v1802
    %v2179 = vunpack.c.l.b16 %v1803
    %v2180 = vunpack.c.l.b16 %v1804
    %v2181 = vunpack.c.l.b16 %v1805
    %v2182 = vunpack.c.l.b16 %v1806
    %v2183 = vunpack.c.l.b16 %v1807
    %v2184 = vunpack.c.l.b16 %v1808
    %v2185 = vunpack.c.l.b16 %v1809
    %v2186 = vunpack.c.l.b16 %v1810
    %v2187 = vunpack.c.l.b16 %v1811
    %v2188 = vunpack.c.l.b16 %v1812
    %v2189 = vunpack.c.l.b16 %v1813
    %v2190 = vunpack.c.l.b16 %v1814
    %v2191 = vunpack.c.l.b16 %v1815
    %v2192 = vunpack.c.l.b16 %v1816
    %v2193 = vunpack.c.l.b16 %v1817
    %v2194 = vpack.c.b16 %v2179, %v2178
    %v2195 = vpack.c.b16 %v2181, %v2180
    %v2196 = vpack.c.b16 %v2183, %v2182
    %v2197 = vpack.c.b16 %v2185, %v2184
    %v2198 = vpack.c.b16 %v2187, %v2186
    %v2199 = vpack.c.b16 %v2189, %v2188
    %v2200 = vpack.c.b16 %v2191, %v2190
    %v2201 = vpack.c.b16 %v2193, %v2192
    %2202 = vrot.lane.b32.xlu0 %v2194, 32
    %v2203 = vpop.permute.xlu0 %2202
    %2204 = vrot.lane.b32.xlu0 %v2195, 32
    %v2205 = vpop.permute.xlu0 %2204
    %2206 = vrot.lane.b32.xlu0 %v2196, 32
    %v2207 = vpop.permute.xlu0 %2206
    %2208 = vrot.lane.b32.xlu0 %v2197, 32
    %v2209 = vpop.permute.xlu0 %2208
    %2210 = vrot.lane.b32.xlu0 %v2198, 32
    %v2211 = vpop.permute.xlu0 %2210
    %2212 = vrot.lane.b32.xlu0 %v2199, 32
    %v2213 = vpop.permute.xlu0 %2212
    %2214 = vrot.lane.b32.xlu0 %v2200, 32
    %v2215 = vpop.permute.xlu0 %2214
    %2216 = vrot.lane.b32.xlu0 %v2201, 32
    %v2217 = vpop.permute.xlu0 %2216
    %v2234 = vunpack.c.l.b16 %v1834
    %v2235 = vunpack.c.l.b16 %v1835
    %v2236 = vunpack.c.l.b16 %v1836
    %v2237 = vunpack.c.l.b16 %v1837
    %v2238 = vunpack.c.l.b16 %v1838
    %v2239 = vunpack.c.l.b16 %v1839
    %v2240 = vunpack.c.l.b16 %v1840
    %v2241 = vunpack.c.l.b16 %v1841
    %v2242 = vunpack.c.l.b16 %v1842
    %v2243 = vunpack.c.l.b16 %v1843
    %v2244 = vunpack.c.l.b16 %v1844
    %v2245 = vunpack.c.l.b16 %v1845
    %v2246 = vunpack.c.l.b16 %v1846
    %v2247 = vunpack.c.l.b16 %v1847
    %v2248 = vunpack.c.l.b16 %v1848
    %v2249 = vunpack.c.l.b16 %v1849
    %v2250 = vpack.c.b16 %v2235, %v2234
    %v2251 = vpack.c.b16 %v2237, %v2236
    %v2252 = vpack.c.b16 %v2239, %v2238
    %v2253 = vpack.c.b16 %v2241, %v2240
    %v2254 = vpack.c.b16 %v2243, %v2242
    %v2255 = vpack.c.b16 %v2245, %v2244
    %v2256 = vpack.c.b16 %v2247, %v2246
    %v2257 = vpack.c.b16 %v2249, %v2248
    %2258 = vrot.lane.b32.xlu0 %v2250, 64
    %v2259 = vpop.permute.xlu0 %2258
    %2260 = vrot.lane.b32.xlu0 %v2251, 64
    %v2261 = vpop.permute.xlu0 %2260
    %2262 = vrot.lane.b32.xlu0 %v2252, 64
    %v2263 = vpop.permute.xlu0 %2262
    %2264 = vrot.lane.b32.xlu0 %v2253, 64
    %v2265 = vpop.permute.xlu0 %2264
    %2266 = vrot.lane.b32.xlu0 %v2254, 64
    %v2267 = vpop.permute.xlu0 %2266
    %2268 = vrot.lane.b32.xlu0 %v2255, 64
    %v2269 = vpop.permute.xlu0 %2268
    %2270 = vrot.lane.b32.xlu0 %v2256, 64
    %v2271 = vpop.permute.xlu0 %2270
    %2272 = vrot.lane.b32.xlu0 %v2257, 64
    %v2273 = vpop.permute.xlu0 %2272
    %v2290 = vunpack.c.l.b16 %v1866
    %v2291 = vunpack.c.l.b16 %v1867
    %v2292 = vunpack.c.l.b16 %v1868
    %v2293 = vunpack.c.l.b16 %v1869
    %v2294 = vunpack.c.l.b16 %v1870
    %v2295 = vunpack.c.l.b16 %v1871
    %v2296 = vunpack.c.l.b16 %v1872
    %v2297 = vunpack.c.l.b16 %v1873
    %v2298 = vunpack.c.l.b16 %v1874
    %v2299 = vunpack.c.l.b16 %v1875
    %v2300 = vunpack.c.l.b16 %v1876
    %v2301 = vunpack.c.l.b16 %v1877
    %v2302 = vunpack.c.l.b16 %v1878
    %v2303 = vunpack.c.l.b16 %v1879
    %v2304 = vunpack.c.l.b16 %v1880
    %v2305 = vunpack.c.l.b16 %v1881
    %v2306 = vpack.c.b16 %v2291, %v2290
    %v2307 = vpack.c.b16 %v2293, %v2292
    %v2308 = vpack.c.b16 %v2295, %v2294
    %v2309 = vpack.c.b16 %v2297, %v2296
    %v2310 = vpack.c.b16 %v2299, %v2298
    %v2311 = vpack.c.b16 %v2301, %v2300
    %v2312 = vpack.c.b16 %v2303, %v2302
    %v2313 = vpack.c.b16 %v2305, %v2304
    %2314 = vrot.lane.b32.xlu0 %v2306, 96
    %v2315 = vpop.permute.xlu0 %2314
    %2316 = vrot.lane.b32.xlu0 %v2307, 96
    %v2317 = vpop.permute.xlu0 %2316
    %2318 = vrot.lane.b32.xlu0 %v2308, 96
    %v2319 = vpop.permute.xlu0 %2318
    %2320 = vrot.lane.b32.xlu0 %v2309, 96
    %v2321 = vpop.permute.xlu0 %2320
    %2322 = vrot.lane.b32.xlu0 %v2310, 96
    %v2323 = vpop.permute.xlu0 %2322
    %2324 = vrot.lane.b32.xlu0 %v2311, 96
    %v2325 = vpop.permute.xlu0 %2324
    %2326 = vrot.lane.b32.xlu0 %v2312, 96
    %v2327 = vpop.permute.xlu0 %2326
    %2328 = vrot.lane.b32.xlu0 %v2313, 96
    %v2329 = vpop.permute.xlu0 %2328
    %v2346 = vunpack.c.l.b16 %v1898
    %v2347 = vunpack.c.l.b16 %v1899
    %v2348 = vunpack.c.l.b16 %v1900
    %v2349 = vunpack.c.l.b16 %v1901
    %v2350 = vunpack.c.l.b16 %v1902
    %v2351 = vunpack.c.l.b16 %v1903
    %v2352 = vunpack.c.l.b16 %v1904
    %v2353 = vunpack.c.l.b16 %v1905
    %v2354 = vunpack.c.l.b16 %v1906
    %v2355 = vunpack.c.l.b16 %v1907
    %v2356 = vunpack.c.l.b16 %v1908
    %v2357 = vunpack.c.l.b16 %v1909
    %v2358 = vunpack.c.l.b16 %v1910
    %v2359 = vunpack.c.l.b16 %v1911
    %v2360 = vunpack.c.l.b16 %v1912
    %v2361 = vunpack.c.l.b16 %v1913
    %v2362 = vpack.c.b16 %v2347, %v2346
    %v2363 = vpack.c.b16 %v2349, %v2348
    %v2364 = vpack.c.b16 %v2351, %v2350
    %v2365 = vpack.c.b16 %v2353, %v2352
    %v2366 = vpack.c.b16 %v2355, %v2354
    %v2367 = vpack.c.b16 %v2357, %v2356
    %v2368 = vpack.c.b16 %v2359, %v2358
    %v2369 = vpack.c.b16 %v2361, %v2360
    %v2372 = vsel %vm105, %v1946, %v1995
    %v2375 = vsel %vm105, %v1947, %v1997
    %v2378 = vsel %vm105, %v1948, %v1999
    %v2381 = vsel %vm105, %v1949, %v2001
    %v2384 = vsel %vm105, %v1950, %v2003
    %v2387 = vsel %vm105, %v1951, %v2005
    %v2390 = vsel %vm105, %v1952, %v2007
    %v2393 = vsel %vm105, %v1953, %v2009
    %v2395 = vsel %vm950, %v2372, %v2051
    %v2397 = vsel %vm950, %v2375, %v2053
    %v2399 = vsel %vm950, %v2378, %v2055
    %v2401 = vsel %vm950, %v2381, %v2057
    %v2403 = vsel %vm950, %v2384, %v2059
    %v2405 = vsel %vm950, %v2387, %v2061
    %v2407 = vsel %vm950, %v2390, %v2063
    %v2409 = vsel %vm950, %v2393, %v2065
    %v2411 = vsel %vm967, %v2395, %v2107
    %v2414 = vsel %vm967, %v2397, %v2109
    %v2417 = vsel %vm967, %v2399, %v2111
    %v2420 = vsel %vm967, %v2401, %v2113
    %v2423 = vsel %vm967, %v2403, %v2115
    %v2426 = vsel %vm967, %v2405, %v2117
    %v2429 = vsel %vm967, %v2407, %v2119
    %v2432 = vsel %vm967, %v2409, %v2121
    %v2436 = vsel %vm105, %v2154, %v2203
    %v2439 = vsel %vm105, %v2155, %v2205
    %v2442 = vsel %vm105, %v2156, %v2207
    %v2445 = vsel %vm105, %v2157, %v2209
    %v2448 = vsel %vm105, %v2158, %v2211
    %v2451 = vsel %vm105, %v2159, %v2213
    %v2454 = vsel %vm105, %v2160, %v2215
    %v2457 = vsel %vm105, %v2161, %v2217
    %v2459 = vsel %vm950, %v2436, %v2259
    %v2461 = vsel %vm950, %v2439, %v2261
    %v2463 = vsel %vm950, %v2442, %v2263
    %v2465 = vsel %vm950, %v2445, %v2265
    %v2467 = vsel %vm950, %v2448, %v2267
    %v2469 = vsel %vm950, %v2451, %v2269
    %v2471 = vsel %vm950, %v2454, %v2271
    %v2473 = vsel %vm950, %v2457, %v2273
    %v2475 = vsel %vm967, %v2459, %v2315
    %v2478 = vsel %vm967, %v2461, %v2317
    %v2481 = vsel %vm967, %v2463, %v2319
    %v2484 = vsel %vm967, %v2465, %v2321
    %v2487 = vsel %vm967, %v2467, %v2323
    %v2490 = vsel %vm967, %v2469, %v2325
    %v2493 = vsel %vm967, %v2471, %v2327
    %v2496 = vsel %vm967, %v2473, %v2329
    %s2498 = scalar_lea.vmem %s1, 144
    %v2499 = vld [vmem:[%s2498] sm:$0xf]
    %v2500 = vld [vmem:[%s2498 + $0x4] sm:$0xf]
    %v2501 = vld [vmem:[%s2498 + $0x8] sm:$0xf]
    %v2502 = vld [vmem:[%s2498 + $0xc] sm:$0xf]
    %v2503 = vld [vmem:[%s2498 + $0x10] sm:$0xf]
    %v2504 = vld [vmem:[%s2498 + $0x14] sm:$0xf]
    %v2505 = vld [vmem:[%s2498 + $0x18] sm:$0xf]
    %v2506 = vld [vmem:[%s2498 + $0x1c] sm:$0xf]
    %v2507 = vld [vmem:[%s2498 + $0x20] sm:$0xf]
    %v2508 = vld [vmem:[%s2498 + $0x24] sm:$0xf]
    %v2509 = vld [vmem:[%s2498 + $0x28] sm:$0xf]
    %v2510 = vld [vmem:[%s2498 + $0x2c] sm:$0xf]
    %v2511 = vld [vmem:[%s2498 + $0x30] sm:$0xf]
    %v2512 = vld [vmem:[%s2498 + $0x34] sm:$0xf]
    %v2513 = vld [vmem:[%s2498 + $0x38] sm:$0xf]
    %v2514 = vld [vmem:[%s2498 + $0x3c] sm:$0xf]
    %v2515 = vld [vmem:[%s2498 + $0x40] sm:$0xf]
    %v2516 = vld [vmem:[%s2498 + $0x44] sm:$0xf]
    %v2517 = vld [vmem:[%s2498 + $0x48] sm:$0xf]
    %v2518 = vld [vmem:[%s2498 + $0x4c] sm:$0xf]
    %v2519 = vld [vmem:[%s2498 + $0x50] sm:$0xf]
    %v2520 = vld [vmem:[%s2498 + $0x54] sm:$0xf]
    %v2521 = vld [vmem:[%s2498 + $0x58] sm:$0xf]
    %v2522 = vld [vmem:[%s2498 + $0x5c] sm:$0xf]
    %v2523 = vld [vmem:[%s2498 + $0x60] sm:$0xf]
    %v2524 = vld [vmem:[%s2498 + $0x64] sm:$0xf]
    %v2525 = vld [vmem:[%s2498 + $0x68] sm:$0xf]
    %v2526 = vld [vmem:[%s2498 + $0x6c] sm:$0xf]
    %v2527 = vld [vmem:[%s2498 + $0x70] sm:$0xf]
    %v2528 = vld [vmem:[%s2498 + $0x74] sm:$0xf]
    %v2529 = vld [vmem:[%s2498 + $0x78] sm:$0xf]
    %v2530 = vld [vmem:[%s2498 + $0x7c] sm:$0xf]
    %v2531 = vld [vmem:[%s2498 + $0x80] sm:$0xf]
    %v2532 = vld [vmem:[%s2498 + $0x84] sm:$0xf]
    %v2533 = vld [vmem:[%s2498 + $0x88] sm:$0xf]
    %v2534 = vld [vmem:[%s2498 + $0x8c] sm:$0xf]
    %s2535 = scalar_lea.vmem [#allocation5], 1
    %v2536 = vld [vmem:[%s2535] sm:$0x1]
    %s2537 = scalar_lea.vmem [#allocation7], 1
    %v2538 = vld [vmem:[%s2537] sm:$0x1]
    %v2575 = vunpack.c.l.b16 %v2499
    %v2576 = vunpack.c.l.b16 %v2500
    %v2577 = vunpack.c.l.b16 %v2501
    %v2578 = vunpack.c.l.b16 %v2502
    %v2579 = vunpack.c.l.b16 %v2503
    %v2580 = vunpack.c.l.b16 %v2504
    %v2581 = vunpack.c.l.b16 %v2505
    %v2582 = vunpack.c.l.b16 %v2506
    %v2583 = vunpack.c.l.b16 %v2507
    %v2584 = vunpack.c.l.b16 %v2508
    %v2585 = vunpack.c.l.b16 %v2509
    %v2586 = vunpack.c.l.b16 %v2510
    %v2587 = vunpack.c.l.b16 %v2511
    %v2588 = vunpack.c.l.b16 %v2512
    %v2589 = vunpack.c.l.b16 %v2513
    %v2590 = vunpack.c.l.b16 %v2514
    %v2591 = vunpack.c.l.b16 %v2515
    %v2592 = vunpack.c.l.b16 %v2516
    %v2593 = vunpack.c.l.b16 %v2517
    %v2594 = vunpack.c.l.b16 %v2518
    %v2595 = vunpack.c.l.b16 %v2519
    %v2596 = vunpack.c.l.b16 %v2520
    %v2597 = vunpack.c.l.b16 %v2521
    %v2598 = vunpack.c.l.b16 %v2522
    %v2599 = vunpack.c.l.b16 %v2523
    %v2600 = vunpack.c.l.b16 %v2524
    %v2601 = vunpack.c.l.b16 %v2525
    %v2602 = vunpack.c.l.b16 %v2526
    %v2603 = vunpack.c.l.b16 %v2527
    %v2604 = vunpack.c.l.b16 %v2528
    %v2605 = vunpack.c.l.b16 %v2529
    %v2606 = vunpack.c.l.b16 %v2530
    %v2607 = vunpack.c.l.b16 %v2531
    %v2608 = vunpack.c.l.b16 %v2532
    %v2609 = vunpack.c.l.b16 %v2533
    %v2610 = vunpack.c.l.b16 %v2534
    %v2611 = vpack.c.b16 %v2576, %v2575
    %v2612 = vpack.c.b16 %v2578, %v2577
    %v2613 = vpack.c.b16 %v2580, %v2579
    %v2614 = vpack.c.b16 %v2582, %v2581
    %v2615 = vpack.c.b16 %v2584, %v2583
    %v2616 = vpack.c.b16 %v2586, %v2585
    %v2617 = vpack.c.b16 %v2588, %v2587
    %v2618 = vpack.c.b16 %v2590, %v2589
    %v2619 = vpack.c.b16 %v2592, %v2591
    %v2620 = vpack.c.b16 %v2594, %v2593
    %v2621 = vpack.c.b16 %v2596, %v2595
    %v2622 = vpack.c.b16 %v2598, %v2597
    %v2623 = vpack.c.b16 %v2600, %v2599
    %v2624 = vpack.c.b16 %v2602, %v2601
    %v2625 = vpack.c.b16 %v2604, %v2603
    %v2626 = vpack.c.b16 %v2606, %v2605
    %v2627 = vpack.c.b16 %v2608, %v2607
    %v2628 = vpack.c.b16 %v2610, %v2609
    %v2648 = vsel %vm105, %v2362, 0
    %v2651 = vsel %vm105, %v2363, 0
    %v2654 = vsel %vm105, %v2364, 0
    %v2657 = vsel %vm105, %v2365, 0
    %v2660 = vsel %vm105, %v2366, 0
    %v2663 = vsel %vm105, %v2367, 0
    %v2666 = vsel %vm105, %v2368, 0
    %v2669 = vsel %vm105, %v2369, 0
    %2671 = vmatprep.subr.bf16.mxu0 0
    %2672 = vmatpush1.bf16.msra.mxu0 %v2611
    %2673 = vmatprep.subr.bf16.mxu0 0
    %2674 = vmatpush1.bf16.msra.mxu0 %v2612
    %2675 = vmatprep.subr.bf16.mxu0 0
    %2676 = vmatpush1.bf16.msra.mxu0 %v2613
    %2677 = vmatprep.subr.bf16.mxu0 0
    %2678 = vmatpush1.bf16.msra.mxu0 %v2614
    %2679 = vmatprep.subr.bf16.mxu0 0
    %2680 = vmatpush1.bf16.msra.mxu0 %v2615
    %2681 = vmatprep.subr.bf16.mxu0 0
    %2682 = vmatpush1.bf16.msra.mxu0 %v2616
    %2683 = vmatprep.subr.bf16.mxu0 0
    %2684 = vmatpush1.bf16.msra.mxu0 %v2617
    %2685 = vmatprep.subr.bf16.mxu0 0
    %2686 = vmatpush1.bf16.msra.mxu0 %v2618
    %2687 = vmatprep.subr.bf16.mxu0 0
    %2688 = vmatpush1.bf16.msra.mxu0 %v2619
    %2689 = vmatprep.subr.bf16.mxu0 0
    %2690 = vmatpush1.bf16.msra.mxu0 %v2620
    %2691 = vmatprep.subr.bf16.mxu0 0
    %2692 = vmatpush1.bf16.msra.mxu0 %v2621
    %2693 = vmatprep.subr.bf16.mxu0 0
    %2694 = vmatpush1.bf16.msra.mxu0 %v2622
    %2695 = vmatprep.subr.bf16.mxu0 0
    %2696 = vmatpush1.bf16.msra.mxu0 %v2623
    %2697 = vmatprep.subr.bf16.mxu0 0
    %2698 = vmatpush1.bf16.msra.mxu0 %v2624
    %2699 = vmatprep.subr.bf16.mxu0 0
    %2700 = vmatpush1.bf16.msra.mxu0 %v2625
    %2701 = vmatprep.subr.bf16.mxu0 0
    %2702 = vmatpush1.bf16.msra.mxu0 %v2626
    %2703 = vmatprep.mubr.bf16.mxu0 %v2475
    %2704 = vmatmul.mubr.bf16.gmra.mrb[0].mxu0 %v2411
    %v2705 = vpop.f32.mrb[0].mxu0
    %v2706 = vadd.f32 0.0, %v2705
    %v2707 = vpop.f32.mrb[0].mxu0
    %v2708 = vpop.f32.mrb[0].mxu0
    %v2709 = vadd.f32 0.0, %v2708
    %v2710 = vpop.f32.mrb[0].mxu0
    %2711 = vmatprep.mubr.bf16.mxu0 %v2478
    %2712 = vmatmul.mubr.bf16.gmra.mrb[0].mxu0 %v2414
    %v2713 = vpop.f32.mrb[0].mxu0
    %v2714 = vadd.f32 0.0, %v2713
    %v2715 = vpop.f32.mrb[0].mxu0
    %v2716 = vpop.f32.mrb[0].mxu0
    %v2717 = vadd.f32 0.0, %v2716
    %v2718 = vpop.f32.mrb[0].mxu0
    %2719 = vmatprep.mubr.bf16.mxu0 %v2481
    %2720 = vmatmul.mubr.bf16.gmra.mrb[0].mxu0 %v2417
    %v2721 = vpop.f32.mrb[0].mxu0
    %v2722 = vadd.f32 0.0, %v2721
    %v2723 = vpop.f32.mrb[0].mxu0
    %v2724 = vpop.f32.mrb[0].mxu0
    %v2725 = vadd.f32 0.0, %v2724
    %v2726 = vpop.f32.mrb[0].mxu0
    %2727 = vmatprep.mubr.bf16.mxu0 %v2484
    %2728 = vmatmul.mubr.bf16.gmra.mrb[0].mxu0 %v2420
    %v2729 = vpop.f32.mrb[0].mxu0
    %v2730 = vadd.f32 0.0, %v2729
    %v2731 = vpop.f32.mrb[0].mxu0
    %v2732 = vpop.f32.mrb[0].mxu0
    %v2733 = vadd.f32 0.0, %v2732
    %v2734 = vpop.f32.mrb[0].mxu0
    %2735 = vmatprep.mubr.bf16.mxu0 %v2487
    %2736 = vmatmul.mubr.bf16.gmra.mrb[0].mxu0 %v2423
    %v2737 = vpop.f32.mrb[0].mxu0
    %v2738 = vadd.f32 0.0, %v2737
    %v2739 = vpop.f32.mrb[0].mxu0
    %v2740 = vpop.f32.mrb[0].mxu0
    %v2741 = vadd.f32 0.0, %v2740
    %v2742 = vpop.f32.mrb[0].mxu0
    %2743 = vmatprep.mubr.bf16.mxu0 %v2490
    %2744 = vmatmul.mubr.bf16.gmra.mrb[0].mxu0 %v2426
    %v2745 = vpop.f32.mrb[0].mxu0
    %v2746 = vadd.f32 0.0, %v2745
    %v2747 = vpop.f32.mrb[0].mxu0
    %v2748 = vpop.f32.mrb[0].mxu0
    %v2749 = vadd.f32 0.0, %v2748
    %v2750 = vpop.f32.mrb[0].mxu0
    %2751 = vmatprep.mubr.bf16.mxu0 %v2493
    %2752 = vmatmul.mubr.bf16.gmra.mrb[0].mxu0 %v2429
    %v2753 = vpop.f32.mrb[0].mxu0
    %v2754 = vadd.f32 0.0, %v2753
    %v2755 = vpop.f32.mrb[0].mxu0
    %v2756 = vpop.f32.mrb[0].mxu0
    %v2757 = vadd.f32 0.0, %v2756
    %v2758 = vpop.f32.mrb[0].mxu0
    %2759 = vmatprep.mubr.bf16.mxu0 %v2496
    %2760 = vmatmul.mubr.bf16.gmra.mrb[0].mxu0 %v2432
    %v2761 = vpop.f32.mrb[0].mxu0
    %v2762 = vadd.f32 0.0, %v2761
    %v2763 = vpop.f32.mrb[0].mxu0
    %v2764 = vpop.f32.mrb[0].mxu0
    %v2765 = vadd.f32 0.0, %v2764
    %v2766 = vpop.f32.mrb[0].mxu0
    %2767 = vdwg.mxu0
    %2768 = vmatprep.subr.bf16.mxu0 0
    %2769 = vmatpush1.bf16.msra.mxu0 %v2627
    %2770 = vmatprep.subr.bf16.mxu0 0
    %2771 = vmatpush1.bf16.msra.mxu0 %v2628
    %2772 = vmatprep.subr.bf16.mxu0 0
    %2773 = vmatpush1.bf16.msra.mxu0 0
    %2774 = vmatprep.subr.bf16.mxu0 0
    %2775 = vmatpush1.bf16.msra.mxu0 0
    %2776 = vmatprep.subr.bf16.mxu0 0
    %2777 = vmatpush1.bf16.msra.mxu0 0
    %2778 = vmatprep.subr.bf16.mxu0 0
    %2779 = vmatpush1.bf16.msra.mxu0 0
    %2780 = vmatprep.subr.bf16.mxu0 0
    %2781 = vmatpush1.bf16.msra.mxu0 0
    %2782 = vmatprep.subr.bf16.mxu0 0
    %2783 = vmatpush1.bf16.msra.mxu0 0
    %2784 = vmatprep.subr.bf16.mxu0 0
    %2785 = vmatpush1.bf16.msra.mxu0 0
    %2786 = vmatprep.subr.bf16.mxu0 0
    %2787 = vmatpush1.bf16.msra.mxu0 0
    %2788 = vmatprep.subr.bf16.mxu0 0
    %2789 = vmatpush1.bf16.msra.mxu0 0
    %2790 = vmatprep.subr.bf16.mxu0 0
    %2791 = vmatpush1.bf16.msra.mxu0 0
    %2792 = vmatprep.subr.bf16.mxu0 0
    %2793 = vmatpush1.bf16.msra.mxu0 0
    %2794 = vmatprep.subr.bf16.mxu0 0
    %2795 = vmatpush1.bf16.msra.mxu0 0
    %2796 = vmatprep.subr.bf16.mxu0 0
    %2797 = vmatpush1.bf16.msra.mxu0 0
    %2798 = vmatprep.subr.bf16.mxu0 0
    %2799 = vmatpush1.bf16.msra.mxu0 0
    %2800 = vmatprep.mubr.bf16.mxu0 0
    %2801 = vmatmul.mubr.bf16.gmra.mrb[0].mxu0 %v2648
    %v2802 = vpop.f32.mrb[0].mxu0
    %v2803 = vadd.f32 %v2706, %v2802
    %v2804 = vpop.f32.mrb[0].mxu0
    %v2805 = vpop.f32.mrb[0].mxu0
    %v2806 = vadd.f32 %v2709, %v2805
    %v2807 = vpop.f32.mrb[0].mxu0
    %2808 = vmatprep.mubr.bf16.mxu0 0
    %2809 = vmatmul.mubr.bf16.gmra.mrb[0].mxu0 %v2651
    %v2810 = vpop.f32.mrb[0].mxu0
    %v2811 = vadd.f32 %v2714, %v2810
    %v2812 = vpop.f32.mrb[0].mxu0
    %v2813 = vpop.f32.mrb[0].mxu0
    %v2814 = vadd.f32 %v2717, %v2813
    %v2815 = vpop.f32.mrb[0].mxu0
    %2816 = vmatprep.mubr.bf16.mxu0 0
    %2817 = vmatmul.mubr.bf16.gmra.mrb[0].mxu0 %v2654
    %v2818 = vpop.f32.mrb[0].mxu0
    %v2819 = vadd.f32 %v2722, %v2818
    %v2820 = vpop.f32.mrb[0].mxu0
    %v2821 = vpop.f32.mrb[0].mxu0
    %v2822 = vadd.f32 %v2725, %v2821
    %v2823 = vpop.f32.mrb[0].mxu0
    %2824 = vmatprep.mubr.bf16.mxu0 0
    %2825 = vmatmul.mubr.bf16.gmra.mrb[0].mxu0 %v2657
    %v2826 = vpop.f32.mrb[0].mxu0
    %v2827 = vadd.f32 %v2730, %v2826
    %v2828 = vpop.f32.mrb[0].mxu0
    %v2829 = vpop.f32.mrb[0].mxu0
    %v2830 = vadd.f32 %v2733, %v2829
    %v2831 = vpop.f32.mrb[0].mxu0
    %2832 = vmatprep.mubr.bf16.mxu0 0
    %2833 = vmatmul.mubr.bf16.gmra.mrb[0].mxu0 %v2660
    %v2834 = vpop.f32.mrb[0].mxu0
    %v2835 = vadd.f32 %v2738, %v2834
    %v2836 = vpop.f32.mrb[0].mxu0
    %v2837 = vpop.f32.mrb[0].mxu0
    %v2838 = vadd.f32 %v2741, %v2837
    %v2839 = vpop.f32.mrb[0].mxu0
    %2840 = vmatprep.mubr.bf16.mxu0 0
    %2841 = vmatmul.mubr.bf16.gmra.mrb[0].mxu0 %v2663
    %v2842 = vpop.f32.mrb[0].mxu0
    %v2843 = vadd.f32 %v2746, %v2842
    %v2844 = vpop.f32.mrb[0].mxu0
    %v2845 = vpop.f32.mrb[0].mxu0
    %v2846 = vadd.f32 %v2749, %v2845
    %v2847 = vpop.f32.mrb[0].mxu0
    %2848 = vmatprep.mubr.bf16.mxu0 0
    %2849 = vmatmul.mubr.bf16.gmra.mrb[0].mxu0 %v2666
    %v2850 = vpop.f32.mrb[0].mxu0
    %v2851 = vadd.f32 %v2754, %v2850
    %v2852 = vpop.f32.mrb[0].mxu0
    %v2853 = vpop.f32.mrb[0].mxu0
    %v2854 = vadd.f32 %v2757, %v2853
    %v2855 = vpop.f32.mrb[0].mxu0
    %2856 = vmatprep.mubr.bf16.mxu0 0
    %2857 = vmatmul.mubr.bf16.gmra.mrb[0].mxu0 %v2669
    %v2858 = vpop.f32.mrb[0].mxu0
    %v2859 = vadd.f32 %v2762, %v2858
    %v2860 = vpop.f32.mrb[0].mxu0
    %v2861 = vpop.f32.mrb[0].mxu0
    %v2862 = vadd.f32 %v2765, %v2861
    %v2863 = vpop.f32.mrb[0].mxu0
    %2864 = vdwg.mxu0
    %v2865 = vsel %vm105, %v2803, 0.0
    %v2866 = vsel %vm105, %v2806, 0.0
    %v2867 = vadd.f32 %v2865, %v2866
    %v2868 = vsel %vm105, %v2811, 0.0
    %v2869 = vadd.f32 %v2867, %v2868
    %v2870 = vsel %vm105, %v2814, 0.0
    %v2871 = vadd.f32 %v2869, %v2870
    %v2872 = vsel %vm105, %v2819, 0.0
    %v2873 = vadd.f32 %v2871, %v2872
    %v2874 = vsel %vm105, %v2822, 0.0
    %v2875 = vadd.f32 %v2873, %v2874
    %v2876 = vsel %vm105, %v2827, 0.0
    %v2877 = vadd.f32 %v2875, %v2876
    %v2878 = vsel %vm105, %v2830, 0.0
    %v2879 = vadd.f32 %v2877, %v2878
    %v2880 = vsel %vm105, %v2835, 0.0
    %v2881 = vadd.f32 %v2879, %v2880
    %v2882 = vsel %vm105, %v2838, 0.0
    %v2883 = vadd.f32 %v2881, %v2882
    %v2884 = vsel %vm105, %v2843, 0.0
    %v2885 = vadd.f32 %v2883, %v2884
    %v2886 = vsel %vm105, %v2846, 0.0
    %v2887 = vadd.f32 %v2885, %v2886
    %v2888 = vsel %vm105, %v2851, 0.0
    %v2889 = vadd.f32 %v2887, %v2888
    %v2890 = vsel %vm105, %v2854, 0.0
    %v2891 = vadd.f32 %v2889, %v2890
    %v2892 = vsel %vm105, %v2859, 0.0
    %v2893 = vadd.f32 %v2891, %v2892
    %v2894 = vsel %vm105, %v2862, 0.0
    %v2895 = vadd.f32 %v2893, %v2894
    %v2896 = vrot.slane %v2895, 4
    %v2897 = vadd.f32 %v2895, %v2896
    %v2898 = vrot.slane %v2897, 2
    %v2899 = vadd.f32 %v2897, %v2898
    %v2900 = vrot.slane %v2899, 1
    %v2901 = vadd.f32 %v2899, %v2900
    %v2902 = vmul.f32 %v2901, %v1457
    %v2903 = vmul.f32 %v2803, %v2803
    %v2904 = vmul.f32 %v2806, %v2806
    %v2905 = vmul.f32 %v2811, %v2811
    %v2906 = vmul.f32 %v2814, %v2814
    %v2907 = vmul.f32 %v2819, %v2819
    %v2908 = vmul.f32 %v2822, %v2822
    %v2909 = vmul.f32 %v2827, %v2827
    %v2910 = vmul.f32 %v2830, %v2830
    %v2911 = vmul.f32 %v2835, %v2835
    %v2912 = vmul.f32 %v2838, %v2838
    %v2913 = vmul.f32 %v2843, %v2843
    %v2914 = vmul.f32 %v2846, %v2846
    %v2915 = vmul.f32 %v2851, %v2851
    %v2916 = vmul.f32 %v2854, %v2854
    %v2917 = vmul.f32 %v2859, %v2859
    %v2918 = vmul.f32 %v2862, %v2862
    %v2919 = vsel %vm105, %v2903, 0.0
    %v2920 = vsel %vm105, %v2904, 0.0
    %v2921 = vadd.f32 %v2919, %v2920
    %v2922 = vsel %vm105, %v2905, 0.0
    %v2923 = vadd.f32 %v2921, %v2922
    %v2924 = vsel %vm105, %v2906, 0.0
    %v2925 = vadd.f32 %v2923, %v2924
    %v2926 = vsel %vm105, %v2907, 0.0
    %v2927 = vadd.f32 %v2925, %v2926
    %v2928 = vsel %vm105, %v2908, 0.0
    %v2929 = vadd.f32 %v2927, %v2928
    %v2930 = vsel %vm105, %v2909, 0.0
    %v2931 = vadd.f32 %v2929, %v2930
    %v2932 = vsel %vm105, %v2910, 0.0
    %v2933 = vadd.f32 %v2931, %v2932
    %v2934 = vsel %vm105, %v2911, 0.0
    %v2935 = vadd.f32 %v2933, %v2934
    %v2936 = vsel %vm105, %v2912, 0.0
    %v2937 = vadd.f32 %v2935, %v2936
    %v2938 = vsel %vm105, %v2913, 0.0
    %v2939 = vadd.f32 %v2937, %v2938
    %v2940 = vsel %vm105, %v2914, 0.0
    %v2941 = vadd.f32 %v2939, %v2940
    %v2942 = vsel %vm105, %v2915, 0.0
    %v2943 = vadd.f32 %v2941, %v2942
    %v2944 = vsel %vm105, %v2916, 0.0
    %v2945 = vadd.f32 %v2943, %v2944
    %v2946 = vsel %vm105, %v2917, 0.0
    %v2947 = vadd.f32 %v2945, %v2946
    %v2948 = vsel %vm105, %v2918, 0.0
    %v2949 = vadd.f32 %v2947, %v2948
    %v2950 = vrot.slane %v2949, 4
    %v2951 = vadd.f32 %v2949, %v2950
    %v2952 = vrot.slane %v2951, 2
    %v2953 = vadd.f32 %v2951, %v2952
    %v2954 = vrot.slane %v2953, 1
    %v2955 = vadd.f32 %v2953, %v2954
    %v2956 = vmul.f32 %v2955, %v1457
    %v2957 = vmul.f32 %v2902, %v2902
    %v2958 = vsub.f32 %v2956, %v2957
    %v2959 = vmax.f32 %v2958, 0.0
    %v2960 = vsub.f32 %v2803, %v2902
    %v2961 = vsub.f32 %v2806, %v2902
    %v2962 = vsub.f32 %v2811, %v2902
    %v2963 = vsub.f32 %v2814, %v2902
    %v2964 = vsub.f32 %v2819, %v2902
    %v2965 = vsub.f32 %v2822, %v2902
    %v2966 = vsub.f32 %v2827, %v2902
    %v2967 = vsub.f32 %v2830, %v2902
    %v2968 = vsub.f32 %v2835, %v2902
    %v2969 = vsub.f32 %v2838, %v2902
    %v2970 = vsub.f32 %v2843, %v2902
    %v2971 = vsub.f32 %v2846, %v2902
    %v2972 = vsub.f32 %v2851, %v2902
    %v2973 = vsub.f32 %v2854, %v2902
    %v2974 = vsub.f32 %v2859, %v2902
    %v2975 = vsub.f32 %v2862, %v2902
    %v2976 = vadd.f32 %v2959, 1e-05
    %v2977 = vrsqrt.pop %v2976
    %v2978 = vmul.f32 %v2960, %v2977
    %v2979 = vmul.f32 %v2961, %v2977
    %v2980 = vmul.f32 %v2962, %v2977
    %v2981 = vmul.f32 %v2963, %v2977
    %v2982 = vmul.f32 %v2964, %v2977
    %v2983 = vmul.f32 %v2965, %v2977
    %v2984 = vmul.f32 %v2966, %v2977
    %v2985 = vmul.f32 %v2967, %v2977
    %v2986 = vmul.f32 %v2968, %v2977
    %v2987 = vmul.f32 %v2969, %v2977
    %v2988 = vmul.f32 %v2970, %v2977
    %v2989 = vmul.f32 %v2971, %v2977
    %v2990 = vmul.f32 %v2972, %v2977
    %v2991 = vmul.f32 %v2973, %v2977
    %v2992 = vmul.f32 %v2974, %v2977
    %v2993 = vmul.f32 %v2975, %v2977
    %v2995 = vlaneseq
    %v2996 = vshrl.u32 %v2995, 7
    %v2997 = vsub.s32 0, %v2996
    %v2998 = vrot.slane %v2536, %v2997
    %v3000 = vmul.f32 %v2978, %v2998
    %v3001 = vmul.f32 %v2979, %v2998
    %v3002 = vmul.f32 %v2980, %v2998
    %v3003 = vmul.f32 %v2981, %v2998
    %v3004 = vmul.f32 %v2982, %v2998
    %v3005 = vmul.f32 %v2983, %v2998
    %v3006 = vmul.f32 %v2984, %v2998
    %v3007 = vmul.f32 %v2985, %v2998
    %v3008 = vmul.f32 %v2986, %v2998
    %v3009 = vmul.f32 %v2987, %v2998
    %v3010 = vmul.f32 %v2988, %v2998
    %v3011 = vmul.f32 %v2989, %v2998
    %v3012 = vmul.f32 %v2990, %v2998
    %v3013 = vmul.f32 %v2991, %v2998
    %v3014 = vmul.f32 %v2992, %v2998
    %v3015 = vmul.f32 %v2993, %v2998
    %v3017 = vlaneseq
    %v3018 = vshrl.u32 %v3017, 7
    %v3019 = vsub.s32 0, %v3018
    %v3020 = vrot.slane %v2538, %v3019
    %v3022 = vadd.f32 %v3000, %v3020
    %v3023 = vadd.f32 %v3001, %v3020
    %v3024 = vadd.f32 %v3002, %v3020
    %v3025 = vadd.f32 %v3003, %v3020
    %v3026 = vadd.f32 %v3004, %v3020
    %v3027 = vadd.f32 %v3005, %v3020
    %v3028 = vadd.f32 %v3006, %v3020
    %v3029 = vadd.f32 %v3007, %v3020
    %v3030 = vadd.f32 %v3008, %v3020
    %v3031 = vadd.f32 %v3009, %v3020
    %v3032 = vadd.f32 %v3010, %v3020
    %v3033 = vadd.f32 %v3011, %v3020
    %v3034 = vadd.f32 %v3012, %v3020
    %v3035 = vadd.f32 %v3013, %v3020
    %v3036 = vadd.f32 %v3014, %v3020
    %v3037 = vadd.f32 %v3015, %v3020
    %v3038 = vmax.f32 %v3022, 0.0
    %v3039 = vmax.f32 %v3023, 0.0
    %v3040 = vmax.f32 %v3024, 0.0
    %v3041 = vmax.f32 %v3025, 0.0
    %v3042 = vmax.f32 %v3026, 0.0
    %v3043 = vmax.f32 %v3027, 0.0
    %v3044 = vmax.f32 %v3028, 0.0
    %v3045 = vmax.f32 %v3029, 0.0
    %v3046 = vmax.f32 %v3030, 0.0
    %v3047 = vmax.f32 %v3031, 0.0
    %v3048 = vmax.f32 %v3032, 0.0
    %v3049 = vmax.f32 %v3033, 0.0
    %v3050 = vmax.f32 %v3034, 0.0
    %v3051 = vmax.f32 %v3035, 0.0
    %v3052 = vmax.f32 %v3036, 0.0
    %v3053 = vmax.f32 %v3037, 0.0
    %3054 = vst.msk [vmem:[%s163 + $0x1] sm:$0xff] %vm105, %v3038
    %3055 = vst.msk [vmem:[%s163 + $0x11] sm:$0xff] %vm105, %v3039
    %3056 = vst.msk [vmem:[%s163 + $0x21] sm:$0xff] %vm105, %v3040
    %3057 = vst.msk [vmem:[%s163 + $0x31] sm:$0xff] %vm105, %v3041
    %3058 = vst.msk [vmem:[%s163 + $0x41] sm:$0xff] %vm105, %v3042
    %3059 = vst.msk [vmem:[%s163 + $0x51] sm:$0xff] %vm105, %v3043
    %3060 = vst.msk [vmem:[%s163 + $0x61] sm:$0xff] %vm105, %v3044
    %3061 = vst.msk [vmem:[%s163 + $0x71] sm:$0xff] %vm105, %v3045
    %3062 = vst.msk [vmem:[%s163 + $0xa1] sm:$0xff] %vm105, %v3046
    %3063 = vst.msk [vmem:[%s163 + $0xb1] sm:$0xff] %vm105, %v3047
    %3064 = vst.msk [vmem:[%s163 + $0xc1] sm:$0xff] %vm105, %v3048
    %3065 = vst.msk [vmem:[%s163 + $0xd1] sm:$0xff] %vm105, %v3049
    %3066 = vst.msk [vmem:[%s163 + $0xe1] sm:$0xff] %vm105, %v3050
    %3067 = vst.msk [vmem:[%s163 + $0xf1] sm:$0xff] %vm105, %v3051
    %3068 = vst.msk [vmem:[%s163 + $0x101] sm:$0xff] %vm105, %v3052
    %3069 = vst.msk [vmem:[%s163 + $0x111] sm:$0xff] %vm105, %v3053
    %v3070 = vld [vmem:[#allocation2] sm:$0xff]
    %v3071 = vld [vmem:[#allocation2 + $0x10] sm:$0xff]
    %v3072 = vld [vmem:[#allocation2 + $0x20] sm:$0xff]
    %v3073 = vld [vmem:[#allocation2 + $0x30] sm:$0xff]
    %v3074 = vld [vmem:[#allocation2 + $0x40] sm:$0xff]
    %v3075 = vld [vmem:[#allocation2 + $0x50] sm:$0xff]
    %v3076 = vld [vmem:[#allocation2 + $0x60] sm:$0xff]
    %v3077 = vld [vmem:[#allocation2 + $0x70] sm:$0xff]
    %v3078 = vld [vmem:[#allocation2 + $0xa0] sm:$0xff]
    %v3079 = vld [vmem:[#allocation2 + $0xb0] sm:$0xff]
    %v3080 = vld [vmem:[#allocation2 + $0xc0] sm:$0xff]
    %v3081 = vld [vmem:[#allocation2 + $0xd0] sm:$0xff]
    %v3082 = vld [vmem:[#allocation2 + $0xe0] sm:$0xff]
    %v3083 = vld [vmem:[#allocation2 + $0xf0] sm:$0xff]
    %v3084 = vld [vmem:[#allocation2 + $0x100] sm:$0xff]
    %v3085 = vld [vmem:[#allocation2 + $0x110] sm:$0xff]
    %v3086 = vpack.c.bf16 %v3070, %v3070
    %v3087 = vpack.c.bf16 %v3071, %v3071
    %v3088 = vpack.c.bf16 %v3072, %v3072
    %v3089 = vpack.c.bf16 %v3073, %v3073
    %v3090 = vpack.c.bf16 %v3074, %v3074
    %v3091 = vpack.c.bf16 %v3075, %v3075
    %v3092 = vpack.c.bf16 %v3076, %v3076
    %v3093 = vpack.c.bf16 %v3077, %v3077
    %v3094 = vpack.c.bf16 %v3078, %v3078
    %v3095 = vpack.c.bf16 %v3079, %v3079
    %v3096 = vpack.c.bf16 %v3080, %v3080
    %v3097 = vpack.c.bf16 %v3081, %v3081
    %v3098 = vpack.c.bf16 %v3082, %v3082
    %v3099 = vpack.c.bf16 %v3083, %v3083
    %v3100 = vpack.c.bf16 %v3084, %v3084
    %v3101 = vpack.c.bf16 %v3085, %v3085
    %v3102 = vld [vmem:[#allocation2 + $0x1] sm:$0xff]
    %v3103 = vld [vmem:[#allocation2 + $0x11] sm:$0xff]
    %v3104 = vld [vmem:[#allocation2 + $0x21] sm:$0xff]
    %v3105 = vld [vmem:[#allocation2 + $0x31] sm:$0xff]
    %v3106 = vld [vmem:[#allocation2 + $0x41] sm:$0xff]
    %v3107 = vld [vmem:[#allocation2 + $0x51] sm:$0xff]
    %v3108 = vld [vmem:[#allocation2 + $0x61] sm:$0xff]
    %v3109 = vld [vmem:[#allocation2 + $0x71] sm:$0xff]
    %v3110 = vld [vmem:[#allocation2 + $0xa1] sm:$0xff]
    %v3111 = vld [vmem:[#allocation2 + $0xb1] sm:$0xff]
    %v3112 = vld [vmem:[#allocation2 + $0xc1] sm:$0xff]
    %v3113 = vld [vmem:[#allocation2 + $0xd1] sm:$0xff]
    %v3114 = vld [vmem:[#allocation2 + $0xe1] sm:$0xff]
    %v3115 = vld [vmem:[#allocation2 + $0xf1] sm:$0xff]
    %v3116 = vld [vmem:[#allocation2 + $0x101] sm:$0xff]
    %v3117 = vld [vmem:[#allocation2 + $0x111] sm:$0xff]
    %v3118 = vpack.c.bf16 %v3102, %v3102
    %v3119 = vpack.c.bf16 %v3103, %v3103
    %v3120 = vpack.c.bf16 %v3104, %v3104
    %v3121 = vpack.c.bf16 %v3105, %v3105
    %v3122 = vpack.c.bf16 %v3106, %v3106
    %v3123 = vpack.c.bf16 %v3107, %v3107
    %v3124 = vpack.c.bf16 %v3108, %v3108
    %v3125 = vpack.c.bf16 %v3109, %v3109
    %v3126 = vpack.c.bf16 %v3110, %v3110
    %v3127 = vpack.c.bf16 %v3111, %v3111
    %v3128 = vpack.c.bf16 %v3112, %v3112
    %v3129 = vpack.c.bf16 %v3113, %v3113
    %v3130 = vpack.c.bf16 %v3114, %v3114
    %v3131 = vpack.c.bf16 %v3115, %v3115
    %v3132 = vpack.c.bf16 %v3116, %v3116
    %v3133 = vpack.c.bf16 %v3117, %v3117
    %v3134 = vld [vmem:[#allocation2 + $0x2] sm:$0xff]
    %v3135 = vld [vmem:[#allocation2 + $0x12] sm:$0xff]
    %v3136 = vld [vmem:[#allocation2 + $0x22] sm:$0xff]
    %v3137 = vld [vmem:[#allocation2 + $0x32] sm:$0xff]
    %v3138 = vld [vmem:[#allocation2 + $0x42] sm:$0xff]
    %v3139 = vld [vmem:[#allocation2 + $0x52] sm:$0xff]
    %v3140 = vld [vmem:[#allocation2 + $0x62] sm:$0xff]
    %v3141 = vld [vmem:[#allocation2 + $0x72] sm:$0xff]
    %v3142 = vld [vmem:[#allocation2 + $0xa2] sm:$0xff]
    %v3143 = vld [vmem:[#allocation2 + $0xb2] sm:$0xff]
    %v3144 = vld [vmem:[#allocation2 + $0xc2] sm:$0xff]
    %v3145 = vld [vmem:[#allocation2 + $0xd2] sm:$0xff]
    %v3146 = vld [vmem:[#allocation2 + $0xe2] sm:$0xff]
    %v3147 = vld [vmem:[#allocation2 + $0xf2] sm:$0xff]
    %v3148 = vld [vmem:[#allocation2 + $0x102] sm:$0xff]
    %v3149 = vld [vmem:[#allocation2 + $0x112] sm:$0xff]
    %v3150 = vpack.c.bf16 %v3134, %v3134
    %v3151 = vpack.c.bf16 %v3135, %v3135
    %v3152 = vpack.c.bf16 %v3136, %v3136
    %v3153 = vpack.c.bf16 %v3137, %v3137
    %v3154 = vpack.c.bf16 %v3138, %v3138
    %v3155 = vpack.c.bf16 %v3139, %v3139
    %v3156 = vpack.c.bf16 %v3140, %v3140
    %v3157 = vpack.c.bf16 %v3141, %v3141
    %v3158 = vpack.c.bf16 %v3142, %v3142
    %v3159 = vpack.c.bf16 %v3143, %v3143
    %v3160 = vpack.c.bf16 %v3144, %v3144
    %v3161 = vpack.c.bf16 %v3145, %v3145
    %v3162 = vpack.c.bf16 %v3146, %v3146
    %v3163 = vpack.c.bf16 %v3147, %v3147
    %v3164 = vpack.c.bf16 %v3148, %v3148
    %v3165 = vpack.c.bf16 %v3149, %v3149
    %v3166 = vld [vmem:[%s163] sm:$0xff]
    %v3167 = vld [vmem:[%s163 + $0x10] sm:$0xff]
    %v3168 = vld [vmem:[%s163 + $0x20] sm:$0xff]
    %v3169 = vld [vmem:[%s163 + $0x30] sm:$0xff]
    %v3170 = vld [vmem:[%s163 + $0x40] sm:$0xff]
    %v3171 = vld [vmem:[%s163 + $0x50] sm:$0xff]
    %v3172 = vld [vmem:[%s163 + $0x60] sm:$0xff]
    %v3173 = vld [vmem:[%s163 + $0x70] sm:$0xff]
    %v3174 = vld [vmem:[%s163 + $0xa0] sm:$0xff]
    %v3175 = vld [vmem:[%s163 + $0xb0] sm:$0xff]
    %v3176 = vld [vmem:[%s163 + $0xc0] sm:$0xff]
    %v3177 = vld [vmem:[%s163 + $0xd0] sm:$0xff]
    %v3178 = vld [vmem:[%s163 + $0xe0] sm:$0xff]
    %v3179 = vld [vmem:[%s163 + $0xf0] sm:$0xff]
    %v3180 = vld [vmem:[%s163 + $0x100] sm:$0xff]
    %v3181 = vld [vmem:[%s163 + $0x110] sm:$0xff]
    %v3182 = vpack.c.bf16 %v3166, %v3166
    %v3183 = vpack.c.bf16 %v3167, %v3167
    %v3184 = vpack.c.bf16 %v3168, %v3168
    %v3185 = vpack.c.bf16 %v3169, %v3169
    %v3186 = vpack.c.bf16 %v3170, %v3170
    %v3187 = vpack.c.bf16 %v3171, %v3171
    %v3188 = vpack.c.bf16 %v3172, %v3172
    %v3189 = vpack.c.bf16 %v3173, %v3173
    %v3190 = vpack.c.bf16 %v3174, %v3174
    %v3191 = vpack.c.bf16 %v3175, %v3175
    %v3192 = vpack.c.bf16 %v3176, %v3176
    %v3193 = vpack.c.bf16 %v3177, %v3177
    %v3194 = vpack.c.bf16 %v3178, %v3178
    %v3195 = vpack.c.bf16 %v3179, %v3179
    %v3196 = vpack.c.bf16 %v3180, %v3180
    %v3197 = vpack.c.bf16 %v3181, %v3181
    %v3198 = vld [vmem:[%s163 + $0x1] sm:$0xff]
    %v3199 = vld [vmem:[%s163 + $0x11] sm:$0xff]
    %v3200 = vld [vmem:[%s163 + $0x21] sm:$0xff]
    %v3201 = vld [vmem:[%s163 + $0x31] sm:$0xff]
    %v3202 = vld [vmem:[%s163 + $0x41] sm:$0xff]
    %v3203 = vld [vmem:[%s163 + $0x51] sm:$0xff]
    %v3204 = vld [vmem:[%s163 + $0x61] sm:$0xff]
    %v3205 = vld [vmem:[%s163 + $0x71] sm:$0xff]
    %v3206 = vld [vmem:[%s163 + $0xa1] sm:$0xff]
    %v3207 = vld [vmem:[%s163 + $0xb1] sm:$0xff]
    %v3208 = vld [vmem:[%s163 + $0xc1] sm:$0xff]
    %v3209 = vld [vmem:[%s163 + $0xd1] sm:$0xff]
    %v3210 = vld [vmem:[%s163 + $0xe1] sm:$0xff]
    %v3211 = vld [vmem:[%s163 + $0xf1] sm:$0xff]
    %v3212 = vld [vmem:[%s163 + $0x101] sm:$0xff]
    %v3213 = vld [vmem:[%s163 + $0x111] sm:$0xff]
    %v3214 = vpack.c.bf16 %v3198, %v3198
    %v3215 = vpack.c.bf16 %v3199, %v3199
    %v3216 = vpack.c.bf16 %v3200, %v3200
    %v3217 = vpack.c.bf16 %v3201, %v3201
    %v3218 = vpack.c.bf16 %v3202, %v3202
    %v3219 = vpack.c.bf16 %v3203, %v3203
    %v3220 = vpack.c.bf16 %v3204, %v3204
    %v3221 = vpack.c.bf16 %v3205, %v3205
    %v3222 = vpack.c.bf16 %v3206, %v3206
    %v3223 = vpack.c.bf16 %v3207, %v3207
    %v3224 = vpack.c.bf16 %v3208, %v3208
    %v3225 = vpack.c.bf16 %v3209, %v3209
    %v3226 = vpack.c.bf16 %v3210, %v3210
    %v3227 = vpack.c.bf16 %v3211, %v3211
    %v3228 = vpack.c.bf16 %v3212, %v3212
    %v3229 = vpack.c.bf16 %v3213, %v3213
    %v3230 = vld [vmem:[%s163 + $0x2] sm:$0xff]
    %v3231 = vld [vmem:[%s163 + $0x12] sm:$0xff]
    %v3232 = vld [vmem:[%s163 + $0x22] sm:$0xff]
    %v3233 = vld [vmem:[%s163 + $0x32] sm:$0xff]
    %v3234 = vld [vmem:[%s163 + $0x42] sm:$0xff]
    %v3235 = vld [vmem:[%s163 + $0x52] sm:$0xff]
    %v3236 = vld [vmem:[%s163 + $0x62] sm:$0xff]
    %v3237 = vld [vmem:[%s163 + $0x72] sm:$0xff]
    %v3238 = vld [vmem:[%s163 + $0xa2] sm:$0xff]
    %v3239 = vld [vmem:[%s163 + $0xb2] sm:$0xff]
    %v3240 = vld [vmem:[%s163 + $0xc2] sm:$0xff]
    %v3241 = vld [vmem:[%s163 + $0xd2] sm:$0xff]
    %v3242 = vld [vmem:[%s163 + $0xe2] sm:$0xff]
    %v3243 = vld [vmem:[%s163 + $0xf2] sm:$0xff]
    %v3244 = vld [vmem:[%s163 + $0x102] sm:$0xff]
    %v3245 = vld [vmem:[%s163 + $0x112] sm:$0xff]
    %v3246 = vpack.c.bf16 %v3230, %v3230
    %v3247 = vpack.c.bf16 %v3231, %v3231
    %v3248 = vpack.c.bf16 %v3232, %v3232
    %v3249 = vpack.c.bf16 %v3233, %v3233
    %v3250 = vpack.c.bf16 %v3234, %v3234
    %v3251 = vpack.c.bf16 %v3235, %v3235
    %v3252 = vpack.c.bf16 %v3236, %v3236
    %v3253 = vpack.c.bf16 %v3237, %v3237
    %v3254 = vpack.c.bf16 %v3238, %v3238
    %v3255 = vpack.c.bf16 %v3239, %v3239
    %v3256 = vpack.c.bf16 %v3240, %v3240
    %v3257 = vpack.c.bf16 %v3241, %v3241
    %v3258 = vpack.c.bf16 %v3242, %v3242
    %v3259 = vpack.c.bf16 %v3243, %v3243
    %v3260 = vpack.c.bf16 %v3244, %v3244
    %v3261 = vpack.c.bf16 %v3245, %v3245
    %v3262 = vld [vmem:[%s373] sm:$0xff]
    %v3263 = vld [vmem:[%s373 + $0x10] sm:$0xff]
    %v3264 = vld [vmem:[%s373 + $0x20] sm:$0xff]
    %v3265 = vld [vmem:[%s373 + $0x30] sm:$0xff]
    %v3266 = vld [vmem:[%s373 + $0x40] sm:$0xff]
    %v3267 = vld [vmem:[%s373 + $0x50] sm:$0xff]
    %v3268 = vld [vmem:[%s373 + $0x60] sm:$0xff]
    %v3269 = vld [vmem:[%s373 + $0x70] sm:$0xff]
    %v3270 = vld [vmem:[%s373 + $0xa0] sm:$0xff]
    %v3271 = vld [vmem:[%s373 + $0xb0] sm:$0xff]
    %v3272 = vld [vmem:[%s373 + $0xc0] sm:$0xff]
    %v3273 = vld [vmem:[%s373 + $0xd0] sm:$0xff]
    %v3274 = vld [vmem:[%s373 + $0xe0] sm:$0xff]
    %v3275 = vld [vmem:[%s373 + $0xf0] sm:$0xff]
    %v3276 = vld [vmem:[%s373 + $0x100] sm:$0xff]
    %v3277 = vld [vmem:[%s373 + $0x110] sm:$0xff]
    %v3278 = vpack.c.bf16 %v3262, %v3262
    %v3279 = vpack.c.bf16 %v3263, %v3263
    %v3280 = vpack.c.bf16 %v3264, %v3264
    %v3281 = vpack.c.bf16 %v3265, %v3265
    %v3282 = vpack.c.bf16 %v3266, %v3266
    %v3283 = vpack.c.bf16 %v3267, %v3267
    %v3284 = vpack.c.bf16 %v3268, %v3268
    %v3285 = vpack.c.bf16 %v3269, %v3269
    %v3286 = vpack.c.bf16 %v3270, %v3270
    %v3287 = vpack.c.bf16 %v3271, %v3271
    %v3288 = vpack.c.bf16 %v3272, %v3272
    %v3289 = vpack.c.bf16 %v3273, %v3273
    %v3290 = vpack.c.bf16 %v3274, %v3274
    %v3291 = vpack.c.bf16 %v3275, %v3275
    %v3292 = vpack.c.bf16 %v3276, %v3276
    %v3293 = vpack.c.bf16 %v3277, %v3277
    %v3294 = vld [vmem:[%s373 + $0x1] sm:$0xff]
    %v3295 = vld [vmem:[%s373 + $0x11] sm:$0xff]
    %v3296 = vld [vmem:[%s373 + $0x21] sm:$0xff]
    %v3297 = vld [vmem:[%s373 + $0x31] sm:$0xff]
    %v3298 = vld [vmem:[%s373 + $0x41] sm:$0xff]
    %v3299 = vld [vmem:[%s373 + $0x51] sm:$0xff]
    %v3300 = vld [vmem:[%s373 + $0x61] sm:$0xff]
    %v3301 = vld [vmem:[%s373 + $0x71] sm:$0xff]
    %v3302 = vld [vmem:[%s373 + $0xa1] sm:$0xff]
    %v3303 = vld [vmem:[%s373 + $0xb1] sm:$0xff]
    %v3304 = vld [vmem:[%s373 + $0xc1] sm:$0xff]
    %v3305 = vld [vmem:[%s373 + $0xd1] sm:$0xff]
    %v3306 = vld [vmem:[%s373 + $0xe1] sm:$0xff]
    %v3307 = vld [vmem:[%s373 + $0xf1] sm:$0xff]
    %v3308 = vld [vmem:[%s373 + $0x101] sm:$0xff]
    %v3309 = vld [vmem:[%s373 + $0x111] sm:$0xff]
    %v3310 = vpack.c.bf16 %v3294, %v3294
    %v3311 = vpack.c.bf16 %v3295, %v3295
    %v3312 = vpack.c.bf16 %v3296, %v3296
    %v3313 = vpack.c.bf16 %v3297, %v3297
    %v3314 = vpack.c.bf16 %v3298, %v3298
    %v3315 = vpack.c.bf16 %v3299, %v3299
    %v3316 = vpack.c.bf16 %v3300, %v3300
    %v3317 = vpack.c.bf16 %v3301, %v3301
    %v3318 = vpack.c.bf16 %v3302, %v3302
    %v3319 = vpack.c.bf16 %v3303, %v3303
    %v3320 = vpack.c.bf16 %v3304, %v3304
    %v3321 = vpack.c.bf16 %v3305, %v3305
    %v3322 = vpack.c.bf16 %v3306, %v3306
    %v3323 = vpack.c.bf16 %v3307, %v3307
    %v3324 = vpack.c.bf16 %v3308, %v3308
    %v3325 = vpack.c.bf16 %v3309, %v3309
    %v3326 = vld [vmem:[%s373 + $0x2] sm:$0xff]
    %v3327 = vld [vmem:[%s373 + $0x12] sm:$0xff]
    %v3328 = vld [vmem:[%s373 + $0x22] sm:$0xff]
    %v3329 = vld [vmem:[%s373 + $0x32] sm:$0xff]
    %v3330 = vld [vmem:[%s373 + $0x42] sm:$0xff]
    %v3331 = vld [vmem:[%s373 + $0x52] sm:$0xff]
    %v3332 = vld [vmem:[%s373 + $0x62] sm:$0xff]
    %v3333 = vld [vmem:[%s373 + $0x72] sm:$0xff]
    %v3334 = vld [vmem:[%s373 + $0xa2] sm:$0xff]
    %v3335 = vld [vmem:[%s373 + $0xb2] sm:$0xff]
    %v3336 = vld [vmem:[%s373 + $0xc2] sm:$0xff]
    %v3337 = vld [vmem:[%s373 + $0xd2] sm:$0xff]
    %v3338 = vld [vmem:[%s373 + $0xe2] sm:$0xff]
    %v3339 = vld [vmem:[%s373 + $0xf2] sm:$0xff]
    %v3340 = vld [vmem:[%s373 + $0x102] sm:$0xff]
    %v3341 = vld [vmem:[%s373 + $0x112] sm:$0xff]
    %v3342 = vpack.c.bf16 %v3326, %v3326
    %v3343 = vpack.c.bf16 %v3327, %v3327
    %v3344 = vpack.c.bf16 %v3328, %v3328
    %v3345 = vpack.c.bf16 %v3329, %v3329
    %v3346 = vpack.c.bf16 %v3330, %v3330
    %v3347 = vpack.c.bf16 %v3331, %v3331
    %v3348 = vpack.c.bf16 %v3332, %v3332
    %v3349 = vpack.c.bf16 %v3333, %v3333
    %v3350 = vpack.c.bf16 %v3334, %v3334
    %v3351 = vpack.c.bf16 %v3335, %v3335
    %v3352 = vpack.c.bf16 %v3336, %v3336
    %v3353 = vpack.c.bf16 %v3337, %v3337
    %v3354 = vpack.c.bf16 %v3338, %v3338
    %v3355 = vpack.c.bf16 %v3339, %v3339
    %v3356 = vpack.c.bf16 %v3340, %v3340
    %v3357 = vpack.c.bf16 %v3341, %v3341
    %v3374 = vunpack.c.l.b16 %v3086
    %v3375 = vunpack.c.l.b16 %v3087
    %v3376 = vunpack.c.l.b16 %v3088
    %v3377 = vunpack.c.l.b16 %v3089
    %v3378 = vunpack.c.l.b16 %v3090
    %v3379 = vunpack.c.l.b16 %v3091
    %v3380 = vunpack.c.l.b16 %v3092
    %v3381 = vunpack.c.l.b16 %v3093
    %v3382 = vunpack.c.l.b16 %v3094
    %v3383 = vunpack.c.l.b16 %v3095
    %v3384 = vunpack.c.l.b16 %v3096
    %v3385 = vunpack.c.l.b16 %v3097
    %v3386 = vunpack.c.l.b16 %v3098
    %v3387 = vunpack.c.l.b16 %v3099
    %v3388 = vunpack.c.l.b16 %v3100
    %v3389 = vunpack.c.l.b16 %v3101
    %v3390 = vpack.c.b16 %v3375, %v3374
    %v3391 = vpack.c.b16 %v3377, %v3376
    %v3392 = vpack.c.b16 %v3379, %v3378
    %v3393 = vpack.c.b16 %v3381, %v3380
    %v3394 = vpack.c.b16 %v3383, %v3382
    %v3395 = vpack.c.b16 %v3385, %v3384
    %v3396 = vpack.c.b16 %v3387, %v3386
    %v3397 = vpack.c.b16 %v3389, %v3388
    %v3414 = vunpack.c.l.b16 %v3118
    %v3415 = vunpack.c.l.b16 %v3119
    %v3416 = vunpack.c.l.b16 %v3120
    %v3417 = vunpack.c.l.b16 %v3121
    %v3418 = vunpack.c.l.b16 %v3122
    %v3419 = vunpack.c.l.b16 %v3123
    %v3420 = vunpack.c.l.b16 %v3124
    %v3421 = vunpack.c.l.b16 %v3125
    %v3422 = vunpack.c.l.b16 %v3126
    %v3423 = vunpack.c.l.b16 %v3127
    %v3424 = vunpack.c.l.b16 %v3128
    %v3425 = vunpack.c.l.b16 %v3129
    %v3426 = vunpack.c.l.b16 %v3130
    %v3427 = vunpack.c.l.b16 %v3131
    %v3428 = vunpack.c.l.b16 %v3132
    %v3429 = vunpack.c.l.b16 %v3133
    %v3430 = vpack.c.b16 %v3415, %v3414
    %v3431 = vpack.c.b16 %v3417, %v3416
    %v3432 = vpack.c.b16 %v3419, %v3418
    %v3433 = vpack.c.b16 %v3421, %v3420
    %v3434 = vpack.c.b16 %v3423, %v3422
    %v3435 = vpack.c.b16 %v3425, %v3424
    %v3436 = vpack.c.b16 %v3427, %v3426
    %v3437 = vpack.c.b16 %v3429, %v3428
    %3438 = vrot.lane.b32.xlu0 %v3430, 32
    %v3439 = vpop.permute.xlu0 %3438
    %3440 = vrot.lane.b32.xlu0 %v3431, 32
    %v3441 = vpop.permute.xlu0 %3440
    %3442 = vrot.lane.b32.xlu0 %v3432, 32
    %v3443 = vpop.permute.xlu0 %3442
    %3444 = vrot.lane.b32.xlu0 %v3433, 32
    %v3445 = vpop.permute.xlu0 %3444
    %3446 = vrot.lane.b32.xlu0 %v3434, 32
    %v3447 = vpop.permute.xlu0 %3446
    %3448 = vrot.lane.b32.xlu0 %v3435, 32
    %v3449 = vpop.permute.xlu0 %3448
    %3450 = vrot.lane.b32.xlu0 %v3436, 32
    %v3451 = vpop.permute.xlu0 %3450
    %3452 = vrot.lane.b32.xlu0 %v3437, 32
    %v3453 = vpop.permute.xlu0 %3452
    %v3470 = vunpack.c.l.b16 %v3150
    %v3471 = vunpack.c.l.b16 %v3151
    %v3472 = vunpack.c.l.b16 %v3152
    %v3473 = vunpack.c.l.b16 %v3153
    %v3474 = vunpack.c.l.b16 %v3154
    %v3475 = vunpack.c.l.b16 %v3155
    %v3476 = vunpack.c.l.b16 %v3156
    %v3477 = vunpack.c.l.b16 %v3157
    %v3478 = vunpack.c.l.b16 %v3158
    %v3479 = vunpack.c.l.b16 %v3159
    %v3480 = vunpack.c.l.b16 %v3160
    %v3481 = vunpack.c.l.b16 %v3161
    %v3482 = vunpack.c.l.b16 %v3162
    %v3483 = vunpack.c.l.b16 %v3163
    %v3484 = vunpack.c.l.b16 %v3164
    %v3485 = vunpack.c.l.b16 %v3165
    %v3486 = vpack.c.b16 %v3471, %v3470
    %v3487 = vpack.c.b16 %v3473, %v3472
    %v3488 = vpack.c.b16 %v3475, %v3474
    %v3489 = vpack.c.b16 %v3477, %v3476
    %v3490 = vpack.c.b16 %v3479, %v3478
    %v3491 = vpack.c.b16 %v3481, %v3480
    %v3492 = vpack.c.b16 %v3483, %v3482
    %v3493 = vpack.c.b16 %v3485, %v3484
    %3494 = vrot.lane.b32.xlu0 %v3486, 64
    %v3495 = vpop.permute.xlu0 %3494
    %3496 = vrot.lane.b32.xlu0 %v3487, 64
    %v3497 = vpop.permute.xlu0 %3496
    %3498 = vrot.lane.b32.xlu0 %v3488, 64
    %v3499 = vpop.permute.xlu0 %3498
    %3500 = vrot.lane.b32.xlu0 %v3489, 64
    %v3501 = vpop.permute.xlu0 %3500
    %3502 = vrot.lane.b32.xlu0 %v3490, 64
    %v3503 = vpop.permute.xlu0 %3502
    %3504 = vrot.lane.b32.xlu0 %v3491, 64
    %v3505 = vpop.permute.xlu0 %3504
    %3506 = vrot.lane.b32.xlu0 %v3492, 64
    %v3507 = vpop.permute.xlu0 %3506
    %3508 = vrot.lane.b32.xlu0 %v3493, 64
    %v3509 = vpop.permute.xlu0 %3508
    %v3526 = vunpack.c.l.b16 %v3182
    %v3527 = vunpack.c.l.b16 %v3183
    %v3528 = vunpack.c.l.b16 %v3184
    %v3529 = vunpack.c.l.b16 %v3185
    %v3530 = vunpack.c.l.b16 %v3186
    %v3531 = vunpack.c.l.b16 %v3187
    %v3532 = vunpack.c.l.b16 %v3188
    %v3533 = vunpack.c.l.b16 %v3189
    %v3534 = vunpack.c.l.b16 %v3190
    %v3535 = vunpack.c.l.b16 %v3191
    %v3536 = vunpack.c.l.b16 %v3192
    %v3537 = vunpack.c.l.b16 %v3193
    %v3538 = vunpack.c.l.b16 %v3194
    %v3539 = vunpack.c.l.b16 %v3195
    %v3540 = vunpack.c.l.b16 %v3196
    %v3541 = vunpack.c.l.b16 %v3197
    %v3542 = vpack.c.b16 %v3527, %v3526
    %v3543 = vpack.c.b16 %v3529, %v3528
    %v3544 = vpack.c.b16 %v3531, %v3530
    %v3545 = vpack.c.b16 %v3533, %v3532
    %v3546 = vpack.c.b16 %v3535, %v3534
    %v3547 = vpack.c.b16 %v3537, %v3536
    %v3548 = vpack.c.b16 %v3539, %v3538
    %v3549 = vpack.c.b16 %v3541, %v3540
    %3550 = vrot.lane.b32.xlu0 %v3542, 96
    %v3551 = vpop.permute.xlu0 %3550
    %3552 = vrot.lane.b32.xlu0 %v3543, 96
    %v3553 = vpop.permute.xlu0 %3552
    %3554 = vrot.lane.b32.xlu0 %v3544, 96
    %v3555 = vpop.permute.xlu0 %3554
    %3556 = vrot.lane.b32.xlu0 %v3545, 96
    %v3557 = vpop.permute.xlu0 %3556
    %3558 = vrot.lane.b32.xlu0 %v3546, 96
    %v3559 = vpop.permute.xlu0 %3558
    %3560 = vrot.lane.b32.xlu0 %v3547, 96
    %v3561 = vpop.permute.xlu0 %3560
    %3562 = vrot.lane.b32.xlu0 %v3548, 96
    %v3563 = vpop.permute.xlu0 %3562
    %3564 = vrot.lane.b32.xlu0 %v3549, 96
    %v3565 = vpop.permute.xlu0 %3564
    %v3582 = vunpack.c.l.b16 %v3214
    %v3583 = vunpack.c.l.b16 %v3215
    %v3584 = vunpack.c.l.b16 %v3216
    %v3585 = vunpack.c.l.b16 %v3217
    %v3586 = vunpack.c.l.b16 %v3218
    %v3587 = vunpack.c.l.b16 %v3219
    %v3588 = vunpack.c.l.b16 %v3220
    %v3589 = vunpack.c.l.b16 %v3221
    %v3590 = vunpack.c.l.b16 %v3222
    %v3591 = vunpack.c.l.b16 %v3223
    %v3592 = vunpack.c.l.b16 %v3224
    %v3593 = vunpack.c.l.b16 %v3225
    %v3594 = vunpack.c.l.b16 %v3226
    %v3595 = vunpack.c.l.b16 %v3227
    %v3596 = vunpack.c.l.b16 %v3228
    %v3597 = vunpack.c.l.b16 %v3229
    %v3598 = vpack.c.b16 %v3583, %v3582
    %v3599 = vpack.c.b16 %v3585, %v3584
    %v3600 = vpack.c.b16 %v3587, %v3586
    %v3601 = vpack.c.b16 %v3589, %v3588
    %v3602 = vpack.c.b16 %v3591, %v3590
    %v3603 = vpack.c.b16 %v3593, %v3592
    %v3604 = vpack.c.b16 %v3595, %v3594
    %v3605 = vpack.c.b16 %v3597, %v3596
    %v3622 = vunpack.c.l.b16 %v3246
    %v3623 = vunpack.c.l.b16 %v3247
    %v3624 = vunpack.c.l.b16 %v3248
    %v3625 = vunpack.c.l.b16 %v3249
    %v3626 = vunpack.c.l.b16 %v3250
    %v3627 = vunpack.c.l.b16 %v3251
    %v3628 = vunpack.c.l.b16 %v3252
    %v3629 = vunpack.c.l.b16 %v3253
    %v3630 = vunpack.c.l.b16 %v3254
    %v3631 = vunpack.c.l.b16 %v3255
    %v3632 = vunpack.c.l.b16 %v3256
    %v3633 = vunpack.c.l.b16 %v3257
    %v3634 = vunpack.c.l.b16 %v3258
    %v3635 = vunpack.c.l.b16 %v3259
    %v3636 = vunpack.c.l.b16 %v3260
    %v3637 = vunpack.c.l.b16 %v3261
    %v3638 = vpack.c.b16 %v3623, %v3622
    %v3639 = vpack.c.b16 %v3625, %v3624
    %v3640 = vpack.c.b16 %v3627, %v3626
    %v3641 = vpack.c.b16 %v3629, %v3628
    %v3642 = vpack.c.b16 %v3631, %v3630
    %v3643 = vpack.c.b16 %v3633, %v3632
    %v3644 = vpack.c.b16 %v3635, %v3634
    %v3645 = vpack.c.b16 %v3637, %v3636
    %3646 = vrot.lane.b32.xlu0 %v3638, 32
    %v3647 = vpop.permute.xlu0 %3646
    %3648 = vrot.lane.b32.xlu0 %v3639, 32
    %v3649 = vpop.permute.xlu0 %3648
    %3650 = vrot.lane.b32.xlu0 %v3640, 32
    %v3651 = vpop.permute.xlu0 %3650
    %3652 = vrot.lane.b32.xlu0 %v3641, 32
    %v3653 = vpop.permute.xlu0 %3652
    %3654 = vrot.lane.b32.xlu0 %v3642, 32
    %v3655 = vpop.permute.xlu0 %3654
    %3656 = vrot.lane.b32.xlu0 %v3643, 32
    %v3657 = vpop.permute.xlu0 %3656
    %3658 = vrot.lane.b32.xlu0 %v3644, 32
    %v3659 = vpop.permute.xlu0 %3658
    %3660 = vrot.lane.b32.xlu0 %v3645, 32
    %v3661 = vpop.permute.xlu0 %3660
    %v3678 = vunpack.c.l.b16 %v3278
    %v3679 = vunpack.c.l.b16 %v3279
    %v3680 = vunpack.c.l.b16 %v3280
    %v3681 = vunpack.c.l.b16 %v3281
    %v3682 = vunpack.c.l.b16 %v3282
    %v3683 = vunpack.c.l.b16 %v3283
    %v3684 = vunpack.c.l.b16 %v3284
    %v3685 = vunpack.c.l.b16 %v3285
    %v3686 = vunpack.c.l.b16 %v3286
    %v3687 = vunpack.c.l.b16 %v3287
    %v3688 = vunpack.c.l.b16 %v3288
    %v3689 = vunpack.c.l.b16 %v3289
    %v3690 = vunpack.c.l.b16 %v3290
    %v3691 = vunpack.c.l.b16 %v3291
    %v3692 = vunpack.c.l.b16 %v3292
    %v3693 = vunpack.c.l.b16 %v3293
    %v3694 = vpack.c.b16 %v3679, %v3678
    %v3695 = vpack.c.b16 %v3681, %v3680
    %v3696 = vpack.c.b16 %v3683, %v3682
    %v3697 = vpack.c.b16 %v3685, %v3684
    %v3698 = vpack.c.b16 %v3687, %v3686
    %v3699 = vpack.c.b16 %v3689, %v3688
    %v3700 = vpack.c.b16 %v3691, %v3690
    %v3701 = vpack.c.b16 %v3693, %v3692
    %3702 = vrot.lane.b32.xlu0 %v3694, 64
    %v3703 = vpop.permute.xlu0 %3702
    %3704 = vrot.lane.b32.xlu0 %v3695, 64
    %v3705 = vpop.permute.xlu0 %3704
    %3706 = vrot.lane.b32.xlu0 %v3696, 64
    %v3707 = vpop.permute.xlu0 %3706
    %3708 = vrot.lane.b32.xlu0 %v3697, 64
    %v3709 = vpop.permute.xlu0 %3708
    %3710 = vrot.lane.b32.xlu0 %v3698, 64
    %v3711 = vpop.permute.xlu0 %3710
    %3712 = vrot.lane.b32.xlu0 %v3699, 64
    %v3713 = vpop.permute.xlu0 %3712
    %3714 = vrot.lane.b32.xlu0 %v3700, 64
    %v3715 = vpop.permute.xlu0 %3714
    %3716 = vrot.lane.b32.xlu0 %v3701, 64
    %v3717 = vpop.permute.xlu0 %3716
    %v3734 = vunpack.c.l.b16 %v3310
    %v3735 = vunpack.c.l.b16 %v3311
    %v3736 = vunpack.c.l.b16 %v3312
    %v3737 = vunpack.c.l.b16 %v3313
    %v3738 = vunpack.c.l.b16 %v3314
    %v3739 = vunpack.c.l.b16 %v3315
    %v3740 = vunpack.c.l.b16 %v3316
    %v3741 = vunpack.c.l.b16 %v3317
    %v3742 = vunpack.c.l.b16 %v3318
    %v3743 = vunpack.c.l.b16 %v3319
    %v3744 = vunpack.c.l.b16 %v3320
    %v3745 = vunpack.c.l.b16 %v3321
    %v3746 = vunpack.c.l.b16 %v3322
    %v3747 = vunpack.c.l.b16 %v3323
    %v3748 = vunpack.c.l.b16 %v3324
    %v3749 = vunpack.c.l.b16 %v3325
    %v3750 = vpack.c.b16 %v3735, %v3734
    %v3751 = vpack.c.b16 %v3737, %v3736
    %v3752 = vpack.c.b16 %v3739, %v3738
    %v3753 = vpack.c.b16 %v3741, %v3740
    %v3754 = vpack.c.b16 %v3743, %v3742
    %v3755 = vpack.c.b16 %v3745, %v3744
    %v3756 = vpack.c.b16 %v3747, %v3746
    %v3757 = vpack.c.b16 %v3749, %v3748
    %3758 = vrot.lane.b32.xlu0 %v3750, 96
    %v3759 = vpop.permute.xlu0 %3758
    %3760 = vrot.lane.b32.xlu0 %v3751, 96
    %v3761 = vpop.permute.xlu0 %3760
    %3762 = vrot.lane.b32.xlu0 %v3752, 96
    %v3763 = vpop.permute.xlu0 %3762
    %3764 = vrot.lane.b32.xlu0 %v3753, 96
    %v3765 = vpop.permute.xlu0 %3764
    %3766 = vrot.lane.b32.xlu0 %v3754, 96
    %v3767 = vpop.permute.xlu0 %3766
    %3768 = vrot.lane.b32.xlu0 %v3755, 96
    %v3769 = vpop.permute.xlu0 %3768
    %3770 = vrot.lane.b32.xlu0 %v3756, 96
    %v3771 = vpop.permute.xlu0 %3770
    %3772 = vrot.lane.b32.xlu0 %v3757, 96
    %v3773 = vpop.permute.xlu0 %3772
    %v3790 = vunpack.c.l.b16 %v3342
    %v3791 = vunpack.c.l.b16 %v3343
    %v3792 = vunpack.c.l.b16 %v3344
    %v3793 = vunpack.c.l.b16 %v3345
    %v3794 = vunpack.c.l.b16 %v3346
    %v3795 = vunpack.c.l.b16 %v3347
    %v3796 = vunpack.c.l.b16 %v3348
    %v3797 = vunpack.c.l.b16 %v3349
    %v3798 = vunpack.c.l.b16 %v3350
    %v3799 = vunpack.c.l.b16 %v3351
    %v3800 = vunpack.c.l.b16 %v3352
    %v3801 = vunpack.c.l.b16 %v3353
    %v3802 = vunpack.c.l.b16 %v3354
    %v3803 = vunpack.c.l.b16 %v3355
    %v3804 = vunpack.c.l.b16 %v3356
    %v3805 = vunpack.c.l.b16 %v3357
    %v3806 = vpack.c.b16 %v3791, %v3790
    %v3807 = vpack.c.b16 %v3793, %v3792
    %v3808 = vpack.c.b16 %v3795, %v3794
    %v3809 = vpack.c.b16 %v3797, %v3796
    %v3810 = vpack.c.b16 %v3799, %v3798
    %v3811 = vpack.c.b16 %v3801, %v3800
    %v3812 = vpack.c.b16 %v3803, %v3802
    %v3813 = vpack.c.b16 %v3805, %v3804
    %v3816 = vsel %vm105, %v3390, %v3439
    %v3819 = vsel %vm105, %v3391, %v3441
    %v3822 = vsel %vm105, %v3392, %v3443
    %v3825 = vsel %vm105, %v3393, %v3445
    %v3828 = vsel %vm105, %v3394, %v3447
    %v3831 = vsel %vm105, %v3395, %v3449
    %v3834 = vsel %vm105, %v3396, %v3451
    %v3837 = vsel %vm105, %v3397, %v3453
    %v3839 = vsel %vm950, %v3816, %v3495
    %v3841 = vsel %vm950, %v3819, %v3497
    %v3843 = vsel %vm950, %v3822, %v3499
    %v3845 = vsel %vm950, %v3825, %v3501
    %v3847 = vsel %vm950, %v3828, %v3503
    %v3849 = vsel %vm950, %v3831, %v3505
    %v3851 = vsel %vm950, %v3834, %v3507
    %v3853 = vsel %vm950, %v3837, %v3509
    %v3855 = vsel %vm967, %v3839, %v3551
    %v3858 = vsel %vm967, %v3841, %v3553
    %v3861 = vsel %vm967, %v3843, %v3555
    %v3864 = vsel %vm967, %v3845, %v3557
    %v3867 = vsel %vm967, %v3847, %v3559
    %v3870 = vsel %vm967, %v3849, %v3561
    %v3873 = vsel %vm967, %v3851, %v3563
    %v3876 = vsel %vm967, %v3853, %v3565
    %v3880 = vsel %vm105, %v3598, %v3647
    %v3883 = vsel %vm105, %v3599, %v3649
    %v3886 = vsel %vm105, %v3600, %v3651
    %v3889 = vsel %vm105, %v3601, %v3653
    %v3892 = vsel %vm105, %v3602, %v3655
    %v3895 = vsel %vm105, %v3603, %v3657
    %v3898 = vsel %vm105, %v3604, %v3659
    %v3901 = vsel %vm105, %v3605, %v3661
    %v3903 = vsel %vm950, %v3880, %v3703
    %v3905 = vsel %vm950, %v3883, %v3705
    %v3907 = vsel %vm950, %v3886, %v3707
    %v3909 = vsel %vm950, %v3889, %v3709
    %v3911 = vsel %vm950, %v3892, %v3711
    %v3913 = vsel %vm950, %v3895, %v3713
    %v3915 = vsel %vm950, %v3898, %v3715
    %v3917 = vsel %vm950, %v3901, %v3717
    %v3919 = vsel %vm967, %v3903, %v3759
    %v3922 = vsel %vm967, %v3905, %v3761
    %v3925 = vsel %vm967, %v3907, %v3763
    %v3928 = vsel %vm967, %v3909, %v3765
    %v3931 = vsel %vm967, %v3911, %v3767
    %v3934 = vsel %vm967, %v3913, %v3769
    %v3937 = vsel %vm967, %v3915, %v3771
    %v3940 = vsel %vm967, %v3917, %v3773
    %s3942 = scalar_lea.vmem %s1, 288
    %v3943 = vld [vmem:[%s3942] sm:$0xf]
    %v3944 = vld [vmem:[%s3942 + $0x4] sm:$0xf]
    %v3945 = vld [vmem:[%s3942 + $0x8] sm:$0xf]
    %v3946 = vld [vmem:[%s3942 + $0xc] sm:$0xf]
    %v3947 = vld [vmem:[%s3942 + $0x10] sm:$0xf]
    %v3948 = vld [vmem:[%s3942 + $0x14] sm:$0xf]
    %v3949 = vld [vmem:[%s3942 + $0x18] sm:$0xf]
    %v3950 = vld [vmem:[%s3942 + $0x1c] sm:$0xf]
    %v3951 = vld [vmem:[%s3942 + $0x20] sm:$0xf]
    %v3952 = vld [vmem:[%s3942 + $0x24] sm:$0xf]
    %v3953 = vld [vmem:[%s3942 + $0x28] sm:$0xf]
    %v3954 = vld [vmem:[%s3942 + $0x2c] sm:$0xf]
    %v3955 = vld [vmem:[%s3942 + $0x30] sm:$0xf]
    %v3956 = vld [vmem:[%s3942 + $0x34] sm:$0xf]
    %v3957 = vld [vmem:[%s3942 + $0x38] sm:$0xf]
    %v3958 = vld [vmem:[%s3942 + $0x3c] sm:$0xf]
    %v3959 = vld [vmem:[%s3942 + $0x40] sm:$0xf]
    %v3960 = vld [vmem:[%s3942 + $0x44] sm:$0xf]
    %v3961 = vld [vmem:[%s3942 + $0x48] sm:$0xf]
    %v3962 = vld [vmem:[%s3942 + $0x4c] sm:$0xf]
    %v3963 = vld [vmem:[%s3942 + $0x50] sm:$0xf]
    %v3964 = vld [vmem:[%s3942 + $0x54] sm:$0xf]
    %v3965 = vld [vmem:[%s3942 + $0x58] sm:$0xf]
    %v3966 = vld [vmem:[%s3942 + $0x5c] sm:$0xf]
    %v3967 = vld [vmem:[%s3942 + $0x60] sm:$0xf]
    %v3968 = vld [vmem:[%s3942 + $0x64] sm:$0xf]
    %v3969 = vld [vmem:[%s3942 + $0x68] sm:$0xf]
    %v3970 = vld [vmem:[%s3942 + $0x6c] sm:$0xf]
    %v3971 = vld [vmem:[%s3942 + $0x70] sm:$0xf]
    %v3972 = vld [vmem:[%s3942 + $0x74] sm:$0xf]
    %v3973 = vld [vmem:[%s3942 + $0x78] sm:$0xf]
    %v3974 = vld [vmem:[%s3942 + $0x7c] sm:$0xf]
    %v3975 = vld [vmem:[%s3942 + $0x80] sm:$0xf]
    %v3976 = vld [vmem:[%s3942 + $0x84] sm:$0xf]
    %v3977 = vld [vmem:[%s3942 + $0x88] sm:$0xf]
    %v3978 = vld [vmem:[%s3942 + $0x8c] sm:$0xf]
    %s3979 = scalar_lea.vmem [#allocation5], 2
    %v3980 = vld [vmem:[%s3979] sm:$0x1]
    %s3981 = scalar_lea.vmem [#allocation7], 2
    %v3982 = vld [vmem:[%s3981] sm:$0x1]
    %v4019 = vunpack.c.l.b16 %v3943
    %v4020 = vunpack.c.l.b16 %v3944
    %v4021 = vunpack.c.l.b16 %v3945
    %v4022 = vunpack.c.l.b16 %v3946
    %v4023 = vunpack.c.l.b16 %v3947
    %v4024 = vunpack.c.l.b16 %v3948
    %v4025 = vunpack.c.l.b16 %v3949
    %v4026 = vunpack.c.l.b16 %v3950
    %v4027 = vunpack.c.l.b16 %v3951
    %v4028 = vunpack.c.l.b16 %v3952
    %v4029 = vunpack.c.l.b16 %v3953
    %v4030 = vunpack.c.l.b16 %v3954
    %v4031 = vunpack.c.l.b16 %v3955
    %v4032 = vunpack.c.l.b16 %v3956
    %v4033 = vunpack.c.l.b16 %v3957
    %v4034 = vunpack.c.l.b16 %v3958
    %v4035 = vunpack.c.l.b16 %v3959
    %v4036 = vunpack.c.l.b16 %v3960
    %v4037 = vunpack.c.l.b16 %v3961
    %v4038 = vunpack.c.l.b16 %v3962
    %v4039 = vunpack.c.l.b16 %v3963
    %v4040 = vunpack.c.l.b16 %v3964
    %v4041 = vunpack.c.l.b16 %v3965
    %v4042 = vunpack.c.l.b16 %v3966
    %v4043 = vunpack.c.l.b16 %v3967
    %v4044 = vunpack.c.l.b16 %v3968
    %v4045 = vunpack.c.l.b16 %v3969
    %v4046 = vunpack.c.l.b16 %v3970
    %v4047 = vunpack.c.l.b16 %v3971
    %v4048 = vunpack.c.l.b16 %v3972
    %v4049 = vunpack.c.l.b16 %v3973
    %v4050 = vunpack.c.l.b16 %v3974
    %v4051 = vunpack.c.l.b16 %v3975
    %v4052 = vunpack.c.l.b16 %v3976
    %v4053 = vunpack.c.l.b16 %v3977
    %v4054 = vunpack.c.l.b16 %v3978
    %v4055 = vpack.c.b16 %v4020, %v4019
    %v4056 = vpack.c.b16 %v4022, %v4021
    %v4057 = vpack.c.b16 %v4024, %v4023
    %v4058 = vpack.c.b16 %v4026, %v4025
    %v4059 = vpack.c.b16 %v4028, %v4027
    %v4060 = vpack.c.b16 %v4030, %v4029
    %v4061 = vpack.c.b16 %v4032, %v4031
    %v4062 = vpack.c.b16 %v4034, %v4033
    %v4063 = vpack.c.b16 %v4036, %v4035
    %v4064 = vpack.c.b16 %v4038, %v4037
    %v4065 = vpack.c.b16 %v4040, %v4039
    %v4066 = vpack.c.b16 %v4042, %v4041
    %v4067 = vpack.c.b16 %v4044, %v4043
    %v4068 = vpack.c.b16 %v4046, %v4045
    %v4069 = vpack.c.b16 %v4048, %v4047
    %v4070 = vpack.c.b16 %v4050, %v4049
    %v4071 = vpack.c.b16 %v4052, %v4051
    %v4072 = vpack.c.b16 %v4054, %v4053
    %v4092 = vsel %vm105, %v3806, 0
    %v4095 = vsel %vm105, %v3807, 0
    %v4098 = vsel %vm105, %v3808, 0
    %v4101 = vsel %vm105, %v3809, 0
    %v4104 = vsel %vm105, %v3810, 0
    %v4107 = vsel %vm105, %v3811, 0
    %v4110 = vsel %vm105, %v3812, 0
    %v4113 = vsel %vm105, %v3813, 0
    %4115 = vmatprep.subr.bf16.mxu0 0
    %4116 = vmatpush1.bf16.msra.mxu0 %v4055
    %4117 = vmatprep.subr.bf16.mxu0 0
    %4118 = vmatpush1.bf16.msra.mxu0 %v4056
    %4119 = vmatprep.subr.bf16.mxu0 0
    %4120 = vmatpush1.bf16.msra.mxu0 %v4057
    %4121 = vmatprep.subr.bf16.mxu0 0
    %4122 = vmatpush1.bf16.msra.mxu0 %v4058
    %4123 = vmatprep.subr.bf16.mxu0 0
    %4124 = vmatpush1.bf16.msra.mxu0 %v4059
    %4125 = vmatprep.subr.bf16.mxu0 0
    %4126 = vmatpush1.bf16.msra.mxu0 %v4060
    %4127 = vmatprep.subr.bf16.mxu0 0
    %4128 = vmatpush1.bf16.msra.mxu0 %v4061
    %4129 = vmatprep.subr.bf16.mxu0 0
    %4130 = vmatpush1.bf16.msra.mxu0 %v4062
    %4131 = vmatprep.subr.bf16.mxu0 0
    %4132 = vmatpush1.bf16.msra.mxu0 %v4063
    %4133 = vmatprep.subr.bf16.mxu0 0
    %4134 = vmatpush1.bf16.msra.mxu0 %v4064
    %4135 = vmatprep.subr.bf16.mxu0 0
    %4136 = vmatpush1.bf16.msra.mxu0 %v4065
    %4137 = vmatprep.subr.bf16.mxu0 0
    %4138 = vmatpush1.bf16.msra.mxu0 %v4066
    %4139 = vmatprep.subr.bf16.mxu0 0
    %4140 = vmatpush1.bf16.msra.mxu0 %v4067
    %4141 = vmatprep.subr.bf16.mxu0 0
    %4142 = vmatpush1.bf16.msra.mxu0 %v4068
    %4143 = vmatprep.subr.bf16.mxu0 0
    %4144 = vmatpush1.bf16.msra.mxu0 %v4069
    %4145 = vmatprep.subr.bf16.mxu0 0
    %4146 = vmatpush1.bf16.msra.mxu0 %v4070
    %4147 = vmatprep.mubr.bf16.mxu0 %v3919
    %4148 = vmatmul.mubr.bf16.gmra.mrb[0].mxu0 %v3855
    %v4149 = vpop.f32.mrb[0].mxu0
    %v4150 = vadd.f32 0.0, %v4149
    %v4151 = vpop.f32.mrb[0].mxu0
    %v4152 = vpop.f32.mrb[0].mxu0
    %v4153 = vadd.f32 0.0, %v4152
    %v4154 = vpop.f32.mrb[0].mxu0
    %4155 = vmatprep.mubr.bf16.mxu0 %v3922
    %4156 = vmatmul.mubr.bf16.gmra.mrb[0].mxu0 %v3858
    %v4157 = vpop.f32.mrb[0].mxu0
    %v4158 = vadd.f32 0.0, %v4157
    %v4159 = vpop.f32.mrb[0].mxu0
    %v4160 = vpop.f32.mrb[0].mxu0
    %v4161 = vadd.f32 0.0, %v4160
    %v4162 = vpop.f32.mrb[0].mxu0
    %4163 = vmatprep.mubr.bf16.mxu0 %v3925
    %4164 = vmatmul.mubr.bf16.gmra.mrb[0].mxu0 %v3861
    %v4165 = vpop.f32.mrb[0].mxu0
    %v4166 = vadd.f32 0.0, %v4165
    %v4167 = vpop.f32.mrb[0].mxu0
    %v4168 = vpop.f32.mrb[0].mxu0
    %v4169 = vadd.f32 0.0, %v4168
    %v4170 = vpop.f32.mrb[0].mxu0
    %4171 = vmatprep.mubr.bf16.mxu0 %v3928
    %4172 = vmatmul.mubr.bf16.gmra.mrb[0].mxu0 %v3864
    %v4173 = vpop.f32.mrb[0].mxu0
    %v4174 = vadd.f32 0.0, %v4173
    %v4175 = vpop.f32.mrb[0].mxu0
    %v4176 = vpop.f32.mrb[0].mxu0
    %v4177 = vadd.f32 0.0, %v4176
    %v4178 = vpop.f32.mrb[0].mxu0
    %4179 = vmatprep.mubr.bf16.mxu0 %v3931
    %4180 = vmatmul.mubr.bf16.gmra.mrb[0].mxu0 %v3867
    %v4181 = vpop.f32.mrb[0].mxu0
    %v4182 = vadd.f32 0.0, %v4181
    %v4183 = vpop.f32.mrb[0].mxu0
    %v4184 = vpop.f32.mrb[0].mxu0
    %v4185 = vadd.f32 0.0, %v4184
    %v4186 = vpop.f32.mrb[0].mxu0
    %4187 = vmatprep.mubr.bf16.mxu0 %v3934
    %4188 = vmatmul.mubr.bf16.gmra.mrb[0].mxu0 %v3870
    %v4189 = vpop.f32.mrb[0].mxu0
    %v4190 = vadd.f32 0.0, %v4189
    %v4191 = vpop.f32.mrb[0].mxu0
    %v4192 = vpop.f32.mrb[0].mxu0
    %v4193 = vadd.f32 0.0, %v4192
    %v4194 = vpop.f32.mrb[0].mxu0
    %4195 = vmatprep.mubr.bf16.mxu0 %v3937
    %4196 = vmatmul.mubr.bf16.gmra.mrb[0].mxu0 %v3873
    %v4197 = vpop.f32.mrb[0].mxu0
    %v4198 = vadd.f32 0.0, %v4197
    %v4199 = vpop.f32.mrb[0].mxu0
    %v4200 = vpop.f32.mrb[0].mxu0
    %v4201 = vadd.f32 0.0, %v4200
    %v4202 = vpop.f32.mrb[0].mxu0
    %4203 = vmatprep.mubr.bf16.mxu0 %v3940
    %4204 = vmatmul.mubr.bf16.gmra.mrb[0].mxu0 %v3876
    %v4205 = vpop.f32.mrb[0].mxu0
    %v4206 = vadd.f32 0.0, %v4205
    %v4207 = vpop.f32.mrb[0].mxu0
    %v4208 = vpop.f32.mrb[0].mxu0
    %v4209 = vadd.f32 0.0, %v4208
    %v4210 = vpop.f32.mrb[0].mxu0
    %4211 = vdwg.mxu0
    %4212 = vmatprep.subr.bf16.mxu0 0
    %4213 = vmatpush1.bf16.msra.mxu0 %v4071
    %4214 = vmatprep.subr.bf16.mxu0 0
    %4215 = vmatpush1.bf16.msra.mxu0 %v4072
    %4216 = vmatprep.subr.bf16.mxu0 0
    %4217 = vmatpush1.bf16.msra.mxu0 0
    %4218 = vmatprep.subr.bf16.mxu0 0
    %4219 = vmatpush1.bf16.msra.mxu0 0
    %4220 = vmatprep.subr.bf16.mxu0 0
    %4221 = vmatpush1.bf16.msra.mxu0 0
    %4222 = vmatprep.subr.bf16.mxu0 0
    %4223 = vmatpush1.bf16.msra.mxu0 0
    %4224 = vmatprep.subr.bf16.mxu0 0
    %4225 = vmatpush1.bf16.msra.mxu0 0
    %4226 = vmatprep.subr.bf16.mxu0 0
    %4227 = vmatpush1.bf16.msra.mxu0 0
    %4228 = vmatprep.subr.bf16.mxu0 0
    %4229 = vmatpush1.bf16.msra.mxu0 0
    %4230 = vmatprep.subr.bf16.mxu0 0
    %4231 = vmatpush1.bf16.msra.mxu0 0
    %4232 = vmatprep.subr.bf16.mxu0 0
    %4233 = vmatpush1.bf16.msra.mxu0 0
    %4234 = vmatprep.subr.bf16.mxu0 0
    %4235 = vmatpush1.bf16.msra.mxu0 0
    %4236 = vmatprep.subr.bf16.mxu0 0
    %4237 = vmatpush1.bf16.msra.mxu0 0
    %4238 = vmatprep.subr.bf16.mxu0 0
    %4239 = vmatpush1.bf16.msra.mxu0 0
    %4240 = vmatprep.subr.bf16.mxu0 0
    %4241 = vmatpush1.bf16.msra.mxu0 0
    %4242 = vmatprep.subr.bf16.mxu0 0
    %4243 = vmatpush1.bf16.msra.mxu0 0
    %4244 = vmatprep.mubr.bf16.mxu0 0
    %4245 = vmatmul.mubr.bf16.gmra.mrb[0].mxu0 %v4092
    %v4246 = vpop.f32.mrb[0].mxu0
    %v4247 = vadd.f32 %v4150, %v4246
    %v4248 = vpop.f32.mrb[0].mxu0
    %v4249 = vpop.f32.mrb[0].mxu0
    %v4250 = vadd.f32 %v4153, %v4249
    %v4251 = vpop.f32.mrb[0].mxu0
    %4252 = vmatprep.mubr.bf16.mxu0 0
    %4253 = vmatmul.mubr.bf16.gmra.mrb[0].mxu0 %v4095
    %v4254 = vpop.f32.mrb[0].mxu0
    %v4255 = vadd.f32 %v4158, %v4254
    %v4256 = vpop.f32.mrb[0].mxu0
    %v4257 = vpop.f32.mrb[0].mxu0
    %v4258 = vadd.f32 %v4161, %v4257
    %v4259 = vpop.f32.mrb[0].mxu0
    %4260 = vmatprep.mubr.bf16.mxu0 0
    %4261 = vmatmul.mubr.bf16.gmra.mrb[0].mxu0 %v4098
    %v4262 = vpop.f32.mrb[0].mxu0
    %v4263 = vadd.f32 %v4166, %v4262
    %v4264 = vpop.f32.mrb[0].mxu0
    %v4265 = vpop.f32.mrb[0].mxu0
    %v4266 = vadd.f32 %v4169, %v4265
    %v4267 = vpop.f32.mrb[0].mxu0
    %4268 = vmatprep.mubr.bf16.mxu0 0
    %4269 = vmatmul.mubr.bf16.gmra.mrb[0].mxu0 %v4101
    %v4270 = vpop.f32.mrb[0].mxu0
    %v4271 = vadd.f32 %v4174, %v4270
    %v4272 = vpop.f32.mrb[0].mxu0
    %v4273 = vpop.f32.mrb[0].mxu0
    %v4274 = vadd.f32 %v4177, %v4273
    %v4275 = vpop.f32.mrb[0].mxu0
    %4276 = vmatprep.mubr.bf16.mxu0 0
    %4277 = vmatmul.mubr.bf16.gmra.mrb[0].mxu0 %v4104
    %v4278 = vpop.f32.mrb[0].mxu0
    %v4279 = vadd.f32 %v4182, %v4278
    %v4280 = vpop.f32.mrb[0].mxu0
    %v4281 = vpop.f32.mrb[0].mxu0
    %v4282 = vadd.f32 %v4185, %v4281
    %v4283 = vpop.f32.mrb[0].mxu0
    %4284 = vmatprep.mubr.bf16.mxu0 0
    %4285 = vmatmul.mubr.bf16.gmra.mrb[0].mxu0 %v4107
    %v4286 = vpop.f32.mrb[0].mxu0
    %v4287 = vadd.f32 %v4190, %v4286
    %v4288 = vpop.f32.mrb[0].mxu0
    %v4289 = vpop.f32.mrb[0].mxu0
    %v4290 = vadd.f32 %v4193, %v4289
    %v4291 = vpop.f32.mrb[0].mxu0
    %4292 = vmatprep.mubr.bf16.mxu0 0
    %4293 = vmatmul.mubr.bf16.gmra.mrb[0].mxu0 %v4110
    %v4294 = vpop.f32.mrb[0].mxu0
    %v4295 = vadd.f32 %v4198, %v4294
    %v4296 = vpop.f32.mrb[0].mxu0
    %v4297 = vpop.f32.mrb[0].mxu0
    %v4298 = vadd.f32 %v4201, %v4297
    %v4299 = vpop.f32.mrb[0].mxu0
    %4300 = vmatprep.mubr.bf16.mxu0 0
    %4301 = vmatmul.mubr.bf16.gmra.mrb[0].mxu0 %v4113
    %v4302 = vpop.f32.mrb[0].mxu0
    %v4303 = vadd.f32 %v4206, %v4302
    %v4304 = vpop.f32.mrb[0].mxu0
    %v4305 = vpop.f32.mrb[0].mxu0
    %v4306 = vadd.f32 %v4209, %v4305
    %v4307 = vpop.f32.mrb[0].mxu0
    %4308 = vdwg.mxu0
    %v4309 = vsel %vm105, %v4247, 0.0
    %v4310 = vsel %vm105, %v4250, 0.0
    %v4311 = vadd.f32 %v4309, %v4310
    %v4312 = vsel %vm105, %v4255, 0.0
    %v4313 = vadd.f32 %v4311, %v4312
    %v4314 = vsel %vm105, %v4258, 0.0
    %v4315 = vadd.f32 %v4313, %v4314
    %v4316 = vsel %vm105, %v4263, 0.0
    %v4317 = vadd.f32 %v4315, %v4316
    %v4318 = vsel %vm105, %v4266, 0.0
    %v4319 = vadd.f32 %v4317, %v4318
    %v4320 = vsel %vm105, %v4271, 0.0
    %v4321 = vadd.f32 %v4319, %v4320
    %v4322 = vsel %vm105, %v4274, 0.0
    %v4323 = vadd.f32 %v4321, %v4322
    %v4324 = vsel %vm105, %v4279, 0.0
    %v4325 = vadd.f32 %v4323, %v4324
    %v4326 = vsel %vm105, %v4282, 0.0
    %v4327 = vadd.f32 %v4325, %v4326
    %v4328 = vsel %vm105, %v4287, 0.0
    %v4329 = vadd.f32 %v4327, %v4328
    %v4330 = vsel %vm105, %v4290, 0.0
    %v4331 = vadd.f32 %v4329, %v4330
    %v4332 = vsel %vm105, %v4295, 0.0
    %v4333 = vadd.f32 %v4331, %v4332
    %v4334 = vsel %vm105, %v4298, 0.0
    %v4335 = vadd.f32 %v4333, %v4334
    %v4336 = vsel %vm105, %v4303, 0.0
    %v4337 = vadd.f32 %v4335, %v4336
    %v4338 = vsel %vm105, %v4306, 0.0
    %v4339 = vadd.f32 %v4337, %v4338
    %v4340 = vrot.slane %v4339, 4
    %v4341 = vadd.f32 %v4339, %v4340
    %v4342 = vrot.slane %v4341, 2
    %v4343 = vadd.f32 %v4341, %v4342
    %v4344 = vrot.slane %v4343, 1
    %v4345 = vadd.f32 %v4343, %v4344
    %v4346 = vmul.f32 %v4345, %v1457
    %v4347 = vmul.f32 %v4247, %v4247
    %v4348 = vmul.f32 %v4250, %v4250
    %v4349 = vmul.f32 %v4255, %v4255
    %v4350 = vmul.f32 %v4258, %v4258
    %v4351 = vmul.f32 %v4263, %v4263
    %v4352 = vmul.f32 %v4266, %v4266
    %v4353 = vmul.f32 %v4271, %v4271
    %v4354 = vmul.f32 %v4274, %v4274
    %v4355 = vmul.f32 %v4279, %v4279
    %v4356 = vmul.f32 %v4282, %v4282
    %v4357 = vmul.f32 %v4287, %v4287
    %v4358 = vmul.f32 %v4290, %v4290
    %v4359 = vmul.f32 %v4295, %v4295
    %v4360 = vmul.f32 %v4298, %v4298
    %v4361 = vmul.f32 %v4303, %v4303
    %v4362 = vmul.f32 %v4306, %v4306
    %v4363 = vsel %vm105, %v4347, 0.0
    %v4364 = vsel %vm105, %v4348, 0.0
    %v4365 = vadd.f32 %v4363, %v4364
    %v4366 = vsel %vm105, %v4349, 0.0
    %v4367 = vadd.f32 %v4365, %v4366
    %v4368 = vsel %vm105, %v4350, 0.0
    %v4369 = vadd.f32 %v4367, %v4368
    %v4370 = vsel %vm105, %v4351, 0.0
    %v4371 = vadd.f32 %v4369, %v4370
    %v4372 = vsel %vm105, %v4352, 0.0
    %v4373 = vadd.f32 %v4371, %v4372
    %v4374 = vsel %vm105, %v4353, 0.0
    %v4375 = vadd.f32 %v4373, %v4374
    %v4376 = vsel %vm105, %v4354, 0.0
    %v4377 = vadd.f32 %v4375, %v4376
    %v4378 = vsel %vm105, %v4355, 0.0
    %v4379 = vadd.f32 %v4377, %v4378
    %v4380 = vsel %vm105, %v4356, 0.0
    %v4381 = vadd.f32 %v4379, %v4380
    %v4382 = vsel %vm105, %v4357, 0.0
    %v4383 = vadd.f32 %v4381, %v4382
    %v4384 = vsel %vm105, %v4358, 0.0
    %v4385 = vadd.f32 %v4383, %v4384
    %v4386 = vsel %vm105, %v4359, 0.0
    %v4387 = vadd.f32 %v4385, %v4386
    %v4388 = vsel %vm105, %v4360, 0.0
    %v4389 = vadd.f32 %v4387, %v4388
    %v4390 = vsel %vm105, %v4361, 0.0
    %v4391 = vadd.f32 %v4389, %v4390
    %v4392 = vsel %vm105, %v4362, 0.0
    %v4393 = vadd.f32 %v4391, %v4392
    %v4394 = vrot.slane %v4393, 4
    %v4395 = vadd.f32 %v4393, %v4394
    %v4396 = vrot.slane %v4395, 2
    %v4397 = vadd.f32 %v4395, %v4396
    %v4398 = vrot.slane %v4397, 1
    %v4399 = vadd.f32 %v4397, %v4398
    %v4400 = vmul.f32 %v4399, %v1457
    %v4401 = vmul.f32 %v4346, %v4346
    %v4402 = vsub.f32 %v4400, %v4401
    %v4403 = vmax.f32 %v4402, 0.0
    %v4404 = vsub.f32 %v4247, %v4346
    %v4405 = vsub.f32 %v4250, %v4346
    %v4406 = vsub.f32 %v4255, %v4346
    %v4407 = vsub.f32 %v4258, %v4346
    %v4408 = vsub.f32 %v4263, %v4346
    %v4409 = vsub.f32 %v4266, %v4346
    %v4410 = vsub.f32 %v4271, %v4346
    %v4411 = vsub.f32 %v4274, %v4346
    %v4412 = vsub.f32 %v4279, %v4346
    %v4413 = vsub.f32 %v4282, %v4346
    %v4414 = vsub.f32 %v4287, %v4346
    %v4415 = vsub.f32 %v4290, %v4346
    %v4416 = vsub.f32 %v4295, %v4346
    %v4417 = vsub.f32 %v4298, %v4346
    %v4418 = vsub.f32 %v4303, %v4346
    %v4419 = vsub.f32 %v4306, %v4346
    %v4420 = vadd.f32 %v4403, 1e-05
    %v4421 = vrsqrt.pop %v4420
    %v4422 = vmul.f32 %v4404, %v4421
    %v4423 = vmul.f32 %v4405, %v4421
    %v4424 = vmul.f32 %v4406, %v4421
    %v4425 = vmul.f32 %v4407, %v4421
    %v4426 = vmul.f32 %v4408, %v4421
    %v4427 = vmul.f32 %v4409, %v4421
    %v4428 = vmul.f32 %v4410, %v4421
    %v4429 = vmul.f32 %v4411, %v4421
    %v4430 = vmul.f32 %v4412, %v4421
    %v4431 = vmul.f32 %v4413, %v4421
    %v4432 = vmul.f32 %v4414, %v4421
    %v4433 = vmul.f32 %v4415, %v4421
    %v4434 = vmul.f32 %v4416, %v4421
    %v4435 = vmul.f32 %v4417, %v4421
    %v4436 = vmul.f32 %v4418, %v4421
    %v4437 = vmul.f32 %v4419, %v4421
    %v4439 = vlaneseq
    %v4440 = vshrl.u32 %v4439, 7
    %v4441 = vsub.s32 0, %v4440
    %v4442 = vrot.slane %v3980, %v4441
    %v4444 = vmul.f32 %v4422, %v4442
    %v4445 = vmul.f32 %v4423, %v4442
    %v4446 = vmul.f32 %v4424, %v4442
    %v4447 = vmul.f32 %v4425, %v4442
    %v4448 = vmul.f32 %v4426, %v4442
    %v4449 = vmul.f32 %v4427, %v4442
    %v4450 = vmul.f32 %v4428, %v4442
    %v4451 = vmul.f32 %v4429, %v4442
    %v4452 = vmul.f32 %v4430, %v4442
    %v4453 = vmul.f32 %v4431, %v4442
    %v4454 = vmul.f32 %v4432, %v4442
    %v4455 = vmul.f32 %v4433, %v4442
    %v4456 = vmul.f32 %v4434, %v4442
    %v4457 = vmul.f32 %v4435, %v4442
    %v4458 = vmul.f32 %v4436, %v4442
    %v4459 = vmul.f32 %v4437, %v4442
    %v4461 = vlaneseq
    %v4462 = vshrl.u32 %v4461, 7
    %v4463 = vsub.s32 0, %v4462
    %v4464 = vrot.slane %v3982, %v4463
    %v4466 = vadd.f32 %v4444, %v4464
    %v4467 = vadd.f32 %v4445, %v4464
    %v4468 = vadd.f32 %v4446, %v4464
    %v4469 = vadd.f32 %v4447, %v4464
    %v4470 = vadd.f32 %v4448, %v4464
    %v4471 = vadd.f32 %v4449, %v4464
    %v4472 = vadd.f32 %v4450, %v4464
    %v4473 = vadd.f32 %v4451, %v4464
    %v4474 = vadd.f32 %v4452, %v4464
    %v4475 = vadd.f32 %v4453, %v4464
    %v4476 = vadd.f32 %v4454, %v4464
    %v4477 = vadd.f32 %v4455, %v4464
    %v4478 = vadd.f32 %v4456, %v4464
    %v4479 = vadd.f32 %v4457, %v4464
    %v4480 = vadd.f32 %v4458, %v4464
    %v4481 = vadd.f32 %v4459, %v4464
    %v4482 = vadd.f32 %v4466, %v1626
    %v4483 = vadd.f32 %v4467, %v1627
    %v4484 = vadd.f32 %v4468, %v1628
    %v4485 = vadd.f32 %v4469, %v1629
    %v4486 = vadd.f32 %v4470, %v1630
    %v4487 = vadd.f32 %v4471, %v1631
    %v4488 = vadd.f32 %v4472, %v1632
    %v4489 = vadd.f32 %v4473, %v1633
    %v4490 = vadd.f32 %v4474, %v1634
    %v4491 = vadd.f32 %v4475, %v1635
    %v4492 = vadd.f32 %v4476, %v1636
    %v4493 = vadd.f32 %v4477, %v1637
    %v4494 = vadd.f32 %v4478, %v1638
    %v4495 = vadd.f32 %v4479, %v1639
    %v4496 = vadd.f32 %v4480, %v1640
    %v4497 = vadd.f32 %v4481, %v1641
    %v4498 = vmax.f32 %v4482, 0.0
    %v4499 = vmax.f32 %v4483, 0.0
    %v4500 = vmax.f32 %v4484, 0.0
    %v4501 = vmax.f32 %v4485, 0.0
    %v4502 = vmax.f32 %v4486, 0.0
    %v4503 = vmax.f32 %v4487, 0.0
    %v4504 = vmax.f32 %v4488, 0.0
    %v4505 = vmax.f32 %v4489, 0.0
    %v4506 = vmax.f32 %v4490, 0.0
    %v4507 = vmax.f32 %v4491, 0.0
    %v4508 = vmax.f32 %v4492, 0.0
    %v4509 = vmax.f32 %v4493, 0.0
    %v4510 = vmax.f32 %v4494, 0.0
    %v4511 = vmax.f32 %v4495, 0.0
    %v4512 = vmax.f32 %v4496, 0.0
    %v4513 = vmax.f32 %v4497, 0.0
    %4514 = vst.msk [vmem:[%s163 + $0x1] sm:$0xff] %vm105, %v4498
    %4515 = vst.msk [vmem:[%s163 + $0x11] sm:$0xff] %vm105, %v4499
    %4516 = vst.msk [vmem:[%s163 + $0x21] sm:$0xff] %vm105, %v4500
    %4517 = vst.msk [vmem:[%s163 + $0x31] sm:$0xff] %vm105, %v4501
    %4518 = vst.msk [vmem:[%s163 + $0x41] sm:$0xff] %vm105, %v4502
    %4519 = vst.msk [vmem:[%s163 + $0x51] sm:$0xff] %vm105, %v4503
    %4520 = vst.msk [vmem:[%s163 + $0x61] sm:$0xff] %vm105, %v4504
    %4521 = vst.msk [vmem:[%s163 + $0x71] sm:$0xff] %vm105, %v4505
    %4522 = vst.msk [vmem:[%s163 + $0xa1] sm:$0xff] %vm105, %v4506
    %4523 = vst.msk [vmem:[%s163 + $0xb1] sm:$0xff] %vm105, %v4507
    %4524 = vst.msk [vmem:[%s163 + $0xc1] sm:$0xff] %vm105, %v4508
    %4525 = vst.msk [vmem:[%s163 + $0xd1] sm:$0xff] %vm105, %v4509
    %4526 = vst.msk [vmem:[%s163 + $0xe1] sm:$0xff] %vm105, %v4510
    %4527 = vst.msk [vmem:[%s163 + $0xf1] sm:$0xff] %vm105, %v4511
    %4528 = vst.msk [vmem:[%s163 + $0x101] sm:$0xff] %vm105, %v4512
    %4529 = vst.msk [vmem:[%s163 + $0x111] sm:$0xff] %vm105, %v4513
    %v4530 = vld [vmem:[%s163 + $0x1] sm:$0xff]
    %v4531 = vld [vmem:[%s163 + $0x11] sm:$0xff]
    %v4532 = vld [vmem:[%s163 + $0x21] sm:$0xff]
    %v4533 = vld [vmem:[%s163 + $0x31] sm:$0xff]
    %v4534 = vld [vmem:[%s163 + $0x41] sm:$0xff]
    %v4535 = vld [vmem:[%s163 + $0x51] sm:$0xff]
    %v4536 = vld [vmem:[%s163 + $0x61] sm:$0xff]
    %v4537 = vld [vmem:[%s163 + $0x71] sm:$0xff]
    %v4538 = vld [vmem:[%s163 + $0xa1] sm:$0xff]
    %v4539 = vld [vmem:[%s163 + $0xb1] sm:$0xff]
    %v4540 = vld [vmem:[%s163 + $0xc1] sm:$0xff]
    %v4541 = vld [vmem:[%s163 + $0xd1] sm:$0xff]
    %v4542 = vld [vmem:[%s163 + $0xe1] sm:$0xff]
    %v4543 = vld [vmem:[%s163 + $0xf1] sm:$0xff]
    %v4544 = vld [vmem:[%s163 + $0x101] sm:$0xff]
    %v4545 = vld [vmem:[%s163 + $0x111] sm:$0xff]
    %v4546 = vld [vmem:[#allocation2] sm:$0xff]
    %v4547 = vld [vmem:[#allocation2 + $0x10] sm:$0xff]
    %v4548 = vld [vmem:[#allocation2 + $0x20] sm:$0xff]
    %v4549 = vld [vmem:[#allocation2 + $0x30] sm:$0xff]
    %v4550 = vld [vmem:[#allocation2 + $0x40] sm:$0xff]
    %v4551 = vld [vmem:[#allocation2 + $0x50] sm:$0xff]
    %v4552 = vld [vmem:[#allocation2 + $0x60] sm:$0xff]
    %v4553 = vld [vmem:[#allocation2 + $0x70] sm:$0xff]
    %v4554 = vld [vmem:[#allocation2 + $0xa0] sm:$0xff]
    %v4555 = vld [vmem:[#allocation2 + $0xb0] sm:$0xff]
    %v4556 = vld [vmem:[#allocation2 + $0xc0] sm:$0xff]
    %v4557 = vld [vmem:[#allocation2 + $0xd0] sm:$0xff]
    %v4558 = vld [vmem:[#allocation2 + $0xe0] sm:$0xff]
    %v4559 = vld [vmem:[#allocation2 + $0xf0] sm:$0xff]
    %v4560 = vld [vmem:[#allocation2 + $0x100] sm:$0xff]
    %v4561 = vld [vmem:[#allocation2 + $0x110] sm:$0xff]
    %v4562 = vpack.c.bf16 %v4546, %v4546
    %v4563 = vpack.c.bf16 %v4547, %v4547
    %v4564 = vpack.c.bf16 %v4548, %v4548
    %v4565 = vpack.c.bf16 %v4549, %v4549
    %v4566 = vpack.c.bf16 %v4550, %v4550
    %v4567 = vpack.c.bf16 %v4551, %v4551
    %v4568 = vpack.c.bf16 %v4552, %v4552
    %v4569 = vpack.c.bf16 %v4553, %v4553
    %v4570 = vpack.c.bf16 %v4554, %v4554
    %v4571 = vpack.c.bf16 %v4555, %v4555
    %v4572 = vpack.c.bf16 %v4556, %v4556
    %v4573 = vpack.c.bf16 %v4557, %v4557
    %v4574 = vpack.c.bf16 %v4558, %v4558
    %v4575 = vpack.c.bf16 %v4559, %v4559
    %v4576 = vpack.c.bf16 %v4560, %v4560
    %v4577 = vpack.c.bf16 %v4561, %v4561
    %v4578 = vld [vmem:[#allocation2 + $0x1] sm:$0xff]
    %v4579 = vld [vmem:[#allocation2 + $0x11] sm:$0xff]
    %v4580 = vld [vmem:[#allocation2 + $0x21] sm:$0xff]
    %v4581 = vld [vmem:[#allocation2 + $0x31] sm:$0xff]
    %v4582 = vld [vmem:[#allocation2 + $0x41] sm:$0xff]
    %v4583 = vld [vmem:[#allocation2 + $0x51] sm:$0xff]
    %v4584 = vld [vmem:[#allocation2 + $0x61] sm:$0xff]
    %v4585 = vld [vmem:[#allocation2 + $0x71] sm:$0xff]
    %v4586 = vld [vmem:[#allocation2 + $0xa1] sm:$0xff]
    %v4587 = vld [vmem:[#allocation2 + $0xb1] sm:$0xff]
    %v4588 = vld [vmem:[#allocation2 + $0xc1] sm:$0xff]
    %v4589 = vld [vmem:[#allocation2 + $0xd1] sm:$0xff]
    %v4590 = vld [vmem:[#allocation2 + $0xe1] sm:$0xff]
    %v4591 = vld [vmem:[#allocation2 + $0xf1] sm:$0xff]
    %v4592 = vld [vmem:[#allocation2 + $0x101] sm:$0xff]
    %v4593 = vld [vmem:[#allocation2 + $0x111] sm:$0xff]
    %v4594 = vpack.c.bf16 %v4578, %v4578
    %v4595 = vpack.c.bf16 %v4579, %v4579
    %v4596 = vpack.c.bf16 %v4580, %v4580
    %v4597 = vpack.c.bf16 %v4581, %v4581
    %v4598 = vpack.c.bf16 %v4582, %v4582
    %v4599 = vpack.c.bf16 %v4583, %v4583
    %v4600 = vpack.c.bf16 %v4584, %v4584
    %v4601 = vpack.c.bf16 %v4585, %v4585
    %v4602 = vpack.c.bf16 %v4586, %v4586
    %v4603 = vpack.c.bf16 %v4587, %v4587
    %v4604 = vpack.c.bf16 %v4588, %v4588
    %v4605 = vpack.c.bf16 %v4589, %v4589
    %v4606 = vpack.c.bf16 %v4590, %v4590
    %v4607 = vpack.c.bf16 %v4591, %v4591
    %v4608 = vpack.c.bf16 %v4592, %v4592
    %v4609 = vpack.c.bf16 %v4593, %v4593
    %v4610 = vld [vmem:[#allocation2 + $0x2] sm:$0xff]
    %v4611 = vld [vmem:[#allocation2 + $0x12] sm:$0xff]
    %v4612 = vld [vmem:[#allocation2 + $0x22] sm:$0xff]
    %v4613 = vld [vmem:[#allocation2 + $0x32] sm:$0xff]
    %v4614 = vld [vmem:[#allocation2 + $0x42] sm:$0xff]
    %v4615 = vld [vmem:[#allocation2 + $0x52] sm:$0xff]
    %v4616 = vld [vmem:[#allocation2 + $0x62] sm:$0xff]
    %v4617 = vld [vmem:[#allocation2 + $0x72] sm:$0xff]
    %v4618 = vld [vmem:[#allocation2 + $0xa2] sm:$0xff]
    %v4619 = vld [vmem:[#allocation2 + $0xb2] sm:$0xff]
    %v4620 = vld [vmem:[#allocation2 + $0xc2] sm:$0xff]
    %v4621 = vld [vmem:[#allocation2 + $0xd2] sm:$0xff]
    %v4622 = vld [vmem:[#allocation2 + $0xe2] sm:$0xff]
    %v4623 = vld [vmem:[#allocation2 + $0xf2] sm:$0xff]
    %v4624 = vld [vmem:[#allocation2 + $0x102] sm:$0xff]
    %v4625 = vld [vmem:[#allocation2 + $0x112] sm:$0xff]
    %v4626 = vpack.c.bf16 %v4610, %v4610
    %v4627 = vpack.c.bf16 %v4611, %v4611
    %v4628 = vpack.c.bf16 %v4612, %v4612
    %v4629 = vpack.c.bf16 %v4613, %v4613
    %v4630 = vpack.c.bf16 %v4614, %v4614
    %v4631 = vpack.c.bf16 %v4615, %v4615
    %v4632 = vpack.c.bf16 %v4616, %v4616
    %v4633 = vpack.c.bf16 %v4617, %v4617
    %v4634 = vpack.c.bf16 %v4618, %v4618
    %v4635 = vpack.c.bf16 %v4619, %v4619
    %v4636 = vpack.c.bf16 %v4620, %v4620
    %v4637 = vpack.c.bf16 %v4621, %v4621
    %v4638 = vpack.c.bf16 %v4622, %v4622
    %v4639 = vpack.c.bf16 %v4623, %v4623
    %v4640 = vpack.c.bf16 %v4624, %v4624
    %v4641 = vpack.c.bf16 %v4625, %v4625
    %v4642 = vld [vmem:[%s163] sm:$0xff]
    %v4643 = vld [vmem:[%s163 + $0x10] sm:$0xff]
    %v4644 = vld [vmem:[%s163 + $0x20] sm:$0xff]
    %v4645 = vld [vmem:[%s163 + $0x30] sm:$0xff]
    %v4646 = vld [vmem:[%s163 + $0x40] sm:$0xff]
    %v4647 = vld [vmem:[%s163 + $0x50] sm:$0xff]
    %v4648 = vld [vmem:[%s163 + $0x60] sm:$0xff]
    %v4649 = vld [vmem:[%s163 + $0x70] sm:$0xff]
    %v4650 = vld [vmem:[%s163 + $0xa0] sm:$0xff]
    %v4651 = vld [vmem:[%s163 + $0xb0] sm:$0xff]
    %v4652 = vld [vmem:[%s163 + $0xc0] sm:$0xff]
    %v4653 = vld [vmem:[%s163 + $0xd0] sm:$0xff]
    %v4654 = vld [vmem:[%s163 + $0xe0] sm:$0xff]
    %v4655 = vld [vmem:[%s163 + $0xf0] sm:$0xff]
    %v4656 = vld [vmem:[%s163 + $0x100] sm:$0xff]
    %v4657 = vld [vmem:[%s163 + $0x110] sm:$0xff]
    %v4658 = vpack.c.bf16 %v4642, %v4642
    %v4659 = vpack.c.bf16 %v4643, %v4643
    %v4660 = vpack.c.bf16 %v4644, %v4644
    %v4661 = vpack.c.bf16 %v4645, %v4645
    %v4662 = vpack.c.bf16 %v4646, %v4646
    %v4663 = vpack.c.bf16 %v4647, %v4647
    %v4664 = vpack.c.bf16 %v4648, %v4648
    %v4665 = vpack.c.bf16 %v4649, %v4649
    %v4666 = vpack.c.bf16 %v4650, %v4650
    %v4667 = vpack.c.bf16 %v4651, %v4651
    %v4668 = vpack.c.bf16 %v4652, %v4652
    %v4669 = vpack.c.bf16 %v4653, %v4653
    %v4670 = vpack.c.bf16 %v4654, %v4654
    %v4671 = vpack.c.bf16 %v4655, %v4655
    %v4672 = vpack.c.bf16 %v4656, %v4656
    %v4673 = vpack.c.bf16 %v4657, %v4657
    %v4674 = vpack.c.bf16 %v4530, %v4530
    %v4675 = vpack.c.bf16 %v4531, %v4531
    %v4676 = vpack.c.bf16 %v4532, %v4532
    %v4677 = vpack.c.bf16 %v4533, %v4533
    %v4678 = vpack.c.bf16 %v4534, %v4534
    %v4679 = vpack.c.bf16 %v4535, %v4535
    %v4680 = vpack.c.bf16 %v4536, %v4536
    %v4681 = vpack.c.bf16 %v4537, %v4537
    %v4682 = vpack.c.bf16 %v4538, %v4538
    %v4683 = vpack.c.bf16 %v4539, %v4539
    %v4684 = vpack.c.bf16 %v4540, %v4540
    %v4685 = vpack.c.bf16 %v4541, %v4541
    %v4686 = vpack.c.bf16 %v4542, %v4542
    %v4687 = vpack.c.bf16 %v4543, %v4543
    %v4688 = vpack.c.bf16 %v4544, %v4544
    %v4689 = vpack.c.bf16 %v4545, %v4545
    %v4690 = vld [vmem:[%s163 + $0x2] sm:$0xff]
    %v4691 = vld [vmem:[%s163 + $0x12] sm:$0xff]
    %v4692 = vld [vmem:[%s163 + $0x22] sm:$0xff]
    %v4693 = vld [vmem:[%s163 + $0x32] sm:$0xff]
    %v4694 = vld [vmem:[%s163 + $0x42] sm:$0xff]
    %v4695 = vld [vmem:[%s163 + $0x52] sm:$0xff]
    %v4696 = vld [vmem:[%s163 + $0x62] sm:$0xff]
    %v4697 = vld [vmem:[%s163 + $0x72] sm:$0xff]
    %v4698 = vld [vmem:[%s163 + $0xa2] sm:$0xff]
    %v4699 = vld [vmem:[%s163 + $0xb2] sm:$0xff]
    %v4700 = vld [vmem:[%s163 + $0xc2] sm:$0xff]
    %v4701 = vld [vmem:[%s163 + $0xd2] sm:$0xff]
    %v4702 = vld [vmem:[%s163 + $0xe2] sm:$0xff]
    %v4703 = vld [vmem:[%s163 + $0xf2] sm:$0xff]
    %v4704 = vld [vmem:[%s163 + $0x102] sm:$0xff]
    %v4705 = vld [vmem:[%s163 + $0x112] sm:$0xff]
    %v4706 = vpack.c.bf16 %v4690, %v4690
    %v4707 = vpack.c.bf16 %v4691, %v4691
    %v4708 = vpack.c.bf16 %v4692, %v4692
    %v4709 = vpack.c.bf16 %v4693, %v4693
    %v4710 = vpack.c.bf16 %v4694, %v4694
    %v4711 = vpack.c.bf16 %v4695, %v4695
    %v4712 = vpack.c.bf16 %v4696, %v4696
    %v4713 = vpack.c.bf16 %v4697, %v4697
    %v4714 = vpack.c.bf16 %v4698, %v4698
    %v4715 = vpack.c.bf16 %v4699, %v4699
    %v4716 = vpack.c.bf16 %v4700, %v4700
    %v4717 = vpack.c.bf16 %v4701, %v4701
    %v4718 = vpack.c.bf16 %v4702, %v4702
    %v4719 = vpack.c.bf16 %v4703, %v4703
    %v4720 = vpack.c.bf16 %v4704, %v4704
    %v4721 = vpack.c.bf16 %v4705, %v4705
    %v4722 = vld [vmem:[%s373] sm:$0xff]
    %v4723 = vld [vmem:[%s373 + $0x10] sm:$0xff]
    %v4724 = vld [vmem:[%s373 + $0x20] sm:$0xff]
    %v4725 = vld [vmem:[%s373 + $0x30] sm:$0xff]
    %v4726 = vld [vmem:[%s373 + $0x40] sm:$0xff]
    %v4727 = vld [vmem:[%s373 + $0x50] sm:$0xff]
    %v4728 = vld [vmem:[%s373 + $0x60] sm:$0xff]
    %v4729 = vld [vmem:[%s373 + $0x70] sm:$0xff]
    %v4730 = vld [vmem:[%s373 + $0xa0] sm:$0xff]
    %v4731 = vld [vmem:[%s373 + $0xb0] sm:$0xff]
    %v4732 = vld [vmem:[%s373 + $0xc0] sm:$0xff]
    %v4733 = vld [vmem:[%s373 + $0xd0] sm:$0xff]
    %v4734 = vld [vmem:[%s373 + $0xe0] sm:$0xff]
    %v4735 = vld [vmem:[%s373 + $0xf0] sm:$0xff]
    %v4736 = vld [vmem:[%s373 + $0x100] sm:$0xff]
    %v4737 = vld [vmem:[%s373 + $0x110] sm:$0xff]
    %v4738 = vpack.c.bf16 %v4722, %v4722
    %v4739 = vpack.c.bf16 %v4723, %v4723
    %v4740 = vpack.c.bf16 %v4724, %v4724
    %v4741 = vpack.c.bf16 %v4725, %v4725
    %v4742 = vpack.c.bf16 %v4726, %v4726
    %v4743 = vpack.c.bf16 %v4727, %v4727
    %v4744 = vpack.c.bf16 %v4728, %v4728
    %v4745 = vpack.c.bf16 %v4729, %v4729
    %v4746 = vpack.c.bf16 %v4730, %v4730
    %v4747 = vpack.c.bf16 %v4731, %v4731
    %v4748 = vpack.c.bf16 %v4732, %v4732
    %v4749 = vpack.c.bf16 %v4733, %v4733
    %v4750 = vpack.c.bf16 %v4734, %v4734
    %v4751 = vpack.c.bf16 %v4735, %v4735
    %v4752 = vpack.c.bf16 %v4736, %v4736
    %v4753 = vpack.c.bf16 %v4737, %v4737
    %v4754 = vld [vmem:[%s373 + $0x1] sm:$0xff]
    %v4755 = vld [vmem:[%s373 + $0x11] sm:$0xff]
    %v4756 = vld [vmem:[%s373 + $0x21] sm:$0xff]
    %v4757 = vld [vmem:[%s373 + $0x31] sm:$0xff]
    %v4758 = vld [vmem:[%s373 + $0x41] sm:$0xff]
    %v4759 = vld [vmem:[%s373 + $0x51] sm:$0xff]
    %v4760 = vld [vmem:[%s373 + $0x61] sm:$0xff]
    %v4761 = vld [vmem:[%s373 + $0x71] sm:$0xff]
    %v4762 = vld [vmem:[%s373 + $0xa1] sm:$0xff]
    %v4763 = vld [vmem:[%s373 + $0xb1] sm:$0xff]
    %v4764 = vld [vmem:[%s373 + $0xc1] sm:$0xff]
    %v4765 = vld [vmem:[%s373 + $0xd1] sm:$0xff]
    %v4766 = vld [vmem:[%s373 + $0xe1] sm:$0xff]
    %v4767 = vld [vmem:[%s373 + $0xf1] sm:$0xff]
    %v4768 = vld [vmem:[%s373 + $0x101] sm:$0xff]
    %v4769 = vld [vmem:[%s373 + $0x111] sm:$0xff]
    %v4770 = vpack.c.bf16 %v4754, %v4754
    %v4771 = vpack.c.bf16 %v4755, %v4755
    %v4772 = vpack.c.bf16 %v4756, %v4756
    %v4773 = vpack.c.bf16 %v4757, %v4757
    %v4774 = vpack.c.bf16 %v4758, %v4758
    %v4775 = vpack.c.bf16 %v4759, %v4759
    %v4776 = vpack.c.bf16 %v4760, %v4760
    %v4777 = vpack.c.bf16 %v4761, %v4761
    %v4778 = vpack.c.bf16 %v4762, %v4762
    %v4779 = vpack.c.bf16 %v4763, %v4763
    %v4780 = vpack.c.bf16 %v4764, %v4764
    %v4781 = vpack.c.bf16 %v4765, %v4765
    %v4782 = vpack.c.bf16 %v4766, %v4766
    %v4783 = vpack.c.bf16 %v4767, %v4767
    %v4784 = vpack.c.bf16 %v4768, %v4768
    %v4785 = vpack.c.bf16 %v4769, %v4769
    %v4786 = vld [vmem:[%s373 + $0x2] sm:$0xff]
    %v4787 = vld [vmem:[%s373 + $0x12] sm:$0xff]
    %v4788 = vld [vmem:[%s373 + $0x22] sm:$0xff]
    %v4789 = vld [vmem:[%s373 + $0x32] sm:$0xff]
    %v4790 = vld [vmem:[%s373 + $0x42] sm:$0xff]
    %v4791 = vld [vmem:[%s373 + $0x52] sm:$0xff]
    %v4792 = vld [vmem:[%s373 + $0x62] sm:$0xff]
    %v4793 = vld [vmem:[%s373 + $0x72] sm:$0xff]
    %v4794 = vld [vmem:[%s373 + $0xa2] sm:$0xff]
    %v4795 = vld [vmem:[%s373 + $0xb2] sm:$0xff]
    %v4796 = vld [vmem:[%s373 + $0xc2] sm:$0xff]
    %v4797 = vld [vmem:[%s373 + $0xd2] sm:$0xff]
    %v4798 = vld [vmem:[%s373 + $0xe2] sm:$0xff]
    %v4799 = vld [vmem:[%s373 + $0xf2] sm:$0xff]
    %v4800 = vld [vmem:[%s373 + $0x102] sm:$0xff]
    %v4801 = vld [vmem:[%s373 + $0x112] sm:$0xff]
    %v4802 = vpack.c.bf16 %v4786, %v4786
    %v4803 = vpack.c.bf16 %v4787, %v4787
    %v4804 = vpack.c.bf16 %v4788, %v4788
    %v4805 = vpack.c.bf16 %v4789, %v4789
    %v4806 = vpack.c.bf16 %v4790, %v4790
    %v4807 = vpack.c.bf16 %v4791, %v4791
    %v4808 = vpack.c.bf16 %v4792, %v4792
    %v4809 = vpack.c.bf16 %v4793, %v4793
    %v4810 = vpack.c.bf16 %v4794, %v4794
    %v4811 = vpack.c.bf16 %v4795, %v4795
    %v4812 = vpack.c.bf16 %v4796, %v4796
    %v4813 = vpack.c.bf16 %v4797, %v4797
    %v4814 = vpack.c.bf16 %v4798, %v4798
    %v4815 = vpack.c.bf16 %v4799, %v4799
    %v4816 = vpack.c.bf16 %v4800, %v4800
    %v4817 = vpack.c.bf16 %v4801, %v4801
    %v4834 = vunpack.c.l.b16 %v4562
    %v4835 = vunpack.c.l.b16 %v4563
    %v4836 = vunpack.c.l.b16 %v4564
    %v4837 = vunpack.c.l.b16 %v4565
    %v4838 = vunpack.c.l.b16 %v4566
    %v4839 = vunpack.c.l.b16 %v4567
    %v4840 = vunpack.c.l.b16 %v4568
    %v4841 = vunpack.c.l.b16 %v4569
    %v4842 = vunpack.c.l.b16 %v4570
    %v4843 = vunpack.c.l.b16 %v4571
    %v4844 = vunpack.c.l.b16 %v4572
    %v4845 = vunpack.c.l.b16 %v4573
    %v4846 = vunpack.c.l.b16 %v4574
    %v4847 = vunpack.c.l.b16 %v4575
    %v4848 = vunpack.c.l.b16 %v4576
    %v4849 = vunpack.c.l.b16 %v4577
    %v4850 = vpack.c.b16 %v4835, %v4834
    %v4851 = vpack.c.b16 %v4837, %v4836
    %v4852 = vpack.c.b16 %v4839, %v4838
    %v4853 = vpack.c.b16 %v4841, %v4840
    %v4854 = vpack.c.b16 %v4843, %v4842
    %v4855 = vpack.c.b16 %v4845, %v4844
    %v4856 = vpack.c.b16 %v4847, %v4846
    %v4857 = vpack.c.b16 %v4849, %v4848
    %v4874 = vunpack.c.l.b16 %v4594
    %v4875 = vunpack.c.l.b16 %v4595
    %v4876 = vunpack.c.l.b16 %v4596
    %v4877 = vunpack.c.l.b16 %v4597
    %v4878 = vunpack.c.l.b16 %v4598
    %v4879 = vunpack.c.l.b16 %v4599
    %v4880 = vunpack.c.l.b16 %v4600
    %v4881 = vunpack.c.l.b16 %v4601
    %v4882 = vunpack.c.l.b16 %v4602
    %v4883 = vunpack.c.l.b16 %v4603
    %v4884 = vunpack.c.l.b16 %v4604
    %v4885 = vunpack.c.l.b16 %v4605
    %v4886 = vunpack.c.l.b16 %v4606
    %v4887 = vunpack.c.l.b16 %v4607
    %v4888 = vunpack.c.l.b16 %v4608
    %v4889 = vunpack.c.l.b16 %v4609
    %v4890 = vpack.c.b16 %v4875, %v4874
    %v4891 = vpack.c.b16 %v4877, %v4876
    %v4892 = vpack.c.b16 %v4879, %v4878
    %v4893 = vpack.c.b16 %v4881, %v4880
    %v4894 = vpack.c.b16 %v4883, %v4882
    %v4895 = vpack.c.b16 %v4885, %v4884
    %v4896 = vpack.c.b16 %v4887, %v4886
    %v4897 = vpack.c.b16 %v4889, %v4888
    %4898 = vrot.lane.b32.xlu0 %v4890, 32
    %v4899 = vpop.permute.xlu0 %4898
    %4900 = vrot.lane.b32.xlu0 %v4891, 32
    %v4901 = vpop.permute.xlu0 %4900
    %4902 = vrot.lane.b32.xlu0 %v4892, 32
    %v4903 = vpop.permute.xlu0 %4902
    %4904 = vrot.lane.b32.xlu0 %v4893, 32
    %v4905 = vpop.permute.xlu0 %4904
    %4906 = vrot.lane.b32.xlu0 %v4894, 32
    %v4907 = vpop.permute.xlu0 %4906
    %4908 = vrot.lane.b32.xlu0 %v4895, 32
    %v4909 = vpop.permute.xlu0 %4908
    %4910 = vrot.lane.b32.xlu0 %v4896, 32
    %v4911 = vpop.permute.xlu0 %4910
    %4912 = vrot.lane.b32.xlu0 %v4897, 32
    %v4913 = vpop.permute.xlu0 %4912
    %v4930 = vunpack.c.l.b16 %v4626
    %v4931 = vunpack.c.l.b16 %v4627
    %v4932 = vunpack.c.l.b16 %v4628
    %v4933 = vunpack.c.l.b16 %v4629
    %v4934 = vunpack.c.l.b16 %v4630
    %v4935 = vunpack.c.l.b16 %v4631
    %v4936 = vunpack.c.l.b16 %v4632
    %v4937 = vunpack.c.l.b16 %v4633
    %v4938 = vunpack.c.l.b16 %v4634
    %v4939 = vunpack.c.l.b16 %v4635
    %v4940 = vunpack.c.l.b16 %v4636
    %v4941 = vunpack.c.l.b16 %v4637
    %v4942 = vunpack.c.l.b16 %v4638
    %v4943 = vunpack.c.l.b16 %v4639
    %v4944 = vunpack.c.l.b16 %v4640
    %v4945 = vunpack.c.l.b16 %v4641
    %v4946 = vpack.c.b16 %v4931, %v4930
    %v4947 = vpack.c.b16 %v4933, %v4932
    %v4948 = vpack.c.b16 %v4935, %v4934
    %v4949 = vpack.c.b16 %v4937, %v4936
    %v4950 = vpack.c.b16 %v4939, %v4938
    %v4951 = vpack.c.b16 %v4941, %v4940
    %v4952 = vpack.c.b16 %v4943, %v4942
    %v4953 = vpack.c.b16 %v4945, %v4944
    %4954 = vrot.lane.b32.xlu0 %v4946, 64
    %v4955 = vpop.permute.xlu0 %4954
    %4956 = vrot.lane.b32.xlu0 %v4947, 64
    %v4957 = vpop.permute.xlu0 %4956
    %4958 = vrot.lane.b32.xlu0 %v4948, 64
    %v4959 = vpop.permute.xlu0 %4958
    %4960 = vrot.lane.b32.xlu0 %v4949, 64
    %v4961 = vpop.permute.xlu0 %4960
    %4962 = vrot.lane.b32.xlu0 %v4950, 64
    %v4963 = vpop.permute.xlu0 %4962
    %4964 = vrot.lane.b32.xlu0 %v4951, 64
    %v4965 = vpop.permute.xlu0 %4964
    %4966 = vrot.lane.b32.xlu0 %v4952, 64
    %v4967 = vpop.permute.xlu0 %4966
    %4968 = vrot.lane.b32.xlu0 %v4953, 64
    %v4969 = vpop.permute.xlu0 %4968
    %v4986 = vunpack.c.l.b16 %v4658
    %v4987 = vunpack.c.l.b16 %v4659
    %v4988 = vunpack.c.l.b16 %v4660
    %v4989 = vunpack.c.l.b16 %v4661
    %v4990 = vunpack.c.l.b16 %v4662
    %v4991 = vunpack.c.l.b16 %v4663
    %v4992 = vunpack.c.l.b16 %v4664
    %v4993 = vunpack.c.l.b16 %v4665
    %v4994 = vunpack.c.l.b16 %v4666
    %v4995 = vunpack.c.l.b16 %v4667
    %v4996 = vunpack.c.l.b16 %v4668
    %v4997 = vunpack.c.l.b16 %v4669
    %v4998 = vunpack.c.l.b16 %v4670
    %v4999 = vunpack.c.l.b16 %v4671
    %v5000 = vunpack.c.l.b16 %v4672
    %v5001 = vunpack.c.l.b16 %v4673
    %v5002 = vpack.c.b16 %v4987, %v4986
    %v5003 = vpack.c.b16 %v4989, %v4988
    %v5004 = vpack.c.b16 %v4991, %v4990
    %v5005 = vpack.c.b16 %v4993, %v4992
    %v5006 = vpack.c.b16 %v4995, %v4994
    %v5007 = vpack.c.b16 %v4997, %v4996
    %v5008 = vpack.c.b16 %v4999, %v4998
    %v5009 = vpack.c.b16 %v5001, %v5000
    %5010 = vrot.lane.b32.xlu0 %v5002, 96
    %v5011 = vpop.permute.xlu0 %5010
    %5012 = vrot.lane.b32.xlu0 %v5003, 96
    %v5013 = vpop.permute.xlu0 %5012
    %5014 = vrot.lane.b32.xlu0 %v5004, 96
    %v5015 = vpop.permute.xlu0 %5014
    %5016 = vrot.lane.b32.xlu0 %v5005, 96
    %v5017 = vpop.permute.xlu0 %5016
    %5018 = vrot.lane.b32.xlu0 %v5006, 96
    %v5019 = vpop.permute.xlu0 %5018
    %5020 = vrot.lane.b32.xlu0 %v5007, 96
    %v5021 = vpop.permute.xlu0 %5020
    %5022 = vrot.lane.b32.xlu0 %v5008, 96
    %v5023 = vpop.permute.xlu0 %5022
    %5024 = vrot.lane.b32.xlu0 %v5009, 96
    %v5025 = vpop.permute.xlu0 %5024
    %v5042 = vunpack.c.l.b16 %v4674
    %v5043 = vunpack.c.l.b16 %v4675
    %v5044 = vunpack.c.l.b16 %v4676
    %v5045 = vunpack.c.l.b16 %v4677
    %v5046 = vunpack.c.l.b16 %v4678
    %v5047 = vunpack.c.l.b16 %v4679
    %v5048 = vunpack.c.l.b16 %v4680
    %v5049 = vunpack.c.l.b16 %v4681
    %v5050 = vunpack.c.l.b16 %v4682
    %v5051 = vunpack.c.l.b16 %v4683
    %v5052 = vunpack.c.l.b16 %v4684
    %v5053 = vunpack.c.l.b16 %v4685
    %v5054 = vunpack.c.l.b16 %v4686
    %v5055 = vunpack.c.l.b16 %v4687
    %v5056 = vunpack.c.l.b16 %v4688
    %v5057 = vunpack.c.l.b16 %v4689
    %v5058 = vpack.c.b16 %v5043, %v5042
    %v5059 = vpack.c.b16 %v5045, %v5044
    %v5060 = vpack.c.b16 %v5047, %v5046
    %v5061 = vpack.c.b16 %v5049, %v5048
    %v5062 = vpack.c.b16 %v5051, %v5050
    %v5063 = vpack.c.b16 %v5053, %v5052
    %v5064 = vpack.c.b16 %v5055, %v5054
    %v5065 = vpack.c.b16 %v5057, %v5056
    %v5082 = vunpack.c.l.b16 %v4706
    %v5083 = vunpack.c.l.b16 %v4707
    %v5084 = vunpack.c.l.b16 %v4708
    %v5085 = vunpack.c.l.b16 %v4709
    %v5086 = vunpack.c.l.b16 %v4710
    %v5087 = vunpack.c.l.b16 %v4711
    %v5088 = vunpack.c.l.b16 %v4712
    %v5089 = vunpack.c.l.b16 %v4713
    %v5090 = vunpack.c.l.b16 %v4714
    %v5091 = vunpack.c.l.b16 %v4715
    %v5092 = vunpack.c.l.b16 %v4716
    %v5093 = vunpack.c.l.b16 %v4717
    %v5094 = vunpack.c.l.b16 %v4718
    %v5095 = vunpack.c.l.b16 %v4719
    %v5096 = vunpack.c.l.b16 %v4720
    %v5097 = vunpack.c.l.b16 %v4721
    %v5098 = vpack.c.b16 %v5083, %v5082
    %v5099 = vpack.c.b16 %v5085, %v5084
    %v5100 = vpack.c.b16 %v5087, %v5086
    %v5101 = vpack.c.b16 %v5089, %v5088
    %v5102 = vpack.c.b16 %v5091, %v5090
    %v5103 = vpack.c.b16 %v5093, %v5092
    %v5104 = vpack.c.b16 %v5095, %v5094
    %v5105 = vpack.c.b16 %v5097, %v5096
    %5106 = vrot.lane.b32.xlu0 %v5098, 32
    %v5107 = vpop.permute.xlu0 %5106
    %5108 = vrot.lane.b32.xlu0 %v5099, 32
    %v5109 = vpop.permute.xlu0 %5108
    %5110 = vrot.lane.b32.xlu0 %v5100, 32
    %v5111 = vpop.permute.xlu0 %5110
    %5112 = vrot.lane.b32.xlu0 %v5101, 32
    %v5113 = vpop.permute.xlu0 %5112
    %5114 = vrot.lane.b32.xlu0 %v5102, 32
    %v5115 = vpop.permute.xlu0 %5114
    %5116 = vrot.lane.b32.xlu0 %v5103, 32
    %v5117 = vpop.permute.xlu0 %5116
    %5118 = vrot.lane.b32.xlu0 %v5104, 32
    %v5119 = vpop.permute.xlu0 %5118
    %5120 = vrot.lane.b32.xlu0 %v5105, 32
    %v5121 = vpop.permute.xlu0 %5120
    %v5138 = vunpack.c.l.b16 %v4738
    %v5139 = vunpack.c.l.b16 %v4739
    %v5140 = vunpack.c.l.b16 %v4740
    %v5141 = vunpack.c.l.b16 %v4741
    %v5142 = vunpack.c.l.b16 %v4742
    %v5143 = vunpack.c.l.b16 %v4743
    %v5144 = vunpack.c.l.b16 %v4744
    %v5145 = vunpack.c.l.b16 %v4745
    %v5146 = vunpack.c.l.b16 %v4746
    %v5147 = vunpack.c.l.b16 %v4747
    %v5148 = vunpack.c.l.b16 %v4748
    %v5149 = vunpack.c.l.b16 %v4749
    %v5150 = vunpack.c.l.b16 %v4750
    %v5151 = vunpack.c.l.b16 %v4751
    %v5152 = vunpack.c.l.b16 %v4752
    %v5153 = vunpack.c.l.b16 %v4753
    %v5154 = vpack.c.b16 %v5139, %v5138
    %v5155 = vpack.c.b16 %v5141, %v5140
    %v5156 = vpack.c.b16 %v5143, %v5142
    %v5157 = vpack.c.b16 %v5145, %v5144
    %v5158 = vpack.c.b16 %v5147, %v5146
    %v5159 = vpack.c.b16 %v5149, %v5148
    %v5160 = vpack.c.b16 %v5151, %v5150
    %v5161 = vpack.c.b16 %v5153, %v5152
    %5162 = vrot.lane.b32.xlu0 %v5154, 64
    %v5163 = vpop.permute.xlu0 %5162
    %5164 = vrot.lane.b32.xlu0 %v5155, 64
    %v5165 = vpop.permute.xlu0 %5164
    %5166 = vrot.lane.b32.xlu0 %v5156, 64
    %v5167 = vpop.permute.xlu0 %5166
    %5168 = vrot.lane.b32.xlu0 %v5157, 64
    %v5169 = vpop.permute.xlu0 %5168
    %5170 = vrot.lane.b32.xlu0 %v5158, 64
    %v5171 = vpop.permute.xlu0 %5170
    %5172 = vrot.lane.b32.xlu0 %v5159, 64
    %v5173 = vpop.permute.xlu0 %5172
    %5174 = vrot.lane.b32.xlu0 %v5160, 64
    %v5175 = vpop.permute.xlu0 %5174
    %5176 = vrot.lane.b32.xlu0 %v5161, 64
    %v5177 = vpop.permute.xlu0 %5176
    %v5194 = vunpack.c.l.b16 %v4770
    %v5195 = vunpack.c.l.b16 %v4771
    %v5196 = vunpack.c.l.b16 %v4772
    %v5197 = vunpack.c.l.b16 %v4773
    %v5198 = vunpack.c.l.b16 %v4774
    %v5199 = vunpack.c.l.b16 %v4775
    %v5200 = vunpack.c.l.b16 %v4776
    %v5201 = vunpack.c.l.b16 %v4777
    %v5202 = vunpack.c.l.b16 %v4778
    %v5203 = vunpack.c.l.b16 %v4779
    %v5204 = vunpack.c.l.b16 %v4780
    %v5205 = vunpack.c.l.b16 %v4781
    %v5206 = vunpack.c.l.b16 %v4782
    %v5207 = vunpack.c.l.b16 %v4783
    %v5208 = vunpack.c.l.b16 %v4784
    %v5209 = vunpack.c.l.b16 %v4785
    %v5210 = vpack.c.b16 %v5195, %v5194
    %v5211 = vpack.c.b16 %v5197, %v5196
    %v5212 = vpack.c.b16 %v5199, %v5198
    %v5213 = vpack.c.b16 %v5201, %v5200
    %v5214 = vpack.c.b16 %v5203, %v5202
    %v5215 = vpack.c.b16 %v5205, %v5204
    %v5216 = vpack.c.b16 %v5207, %v5206
    %v5217 = vpack.c.b16 %v5209, %v5208
    %5218 = vrot.lane.b32.xlu0 %v5210, 96
    %v5219 = vpop.permute.xlu0 %5218
    %5220 = vrot.lane.b32.xlu0 %v5211, 96
    %v5221 = vpop.permute.xlu0 %5220
    %5222 = vrot.lane.b32.xlu0 %v5212, 96
    %v5223 = vpop.permute.xlu0 %5222
    %5224 = vrot.lane.b32.xlu0 %v5213, 96
    %v5225 = vpop.permute.xlu0 %5224
    %5226 = vrot.lane.b32.xlu0 %v5214, 96
    %v5227 = vpop.permute.xlu0 %5226
    %5228 = vrot.lane.b32.xlu0 %v5215, 96
    %v5229 = vpop.permute.xlu0 %5228
    %5230 = vrot.lane.b32.xlu0 %v5216, 96
    %v5231 = vpop.permute.xlu0 %5230
    %5232 = vrot.lane.b32.xlu0 %v5217, 96
    %v5233 = vpop.permute.xlu0 %5232
    %v5250 = vunpack.c.l.b16 %v4802
    %v5251 = vunpack.c.l.b16 %v4803
    %v5252 = vunpack.c.l.b16 %v4804
    %v5253 = vunpack.c.l.b16 %v4805
    %v5254 = vunpack.c.l.b16 %v4806
    %v5255 = vunpack.c.l.b16 %v4807
    %v5256 = vunpack.c.l.b16 %v4808
    %v5257 = vunpack.c.l.b16 %v4809
    %v5258 = vunpack.c.l.b16 %v4810
    %v5259 = vunpack.c.l.b16 %v4811
    %v5260 = vunpack.c.l.b16 %v4812
    %v5261 = vunpack.c.l.b16 %v4813
    %v5262 = vunpack.c.l.b16 %v4814
    %v5263 = vunpack.c.l.b16 %v4815
    %v5264 = vunpack.c.l.b16 %v4816
    %v5265 = vunpack.c.l.b16 %v4817
    %v5266 = vpack.c.b16 %v5251, %v5250
    %v5267 = vpack.c.b16 %v5253, %v5252
    %v5268 = vpack.c.b16 %v5255, %v5254
    %v5269 = vpack.c.b16 %v5257, %v5256
    %v5270 = vpack.c.b16 %v5259, %v5258
    %v5271 = vpack.c.b16 %v5261, %v5260
    %v5272 = vpack.c.b16 %v5263, %v5262
    %v5273 = vpack.c.b16 %v5265, %v5264
    %v5276 = vsel %vm105, %v4850, %v4899
    %v5279 = vsel %vm105, %v4851, %v4901
    %v5282 = vsel %vm105, %v4852, %v4903
    %v5285 = vsel %vm105, %v4853, %v4905
    %v5288 = vsel %vm105, %v4854, %v4907
    %v5291 = vsel %vm105, %v4855, %v4909
    %v5294 = vsel %vm105, %v4856, %v4911
    %v5297 = vsel %vm105, %v4857, %v4913
    %v5299 = vsel %vm950, %v5276, %v4955
    %v5301 = vsel %vm950, %v5279, %v4957
    %v5303 = vsel %vm950, %v5282, %v4959
    %v5305 = vsel %vm950, %v5285, %v4961
    %v5307 = vsel %vm950, %v5288, %v4963
    %v5309 = vsel %vm950, %v5291, %v4965
    %v5311 = vsel %vm950, %v5294, %v4967
    %v5313 = vsel %vm950, %v5297, %v4969
    %v5315 = vsel %vm967, %v5299, %v5011
    %v5318 = vsel %vm967, %v5301, %v5013
    %v5321 = vsel %vm967, %v5303, %v5015
    %v5324 = vsel %vm967, %v5305, %v5017
    %v5327 = vsel %vm967, %v5307, %v5019
    %v5330 = vsel %vm967, %v5309, %v5021
    %v5333 = vsel %vm967, %v5311, %v5023
    %v5336 = vsel %vm967, %v5313, %v5025
    %v5340 = vsel %vm105, %v5058, %v5107
    %v5343 = vsel %vm105, %v5059, %v5109
    %v5346 = vsel %vm105, %v5060, %v5111
    %v5349 = vsel %vm105, %v5061, %v5113
    %v5352 = vsel %vm105, %v5062, %v5115
    %v5355 = vsel %vm105, %v5063, %v5117
    %v5358 = vsel %vm105, %v5064, %v5119
    %v5361 = vsel %vm105, %v5065, %v5121
    %v5363 = vsel %vm950, %v5340, %v5163
    %v5365 = vsel %vm950, %v5343, %v5165
    %v5367 = vsel %vm950, %v5346, %v5167
    %v5369 = vsel %vm950, %v5349, %v5169
    %v5371 = vsel %vm950, %v5352, %v5171
    %v5373 = vsel %vm950, %v5355, %v5173
    %v5375 = vsel %vm950, %v5358, %v5175
    %v5377 = vsel %vm950, %v5361, %v5177
    %v5379 = vsel %vm967, %v5363, %v5219
    %v5382 = vsel %vm967, %v5365, %v5221
    %v5385 = vsel %vm967, %v5367, %v5223
    %v5388 = vsel %vm967, %v5369, %v5225
    %v5391 = vsel %vm967, %v5371, %v5227
    %v5394 = vsel %vm967, %v5373, %v5229
    %v5397 = vsel %vm967, %v5375, %v5231
    %v5400 = vsel %vm967, %v5377, %v5233
    %s5402 = scalar_lea.vmem %s1, 432
    %v5403 = vld [vmem:[%s5402] sm:$0xf]
    %v5404 = vld [vmem:[%s5402 + $0x4] sm:$0xf]
    %v5405 = vld [vmem:[%s5402 + $0x8] sm:$0xf]
    %v5406 = vld [vmem:[%s5402 + $0xc] sm:$0xf]
    %v5407 = vld [vmem:[%s5402 + $0x10] sm:$0xf]
    %v5408 = vld [vmem:[%s5402 + $0x14] sm:$0xf]
    %v5409 = vld [vmem:[%s5402 + $0x18] sm:$0xf]
    %v5410 = vld [vmem:[%s5402 + $0x1c] sm:$0xf]
    %v5411 = vld [vmem:[%s5402 + $0x20] sm:$0xf]
    %v5412 = vld [vmem:[%s5402 + $0x24] sm:$0xf]
    %v5413 = vld [vmem:[%s5402 + $0x28] sm:$0xf]
    %v5414 = vld [vmem:[%s5402 + $0x2c] sm:$0xf]
    %v5415 = vld [vmem:[%s5402 + $0x30] sm:$0xf]
    %v5416 = vld [vmem:[%s5402 + $0x34] sm:$0xf]
    %v5417 = vld [vmem:[%s5402 + $0x38] sm:$0xf]
    %v5418 = vld [vmem:[%s5402 + $0x3c] sm:$0xf]
    %v5419 = vld [vmem:[%s5402 + $0x40] sm:$0xf]
    %v5420 = vld [vmem:[%s5402 + $0x44] sm:$0xf]
    %v5421 = vld [vmem:[%s5402 + $0x48] sm:$0xf]
    %v5422 = vld [vmem:[%s5402 + $0x4c] sm:$0xf]
    %v5423 = vld [vmem:[%s5402 + $0x50] sm:$0xf]
    %v5424 = vld [vmem:[%s5402 + $0x54] sm:$0xf]
    %v5425 = vld [vmem:[%s5402 + $0x58] sm:$0xf]
    %v5426 = vld [vmem:[%s5402 + $0x5c] sm:$0xf]
    %v5427 = vld [vmem:[%s5402 + $0x60] sm:$0xf]
    %v5428 = vld [vmem:[%s5402 + $0x64] sm:$0xf]
    %v5429 = vld [vmem:[%s5402 + $0x68] sm:$0xf]
    %v5430 = vld [vmem:[%s5402 + $0x6c] sm:$0xf]
    %v5431 = vld [vmem:[%s5402 + $0x70] sm:$0xf]
    %v5432 = vld [vmem:[%s5402 + $0x74] sm:$0xf]
    %v5433 = vld [vmem:[%s5402 + $0x78] sm:$0xf]
    %v5434 = vld [vmem:[%s5402 + $0x7c] sm:$0xf]
    %v5435 = vld [vmem:[%s5402 + $0x80] sm:$0xf]
    %v5436 = vld [vmem:[%s5402 + $0x84] sm:$0xf]
    %v5437 = vld [vmem:[%s5402 + $0x88] sm:$0xf]
    %v5438 = vld [vmem:[%s5402 + $0x8c] sm:$0xf]
    %s5439 = scalar_lea.vmem [#allocation5], 3
    %v5440 = vld [vmem:[%s5439] sm:$0x1]
    %s5441 = scalar_lea.vmem [#allocation7], 3
    %v5442 = vld [vmem:[%s5441] sm:$0x1]
    %v5479 = vunpack.c.l.b16 %v5403
    %v5480 = vunpack.c.l.b16 %v5404
    %v5481 = vunpack.c.l.b16 %v5405
    %v5482 = vunpack.c.l.b16 %v5406
    %v5483 = vunpack.c.l.b16 %v5407
    %v5484 = vunpack.c.l.b16 %v5408
    %v5485 = vunpack.c.l.b16 %v5409
    %v5486 = vunpack.c.l.b16 %v5410
    %v5487 = vunpack.c.l.b16 %v5411
    %v5488 = vunpack.c.l.b16 %v5412
    %v5489 = vunpack.c.l.b16 %v5413
    %v5490 = vunpack.c.l.b16 %v5414
    %v5491 = vunpack.c.l.b16 %v5415
    %v5492 = vunpack.c.l.b16 %v5416
    %v5493 = vunpack.c.l.b16 %v5417
    %v5494 = vunpack.c.l.b16 %v5418
    %v5495 = vunpack.c.l.b16 %v5419
    %v5496 = vunpack.c.l.b16 %v5420
    %v5497 = vunpack.c.l.b16 %v5421
    %v5498 = vunpack.c.l.b16 %v5422
    %v5499 = vunpack.c.l.b16 %v5423
    %v5500 = vunpack.c.l.b16 %v5424
    %v5501 = vunpack.c.l.b16 %v5425
    %v5502 = vunpack.c.l.b16 %v5426
    %v5503 = vunpack.c.l.b16 %v5427
    %v5504 = vunpack.c.l.b16 %v5428
    %v5505 = vunpack.c.l.b16 %v5429
    %v5506 = vunpack.c.l.b16 %v5430
    %v5507 = vunpack.c.l.b16 %v5431
    %v5508 = vunpack.c.l.b16 %v5432
    %v5509 = vunpack.c.l.b16 %v5433
    %v5510 = vunpack.c.l.b16 %v5434
    %v5511 = vunpack.c.l.b16 %v5435
    %v5512 = vunpack.c.l.b16 %v5436
    %v5513 = vunpack.c.l.b16 %v5437
    %v5514 = vunpack.c.l.b16 %v5438
    %v5515 = vpack.c.b16 %v5480, %v5479
    %v5516 = vpack.c.b16 %v5482, %v5481
    %v5517 = vpack.c.b16 %v5484, %v5483
    %v5518 = vpack.c.b16 %v5486, %v5485
    %v5519 = vpack.c.b16 %v5488, %v5487
    %v5520 = vpack.c.b16 %v5490, %v5489
    %v5521 = vpack.c.b16 %v5492, %v5491
    %v5522 = vpack.c.b16 %v5494, %v5493
    %v5523 = vpack.c.b16 %v5496, %v5495
    %v5524 = vpack.c.b16 %v5498, %v5497
    %v5525 = vpack.c.b16 %v5500, %v5499
    %v5526 = vpack.c.b16 %v5502, %v5501
    %v5527 = vpack.c.b16 %v5504, %v5503
    %v5528 = vpack.c.b16 %v5506, %v5505
    %v5529 = vpack.c.b16 %v5508, %v5507
    %v5530 = vpack.c.b16 %v5510, %v5509
    %v5531 = vpack.c.b16 %v5512, %v5511
    %v5532 = vpack.c.b16 %v5514, %v5513
    %v5552 = vsel %vm105, %v5266, 0
    %v5555 = vsel %vm105, %v5267, 0
    %v5558 = vsel %vm105, %v5268, 0
    %v5561 = vsel %vm105, %v5269, 0
    %v5564 = vsel %vm105, %v5270, 0
    %v5567 = vsel %vm105, %v5271, 0
    %v5570 = vsel %vm105, %v5272, 0
    %v5573 = vsel %vm105, %v5273, 0
    %5575 = vmatprep.subr.bf16.mxu0 0
    %5576 = vmatpush1.bf16.msra.mxu0 %v5515
    %5577 = vmatprep.subr.bf16.mxu0 0
    %5578 = vmatpush1.bf16.msra.mxu0 %v5516
    %5579 = vmatprep.subr.bf16.mxu0 0
    %5580 = vmatpush1.bf16.msra.mxu0 %v5517
    %5581 = vmatprep.subr.bf16.mxu0 0
    %5582 = vmatpush1.bf16.msra.mxu0 %v5518
    %5583 = vmatprep.subr.bf16.mxu0 0
    %5584 = vmatpush1.bf16.msra.mxu0 %v5519
    %5585 = vmatprep.subr.bf16.mxu0 0
    %5586 = vmatpush1.bf16.msra.mxu0 %v5520
    %5587 = vmatprep.subr.bf16.mxu0 0
    %5588 = vmatpush1.bf16.msra.mxu0 %v5521
    %5589 = vmatprep.subr.bf16.mxu0 0
    %5590 = vmatpush1.bf16.msra.mxu0 %v5522
    %5591 = vmatprep.subr.bf16.mxu0 0
    %5592 = vmatpush1.bf16.msra.mxu0 %v5523
    %5593 = vmatprep.subr.bf16.mxu0 0
    %5594 = vmatpush1.bf16.msra.mxu0 %v5524
    %5595 = vmatprep.subr.bf16.mxu0 0
    %5596 = vmatpush1.bf16.msra.mxu0 %v5525
    %5597 = vmatprep.subr.bf16.mxu0 0
    %5598 = vmatpush1.bf16.msra.mxu0 %v5526
    %5599 = vmatprep.subr.bf16.mxu0 0
    %5600 = vmatpush1.bf16.msra.mxu0 %v5527
    %5601 = vmatprep.subr.bf16.mxu0 0
    %5602 = vmatpush1.bf16.msra.mxu0 %v5528
    %5603 = vmatprep.subr.bf16.mxu0 0
    %5604 = vmatpush1.bf16.msra.mxu0 %v5529
    %5605 = vmatprep.subr.bf16.mxu0 0
    %5606 = vmatpush1.bf16.msra.mxu0 %v5530
    %5607 = vmatprep.mubr.bf16.mxu0 %v5379
    %5608 = vmatmul.mubr.bf16.gmra.mrb[0].mxu0 %v5315
    %v5609 = vpop.f32.mrb[0].mxu0
    %v5610 = vadd.f32 0.0, %v5609
    %v5611 = vpop.f32.mrb[0].mxu0
    %v5612 = vpop.f32.mrb[0].mxu0
    %v5613 = vadd.f32 0.0, %v5612
    %v5614 = vpop.f32.mrb[0].mxu0
    %5615 = vmatprep.mubr.bf16.mxu0 %v5382
    %5616 = vmatmul.mubr.bf16.gmra.mrb[0].mxu0 %v5318
    %v5617 = vpop.f32.mrb[0].mxu0
    %v5618 = vadd.f32 0.0, %v5617
    %v5619 = vpop.f32.mrb[0].mxu0
    %v5620 = vpop.f32.mrb[0].mxu0
    %v5621 = vadd.f32 0.0, %v5620
    %v5622 = vpop.f32.mrb[0].mxu0
    %5623 = vmatprep.mubr.bf16.mxu0 %v5385
    %5624 = vmatmul.mubr.bf16.gmra.mrb[0].mxu0 %v5321
    %v5625 = vpop.f32.mrb[0].mxu0
    %v5626 = vadd.f32 0.0, %v5625
    %v5627 = vpop.f32.mrb[0].mxu0
    %v5628 = vpop.f32.mrb[0].mxu0
    %v5629 = vadd.f32 0.0, %v5628
    %v5630 = vpop.f32.mrb[0].mxu0
    %5631 = vmatprep.mubr.bf16.mxu0 %v5388
    %5632 = vmatmul.mubr.bf16.gmra.mrb[0].mxu0 %v5324
    %v5633 = vpop.f32.mrb[0].mxu0
    %v5634 = vadd.f32 0.0, %v5633
    %v5635 = vpop.f32.mrb[0].mxu0
    %v5636 = vpop.f32.mrb[0].mxu0
    %v5637 = vadd.f32 0.0, %v5636
    %v5638 = vpop.f32.mrb[0].mxu0
    %5639 = vmatprep.mubr.bf16.mxu0 %v5391
    %5640 = vmatmul.mubr.bf16.gmra.mrb[0].mxu0 %v5327
    %v5641 = vpop.f32.mrb[0].mxu0
    %v5642 = vadd.f32 0.0, %v5641
    %v5643 = vpop.f32.mrb[0].mxu0
    %v5644 = vpop.f32.mrb[0].mxu0
    %v5645 = vadd.f32 0.0, %v5644
    %v5646 = vpop.f32.mrb[0].mxu0
    %5647 = vmatprep.mubr.bf16.mxu0 %v5394
    %5648 = vmatmul.mubr.bf16.gmra.mrb[0].mxu0 %v5330
    %v5649 = vpop.f32.mrb[0].mxu0
    %v5650 = vadd.f32 0.0, %v5649
    %v5651 = vpop.f32.mrb[0].mxu0
    %v5652 = vpop.f32.mrb[0].mxu0
    %v5653 = vadd.f32 0.0, %v5652
    %v5654 = vpop.f32.mrb[0].mxu0
    %5655 = vmatprep.mubr.bf16.mxu0 %v5397
    %5656 = vmatmul.mubr.bf16.gmra.mrb[0].mxu0 %v5333
    %v5657 = vpop.f32.mrb[0].mxu0
    %v5658 = vadd.f32 0.0, %v5657
    %v5659 = vpop.f32.mrb[0].mxu0
    %v5660 = vpop.f32.mrb[0].mxu0
    %v5661 = vadd.f32 0.0, %v5660
    %v5662 = vpop.f32.mrb[0].mxu0
    %5663 = vmatprep.mubr.bf16.mxu0 %v5400
    %5664 = vmatmul.mubr.bf16.gmra.mrb[0].mxu0 %v5336
    %v5665 = vpop.f32.mrb[0].mxu0
    %v5666 = vadd.f32 0.0, %v5665
    %v5667 = vpop.f32.mrb[0].mxu0
    %v5668 = vpop.f32.mrb[0].mxu0
    %v5669 = vadd.f32 0.0, %v5668
    %v5670 = vpop.f32.mrb[0].mxu0
    %5671 = vdwg.mxu0
    %5672 = vmatprep.subr.bf16.mxu0 0
    %5673 = vmatpush1.bf16.msra.mxu0 %v5531
    %5674 = vmatprep.subr.bf16.mxu0 0
    %5675 = vmatpush1.bf16.msra.mxu0 %v5532
    %5676 = vmatprep.subr.bf16.mxu0 0
    %5677 = vmatpush1.bf16.msra.mxu0 0
    %5678 = vmatprep.subr.bf16.mxu0 0
    %5679 = vmatpush1.bf16.msra.mxu0 0
    %5680 = vmatprep.subr.bf16.mxu0 0
    %5681 = vmatpush1.bf16.msra.mxu0 0
    %5682 = vmatprep.subr.bf16.mxu0 0
    %5683 = vmatpush1.bf16.msra.mxu0 0
    %5684 = vmatprep.subr.bf16.mxu0 0
    %5685 = vmatpush1.bf16.msra.mxu0 0
    %5686 = vmatprep.subr.bf16.mxu0 0
    %5687 = vmatpush1.bf16.msra.mxu0 0
    %5688 = vmatprep.subr.bf16.mxu0 0
    %5689 = vmatpush1.bf16.msra.mxu0 0
    %5690 = vmatprep.subr.bf16.mxu0 0
    %5691 = vmatpush1.bf16.msra.mxu0 0
    %5692 = vmatprep.subr.bf16.mxu0 0
    %5693 = vmatpush1.bf16.msra.mxu0 0
    %5694 = vmatprep.subr.bf16.mxu0 0
    %5695 = vmatpush1.bf16.msra.mxu0 0
    %5696 = vmatprep.subr.bf16.mxu0 0
    %5697 = vmatpush1.bf16.msra.mxu0 0
    %5698 = vmatprep.subr.bf16.mxu0 0
    %5699 = vmatpush1.bf16.msra.mxu0 0
    %5700 = vmatprep.subr.bf16.mxu0 0
    %5701 = vmatpush1.bf16.msra.mxu0 0
    %5702 = vmatprep.subr.bf16.mxu0 0
    %5703 = vmatpush1.bf16.msra.mxu0 0
    %5704 = vmatprep.mubr.bf16.mxu0 0
    %5705 = vmatmul.mubr.bf16.gmra.mrb[0].mxu0 %v5552
    %v5706 = vpop.f32.mrb[0].mxu0
    %v5707 = vadd.f32 %v5610, %v5706
    %v5708 = vpop.f32.mrb[0].mxu0
    %v5709 = vpop.f32.mrb[0].mxu0
    %v5710 = vadd.f32 %v5613, %v5709
    %v5711 = vpop.f32.mrb[0].mxu0
    %5712 = vmatprep.mubr.bf16.mxu0 0
    %5713 = vmatmul.mubr.bf16.gmra.mrb[0].mxu0 %v5555
    %v5714 = vpop.f32.mrb[0].mxu0
    %v5715 = vadd.f32 %v5618, %v5714
    %v5716 = vpop.f32.mrb[0].mxu0
    %v5717 = vpop.f32.mrb[0].mxu0
    %v5718 = vadd.f32 %v5621, %v5717
    %v5719 = vpop.f32.mrb[0].mxu0
    %5720 = vmatprep.mubr.bf16.mxu0 0
    %5721 = vmatmul.mubr.bf16.gmra.mrb[0].mxu0 %v5558
    %v5722 = vpop.f32.mrb[0].mxu0
    %v5723 = vadd.f32 %v5626, %v5722
    %v5724 = vpop.f32.mrb[0].mxu0
    %v5725 = vpop.f32.mrb[0].mxu0
    %v5726 = vadd.f32 %v5629, %v5725
    %v5727 = vpop.f32.mrb[0].mxu0
    %5728 = vmatprep.mubr.bf16.mxu0 0
    %5729 = vmatmul.mubr.bf16.gmra.mrb[0].mxu0 %v5561
    %v5730 = vpop.f32.mrb[0].mxu0
    %v5731 = vadd.f32 %v5634, %v5730
    %v5732 = vpop.f32.mrb[0].mxu0
    %v5733 = vpop.f32.mrb[0].mxu0
    %v5734 = vadd.f32 %v5637, %v5733
    %v5735 = vpop.f32.mrb[0].mxu0
    %5736 = vmatprep.mubr.bf16.mxu0 0
    %5737 = vmatmul.mubr.bf16.gmra.mrb[0].mxu0 %v5564
    %v5738 = vpop.f32.mrb[0].mxu0
    %v5739 = vadd.f32 %v5642, %v5738
    %v5740 = vpop.f32.mrb[0].mxu0
    %v5741 = vpop.f32.mrb[0].mxu0
    %v5742 = vadd.f32 %v5645, %v5741
    %v5743 = vpop.f32.mrb[0].mxu0
    %5744 = vmatprep.mubr.bf16.mxu0 0
    %5745 = vmatmul.mubr.bf16.gmra.mrb[0].mxu0 %v5567
    %v5746 = vpop.f32.mrb[0].mxu0
    %v5747 = vadd.f32 %v5650, %v5746
    %v5748 = vpop.f32.mrb[0].mxu0
    %v5749 = vpop.f32.mrb[0].mxu0
    %v5750 = vadd.f32 %v5653, %v5749
    %v5751 = vpop.f32.mrb[0].mxu0
    %5752 = vmatprep.mubr.bf16.mxu0 0
    %5753 = vmatmul.mubr.bf16.gmra.mrb[0].mxu0 %v5570
    %v5754 = vpop.f32.mrb[0].mxu0
    %v5755 = vadd.f32 %v5658, %v5754
    %v5756 = vpop.f32.mrb[0].mxu0
    %v5757 = vpop.f32.mrb[0].mxu0
    %v5758 = vadd.f32 %v5661, %v5757
    %v5759 = vpop.f32.mrb[0].mxu0
    %5760 = vmatprep.mubr.bf16.mxu0 0
    %5761 = vmatmul.mubr.bf16.gmra.mrb[0].mxu0 %v5573
    %v5762 = vpop.f32.mrb[0].mxu0
    %v5763 = vadd.f32 %v5666, %v5762
    %v5764 = vpop.f32.mrb[0].mxu0
    %v5765 = vpop.f32.mrb[0].mxu0
    %v5766 = vadd.f32 %v5669, %v5765
    %v5767 = vpop.f32.mrb[0].mxu0
    %5768 = vdwg.mxu0
    %v5769 = vsel %vm105, %v5707, 0.0
    %v5770 = vsel %vm105, %v5710, 0.0
    %v5771 = vadd.f32 %v5769, %v5770
    %v5772 = vsel %vm105, %v5715, 0.0
    %v5773 = vadd.f32 %v5771, %v5772
    %v5774 = vsel %vm105, %v5718, 0.0
    %v5775 = vadd.f32 %v5773, %v5774
    %v5776 = vsel %vm105, %v5723, 0.0
    %v5777 = vadd.f32 %v5775, %v5776
    %v5778 = vsel %vm105, %v5726, 0.0
    %v5779 = vadd.f32 %v5777, %v5778
    %v5780 = vsel %vm105, %v5731, 0.0
    %v5781 = vadd.f32 %v5779, %v5780
    %v5782 = vsel %vm105, %v5734, 0.0
    %v5783 = vadd.f32 %v5781, %v5782
    %v5784 = vsel %vm105, %v5739, 0.0
    %v5785 = vadd.f32 %v5783, %v5784
    %v5786 = vsel %vm105, %v5742, 0.0
    %v5787 = vadd.f32 %v5785, %v5786
    %v5788 = vsel %vm105, %v5747, 0.0
    %v5789 = vadd.f32 %v5787, %v5788
    %v5790 = vsel %vm105, %v5750, 0.0
    %v5791 = vadd.f32 %v5789, %v5790
    %v5792 = vsel %vm105, %v5755, 0.0
    %v5793 = vadd.f32 %v5791, %v5792
    %v5794 = vsel %vm105, %v5758, 0.0
    %v5795 = vadd.f32 %v5793, %v5794
    %v5796 = vsel %vm105, %v5763, 0.0
    %v5797 = vadd.f32 %v5795, %v5796
    %v5798 = vsel %vm105, %v5766, 0.0
    %v5799 = vadd.f32 %v5797, %v5798
    %v5800 = vrot.slane %v5799, 4
    %v5801 = vadd.f32 %v5799, %v5800
    %v5802 = vrot.slane %v5801, 2
    %v5803 = vadd.f32 %v5801, %v5802
    %v5804 = vrot.slane %v5803, 1
    %v5805 = vadd.f32 %v5803, %v5804
    %v5806 = vmul.f32 %v5805, %v1457
    %v5807 = vmul.f32 %v5707, %v5707
    %v5808 = vmul.f32 %v5710, %v5710
    %v5809 = vmul.f32 %v5715, %v5715
    %v5810 = vmul.f32 %v5718, %v5718
    %v5811 = vmul.f32 %v5723, %v5723
    %v5812 = vmul.f32 %v5726, %v5726
    %v5813 = vmul.f32 %v5731, %v5731
    %v5814 = vmul.f32 %v5734, %v5734
    %v5815 = vmul.f32 %v5739, %v5739
    %v5816 = vmul.f32 %v5742, %v5742
    %v5817 = vmul.f32 %v5747, %v5747
    %v5818 = vmul.f32 %v5750, %v5750
    %v5819 = vmul.f32 %v5755, %v5755
    %v5820 = vmul.f32 %v5758, %v5758
    %v5821 = vmul.f32 %v5763, %v5763
    %v5822 = vmul.f32 %v5766, %v5766
    %v5823 = vsel %vm105, %v5807, 0.0
    %v5824 = vsel %vm105, %v5808, 0.0
    %v5825 = vadd.f32 %v5823, %v5824
    %v5826 = vsel %vm105, %v5809, 0.0
    %v5827 = vadd.f32 %v5825, %v5826
    %v5828 = vsel %vm105, %v5810, 0.0
    %v5829 = vadd.f32 %v5827, %v5828
    %v5830 = vsel %vm105, %v5811, 0.0
    %v5831 = vadd.f32 %v5829, %v5830
    %v5832 = vsel %vm105, %v5812, 0.0
    %v5833 = vadd.f32 %v5831, %v5832
    %v5834 = vsel %vm105, %v5813, 0.0
    %v5835 = vadd.f32 %v5833, %v5834
    %v5836 = vsel %vm105, %v5814, 0.0
    %v5837 = vadd.f32 %v5835, %v5836
    %v5838 = vsel %vm105, %v5815, 0.0
    %v5839 = vadd.f32 %v5837, %v5838
    %v5840 = vsel %vm105, %v5816, 0.0
    %v5841 = vadd.f32 %v5839, %v5840
    %v5842 = vsel %vm105, %v5817, 0.0
    %v5843 = vadd.f32 %v5841, %v5842
    %v5844 = vsel %vm105, %v5818, 0.0
    %v5845 = vadd.f32 %v5843, %v5844
    %v5846 = vsel %vm105, %v5819, 0.0
    %v5847 = vadd.f32 %v5845, %v5846
    %v5848 = vsel %vm105, %v5820, 0.0
    %v5849 = vadd.f32 %v5847, %v5848
    %v5850 = vsel %vm105, %v5821, 0.0
    %v5851 = vadd.f32 %v5849, %v5850
    %v5852 = vsel %vm105, %v5822, 0.0
    %v5853 = vadd.f32 %v5851, %v5852
    %v5854 = vrot.slane %v5853, 4
    %v5855 = vadd.f32 %v5853, %v5854
    %v5856 = vrot.slane %v5855, 2
    %v5857 = vadd.f32 %v5855, %v5856
    %v5858 = vrot.slane %v5857, 1
    %v5859 = vadd.f32 %v5857, %v5858
    %v5860 = vmul.f32 %v5859, %v1457
    %v5861 = vmul.f32 %v5806, %v5806
    %v5862 = vsub.f32 %v5860, %v5861
    %v5863 = vmax.f32 %v5862, 0.0
    %v5864 = vsub.f32 %v5707, %v5806
    %v5865 = vsub.f32 %v5710, %v5806
    %v5866 = vsub.f32 %v5715, %v5806
    %v5867 = vsub.f32 %v5718, %v5806
    %v5868 = vsub.f32 %v5723, %v5806
    %v5869 = vsub.f32 %v5726, %v5806
    %v5870 = vsub.f32 %v5731, %v5806
    %v5871 = vsub.f32 %v5734, %v5806
    %v5872 = vsub.f32 %v5739, %v5806
    %v5873 = vsub.f32 %v5742, %v5806
    %v5874 = vsub.f32 %v5747, %v5806
    %v5875 = vsub.f32 %v5750, %v5806
    %v5876 = vsub.f32 %v5755, %v5806
    %v5877 = vsub.f32 %v5758, %v5806
    %v5878 = vsub.f32 %v5763, %v5806
    %v5879 = vsub.f32 %v5766, %v5806
    %v5880 = vadd.f32 %v5863, 1e-05
    %v5881 = vrsqrt.pop %v5880
    %v5882 = vmul.f32 %v5864, %v5881
    %v5883 = vmul.f32 %v5865, %v5881
    %v5884 = vmul.f32 %v5866, %v5881
    %v5885 = vmul.f32 %v5867, %v5881
    %v5886 = vmul.f32 %v5868, %v5881
    %v5887 = vmul.f32 %v5869, %v5881
    %v5888 = vmul.f32 %v5870, %v5881
    %v5889 = vmul.f32 %v5871, %v5881
    %v5890 = vmul.f32 %v5872, %v5881
    %v5891 = vmul.f32 %v5873, %v5881
    %v5892 = vmul.f32 %v5874, %v5881
    %v5893 = vmul.f32 %v5875, %v5881
    %v5894 = vmul.f32 %v5876, %v5881
    %v5895 = vmul.f32 %v5877, %v5881
    %v5896 = vmul.f32 %v5878, %v5881
    %v5897 = vmul.f32 %v5879, %v5881
    %v5899 = vlaneseq
    %v5900 = vshrl.u32 %v5899, 7
    %v5901 = vsub.s32 0, %v5900
    %v5902 = vrot.slane %v5440, %v5901
    %v5904 = vmul.f32 %v5882, %v5902
    %v5905 = vmul.f32 %v5883, %v5902
    %v5906 = vmul.f32 %v5884, %v5902
    %v5907 = vmul.f32 %v5885, %v5902
    %v5908 = vmul.f32 %v5886, %v5902
    %v5909 = vmul.f32 %v5887, %v5902
    %v5910 = vmul.f32 %v5888, %v5902
    %v5911 = vmul.f32 %v5889, %v5902
    %v5912 = vmul.f32 %v5890, %v5902
    %v5913 = vmul.f32 %v5891, %v5902
    %v5914 = vmul.f32 %v5892, %v5902
    %v5915 = vmul.f32 %v5893, %v5902
    %v5916 = vmul.f32 %v5894, %v5902
    %v5917 = vmul.f32 %v5895, %v5902
    %v5918 = vmul.f32 %v5896, %v5902
    %v5919 = vmul.f32 %v5897, %v5902
    %v5921 = vlaneseq
    %v5922 = vshrl.u32 %v5921, 7
    %v5923 = vsub.s32 0, %v5922
    %v5924 = vrot.slane %v5442, %v5923
    %v5926 = vadd.f32 %v5904, %v5924
    %v5927 = vadd.f32 %v5905, %v5924
    %v5928 = vadd.f32 %v5906, %v5924
    %v5929 = vadd.f32 %v5907, %v5924
    %v5930 = vadd.f32 %v5908, %v5924
    %v5931 = vadd.f32 %v5909, %v5924
    %v5932 = vadd.f32 %v5910, %v5924
    %v5933 = vadd.f32 %v5911, %v5924
    %v5934 = vadd.f32 %v5912, %v5924
    %v5935 = vadd.f32 %v5913, %v5924
    %v5936 = vadd.f32 %v5914, %v5924
    %v5937 = vadd.f32 %v5915, %v5924
    %v5938 = vadd.f32 %v5916, %v5924
    %v5939 = vadd.f32 %v5917, %v5924
    %v5940 = vadd.f32 %v5918, %v5924
    %v5941 = vadd.f32 %v5919, %v5924
    %v5942 = vmax.f32 %v5926, 0.0
    %v5943 = vmax.f32 %v5927, 0.0
    %v5944 = vmax.f32 %v5928, 0.0
    %v5945 = vmax.f32 %v5929, 0.0
    %v5946 = vmax.f32 %v5930, 0.0
    %v5947 = vmax.f32 %v5931, 0.0
    %v5948 = vmax.f32 %v5932, 0.0
    %v5949 = vmax.f32 %v5933, 0.0
    %v5950 = vmax.f32 %v5934, 0.0
    %v5951 = vmax.f32 %v5935, 0.0
    %v5952 = vmax.f32 %v5936, 0.0
    %v5953 = vmax.f32 %v5937, 0.0
    %v5954 = vmax.f32 %v5938, 0.0
    %v5955 = vmax.f32 %v5939, 0.0
    %v5956 = vmax.f32 %v5940, 0.0
    %v5957 = vmax.f32 %v5941, 0.0
    %5958 = vst.msk [vmem:[%s163 + $0x1] sm:$0xff] %vm105, %v5942
    %5959 = vst.msk [vmem:[%s163 + $0x11] sm:$0xff] %vm105, %v5943
    %5960 = vst.msk [vmem:[%s163 + $0x21] sm:$0xff] %vm105, %v5944
    %5961 = vst.msk [vmem:[%s163 + $0x31] sm:$0xff] %vm105, %v5945
    %5962 = vst.msk [vmem:[%s163 + $0x41] sm:$0xff] %vm105, %v5946
    %5963 = vst.msk [vmem:[%s163 + $0x51] sm:$0xff] %vm105, %v5947
    %5964 = vst.msk [vmem:[%s163 + $0x61] sm:$0xff] %vm105, %v5948
    %5965 = vst.msk [vmem:[%s163 + $0x71] sm:$0xff] %vm105, %v5949
    %5966 = vst.msk [vmem:[%s163 + $0xa1] sm:$0xff] %vm105, %v5950
    %5967 = vst.msk [vmem:[%s163 + $0xb1] sm:$0xff] %vm105, %v5951
    %5968 = vst.msk [vmem:[%s163 + $0xc1] sm:$0xff] %vm105, %v5952
    %5969 = vst.msk [vmem:[%s163 + $0xd1] sm:$0xff] %vm105, %v5953
    %5970 = vst.msk [vmem:[%s163 + $0xe1] sm:$0xff] %vm105, %v5954
    %5971 = vst.msk [vmem:[%s163 + $0xf1] sm:$0xff] %vm105, %v5955
    %5972 = vst.msk [vmem:[%s163 + $0x101] sm:$0xff] %vm105, %v5956
    %5973 = vst.msk [vmem:[%s163 + $0x111] sm:$0xff] %vm105, %v5957
    %v5974 = vld [vmem:[#allocation2] sm:$0xff]
    %v5975 = vld [vmem:[#allocation2 + $0x10] sm:$0xff]
    %v5976 = vld [vmem:[#allocation2 + $0x20] sm:$0xff]
    %v5977 = vld [vmem:[#allocation2 + $0x30] sm:$0xff]
    %v5978 = vld [vmem:[#allocation2 + $0x40] sm:$0xff]
    %v5979 = vld [vmem:[#allocation2 + $0x50] sm:$0xff]
    %v5980 = vld [vmem:[#allocation2 + $0x60] sm:$0xff]
    %v5981 = vld [vmem:[#allocation2 + $0x70] sm:$0xff]
    %v5982 = vld [vmem:[#allocation2 + $0xa0] sm:$0xff]
    %v5983 = vld [vmem:[#allocation2 + $0xb0] sm:$0xff]
    %v5984 = vld [vmem:[#allocation2 + $0xc0] sm:$0xff]
    %v5985 = vld [vmem:[#allocation2 + $0xd0] sm:$0xff]
    %v5986 = vld [vmem:[#allocation2 + $0xe0] sm:$0xff]
    %v5987 = vld [vmem:[#allocation2 + $0xf0] sm:$0xff]
    %v5988 = vld [vmem:[#allocation2 + $0x100] sm:$0xff]
    %v5989 = vld [vmem:[#allocation2 + $0x110] sm:$0xff]
    %v5990 = vpack.c.bf16 %v5974, %v5974
    %v5991 = vpack.c.bf16 %v5975, %v5975
    %v5992 = vpack.c.bf16 %v5976, %v5976
    %v5993 = vpack.c.bf16 %v5977, %v5977
    %v5994 = vpack.c.bf16 %v5978, %v5978
    %v5995 = vpack.c.bf16 %v5979, %v5979
    %v5996 = vpack.c.bf16 %v5980, %v5980
    %v5997 = vpack.c.bf16 %v5981, %v5981
    %v5998 = vpack.c.bf16 %v5982, %v5982
    %v5999 = vpack.c.bf16 %v5983, %v5983
    %v6000 = vpack.c.bf16 %v5984, %v5984
    %v6001 = vpack.c.bf16 %v5985, %v5985
    %v6002 = vpack.c.bf16 %v5986, %v5986
    %v6003 = vpack.c.bf16 %v5987, %v5987
    %v6004 = vpack.c.bf16 %v5988, %v5988
    %v6005 = vpack.c.bf16 %v5989, %v5989
    %v6006 = vld [vmem:[#allocation2 + $0x1] sm:$0xff]
    %v6007 = vld [vmem:[#allocation2 + $0x11] sm:$0xff]
    %v6008 = vld [vmem:[#allocation2 + $0x21] sm:$0xff]
    %v6009 = vld [vmem:[#allocation2 + $0x31] sm:$0xff]
    %v6010 = vld [vmem:[#allocation2 + $0x41] sm:$0xff]
    %v6011 = vld [vmem:[#allocation2 + $0x51] sm:$0xff]
    %v6012 = vld [vmem:[#allocation2 + $0x61] sm:$0xff]
    %v6013 = vld [vmem:[#allocation2 + $0x71] sm:$0xff]
    %v6014 = vld [vmem:[#allocation2 + $0xa1] sm:$0xff]
    %v6015 = vld [vmem:[#allocation2 + $0xb1] sm:$0xff]
    %v6016 = vld [vmem:[#allocation2 + $0xc1] sm:$0xff]
    %v6017 = vld [vmem:[#allocation2 + $0xd1] sm:$0xff]
    %v6018 = vld [vmem:[#allocation2 + $0xe1] sm:$0xff]
    %v6019 = vld [vmem:[#allocation2 + $0xf1] sm:$0xff]
    %v6020 = vld [vmem:[#allocation2 + $0x101] sm:$0xff]
    %v6021 = vld [vmem:[#allocation2 + $0x111] sm:$0xff]
    %v6022 = vpack.c.bf16 %v6006, %v6006
    %v6023 = vpack.c.bf16 %v6007, %v6007
    %v6024 = vpack.c.bf16 %v6008, %v6008
    %v6025 = vpack.c.bf16 %v6009, %v6009
    %v6026 = vpack.c.bf16 %v6010, %v6010
    %v6027 = vpack.c.bf16 %v6011, %v6011
    %v6028 = vpack.c.bf16 %v6012, %v6012
    %v6029 = vpack.c.bf16 %v6013, %v6013
    %v6030 = vpack.c.bf16 %v6014, %v6014
    %v6031 = vpack.c.bf16 %v6015, %v6015
    %v6032 = vpack.c.bf16 %v6016, %v6016
    %v6033 = vpack.c.bf16 %v6017, %v6017
    %v6034 = vpack.c.bf16 %v6018, %v6018
    %v6035 = vpack.c.bf16 %v6019, %v6019
    %v6036 = vpack.c.bf16 %v6020, %v6020
    %v6037 = vpack.c.bf16 %v6021, %v6021
    %v6038 = vld [vmem:[#allocation2 + $0x2] sm:$0xff]
    %v6039 = vld [vmem:[#allocation2 + $0x12] sm:$0xff]
    %v6040 = vld [vmem:[#allocation2 + $0x22] sm:$0xff]
    %v6041 = vld [vmem:[#allocation2 + $0x32] sm:$0xff]
    %v6042 = vld [vmem:[#allocation2 + $0x42] sm:$0xff]
    %v6043 = vld [vmem:[#allocation2 + $0x52] sm:$0xff]
    %v6044 = vld [vmem:[#allocation2 + $0x62] sm:$0xff]
    %v6045 = vld [vmem:[#allocation2 + $0x72] sm:$0xff]
    %v6046 = vld [vmem:[#allocation2 + $0xa2] sm:$0xff]
    %v6047 = vld [vmem:[#allocation2 + $0xb2] sm:$0xff]
    %v6048 = vld [vmem:[#allocation2 + $0xc2] sm:$0xff]
    %v6049 = vld [vmem:[#allocation2 + $0xd2] sm:$0xff]
    %v6050 = vld [vmem:[#allocation2 + $0xe2] sm:$0xff]
    %v6051 = vld [vmem:[#allocation2 + $0xf2] sm:$0xff]
    %v6052 = vld [vmem:[#allocation2 + $0x102] sm:$0xff]
    %v6053 = vld [vmem:[#allocation2 + $0x112] sm:$0xff]
    %v6054 = vpack.c.bf16 %v6038, %v6038
    %v6055 = vpack.c.bf16 %v6039, %v6039
    %v6056 = vpack.c.bf16 %v6040, %v6040
    %v6057 = vpack.c.bf16 %v6041, %v6041
    %v6058 = vpack.c.bf16 %v6042, %v6042
    %v6059 = vpack.c.bf16 %v6043, %v6043
    %v6060 = vpack.c.bf16 %v6044, %v6044
    %v6061 = vpack.c.bf16 %v6045, %v6045
    %v6062 = vpack.c.bf16 %v6046, %v6046
    %v6063 = vpack.c.bf16 %v6047, %v6047
    %v6064 = vpack.c.bf16 %v6048, %v6048
    %v6065 = vpack.c.bf16 %v6049, %v6049
    %v6066 = vpack.c.bf16 %v6050, %v6050
    %v6067 = vpack.c.bf16 %v6051, %v6051
    %v6068 = vpack.c.bf16 %v6052, %v6052
    %v6069 = vpack.c.bf16 %v6053, %v6053
    %v6070 = vld [vmem:[%s163] sm:$0xff]
    %v6071 = vld [vmem:[%s163 + $0x10] sm:$0xff]
    %v6072 = vld [vmem:[%s163 + $0x20] sm:$0xff]
    %v6073 = vld [vmem:[%s163 + $0x30] sm:$0xff]
    %v6074 = vld [vmem:[%s163 + $0x40] sm:$0xff]
    %v6075 = vld [vmem:[%s163 + $0x50] sm:$0xff]
    %v6076 = vld [vmem:[%s163 + $0x60] sm:$0xff]
    %v6077 = vld [vmem:[%s163 + $0x70] sm:$0xff]
    %v6078 = vld [vmem:[%s163 + $0xa0] sm:$0xff]
    %v6079 = vld [vmem:[%s163 + $0xb0] sm:$0xff]
    %v6080 = vld [vmem:[%s163 + $0xc0] sm:$0xff]
    %v6081 = vld [vmem:[%s163 + $0xd0] sm:$0xff]
    %v6082 = vld [vmem:[%s163 + $0xe0] sm:$0xff]
    %v6083 = vld [vmem:[%s163 + $0xf0] sm:$0xff]
    %v6084 = vld [vmem:[%s163 + $0x100] sm:$0xff]
    %v6085 = vld [vmem:[%s163 + $0x110] sm:$0xff]
    %v6086 = vpack.c.bf16 %v6070, %v6070
    %v6087 = vpack.c.bf16 %v6071, %v6071
    %v6088 = vpack.c.bf16 %v6072, %v6072
    %v6089 = vpack.c.bf16 %v6073, %v6073
    %v6090 = vpack.c.bf16 %v6074, %v6074
    %v6091 = vpack.c.bf16 %v6075, %v6075
    %v6092 = vpack.c.bf16 %v6076, %v6076
    %v6093 = vpack.c.bf16 %v6077, %v6077
    %v6094 = vpack.c.bf16 %v6078, %v6078
    %v6095 = vpack.c.bf16 %v6079, %v6079
    %v6096 = vpack.c.bf16 %v6080, %v6080
    %v6097 = vpack.c.bf16 %v6081, %v6081
    %v6098 = vpack.c.bf16 %v6082, %v6082
    %v6099 = vpack.c.bf16 %v6083, %v6083
    %v6100 = vpack.c.bf16 %v6084, %v6084
    %v6101 = vpack.c.bf16 %v6085, %v6085
    %v6102 = vld [vmem:[%s163 + $0x1] sm:$0xff]
    %v6103 = vld [vmem:[%s163 + $0x11] sm:$0xff]
    %v6104 = vld [vmem:[%s163 + $0x21] sm:$0xff]
    %v6105 = vld [vmem:[%s163 + $0x31] sm:$0xff]
    %v6106 = vld [vmem:[%s163 + $0x41] sm:$0xff]
    %v6107 = vld [vmem:[%s163 + $0x51] sm:$0xff]
    %v6108 = vld [vmem:[%s163 + $0x61] sm:$0xff]
    %v6109 = vld [vmem:[%s163 + $0x71] sm:$0xff]
    %v6110 = vld [vmem:[%s163 + $0xa1] sm:$0xff]
    %v6111 = vld [vmem:[%s163 + $0xb1] sm:$0xff]
    %v6112 = vld [vmem:[%s163 + $0xc1] sm:$0xff]
    %v6113 = vld [vmem:[%s163 + $0xd1] sm:$0xff]
    %v6114 = vld [vmem:[%s163 + $0xe1] sm:$0xff]
    %v6115 = vld [vmem:[%s163 + $0xf1] sm:$0xff]
    %v6116 = vld [vmem:[%s163 + $0x101] sm:$0xff]
    %v6117 = vld [vmem:[%s163 + $0x111] sm:$0xff]
    %v6118 = vpack.c.bf16 %v6102, %v6102
    %v6119 = vpack.c.bf16 %v6103, %v6103
    %v6120 = vpack.c.bf16 %v6104, %v6104
    %v6121 = vpack.c.bf16 %v6105, %v6105
    %v6122 = vpack.c.bf16 %v6106, %v6106
    %v6123 = vpack.c.bf16 %v6107, %v6107
    %v6124 = vpack.c.bf16 %v6108, %v6108
    %v6125 = vpack.c.bf16 %v6109, %v6109
    %v6126 = vpack.c.bf16 %v6110, %v6110
    %v6127 = vpack.c.bf16 %v6111, %v6111
    %v6128 = vpack.c.bf16 %v6112, %v6112
    %v6129 = vpack.c.bf16 %v6113, %v6113
    %v6130 = vpack.c.bf16 %v6114, %v6114
    %v6131 = vpack.c.bf16 %v6115, %v6115
    %v6132 = vpack.c.bf16 %v6116, %v6116
    %v6133 = vpack.c.bf16 %v6117, %v6117
    %v6134 = vld [vmem:[%s163 + $0x2] sm:$0xff]
    %v6135 = vld [vmem:[%s163 + $0x12] sm:$0xff]
    %v6136 = vld [vmem:[%s163 + $0x22] sm:$0xff]
    %v6137 = vld [vmem:[%s163 + $0x32] sm:$0xff]
    %v6138 = vld [vmem:[%s163 + $0x42] sm:$0xff]
    %v6139 = vld [vmem:[%s163 + $0x52] sm:$0xff]
    %v6140 = vld [vmem:[%s163 + $0x62] sm:$0xff]
    %v6141 = vld [vmem:[%s163 + $0x72] sm:$0xff]
    %v6142 = vld [vmem:[%s163 + $0xa2] sm:$0xff]
    %v6143 = vld [vmem:[%s163 + $0xb2] sm:$0xff]
    %v6144 = vld [vmem:[%s163 + $0xc2] sm:$0xff]
    %v6145 = vld [vmem:[%s163 + $0xd2] sm:$0xff]
    %v6146 = vld [vmem:[%s163 + $0xe2] sm:$0xff]
    %v6147 = vld [vmem:[%s163 + $0xf2] sm:$0xff]
    %v6148 = vld [vmem:[%s163 + $0x102] sm:$0xff]
    %v6149 = vld [vmem:[%s163 + $0x112] sm:$0xff]
    %v6150 = vpack.c.bf16 %v6134, %v6134
    %v6151 = vpack.c.bf16 %v6135, %v6135
    %v6152 = vpack.c.bf16 %v6136, %v6136
    %v6153 = vpack.c.bf16 %v6137, %v6137
    %v6154 = vpack.c.bf16 %v6138, %v6138
    %v6155 = vpack.c.bf16 %v6139, %v6139
    %v6156 = vpack.c.bf16 %v6140, %v6140
    %v6157 = vpack.c.bf16 %v6141, %v6141
    %v6158 = vpack.c.bf16 %v6142, %v6142
    %v6159 = vpack.c.bf16 %v6143, %v6143
    %v6160 = vpack.c.bf16 %v6144, %v6144
    %v6161 = vpack.c.bf16 %v6145, %v6145
    %v6162 = vpack.c.bf16 %v6146, %v6146
    %v6163 = vpack.c.bf16 %v6147, %v6147
    %v6164 = vpack.c.bf16 %v6148, %v6148
    %v6165 = vpack.c.bf16 %v6149, %v6149
    %v6166 = vld [vmem:[%s373] sm:$0xff]
    %v6167 = vld [vmem:[%s373 + $0x10] sm:$0xff]
    %v6168 = vld [vmem:[%s373 + $0x20] sm:$0xff]
    %v6169 = vld [vmem:[%s373 + $0x30] sm:$0xff]
    %v6170 = vld [vmem:[%s373 + $0x40] sm:$0xff]
    %v6171 = vld [vmem:[%s373 + $0x50] sm:$0xff]
    %v6172 = vld [vmem:[%s373 + $0x60] sm:$0xff]
    %v6173 = vld [vmem:[%s373 + $0x70] sm:$0xff]
    %v6174 = vld [vmem:[%s373 + $0xa0] sm:$0xff]
    %v6175 = vld [vmem:[%s373 + $0xb0] sm:$0xff]
    %v6176 = vld [vmem:[%s373 + $0xc0] sm:$0xff]
    %v6177 = vld [vmem:[%s373 + $0xd0] sm:$0xff]
    %v6178 = vld [vmem:[%s373 + $0xe0] sm:$0xff]
    %v6179 = vld [vmem:[%s373 + $0xf0] sm:$0xff]
    %v6180 = vld [vmem:[%s373 + $0x100] sm:$0xff]
    %v6181 = vld [vmem:[%s373 + $0x110] sm:$0xff]
    %v6182 = vpack.c.bf16 %v6166, %v6166
    %v6183 = vpack.c.bf16 %v6167, %v6167
    %v6184 = vpack.c.bf16 %v6168, %v6168
    %v6185 = vpack.c.bf16 %v6169, %v6169
    %v6186 = vpack.c.bf16 %v6170, %v6170
    %v6187 = vpack.c.bf16 %v6171, %v6171
    %v6188 = vpack.c.bf16 %v6172, %v6172
    %v6189 = vpack.c.bf16 %v6173, %v6173
    %v6190 = vpack.c.bf16 %v6174, %v6174
    %v6191 = vpack.c.bf16 %v6175, %v6175
    %v6192 = vpack.c.bf16 %v6176, %v6176
    %v6193 = vpack.c.bf16 %v6177, %v6177
    %v6194 = vpack.c.bf16 %v6178, %v6178
    %v6195 = vpack.c.bf16 %v6179, %v6179
    %v6196 = vpack.c.bf16 %v6180, %v6180
    %v6197 = vpack.c.bf16 %v6181, %v6181
    %v6198 = vld [vmem:[%s373 + $0x1] sm:$0xff]
    %v6199 = vld [vmem:[%s373 + $0x11] sm:$0xff]
    %v6200 = vld [vmem:[%s373 + $0x21] sm:$0xff]
    %v6201 = vld [vmem:[%s373 + $0x31] sm:$0xff]
    %v6202 = vld [vmem:[%s373 + $0x41] sm:$0xff]
    %v6203 = vld [vmem:[%s373 + $0x51] sm:$0xff]
    %v6204 = vld [vmem:[%s373 + $0x61] sm:$0xff]
    %v6205 = vld [vmem:[%s373 + $0x71] sm:$0xff]
    %v6206 = vld [vmem:[%s373 + $0xa1] sm:$0xff]
    %v6207 = vld [vmem:[%s373 + $0xb1] sm:$0xff]
    %v6208 = vld [vmem:[%s373 + $0xc1] sm:$0xff]
    %v6209 = vld [vmem:[%s373 + $0xd1] sm:$0xff]
    %v6210 = vld [vmem:[%s373 + $0xe1] sm:$0xff]
    %v6211 = vld [vmem:[%s373 + $0xf1] sm:$0xff]
    %v6212 = vld [vmem:[%s373 + $0x101] sm:$0xff]
    %v6213 = vld [vmem:[%s373 + $0x111] sm:$0xff]
    %v6214 = vpack.c.bf16 %v6198, %v6198
    %v6215 = vpack.c.bf16 %v6199, %v6199
    %v6216 = vpack.c.bf16 %v6200, %v6200
    %v6217 = vpack.c.bf16 %v6201, %v6201
    %v6218 = vpack.c.bf16 %v6202, %v6202
    %v6219 = vpack.c.bf16 %v6203, %v6203
    %v6220 = vpack.c.bf16 %v6204, %v6204
    %v6221 = vpack.c.bf16 %v6205, %v6205
    %v6222 = vpack.c.bf16 %v6206, %v6206
    %v6223 = vpack.c.bf16 %v6207, %v6207
    %v6224 = vpack.c.bf16 %v6208, %v6208
    %v6225 = vpack.c.bf16 %v6209, %v6209
    %v6226 = vpack.c.bf16 %v6210, %v6210
    %v6227 = vpack.c.bf16 %v6211, %v6211
    %v6228 = vpack.c.bf16 %v6212, %v6212
    %v6229 = vpack.c.bf16 %v6213, %v6213
    %v6230 = vld [vmem:[%s373 + $0x2] sm:$0xff]
    %v6231 = vld [vmem:[%s373 + $0x12] sm:$0xff]
    %v6232 = vld [vmem:[%s373 + $0x22] sm:$0xff]
    %v6233 = vld [vmem:[%s373 + $0x32] sm:$0xff]
    %v6234 = vld [vmem:[%s373 + $0x42] sm:$0xff]
    %v6235 = vld [vmem:[%s373 + $0x52] sm:$0xff]
    %v6236 = vld [vmem:[%s373 + $0x62] sm:$0xff]
    %v6237 = vld [vmem:[%s373 + $0x72] sm:$0xff]
    %v6238 = vld [vmem:[%s373 + $0xa2] sm:$0xff]
    %v6239 = vld [vmem:[%s373 + $0xb2] sm:$0xff]
    %v6240 = vld [vmem:[%s373 + $0xc2] sm:$0xff]
    %v6241 = vld [vmem:[%s373 + $0xd2] sm:$0xff]
    %v6242 = vld [vmem:[%s373 + $0xe2] sm:$0xff]
    %v6243 = vld [vmem:[%s373 + $0xf2] sm:$0xff]
    %v6244 = vld [vmem:[%s373 + $0x102] sm:$0xff]
    %v6245 = vld [vmem:[%s373 + $0x112] sm:$0xff]
    %v6246 = vpack.c.bf16 %v6230, %v6230
    %v6247 = vpack.c.bf16 %v6231, %v6231
    %v6248 = vpack.c.bf16 %v6232, %v6232
    %v6249 = vpack.c.bf16 %v6233, %v6233
    %v6250 = vpack.c.bf16 %v6234, %v6234
    %v6251 = vpack.c.bf16 %v6235, %v6235
    %v6252 = vpack.c.bf16 %v6236, %v6236
    %v6253 = vpack.c.bf16 %v6237, %v6237
    %v6254 = vpack.c.bf16 %v6238, %v6238
    %v6255 = vpack.c.bf16 %v6239, %v6239
    %v6256 = vpack.c.bf16 %v6240, %v6240
    %v6257 = vpack.c.bf16 %v6241, %v6241
    %v6258 = vpack.c.bf16 %v6242, %v6242
    %v6259 = vpack.c.bf16 %v6243, %v6243
    %v6260 = vpack.c.bf16 %v6244, %v6244
    %v6261 = vpack.c.bf16 %v6245, %v6245
    %v6278 = vunpack.c.l.b16 %v5990
    %v6279 = vunpack.c.l.b16 %v5991
    %v6280 = vunpack.c.l.b16 %v5992
    %v6281 = vunpack.c.l.b16 %v5993
    %v6282 = vunpack.c.l.b16 %v5994
    %v6283 = vunpack.c.l.b16 %v5995
    %v6284 = vunpack.c.l.b16 %v5996
    %v6285 = vunpack.c.l.b16 %v5997
    %v6286 = vunpack.c.l.b16 %v5998
    %v6287 = vunpack.c.l.b16 %v5999
    %v6288 = vunpack.c.l.b16 %v6000
    %v6289 = vunpack.c.l.b16 %v6001
    %v6290 = vunpack.c.l.b16 %v6002
    %v6291 = vunpack.c.l.b16 %v6003
    %v6292 = vunpack.c.l.b16 %v6004
    %v6293 = vunpack.c.l.b16 %v6005
    %v6294 = vpack.c.b16 %v6279, %v6278
    %v6295 = vpack.c.b16 %v6281, %v6280
    %v6296 = vpack.c.b16 %v6283, %v6282
    %v6297 = vpack.c.b16 %v6285, %v6284
    %v6298 = vpack.c.b16 %v6287, %v6286
    %v6299 = vpack.c.b16 %v6289, %v6288
    %v6300 = vpack.c.b16 %v6291, %v6290
    %v6301 = vpack.c.b16 %v6293, %v6292
    %v6318 = vunpack.c.l.b16 %v6022
    %v6319 = vunpack.c.l.b16 %v6023
    %v6320 = vunpack.c.l.b16 %v6024
    %v6321 = vunpack.c.l.b16 %v6025
    %v6322 = vunpack.c.l.b16 %v6026
    %v6323 = vunpack.c.l.b16 %v6027
    %v6324 = vunpack.c.l.b16 %v6028
    %v6325 = vunpack.c.l.b16 %v6029
    %v6326 = vunpack.c.l.b16 %v6030
    %v6327 = vunpack.c.l.b16 %v6031
    %v6328 = vunpack.c.l.b16 %v6032
    %v6329 = vunpack.c.l.b16 %v6033
    %v6330 = vunpack.c.l.b16 %v6034
    %v6331 = vunpack.c.l.b16 %v6035
    %v6332 = vunpack.c.l.b16 %v6036
    %v6333 = vunpack.c.l.b16 %v6037
    %v6334 = vpack.c.b16 %v6319, %v6318
    %v6335 = vpack.c.b16 %v6321, %v6320
    %v6336 = vpack.c.b16 %v6323, %v6322
    %v6337 = vpack.c.b16 %v6325, %v6324
    %v6338 = vpack.c.b16 %v6327, %v6326
    %v6339 = vpack.c.b16 %v6329, %v6328
    %v6340 = vpack.c.b16 %v6331, %v6330
    %v6341 = vpack.c.b16 %v6333, %v6332
    %6342 = vrot.lane.b32.xlu0 %v6334, 32
    %v6343 = vpop.permute.xlu0 %6342
    %6344 = vrot.lane.b32.xlu0 %v6335, 32
    %v6345 = vpop.permute.xlu0 %6344
    %6346 = vrot.lane.b32.xlu0 %v6336, 32
    %v6347 = vpop.permute.xlu0 %6346
    %6348 = vrot.lane.b32.xlu0 %v6337, 32
    %v6349 = vpop.permute.xlu0 %6348
    %6350 = vrot.lane.b32.xlu0 %v6338, 32
    %v6351 = vpop.permute.xlu0 %6350
    %6352 = vrot.lane.b32.xlu0 %v6339, 32
    %v6353 = vpop.permute.xlu0 %6352
    %6354 = vrot.lane.b32.xlu0 %v6340, 32
    %v6355 = vpop.permute.xlu0 %6354
    %6356 = vrot.lane.b32.xlu0 %v6341, 32
    %v6357 = vpop.permute.xlu0 %6356
    %v6374 = vunpack.c.l.b16 %v6054
    %v6375 = vunpack.c.l.b16 %v6055
    %v6376 = vunpack.c.l.b16 %v6056
    %v6377 = vunpack.c.l.b16 %v6057
    %v6378 = vunpack.c.l.b16 %v6058
    %v6379 = vunpack.c.l.b16 %v6059
    %v6380 = vunpack.c.l.b16 %v6060
    %v6381 = vunpack.c.l.b16 %v6061
    %v6382 = vunpack.c.l.b16 %v6062
    %v6383 = vunpack.c.l.b16 %v6063
    %v6384 = vunpack.c.l.b16 %v6064
    %v6385 = vunpack.c.l.b16 %v6065
    %v6386 = vunpack.c.l.b16 %v6066
    %v6387 = vunpack.c.l.b16 %v6067
    %v6388 = vunpack.c.l.b16 %v6068
    %v6389 = vunpack.c.l.b16 %v6069
    %v6390 = vpack.c.b16 %v6375, %v6374
    %v6391 = vpack.c.b16 %v6377, %v6376
    %v6392 = vpack.c.b16 %v6379, %v6378
    %v6393 = vpack.c.b16 %v6381, %v6380
    %v6394 = vpack.c.b16 %v6383, %v6382
    %v6395 = vpack.c.b16 %v6385, %v6384
    %v6396 = vpack.c.b16 %v6387, %v6386
    %v6397 = vpack.c.b16 %v6389, %v6388
    %6398 = vrot.lane.b32.xlu0 %v6390, 64
    %v6399 = vpop.permute.xlu0 %6398
    %6400 = vrot.lane.b32.xlu0 %v6391, 64
    %v6401 = vpop.permute.xlu0 %6400
    %6402 = vrot.lane.b32.xlu0 %v6392, 64
    %v6403 = vpop.permute.xlu0 %6402
    %6404 = vrot.lane.b32.xlu0 %v6393, 64
    %v6405 = vpop.permute.xlu0 %6404
    %6406 = vrot.lane.b32.xlu0 %v6394, 64
    %v6407 = vpop.permute.xlu0 %6406
    %6408 = vrot.lane.b32.xlu0 %v6395, 64
    %v6409 = vpop.permute.xlu0 %6408
    %6410 = vrot.lane.b32.xlu0 %v6396, 64
    %v6411 = vpop.permute.xlu0 %6410
    %6412 = vrot.lane.b32.xlu0 %v6397, 64
    %v6413 = vpop.permute.xlu0 %6412
    %v6430 = vunpack.c.l.b16 %v6086
    %v6431 = vunpack.c.l.b16 %v6087
    %v6432 = vunpack.c.l.b16 %v6088
    %v6433 = vunpack.c.l.b16 %v6089
    %v6434 = vunpack.c.l.b16 %v6090
    %v6435 = vunpack.c.l.b16 %v6091
    %v6436 = vunpack.c.l.b16 %v6092
    %v6437 = vunpack.c.l.b16 %v6093
    %v6438 = vunpack.c.l.b16 %v6094
    %v6439 = vunpack.c.l.b16 %v6095
    %v6440 = vunpack.c.l.b16 %v6096
    %v6441 = vunpack.c.l.b16 %v6097
    %v6442 = vunpack.c.l.b16 %v6098
    %v6443 = vunpack.c.l.b16 %v6099
    %v6444 = vunpack.c.l.b16 %v6100
    %v6445 = vunpack.c.l.b16 %v6101
    %v6446 = vpack.c.b16 %v6431, %v6430
    %v6447 = vpack.c.b16 %v6433, %v6432
    %v6448 = vpack.c.b16 %v6435, %v6434
    %v6449 = vpack.c.b16 %v6437, %v6436
    %v6450 = vpack.c.b16 %v6439, %v6438
    %v6451 = vpack.c.b16 %v6441, %v6440
    %v6452 = vpack.c.b16 %v6443, %v6442
    %v6453 = vpack.c.b16 %v6445, %v6444
    %6454 = vrot.lane.b32.xlu0 %v6446, 96
    %v6455 = vpop.permute.xlu0 %6454
    %6456 = vrot.lane.b32.xlu0 %v6447, 96
    %v6457 = vpop.permute.xlu0 %6456
    %6458 = vrot.lane.b32.xlu0 %v6448, 96
    %v6459 = vpop.permute.xlu0 %6458
    %6460 = vrot.lane.b32.xlu0 %v6449, 96
    %v6461 = vpop.permute.xlu0 %6460
    %6462 = vrot.lane.b32.xlu0 %v6450, 96
    %v6463 = vpop.permute.xlu0 %6462
    %6464 = vrot.lane.b32.xlu0 %v6451, 96
    %v6465 = vpop.permute.xlu0 %6464
    %6466 = vrot.lane.b32.xlu0 %v6452, 96
    %v6467 = vpop.permute.xlu0 %6466
    %6468 = vrot.lane.b32.xlu0 %v6453, 96
    %v6469 = vpop.permute.xlu0 %6468
    %v6486 = vunpack.c.l.b16 %v6118
    %v6487 = vunpack.c.l.b16 %v6119
    %v6488 = vunpack.c.l.b16 %v6120
    %v6489 = vunpack.c.l.b16 %v6121
    %v6490 = vunpack.c.l.b16 %v6122
    %v6491 = vunpack.c.l.b16 %v6123
    %v6492 = vunpack.c.l.b16 %v6124
    %v6493 = vunpack.c.l.b16 %v6125
    %v6494 = vunpack.c.l.b16 %v6126
    %v6495 = vunpack.c.l.b16 %v6127
    %v6496 = vunpack.c.l.b16 %v6128
    %v6497 = vunpack.c.l.b16 %v6129
    %v6498 = vunpack.c.l.b16 %v6130
    %v6499 = vunpack.c.l.b16 %v6131
    %v6500 = vunpack.c.l.b16 %v6132
    %v6501 = vunpack.c.l.b16 %v6133
    %v6502 = vpack.c.b16 %v6487, %v6486
    %v6503 = vpack.c.b16 %v6489, %v6488
    %v6504 = vpack.c.b16 %v6491, %v6490
    %v6505 = vpack.c.b16 %v6493, %v6492
    %v6506 = vpack.c.b16 %v6495, %v6494
    %v6507 = vpack.c.b16 %v6497, %v6496
    %v6508 = vpack.c.b16 %v6499, %v6498
    %v6509 = vpack.c.b16 %v6501, %v6500
    %v6526 = vunpack.c.l.b16 %v6150
    %v6527 = vunpack.c.l.b16 %v6151
    %v6528 = vunpack.c.l.b16 %v6152
    %v6529 = vunpack.c.l.b16 %v6153
    %v6530 = vunpack.c.l.b16 %v6154
    %v6531 = vunpack.c.l.b16 %v6155
    %v6532 = vunpack.c.l.b16 %v6156
    %v6533 = vunpack.c.l.b16 %v6157
    %v6534 = vunpack.c.l.b16 %v6158
    %v6535 = vunpack.c.l.b16 %v6159
    %v6536 = vunpack.c.l.b16 %v6160
    %v6537 = vunpack.c.l.b16 %v6161
    %v6538 = vunpack.c.l.b16 %v6162
    %v6539 = vunpack.c.l.b16 %v6163
    %v6540 = vunpack.c.l.b16 %v6164
    %v6541 = vunpack.c.l.b16 %v6165
    %v6542 = vpack.c.b16 %v6527, %v6526
    %v6543 = vpack.c.b16 %v6529, %v6528
    %v6544 = vpack.c.b16 %v6531, %v6530
    %v6545 = vpack.c.b16 %v6533, %v6532
    %v6546 = vpack.c.b16 %v6535, %v6534
    %v6547 = vpack.c.b16 %v6537, %v6536
    %v6548 = vpack.c.b16 %v6539, %v6538
    %v6549 = vpack.c.b16 %v6541, %v6540
    %6550 = vrot.lane.b32.xlu0 %v6542, 32
    %v6551 = vpop.permute.xlu0 %6550
    %6552 = vrot.lane.b32.xlu0 %v6543, 32
    %v6553 = vpop.permute.xlu0 %6552
    %6554 = vrot.lane.b32.xlu0 %v6544, 32
    %v6555 = vpop.permute.xlu0 %6554
    %6556 = vrot.lane.b32.xlu0 %v6545, 32
    %v6557 = vpop.permute.xlu0 %6556
    %6558 = vrot.lane.b32.xlu0 %v6546, 32
    %v6559 = vpop.permute.xlu0 %6558
    %6560 = vrot.lane.b32.xlu0 %v6547, 32
    %v6561 = vpop.permute.xlu0 %6560
    %6562 = vrot.lane.b32.xlu0 %v6548, 32
    %v6563 = vpop.permute.xlu0 %6562
    %6564 = vrot.lane.b32.xlu0 %v6549, 32
    %v6565 = vpop.permute.xlu0 %6564
    %v6582 = vunpack.c.l.b16 %v6182
    %v6583 = vunpack.c.l.b16 %v6183
    %v6584 = vunpack.c.l.b16 %v6184
    %v6585 = vunpack.c.l.b16 %v6185
    %v6586 = vunpack.c.l.b16 %v6186
    %v6587 = vunpack.c.l.b16 %v6187
    %v6588 = vunpack.c.l.b16 %v6188
    %v6589 = vunpack.c.l.b16 %v6189
    %v6590 = vunpack.c.l.b16 %v6190
    %v6591 = vunpack.c.l.b16 %v6191
    %v6592 = vunpack.c.l.b16 %v6192
    %v6593 = vunpack.c.l.b16 %v6193
    %v6594 = vunpack.c.l.b16 %v6194
    %v6595 = vunpack.c.l.b16 %v6195
    %v6596 = vunpack.c.l.b16 %v6196
    %v6597 = vunpack.c.l.b16 %v6197
    %v6598 = vpack.c.b16 %v6583, %v6582
    %v6599 = vpack.c.b16 %v6585, %v6584
    %v6600 = vpack.c.b16 %v6587, %v6586
    %v6601 = vpack.c.b16 %v6589, %v6588
    %v6602 = vpack.c.b16 %v6591, %v6590
    %v6603 = vpack.c.b16 %v6593, %v6592
    %v6604 = vpack.c.b16 %v6595, %v6594
    %v6605 = vpack.c.b16 %v6597, %v6596
    %6606 = vrot.lane.b32.xlu0 %v6598, 64
    %v6607 = vpop.permute.xlu0 %6606
    %6608 = vrot.lane.b32.xlu0 %v6599, 64
    %v6609 = vpop.permute.xlu0 %6608
    %6610 = vrot.lane.b32.xlu0 %v6600, 64
    %v6611 = vpop.permute.xlu0 %6610
    %6612 = vrot.lane.b32.xlu0 %v6601, 64
    %v6613 = vpop.permute.xlu0 %6612
    %6614 = vrot.lane.b32.xlu0 %v6602, 64
    %v6615 = vpop.permute.xlu0 %6614
    %6616 = vrot.lane.b32.xlu0 %v6603, 64
    %v6617 = vpop.permute.xlu0 %6616
    %6618 = vrot.lane.b32.xlu0 %v6604, 64
    %v6619 = vpop.permute.xlu0 %6618
    %6620 = vrot.lane.b32.xlu0 %v6605, 64
    %v6621 = vpop.permute.xlu0 %6620
    %v6638 = vunpack.c.l.b16 %v6214
    %v6639 = vunpack.c.l.b16 %v6215
    %v6640 = vunpack.c.l.b16 %v6216
    %v6641 = vunpack.c.l.b16 %v6217
    %v6642 = vunpack.c.l.b16 %v6218
    %v6643 = vunpack.c.l.b16 %v6219
    %v6644 = vunpack.c.l.b16 %v6220
    %v6645 = vunpack.c.l.b16 %v6221
    %v6646 = vunpack.c.l.b16 %v6222
    %v6647 = vunpack.c.l.b16 %v6223
    %v6648 = vunpack.c.l.b16 %v6224
    %v6649 = vunpack.c.l.b16 %v6225
    %v6650 = vunpack.c.l.b16 %v6226
    %v6651 = vunpack.c.l.b16 %v6227
    %v6652 = vunpack.c.l.b16 %v6228
    %v6653 = vunpack.c.l.b16 %v6229
    %v6654 = vpack.c.b16 %v6639, %v6638
    %v6655 = vpack.c.b16 %v6641, %v6640
    %v6656 = vpack.c.b16 %v6643, %v6642
    %v6657 = vpack.c.b16 %v6645, %v6644
    %v6658 = vpack.c.b16 %v6647, %v6646
    %v6659 = vpack.c.b16 %v6649, %v6648
    %v6660 = vpack.c.b16 %v6651, %v6650
    %v6661 = vpack.c.b16 %v6653, %v6652
    %6662 = vrot.lane.b32.xlu0 %v6654, 96
    %v6663 = vpop.permute.xlu0 %6662
    %6664 = vrot.lane.b32.xlu0 %v6655, 96
    %v6665 = vpop.permute.xlu0 %6664
    %6666 = vrot.lane.b32.xlu0 %v6656, 96
    %v6667 = vpop.permute.xlu0 %6666
    %6668 = vrot.lane.b32.xlu0 %v6657, 96
    %v6669 = vpop.permute.xlu0 %6668
    %6670 = vrot.lane.b32.xlu0 %v6658, 96
    %v6671 = vpop.permute.xlu0 %6670
    %6672 = vrot.lane.b32.xlu0 %v6659, 96
    %v6673 = vpop.permute.xlu0 %6672
    %6674 = vrot.lane.b32.xlu0 %v6660, 96
    %v6675 = vpop.permute.xlu0 %6674
    %6676 = vrot.lane.b32.xlu0 %v6661, 96
    %v6677 = vpop.permute.xlu0 %6676
    %v6694 = vunpack.c.l.b16 %v6246
    %v6695 = vunpack.c.l.b16 %v6247
    %v6696 = vunpack.c.l.b16 %v6248
    %v6697 = vunpack.c.l.b16 %v6249
    %v6698 = vunpack.c.l.b16 %v6250
    %v6699 = vunpack.c.l.b16 %v6251
    %v6700 = vunpack.c.l.b16 %v6252
    %v6701 = vunpack.c.l.b16 %v6253
    %v6702 = vunpack.c.l.b16 %v6254
    %v6703 = vunpack.c.l.b16 %v6255
    %v6704 = vunpack.c.l.b16 %v6256
    %v6705 = vunpack.c.l.b16 %v6257
    %v6706 = vunpack.c.l.b16 %v6258
    %v6707 = vunpack.c.l.b16 %v6259
    %v6708 = vunpack.c.l.b16 %v6260
    %v6709 = vunpack.c.l.b16 %v6261
    %v6710 = vpack.c.b16 %v6695, %v6694
    %v6711 = vpack.c.b16 %v6697, %v6696
    %v6712 = vpack.c.b16 %v6699, %v6698
    %v6713 = vpack.c.b16 %v6701, %v6700
    %v6714 = vpack.c.b16 %v6703, %v6702
    %v6715 = vpack.c.b16 %v6705, %v6704
    %v6716 = vpack.c.b16 %v6707, %v6706
    %v6717 = vpack.c.b16 %v6709, %v6708
    %v6720 = vsel %vm105, %v6294, %v6343
    %v6723 = vsel %vm105, %v6295, %v6345
    %v6726 = vsel %vm105, %v6296, %v6347
    %v6729 = vsel %vm105, %v6297, %v6349
    %v6732 = vsel %vm105, %v6298, %v6351
    %v6735 = vsel %vm105, %v6299, %v6353
    %v6738 = vsel %vm105, %v6300, %v6355
    %v6741 = vsel %vm105, %v6301, %v6357
    %v6743 = vsel %vm950, %v6720, %v6399
    %v6745 = vsel %vm950, %v6723, %v6401
    %v6747 = vsel %vm950, %v6726, %v6403
    %v6749 = vsel %vm950, %v6729, %v6405
    %v6751 = vsel %vm950, %v6732, %v6407
    %v6753 = vsel %vm950, %v6735, %v6409
    %v6755 = vsel %vm950, %v6738, %v6411
    %v6757 = vsel %vm950, %v6741, %v6413
    %v6759 = vsel %vm967, %v6743, %v6455
    %v6762 = vsel %vm967, %v6745, %v6457
    %v6765 = vsel %vm967, %v6747, %v6459
    %v6768 = vsel %vm967, %v6749, %v6461
    %v6771 = vsel %vm967, %v6751, %v6463
    %v6774 = vsel %vm967, %v6753, %v6465
    %v6777 = vsel %vm967, %v6755, %v6467
    %v6780 = vsel %vm967, %v6757, %v6469
    %v6784 = vsel %vm105, %v6502, %v6551
    %v6787 = vsel %vm105, %v6503, %v6553
    %v6790 = vsel %vm105, %v6504, %v6555
    %v6793 = vsel %vm105, %v6505, %v6557
    %v6796 = vsel %vm105, %v6506, %v6559
    %v6799 = vsel %vm105, %v6507, %v6561
    %v6802 = vsel %vm105, %v6508, %v6563
    %v6805 = vsel %vm105, %v6509, %v6565
    %v6807 = vsel %vm950, %v6784, %v6607
    %v6809 = vsel %vm950, %v6787, %v6609
    %v6811 = vsel %vm950, %v6790, %v6611
    %v6813 = vsel %vm950, %v6793, %v6613
    %v6815 = vsel %vm950, %v6796, %v6615
    %v6817 = vsel %vm950, %v6799, %v6617
    %v6819 = vsel %vm950, %v6802, %v6619
    %v6821 = vsel %vm950, %v6805, %v6621
    %v6823 = vsel %vm967, %v6807, %v6663
    %v6826 = vsel %vm967, %v6809, %v6665
    %v6829 = vsel %vm967, %v6811, %v6667
    %v6832 = vsel %vm967, %v6813, %v6669
    %v6835 = vsel %vm967, %v6815, %v6671
    %v6838 = vsel %vm967, %v6817, %v6673
    %v6841 = vsel %vm967, %v6819, %v6675
    %v6844 = vsel %vm967, %v6821, %v6677
    %s6846 = scalar_lea.vmem %s1, 576
    %v6847 = vld [vmem:[%s6846] sm:$0xf]
    %v6848 = vld [vmem:[%s6846 + $0x4] sm:$0xf]
    %v6849 = vld [vmem:[%s6846 + $0x8] sm:$0xf]
    %v6850 = vld [vmem:[%s6846 + $0xc] sm:$0xf]
    %v6851 = vld [vmem:[%s6846 + $0x10] sm:$0xf]
    %v6852 = vld [vmem:[%s6846 + $0x14] sm:$0xf]
    %v6853 = vld [vmem:[%s6846 + $0x18] sm:$0xf]
    %v6854 = vld [vmem:[%s6846 + $0x1c] sm:$0xf]
    %v6855 = vld [vmem:[%s6846 + $0x20] sm:$0xf]
    %v6856 = vld [vmem:[%s6846 + $0x24] sm:$0xf]
    %v6857 = vld [vmem:[%s6846 + $0x28] sm:$0xf]
    %v6858 = vld [vmem:[%s6846 + $0x2c] sm:$0xf]
    %v6859 = vld [vmem:[%s6846 + $0x30] sm:$0xf]
    %v6860 = vld [vmem:[%s6846 + $0x34] sm:$0xf]
    %v6861 = vld [vmem:[%s6846 + $0x38] sm:$0xf]
    %v6862 = vld [vmem:[%s6846 + $0x3c] sm:$0xf]
    %v6863 = vld [vmem:[%s6846 + $0x40] sm:$0xf]
    %v6864 = vld [vmem:[%s6846 + $0x44] sm:$0xf]
    %v6865 = vld [vmem:[%s6846 + $0x48] sm:$0xf]
    %v6866 = vld [vmem:[%s6846 + $0x4c] sm:$0xf]
    %v6867 = vld [vmem:[%s6846 + $0x50] sm:$0xf]
    %v6868 = vld [vmem:[%s6846 + $0x54] sm:$0xf]
    %v6869 = vld [vmem:[%s6846 + $0x58] sm:$0xf]
    %v6870 = vld [vmem:[%s6846 + $0x5c] sm:$0xf]
    %v6871 = vld [vmem:[%s6846 + $0x60] sm:$0xf]
    %v6872 = vld [vmem:[%s6846 + $0x64] sm:$0xf]
    %v6873 = vld [vmem:[%s6846 + $0x68] sm:$0xf]
    %v6874 = vld [vmem:[%s6846 + $0x6c] sm:$0xf]
    %v6875 = vld [vmem:[%s6846 + $0x70] sm:$0xf]
    %v6876 = vld [vmem:[%s6846 + $0x74] sm:$0xf]
    %v6877 = vld [vmem:[%s6846 + $0x78] sm:$0xf]
    %v6878 = vld [vmem:[%s6846 + $0x7c] sm:$0xf]
    %v6879 = vld [vmem:[%s6846 + $0x80] sm:$0xf]
    %v6880 = vld [vmem:[%s6846 + $0x84] sm:$0xf]
    %v6881 = vld [vmem:[%s6846 + $0x88] sm:$0xf]
    %v6882 = vld [vmem:[%s6846 + $0x8c] sm:$0xf]
    %s6883 = scalar_lea.vmem [#allocation5], 4
    %v6884 = vld [vmem:[%s6883] sm:$0x1]
    %s6885 = scalar_lea.vmem [#allocation7], 4
    %v6886 = vld [vmem:[%s6885] sm:$0x1]
    %v6923 = vunpack.c.l.b16 %v6847
    %v6924 = vunpack.c.l.b16 %v6848
    %v6925 = vunpack.c.l.b16 %v6849
    %v6926 = vunpack.c.l.b16 %v6850
    %v6927 = vunpack.c.l.b16 %v6851
    %v6928 = vunpack.c.l.b16 %v6852
    %v6929 = vunpack.c.l.b16 %v6853
    %v6930 = vunpack.c.l.b16 %v6854
    %v6931 = vunpack.c.l.b16 %v6855
    %v6932 = vunpack.c.l.b16 %v6856
    %v6933 = vunpack.c.l.b16 %v6857
    %v6934 = vunpack.c.l.b16 %v6858
    %v6935 = vunpack.c.l.b16 %v6859
    %v6936 = vunpack.c.l.b16 %v6860
    %v6937 = vunpack.c.l.b16 %v6861
    %v6938 = vunpack.c.l.b16 %v6862
    %v6939 = vunpack.c.l.b16 %v6863
    %v6940 = vunpack.c.l.b16 %v6864
    %v6941 = vunpack.c.l.b16 %v6865
    %v6942 = vunpack.c.l.b16 %v6866
    %v6943 = vunpack.c.l.b16 %v6867
    %v6944 = vunpack.c.l.b16 %v6868
    %v6945 = vunpack.c.l.b16 %v6869
    %v6946 = vunpack.c.l.b16 %v6870
    %v6947 = vunpack.c.l.b16 %v6871
    %v6948 = vunpack.c.l.b16 %v6872
    %v6949 = vunpack.c.l.b16 %v6873
    %v6950 = vunpack.c.l.b16 %v6874
    %v6951 = vunpack.c.l.b16 %v6875
    %v6952 = vunpack.c.l.b16 %v6876
    %v6953 = vunpack.c.l.b16 %v6877
    %v6954 = vunpack.c.l.b16 %v6878
    %v6955 = vunpack.c.l.b16 %v6879
    %v6956 = vunpack.c.l.b16 %v6880
    %v6957 = vunpack.c.l.b16 %v6881
    %v6958 = vunpack.c.l.b16 %v6882
    %v6959 = vpack.c.b16 %v6924, %v6923
    %v6960 = vpack.c.b16 %v6926, %v6925
    %v6961 = vpack.c.b16 %v6928, %v6927
    %v6962 = vpack.c.b16 %v6930, %v6929
    %v6963 = vpack.c.b16 %v6932, %v6931
    %v6964 = vpack.c.b16 %v6934, %v6933
    %v6965 = vpack.c.b16 %v6936, %v6935
    %v6966 = vpack.c.b16 %v6938, %v6937
    %v6967 = vpack.c.b16 %v6940, %v6939
    %v6968 = vpack.c.b16 %v6942, %v6941
    %v6969 = vpack.c.b16 %v6944, %v6943
    %v6970 = vpack.c.b16 %v6946, %v6945
    %v6971 = vpack.c.b16 %v6948, %v6947
    %v6972 = vpack.c.b16 %v6950, %v6949
    %v6973 = vpack.c.b16 %v6952, %v6951
    %v6974 = vpack.c.b16 %v6954, %v6953
    %v6975 = vpack.c.b16 %v6956, %v6955
    %v6976 = vpack.c.b16 %v6958, %v6957
    %v6996 = vsel %vm105, %v6710, 0
    %v6999 = vsel %vm105, %v6711, 0
    %v7002 = vsel %vm105, %v6712, 0
    %v7005 = vsel %vm105, %v6713, 0
    %v7008 = vsel %vm105, %v6714, 0
    %v7011 = vsel %vm105, %v6715, 0
    %v7014 = vsel %vm105, %v6716, 0
    %v7017 = vsel %vm105, %v6717, 0
    %7019 = vmatprep.subr.bf16.mxu0 0
    %7020 = vmatpush1.bf16.msra.mxu0 %v6959
    %7021 = vmatprep.subr.bf16.mxu0 0
    %7022 = vmatpush1.bf16.msra.mxu0 %v6960
    %7023 = vmatprep.subr.bf16.mxu0 0
    %7024 = vmatpush1.bf16.msra.mxu0 %v6961
    %7025 = vmatprep.subr.bf16.mxu0 0
    %7026 = vmatpush1.bf16.msra.mxu0 %v6962
    %7027 = vmatprep.subr.bf16.mxu0 0
    %7028 = vmatpush1.bf16.msra.mxu0 %v6963
    %7029 = vmatprep.subr.bf16.mxu0 0
    %7030 = vmatpush1.bf16.msra.mxu0 %v6964
    %7031 = vmatprep.subr.bf16.mxu0 0
    %7032 = vmatpush1.bf16.msra.mxu0 %v6965
    %7033 = vmatprep.subr.bf16.mxu0 0
    %7034 = vmatpush1.bf16.msra.mxu0 %v6966
    %7035 = vmatprep.subr.bf16.mxu0 0
    %7036 = vmatpush1.bf16.msra.mxu0 %v6967
    %7037 = vmatprep.subr.bf16.mxu0 0
    %7038 = vmatpush1.bf16.msra.mxu0 %v6968
    %7039 = vmatprep.subr.bf16.mxu0 0
    %7040 = vmatpush1.bf16.msra.mxu0 %v6969
    %7041 = vmatprep.subr.bf16.mxu0 0
    %7042 = vmatpush1.bf16.msra.mxu0 %v6970
    %7043 = vmatprep.subr.bf16.mxu0 0
    %7044 = vmatpush1.bf16.msra.mxu0 %v6971
    %7045 = vmatprep.subr.bf16.mxu0 0
    %7046 = vmatpush1.bf16.msra.mxu0 %v6972
    %7047 = vmatprep.subr.bf16.mxu0 0
    %7048 = vmatpush1.bf16.msra.mxu0 %v6973
    %7049 = vmatprep.subr.bf16.mxu0 0
    %7050 = vmatpush1.bf16.msra.mxu0 %v6974
    %7051 = vmatprep.mubr.bf16.mxu0 %v6823
    %7052 = vmatmul.mubr.bf16.gmra.mrb[0].mxu0 %v6759
    %v7053 = vpop.f32.mrb[0].mxu0
    %v7054 = vadd.f32 0.0, %v7053
    %v7055 = vpop.f32.mrb[0].mxu0
    %v7056 = vpop.f32.mrb[0].mxu0
    %v7057 = vadd.f32 0.0, %v7056
    %v7058 = vpop.f32.mrb[0].mxu0
    %7059 = vmatprep.mubr.bf16.mxu0 %v6826
    %7060 = vmatmul.mubr.bf16.gmra.mrb[0].mxu0 %v6762
    %v7061 = vpop.f32.mrb[0].mxu0
    %v7062 = vadd.f32 0.0, %v7061
    %v7063 = vpop.f32.mrb[0].mxu0
    %v7064 = vpop.f32.mrb[0].mxu0
    %v7065 = vadd.f32 0.0, %v7064
    %v7066 = vpop.f32.mrb[0].mxu0
    %7067 = vmatprep.mubr.bf16.mxu0 %v6829
    %7068 = vmatmul.mubr.bf16.gmra.mrb[0].mxu0 %v6765
    %v7069 = vpop.f32.mrb[0].mxu0
    %v7070 = vadd.f32 0.0, %v7069
    %v7071 = vpop.f32.mrb[0].mxu0
    %v7072 = vpop.f32.mrb[0].mxu0
    %v7073 = vadd.f32 0.0, %v7072
    %v7074 = vpop.f32.mrb[0].mxu0
    %7075 = vmatprep.mubr.bf16.mxu0 %v6832
    %7076 = vmatmul.mubr.bf16.gmra.mrb[0].mxu0 %v6768
    %v7077 = vpop.f32.mrb[0].mxu0
    %v7078 = vadd.f32 0.0, %v7077
    %v7079 = vpop.f32.mrb[0].mxu0
    %v7080 = vpop.f32.mrb[0].mxu0
    %v7081 = vadd.f32 0.0, %v7080
    %v7082 = vpop.f32.mrb[0].mxu0
    %7083 = vmatprep.mubr.bf16.mxu0 %v6835
    %7084 = vmatmul.mubr.bf16.gmra.mrb[0].mxu0 %v6771
    %v7085 = vpop.f32.mrb[0].mxu0
    %v7086 = vadd.f32 0.0, %v7085
    %v7087 = vpop.f32.mrb[0].mxu0
    %v7088 = vpop.f32.mrb[0].mxu0
    %v7089 = vadd.f32 0.0, %v7088
    %v7090 = vpop.f32.mrb[0].mxu0
    %7091 = vmatprep.mubr.bf16.mxu0 %v6838
    %7092 = vmatmul.mubr.bf16.gmra.mrb[0].mxu0 %v6774
    %v7093 = vpop.f32.mrb[0].mxu0
    %v7094 = vadd.f32 0.0, %v7093
    %v7095 = vpop.f32.mrb[0].mxu0
    %v7096 = vpop.f32.mrb[0].mxu0
    %v7097 = vadd.f32 0.0, %v7096
    %v7098 = vpop.f32.mrb[0].mxu0
    %7099 = vmatprep.mubr.bf16.mxu0 %v6841
    %7100 = vmatmul.mubr.bf16.gmra.mrb[0].mxu0 %v6777
    %v7101 = vpop.f32.mrb[0].mxu0
    %v7102 = vadd.f32 0.0, %v7101
    %v7103 = vpop.f32.mrb[0].mxu0
    %v7104 = vpop.f32.mrb[0].mxu0
    %v7105 = vadd.f32 0.0, %v7104
    %v7106 = vpop.f32.mrb[0].mxu0
    %7107 = vmatprep.mubr.bf16.mxu0 %v6844
    %7108 = vmatmul.mubr.bf16.gmra.mrb[0].mxu0 %v6780
    %v7109 = vpop.f32.mrb[0].mxu0
    %v7110 = vadd.f32 0.0, %v7109
    %v7111 = vpop.f32.mrb[0].mxu0
    %v7112 = vpop.f32.mrb[0].mxu0
    %v7113 = vadd.f32 0.0, %v7112
    %v7114 = vpop.f32.mrb[0].mxu0
    %7115 = vdwg.mxu0
    %7116 = vmatprep.subr.bf16.mxu0 0
    %7117 = vmatpush1.bf16.msra.mxu0 %v6975
    %7118 = vmatprep.subr.bf16.mxu0 0
    %7119 = vmatpush1.bf16.msra.mxu0 %v6976
    %7120 = vmatprep.subr.bf16.mxu0 0
    %7121 = vmatpush1.bf16.msra.mxu0 0
    %7122 = vmatprep.subr.bf16.mxu0 0
    %7123 = vmatpush1.bf16.msra.mxu0 0
    %7124 = vmatprep.subr.bf16.mxu0 0
    %7125 = vmatpush1.bf16.msra.mxu0 0
    %7126 = vmatprep.subr.bf16.mxu0 0
    %7127 = vmatpush1.bf16.msra.mxu0 0
    %7128 = vmatprep.subr.bf16.mxu0 0
    %7129 = vmatpush1.bf16.msra.mxu0 0
    %7130 = vmatprep.subr.bf16.mxu0 0
    %7131 = vmatpush1.bf16.msra.mxu0 0
    %7132 = vmatprep.subr.bf16.mxu0 0
    %7133 = vmatpush1.bf16.msra.mxu0 0
    %7134 = vmatprep.subr.bf16.mxu0 0
    %7135 = vmatpush1.bf16.msra.mxu0 0
    %7136 = vmatprep.subr.bf16.mxu0 0
    %7137 = vmatpush1.bf16.msra.mxu0 0
    %7138 = vmatprep.subr.bf16.mxu0 0
    %7139 = vmatpush1.bf16.msra.mxu0 0
    %7140 = vmatprep.subr.bf16.mxu0 0
    %7141 = vmatpush1.bf16.msra.mxu0 0
    %7142 = vmatprep.subr.bf16.mxu0 0
    %7143 = vmatpush1.bf16.msra.mxu0 0
    %7144 = vmatprep.subr.bf16.mxu0 0
    %7145 = vmatpush1.bf16.msra.mxu0 0
    %7146 = vmatprep.subr.bf16.mxu0 0
    %7147 = vmatpush1.bf16.msra.mxu0 0
    %7148 = vmatprep.mubr.bf16.mxu0 0
    %7149 = vmatmul.mubr.bf16.gmra.mrb[0].mxu0 %v6996
    %v7150 = vpop.f32.mrb[0].mxu0
    %v7151 = vadd.f32 %v7054, %v7150
    %v7152 = vpop.f32.mrb[0].mxu0
    %v7153 = vpop.f32.mrb[0].mxu0
    %v7154 = vadd.f32 %v7057, %v7153
    %v7155 = vpop.f32.mrb[0].mxu0
    %7156 = vmatprep.mubr.bf16.mxu0 0
    %7157 = vmatmul.mubr.bf16.gmra.mrb[0].mxu0 %v6999
    %v7158 = vpop.f32.mrb[0].mxu0
    %v7159 = vadd.f32 %v7062, %v7158
    %v7160 = vpop.f32.mrb[0].mxu0
    %v7161 = vpop.f32.mrb[0].mxu0
    %v7162 = vadd.f32 %v7065, %v7161
    %v7163 = vpop.f32.mrb[0].mxu0
    %7164 = vmatprep.mubr.bf16.mxu0 0
    %7165 = vmatmul.mubr.bf16.gmra.mrb[0].mxu0 %v7002
    %v7166 = vpop.f32.mrb[0].mxu0
    %v7167 = vadd.f32 %v7070, %v7166
    %v7168 = vpop.f32.mrb[0].mxu0
    %v7169 = vpop.f32.mrb[0].mxu0
    %v7170 = vadd.f32 %v7073, %v7169
    %v7171 = vpop.f32.mrb[0].mxu0
    %7172 = vmatprep.mubr.bf16.mxu0 0
    %7173 = vmatmul.mubr.bf16.gmra.mrb[0].mxu0 %v7005
    %v7174 = vpop.f32.mrb[0].mxu0
    %v7175 = vadd.f32 %v7078, %v7174
    %v7176 = vpop.f32.mrb[0].mxu0
    %v7177 = vpop.f32.mrb[0].mxu0
    %v7178 = vadd.f32 %v7081, %v7177
    %v7179 = vpop.f32.mrb[0].mxu0
    %7180 = vmatprep.mubr.bf16.mxu0 0
    %7181 = vmatmul.mubr.bf16.gmra.mrb[0].mxu0 %v7008
    %v7182 = vpop.f32.mrb[0].mxu0
    %v7183 = vadd.f32 %v7086, %v7182
    %v7184 = vpop.f32.mrb[0].mxu0
    %v7185 = vpop.f32.mrb[0].mxu0
    %v7186 = vadd.f32 %v7089, %v7185
    %v7187 = vpop.f32.mrb[0].mxu0
    %7188 = vmatprep.mubr.bf16.mxu0 0
    %7189 = vmatmul.mubr.bf16.gmra.mrb[0].mxu0 %v7011
    %v7190 = vpop.f32.mrb[0].mxu0
    %v7191 = vadd.f32 %v7094, %v7190
    %v7192 = vpop.f32.mrb[0].mxu0
    %v7193 = vpop.f32.mrb[0].mxu0
    %v7194 = vadd.f32 %v7097, %v7193
    %v7195 = vpop.f32.mrb[0].mxu0
    %7196 = vmatprep.mubr.bf16.mxu0 0
    %7197 = vmatmul.mubr.bf16.gmra.mrb[0].mxu0 %v7014
    %v7198 = vpop.f32.mrb[0].mxu0
    %v7199 = vadd.f32 %v7102, %v7198
    %v7200 = vpop.f32.mrb[0].mxu0
    %v7201 = vpop.f32.mrb[0].mxu0
    %v7202 = vadd.f32 %v7105, %v7201
    %v7203 = vpop.f32.mrb[0].mxu0
    %7204 = vmatprep.mubr.bf16.mxu0 0
    %7205 = vmatmul.mubr.bf16.gmra.mrb[0].mxu0 %v7017
    %v7206 = vpop.f32.mrb[0].mxu0
    %v7207 = vadd.f32 %v7110, %v7206
    %v7208 = vpop.f32.mrb[0].mxu0
    %v7209 = vpop.f32.mrb[0].mxu0
    %v7210 = vadd.f32 %v7113, %v7209
    %v7211 = vpop.f32.mrb[0].mxu0
    %7212 = vdwg.mxu0
    %v7213 = vsel %vm105, %v7151, 0.0
    %v7214 = vsel %vm105, %v7154, 0.0
    %v7215 = vadd.f32 %v7213, %v7214
    %v7216 = vsel %vm105, %v7159, 0.0
    %v7217 = vadd.f32 %v7215, %v7216
    %v7218 = vsel %vm105, %v7162, 0.0
    %v7219 = vadd.f32 %v7217, %v7218
    %v7220 = vsel %vm105, %v7167, 0.0
    %v7221 = vadd.f32 %v7219, %v7220
    %v7222 = vsel %vm105, %v7170, 0.0
    %v7223 = vadd.f32 %v7221, %v7222
    %v7224 = vsel %vm105, %v7175, 0.0
    %v7225 = vadd.f32 %v7223, %v7224
    %v7226 = vsel %vm105, %v7178, 0.0
    %v7227 = vadd.f32 %v7225, %v7226
    %v7228 = vsel %vm105, %v7183, 0.0
    %v7229 = vadd.f32 %v7227, %v7228
    %v7230 = vsel %vm105, %v7186, 0.0
    %v7231 = vadd.f32 %v7229, %v7230
    %v7232 = vsel %vm105, %v7191, 0.0
    %v7233 = vadd.f32 %v7231, %v7232
    %v7234 = vsel %vm105, %v7194, 0.0
    %v7235 = vadd.f32 %v7233, %v7234
    %v7236 = vsel %vm105, %v7199, 0.0
    %v7237 = vadd.f32 %v7235, %v7236
    %v7238 = vsel %vm105, %v7202, 0.0
    %v7239 = vadd.f32 %v7237, %v7238
    %v7240 = vsel %vm105, %v7207, 0.0
    %v7241 = vadd.f32 %v7239, %v7240
    %v7242 = vsel %vm105, %v7210, 0.0
    %v7243 = vadd.f32 %v7241, %v7242
    %v7244 = vrot.slane %v7243, 4
    %v7245 = vadd.f32 %v7243, %v7244
    %v7246 = vrot.slane %v7245, 2
    %v7247 = vadd.f32 %v7245, %v7246
    %v7248 = vrot.slane %v7247, 1
    %v7249 = vadd.f32 %v7247, %v7248
    %v7250 = vmul.f32 %v7249, %v1457
    %v7251 = vmul.f32 %v7151, %v7151
    %v7252 = vmul.f32 %v7154, %v7154
    %v7253 = vmul.f32 %v7159, %v7159
    %v7254 = vmul.f32 %v7162, %v7162
    %v7255 = vmul.f32 %v7167, %v7167
    %v7256 = vmul.f32 %v7170, %v7170
    %v7257 = vmul.f32 %v7175, %v7175
    %v7258 = vmul.f32 %v7178, %v7178
    %v7259 = vmul.f32 %v7183, %v7183
    %v7260 = vmul.f32 %v7186, %v7186
    %v7261 = vmul.f32 %v7191, %v7191
    %v7262 = vmul.f32 %v7194, %v7194
    %v7263 = vmul.f32 %v7199, %v7199
    %v7264 = vmul.f32 %v7202, %v7202
    %v7265 = vmul.f32 %v7207, %v7207
    %v7266 = vmul.f32 %v7210, %v7210
    %v7267 = vsel %vm105, %v7251, 0.0
    %v7268 = vsel %vm105, %v7252, 0.0
    %v7269 = vadd.f32 %v7267, %v7268
    %v7270 = vsel %vm105, %v7253, 0.0
    %v7271 = vadd.f32 %v7269, %v7270
    %v7272 = vsel %vm105, %v7254, 0.0
    %v7273 = vadd.f32 %v7271, %v7272
    %v7274 = vsel %vm105, %v7255, 0.0
    %v7275 = vadd.f32 %v7273, %v7274
    %v7276 = vsel %vm105, %v7256, 0.0
    %v7277 = vadd.f32 %v7275, %v7276
    %v7278 = vsel %vm105, %v7257, 0.0
    %v7279 = vadd.f32 %v7277, %v7278
    %v7280 = vsel %vm105, %v7258, 0.0
    %v7281 = vadd.f32 %v7279, %v7280
    %v7282 = vsel %vm105, %v7259, 0.0
    %v7283 = vadd.f32 %v7281, %v7282
    %v7284 = vsel %vm105, %v7260, 0.0
    %v7285 = vadd.f32 %v7283, %v7284
    %v7286 = vsel %vm105, %v7261, 0.0
    %v7287 = vadd.f32 %v7285, %v7286
    %v7288 = vsel %vm105, %v7262, 0.0
    %v7289 = vadd.f32 %v7287, %v7288
    %v7290 = vsel %vm105, %v7263, 0.0
    %v7291 = vadd.f32 %v7289, %v7290
    %v7292 = vsel %vm105, %v7264, 0.0
    %v7293 = vadd.f32 %v7291, %v7292
    %v7294 = vsel %vm105, %v7265, 0.0
    %v7295 = vadd.f32 %v7293, %v7294
    %v7296 = vsel %vm105, %v7266, 0.0
    %v7297 = vadd.f32 %v7295, %v7296
    %v7298 = vrot.slane %v7297, 4
    %v7299 = vadd.f32 %v7297, %v7298
    %v7300 = vrot.slane %v7299, 2
    %v7301 = vadd.f32 %v7299, %v7300
    %v7302 = vrot.slane %v7301, 1
    %v7303 = vadd.f32 %v7301, %v7302
    %v7304 = vmul.f32 %v7303, %v1457
    %v7305 = vmul.f32 %v7250, %v7250
    %v7306 = vsub.f32 %v7304, %v7305
    %v7307 = vmax.f32 %v7306, 0.0
    %v7308 = vsub.f32 %v7151, %v7250
    %v7309 = vsub.f32 %v7154, %v7250
    %v7310 = vsub.f32 %v7159, %v7250
    %v7311 = vsub.f32 %v7162, %v7250
    %v7312 = vsub.f32 %v7167, %v7250
    %v7313 = vsub.f32 %v7170, %v7250
    %v7314 = vsub.f32 %v7175, %v7250
    %v7315 = vsub.f32 %v7178, %v7250
    %v7316 = vsub.f32 %v7183, %v7250
    %v7317 = vsub.f32 %v7186, %v7250
    %v7318 = vsub.f32 %v7191, %v7250
    %v7319 = vsub.f32 %v7194, %v7250
    %v7320 = vsub.f32 %v7199, %v7250
    %v7321 = vsub.f32 %v7202, %v7250
    %v7322 = vsub.f32 %v7207, %v7250
    %v7323 = vsub.f32 %v7210, %v7250
    %v7324 = vadd.f32 %v7307, 1e-05
    %v7325 = vrsqrt.pop %v7324
    %v7326 = vmul.f32 %v7308, %v7325
    %v7327 = vmul.f32 %v7309, %v7325
    %v7328 = vmul.f32 %v7310, %v7325
    %v7329 = vmul.f32 %v7311, %v7325
    %v7330 = vmul.f32 %v7312, %v7325
    %v7331 = vmul.f32 %v7313, %v7325
    %v7332 = vmul.f32 %v7314, %v7325
    %v7333 = vmul.f32 %v7315, %v7325
    %v7334 = vmul.f32 %v7316, %v7325
    %v7335 = vmul.f32 %v7317, %v7325
    %v7336 = vmul.f32 %v7318, %v7325
    %v7337 = vmul.f32 %v7319, %v7325
    %v7338 = vmul.f32 %v7320, %v7325
    %v7339 = vmul.f32 %v7321, %v7325
    %v7340 = vmul.f32 %v7322, %v7325
    %v7341 = vmul.f32 %v7323, %v7325
    %v7343 = vlaneseq
    %v7344 = vshrl.u32 %v7343, 7
    %v7345 = vsub.s32 0, %v7344
    %v7346 = vrot.slane %v6884, %v7345
    %v7348 = vmul.f32 %v7326, %v7346
    %v7349 = vmul.f32 %v7327, %v7346
    %v7350 = vmul.f32 %v7328, %v7346
    %v7351 = vmul.f32 %v7329, %v7346
    %v7352 = vmul.f32 %v7330, %v7346
    %v7353 = vmul.f32 %v7331, %v7346
    %v7354 = vmul.f32 %v7332, %v7346
    %v7355 = vmul.f32 %v7333, %v7346
    %v7356 = vmul.f32 %v7334, %v7346
    %v7357 = vmul.f32 %v7335, %v7346
    %v7358 = vmul.f32 %v7336, %v7346
    %v7359 = vmul.f32 %v7337, %v7346
    %v7360 = vmul.f32 %v7338, %v7346
    %v7361 = vmul.f32 %v7339, %v7346
    %v7362 = vmul.f32 %v7340, %v7346
    %v7363 = vmul.f32 %v7341, %v7346
    %v7365 = vlaneseq
    %v7366 = vshrl.u32 %v7365, 7
    %v7367 = vsub.s32 0, %v7366
    %v7368 = vrot.slane %v6886, %v7367
    %v7370 = vadd.f32 %v7348, %v7368
    %v7371 = vadd.f32 %v7349, %v7368
    %v7372 = vadd.f32 %v7350, %v7368
    %v7373 = vadd.f32 %v7351, %v7368
    %v7374 = vadd.f32 %v7352, %v7368
    %v7375 = vadd.f32 %v7353, %v7368
    %v7376 = vadd.f32 %v7354, %v7368
    %v7377 = vadd.f32 %v7355, %v7368
    %v7378 = vadd.f32 %v7356, %v7368
    %v7379 = vadd.f32 %v7357, %v7368
    %v7380 = vadd.f32 %v7358, %v7368
    %v7381 = vadd.f32 %v7359, %v7368
    %v7382 = vadd.f32 %v7360, %v7368
    %v7383 = vadd.f32 %v7361, %v7368
    %v7384 = vadd.f32 %v7362, %v7368
    %v7385 = vadd.f32 %v7363, %v7368
    %v7386 = vadd.f32 %v7370, %v4530
    %v7387 = vadd.f32 %v7371, %v4531
    %v7388 = vadd.f32 %v7372, %v4532
    %v7389 = vadd.f32 %v7373, %v4533
    %v7390 = vadd.f32 %v7374, %v4534
    %v7391 = vadd.f32 %v7375, %v4535
    %v7392 = vadd.f32 %v7376, %v4536
    %v7393 = vadd.f32 %v7377, %v4537
    %v7394 = vadd.f32 %v7378, %v4538
    %v7395 = vadd.f32 %v7379, %v4539
    %v7396 = vadd.f32 %v7380, %v4540
    %v7397 = vadd.f32 %v7381, %v4541
    %v7398 = vadd.f32 %v7382, %v4542
    %v7399 = vadd.f32 %v7383, %v4543
    %v7400 = vadd.f32 %v7384, %v4544
    %v7401 = vadd.f32 %v7385, %v4545
    %v7402 = vmax.f32 %v7386, 0.0
    %v7403 = vmax.f32 %v7387, 0.0
    %v7404 = vmax.f32 %v7388, 0.0
    %v7405 = vmax.f32 %v7389, 0.0
    %v7406 = vmax.f32 %v7390, 0.0
    %v7407 = vmax.f32 %v7391, 0.0
    %v7408 = vmax.f32 %v7392, 0.0
    %v7409 = vmax.f32 %v7393, 0.0
    %v7410 = vmax.f32 %v7394, 0.0
    %v7411 = vmax.f32 %v7395, 0.0
    %v7412 = vmax.f32 %v7396, 0.0
    %v7413 = vmax.f32 %v7397, 0.0
    %v7414 = vmax.f32 %v7398, 0.0
    %v7415 = vmax.f32 %v7399, 0.0
    %v7416 = vmax.f32 %v7400, 0.0
    %v7417 = vmax.f32 %v7401, 0.0
    %7418 = vst.msk [vmem:[%s163 + $0x1] sm:$0xff] %vm105, %v7402
    %7419 = vst.msk [vmem:[%s163 + $0x11] sm:$0xff] %vm105, %v7403
    %7420 = vst.msk [vmem:[%s163 + $0x21] sm:$0xff] %vm105, %v7404
    %7421 = vst.msk [vmem:[%s163 + $0x31] sm:$0xff] %vm105, %v7405
    %7422 = vst.msk [vmem:[%s163 + $0x41] sm:$0xff] %vm105, %v7406
    %7423 = vst.msk [vmem:[%s163 + $0x51] sm:$0xff] %vm105, %v7407
    %7424 = vst.msk [vmem:[%s163 + $0x61] sm:$0xff] %vm105, %v7408
    %7425 = vst.msk [vmem:[%s163 + $0x71] sm:$0xff] %vm105, %v7409
    %7426 = vst.msk [vmem:[%s163 + $0xa1] sm:$0xff] %vm105, %v7410
    %7427 = vst.msk [vmem:[%s163 + $0xb1] sm:$0xff] %vm105, %v7411
    %7428 = vst.msk [vmem:[%s163 + $0xc1] sm:$0xff] %vm105, %v7412
    %7429 = vst.msk [vmem:[%s163 + $0xd1] sm:$0xff] %vm105, %v7413
    %7430 = vst.msk [vmem:[%s163 + $0xe1] sm:$0xff] %vm105, %v7414
    %7431 = vst.msk [vmem:[%s163 + $0xf1] sm:$0xff] %vm105, %v7415
    %7432 = vst.msk [vmem:[%s163 + $0x101] sm:$0xff] %vm105, %v7416
    %7433 = vst.msk [vmem:[%s163 + $0x111] sm:$0xff] %vm105, %v7417
    %v7434 = vld [vmem:[#allocation2] sm:$0xff]
    %v7435 = vld [vmem:[#allocation2 + $0x10] sm:$0xff]
    %v7436 = vld [vmem:[#allocation2 + $0x20] sm:$0xff]
    %v7437 = vld [vmem:[#allocation2 + $0x30] sm:$0xff]
    %v7438 = vld [vmem:[#allocation2 + $0x40] sm:$0xff]
    %v7439 = vld [vmem:[#allocation2 + $0x50] sm:$0xff]
    %v7440 = vld [vmem:[#allocation2 + $0x60] sm:$0xff]
    %v7441 = vld [vmem:[#allocation2 + $0x70] sm:$0xff]
    %v7442 = vld [vmem:[#allocation2 + $0xa0] sm:$0xff]
    %v7443 = vld [vmem:[#allocation2 + $0xb0] sm:$0xff]
    %v7444 = vld [vmem:[#allocation2 + $0xc0] sm:$0xff]
    %v7445 = vld [vmem:[#allocation2 + $0xd0] sm:$0xff]
    %v7446 = vld [vmem:[#allocation2 + $0xe0] sm:$0xff]
    %v7447 = vld [vmem:[#allocation2 + $0xf0] sm:$0xff]
    %v7448 = vld [vmem:[#allocation2 + $0x100] sm:$0xff]
    %v7449 = vld [vmem:[#allocation2 + $0x110] sm:$0xff]
    %v7450 = vpack.c.bf16 %v7434, %v7434
    %v7451 = vpack.c.bf16 %v7435, %v7435
    %v7452 = vpack.c.bf16 %v7436, %v7436
    %v7453 = vpack.c.bf16 %v7437, %v7437
    %v7454 = vpack.c.bf16 %v7438, %v7438
    %v7455 = vpack.c.bf16 %v7439, %v7439
    %v7456 = vpack.c.bf16 %v7440, %v7440
    %v7457 = vpack.c.bf16 %v7441, %v7441
    %v7458 = vpack.c.bf16 %v7442, %v7442
    %v7459 = vpack.c.bf16 %v7443, %v7443
    %v7460 = vpack.c.bf16 %v7444, %v7444
    %v7461 = vpack.c.bf16 %v7445, %v7445
    %v7462 = vpack.c.bf16 %v7446, %v7446
    %v7463 = vpack.c.bf16 %v7447, %v7447
    %v7464 = vpack.c.bf16 %v7448, %v7448
    %v7465 = vpack.c.bf16 %v7449, %v7449
    %v7466 = vld [vmem:[#allocation2 + $0x1] sm:$0xff]
    %v7467 = vld [vmem:[#allocation2 + $0x11] sm:$0xff]
    %v7468 = vld [vmem:[#allocation2 + $0x21] sm:$0xff]
    %v7469 = vld [vmem:[#allocation2 + $0x31] sm:$0xff]
    %v7470 = vld [vmem:[#allocation2 + $0x41] sm:$0xff]
    %v7471 = vld [vmem:[#allocation2 + $0x51] sm:$0xff]
    %v7472 = vld [vmem:[#allocation2 + $0x61] sm:$0xff]
    %v7473 = vld [vmem:[#allocation2 + $0x71] sm:$0xff]
    %v7474 = vld [vmem:[#allocation2 + $0xa1] sm:$0xff]
    %v7475 = vld [vmem:[#allocation2 + $0xb1] sm:$0xff]
    %v7476 = vld [vmem:[#allocation2 + $0xc1] sm:$0xff]
    %v7477 = vld [vmem:[#allocation2 + $0xd1] sm:$0xff]
    %v7478 = vld [vmem:[#allocation2 + $0xe1] sm:$0xff]
    %v7479 = vld [vmem:[#allocation2 + $0xf1] sm:$0xff]
    %v7480 = vld [vmem:[#allocation2 + $0x101] sm:$0xff]
    %v7481 = vld [vmem:[#allocation2 + $0x111] sm:$0xff]
    %v7482 = vpack.c.bf16 %v7466, %v7466
    %v7483 = vpack.c.bf16 %v7467, %v7467
    %v7484 = vpack.c.bf16 %v7468, %v7468
    %v7485 = vpack.c.bf16 %v7469, %v7469
    %v7486 = vpack.c.bf16 %v7470, %v7470
    %v7487 = vpack.c.bf16 %v7471, %v7471
    %v7488 = vpack.c.bf16 %v7472, %v7472
    %v7489 = vpack.c.bf16 %v7473, %v7473
    %v7490 = vpack.c.bf16 %v7474, %v7474
    %v7491 = vpack.c.bf16 %v7475, %v7475
    %v7492 = vpack.c.bf16 %v7476, %v7476
    %v7493 = vpack.c.bf16 %v7477, %v7477
    %v7494 = vpack.c.bf16 %v7478, %v7478
    %v7495 = vpack.c.bf16 %v7479, %v7479
    %v7496 = vpack.c.bf16 %v7480, %v7480
    %v7497 = vpack.c.bf16 %v7481, %v7481
    %v7498 = vld [vmem:[#allocation2 + $0x2] sm:$0xff]
    %v7499 = vld [vmem:[#allocation2 + $0x12] sm:$0xff]
    %v7500 = vld [vmem:[#allocation2 + $0x22] sm:$0xff]
    %v7501 = vld [vmem:[#allocation2 + $0x32] sm:$0xff]
    %v7502 = vld [vmem:[#allocation2 + $0x42] sm:$0xff]
    %v7503 = vld [vmem:[#allocation2 + $0x52] sm:$0xff]
    %v7504 = vld [vmem:[#allocation2 + $0x62] sm:$0xff]
    %v7505 = vld [vmem:[#allocation2 + $0x72] sm:$0xff]
    %v7506 = vld [vmem:[#allocation2 + $0xa2] sm:$0xff]
    %v7507 = vld [vmem:[#allocation2 + $0xb2] sm:$0xff]
    %v7508 = vld [vmem:[#allocation2 + $0xc2] sm:$0xff]
    %v7509 = vld [vmem:[#allocation2 + $0xd2] sm:$0xff]
    %v7510 = vld [vmem:[#allocation2 + $0xe2] sm:$0xff]
    %v7511 = vld [vmem:[#allocation2 + $0xf2] sm:$0xff]
    %v7512 = vld [vmem:[#allocation2 + $0x102] sm:$0xff]
    %v7513 = vld [vmem:[#allocation2 + $0x112] sm:$0xff]
    %v7514 = vpack.c.bf16 %v7498, %v7498
    %v7515 = vpack.c.bf16 %v7499, %v7499
    %v7516 = vpack.c.bf16 %v7500, %v7500
    %v7517 = vpack.c.bf16 %v7501, %v7501
    %v7518 = vpack.c.bf16 %v7502, %v7502
    %v7519 = vpack.c.bf16 %v7503, %v7503
    %v7520 = vpack.c.bf16 %v7504, %v7504
    %v7521 = vpack.c.bf16 %v7505, %v7505
    %v7522 = vpack.c.bf16 %v7506, %v7506
    %v7523 = vpack.c.bf16 %v7507, %v7507
    %v7524 = vpack.c.bf16 %v7508, %v7508
    %v7525 = vpack.c.bf16 %v7509, %v7509
    %v7526 = vpack.c.bf16 %v7510, %v7510
    %v7527 = vpack.c.bf16 %v7511, %v7511
    %v7528 = vpack.c.bf16 %v7512, %v7512
    %v7529 = vpack.c.bf16 %v7513, %v7513
    %v7530 = vld [vmem:[%s163] sm:$0xff]
    %v7531 = vld [vmem:[%s163 + $0x10] sm:$0xff]
    %v7532 = vld [vmem:[%s163 + $0x20] sm:$0xff]
    %v7533 = vld [vmem:[%s163 + $0x30] sm:$0xff]
    %v7534 = vld [vmem:[%s163 + $0x40] sm:$0xff]
    %v7535 = vld [vmem:[%s163 + $0x50] sm:$0xff]
    %v7536 = vld [vmem:[%s163 + $0x60] sm:$0xff]
    %v7537 = vld [vmem:[%s163 + $0x70] sm:$0xff]
    %v7538 = vld [vmem:[%s163 + $0xa0] sm:$0xff]
    %v7539 = vld [vmem:[%s163 + $0xb0] sm:$0xff]
    %v7540 = vld [vmem:[%s163 + $0xc0] sm:$0xff]
    %v7541 = vld [vmem:[%s163 + $0xd0] sm:$0xff]
    %v7542 = vld [vmem:[%s163 + $0xe0] sm:$0xff]
    %v7543 = vld [vmem:[%s163 + $0xf0] sm:$0xff]
    %v7544 = vld [vmem:[%s163 + $0x100] sm:$0xff]
    %v7545 = vld [vmem:[%s163 + $0x110] sm:$0xff]
    %v7546 = vpack.c.bf16 %v7530, %v7530
    %v7547 = vpack.c.bf16 %v7531, %v7531
    %v7548 = vpack.c.bf16 %v7532, %v7532
    %v7549 = vpack.c.bf16 %v7533, %v7533
    %v7550 = vpack.c.bf16 %v7534, %v7534
    %v7551 = vpack.c.bf16 %v7535, %v7535
    %v7552 = vpack.c.bf16 %v7536, %v7536
    %v7553 = vpack.c.bf16 %v7537, %v7537
    %v7554 = vpack.c.bf16 %v7538, %v7538
    %v7555 = vpack.c.bf16 %v7539, %v7539
    %v7556 = vpack.c.bf16 %v7540, %v7540
    %v7557 = vpack.c.bf16 %v7541, %v7541
    %v7558 = vpack.c.bf16 %v7542, %v7542
    %v7559 = vpack.c.bf16 %v7543, %v7543
    %v7560 = vpack.c.bf16 %v7544, %v7544
    %v7561 = vpack.c.bf16 %v7545, %v7545
    %v7562 = vld [vmem:[%s163 + $0x1] sm:$0xff]
    %v7563 = vld [vmem:[%s163 + $0x11] sm:$0xff]
    %v7564 = vld [vmem:[%s163 + $0x21] sm:$0xff]
    %v7565 = vld [vmem:[%s163 + $0x31] sm:$0xff]
    %v7566 = vld [vmem:[%s163 + $0x41] sm:$0xff]
    %v7567 = vld [vmem:[%s163 + $0x51] sm:$0xff]
    %v7568 = vld [vmem:[%s163 + $0x61] sm:$0xff]
    %v7569 = vld [vmem:[%s163 + $0x71] sm:$0xff]
    %v7570 = vld [vmem:[%s163 + $0xa1] sm:$0xff]
    %v7571 = vld [vmem:[%s163 + $0xb1] sm:$0xff]
    %v7572 = vld [vmem:[%s163 + $0xc1] sm:$0xff]
    %v7573 = vld [vmem:[%s163 + $0xd1] sm:$0xff]
    %v7574 = vld [vmem:[%s163 + $0xe1] sm:$0xff]
    %v7575 = vld [vmem:[%s163 + $0xf1] sm:$0xff]
    %v7576 = vld [vmem:[%s163 + $0x101] sm:$0xff]
    %v7577 = vld [vmem:[%s163 + $0x111] sm:$0xff]
    %v7578 = vpack.c.bf16 %v7562, %v7562
    %v7579 = vpack.c.bf16 %v7563, %v7563
    %v7580 = vpack.c.bf16 %v7564, %v7564
    %v7581 = vpack.c.bf16 %v7565, %v7565
    %v7582 = vpack.c.bf16 %v7566, %v7566
    %v7583 = vpack.c.bf16 %v7567, %v7567
    %v7584 = vpack.c.bf16 %v7568, %v7568
    %v7585 = vpack.c.bf16 %v7569, %v7569
    %v7586 = vpack.c.bf16 %v7570, %v7570
    %v7587 = vpack.c.bf16 %v7571, %v7571
    %v7588 = vpack.c.bf16 %v7572, %v7572
    %v7589 = vpack.c.bf16 %v7573, %v7573
    %v7590 = vpack.c.bf16 %v7574, %v7574
    %v7591 = vpack.c.bf16 %v7575, %v7575
    %v7592 = vpack.c.bf16 %v7576, %v7576
    %v7593 = vpack.c.bf16 %v7577, %v7577
    %v7594 = vld [vmem:[%s163 + $0x2] sm:$0xff]
    %v7595 = vld [vmem:[%s163 + $0x12] sm:$0xff]
    %v7596 = vld [vmem:[%s163 + $0x22] sm:$0xff]
    %v7597 = vld [vmem:[%s163 + $0x32] sm:$0xff]
    %v7598 = vld [vmem:[%s163 + $0x42] sm:$0xff]
    %v7599 = vld [vmem:[%s163 + $0x52] sm:$0xff]
    %v7600 = vld [vmem:[%s163 + $0x62] sm:$0xff]
    %v7601 = vld [vmem:[%s163 + $0x72] sm:$0xff]
    %v7602 = vld [vmem:[%s163 + $0xa2] sm:$0xff]
    %v7603 = vld [vmem:[%s163 + $0xb2] sm:$0xff]
    %v7604 = vld [vmem:[%s163 + $0xc2] sm:$0xff]
    %v7605 = vld [vmem:[%s163 + $0xd2] sm:$0xff]
    %v7606 = vld [vmem:[%s163 + $0xe2] sm:$0xff]
    %v7607 = vld [vmem:[%s163 + $0xf2] sm:$0xff]
    %v7608 = vld [vmem:[%s163 + $0x102] sm:$0xff]
    %v7609 = vld [vmem:[%s163 + $0x112] sm:$0xff]
    %v7610 = vpack.c.bf16 %v7594, %v7594
    %v7611 = vpack.c.bf16 %v7595, %v7595
    %v7612 = vpack.c.bf16 %v7596, %v7596
    %v7613 = vpack.c.bf16 %v7597, %v7597
    %v7614 = vpack.c.bf16 %v7598, %v7598
    %v7615 = vpack.c.bf16 %v7599, %v7599
    %v7616 = vpack.c.bf16 %v7600, %v7600
    %v7617 = vpack.c.bf16 %v7601, %v7601
    %v7618 = vpack.c.bf16 %v7602, %v7602
    %v7619 = vpack.c.bf16 %v7603, %v7603
    %v7620 = vpack.c.bf16 %v7604, %v7604
    %v7621 = vpack.c.bf16 %v7605, %v7605
    %v7622 = vpack.c.bf16 %v7606, %v7606
    %v7623 = vpack.c.bf16 %v7607, %v7607
    %v7624 = vpack.c.bf16 %v7608, %v7608
    %v7625 = vpack.c.bf16 %v7609, %v7609
    %v7626 = vld [vmem:[%s373] sm:$0xff]
    %v7627 = vld [vmem:[%s373 + $0x10] sm:$0xff]
    %v7628 = vld [vmem:[%s373 + $0x20] sm:$0xff]
    %v7629 = vld [vmem:[%s373 + $0x30] sm:$0xff]
    %v7630 = vld [vmem:[%s373 + $0x40] sm:$0xff]
    %v7631 = vld [vmem:[%s373 + $0x50] sm:$0xff]
    %v7632 = vld [vmem:[%s373 + $0x60] sm:$0xff]
    %v7633 = vld [vmem:[%s373 + $0x70] sm:$0xff]
    %v7634 = vld [vmem:[%s373 + $0xa0] sm:$0xff]
    %v7635 = vld [vmem:[%s373 + $0xb0] sm:$0xff]
    %v7636 = vld [vmem:[%s373 + $0xc0] sm:$0xff]
    %v7637 = vld [vmem:[%s373 + $0xd0] sm:$0xff]
    %v7638 = vld [vmem:[%s373 + $0xe0] sm:$0xff]
    %v7639 = vld [vmem:[%s373 + $0xf0] sm:$0xff]
    %v7640 = vld [vmem:[%s373 + $0x100] sm:$0xff]
    %v7641 = vld [vmem:[%s373 + $0x110] sm:$0xff]
    %v7642 = vpack.c.bf16 %v7626, %v7626
    %v7643 = vpack.c.bf16 %v7627, %v7627
    %v7644 = vpack.c.bf16 %v7628, %v7628
    %v7645 = vpack.c.bf16 %v7629, %v7629
    %v7646 = vpack.c.bf16 %v7630, %v7630
    %v7647 = vpack.c.bf16 %v7631, %v7631
    %v7648 = vpack.c.bf16 %v7632, %v7632
    %v7649 = vpack.c.bf16 %v7633, %v7633
    %v7650 = vpack.c.bf16 %v7634, %v7634
    %v7651 = vpack.c.bf16 %v7635, %v7635
    %v7652 = vpack.c.bf16 %v7636, %v7636
    %v7653 = vpack.c.bf16 %v7637, %v7637
    %v7654 = vpack.c.bf16 %v7638, %v7638
    %v7655 = vpack.c.bf16 %v7639, %v7639
    %v7656 = vpack.c.bf16 %v7640, %v7640
    %v7657 = vpack.c.bf16 %v7641, %v7641
    %v7658 = vld [vmem:[%s373 + $0x1] sm:$0xff]
    %v7659 = vld [vmem:[%s373 + $0x11] sm:$0xff]
    %v7660 = vld [vmem:[%s373 + $0x21] sm:$0xff]
    %v7661 = vld [vmem:[%s373 + $0x31] sm:$0xff]
    %v7662 = vld [vmem:[%s373 + $0x41] sm:$0xff]
    %v7663 = vld [vmem:[%s373 + $0x51] sm:$0xff]
    %v7664 = vld [vmem:[%s373 + $0x61] sm:$0xff]
    %v7665 = vld [vmem:[%s373 + $0x71] sm:$0xff]
    %v7666 = vld [vmem:[%s373 + $0xa1] sm:$0xff]
    %v7667 = vld [vmem:[%s373 + $0xb1] sm:$0xff]
    %v7668 = vld [vmem:[%s373 + $0xc1] sm:$0xff]
    %v7669 = vld [vmem:[%s373 + $0xd1] sm:$0xff]
    %v7670 = vld [vmem:[%s373 + $0xe1] sm:$0xff]
    %v7671 = vld [vmem:[%s373 + $0xf1] sm:$0xff]
    %v7672 = vld [vmem:[%s373 + $0x101] sm:$0xff]
    %v7673 = vld [vmem:[%s373 + $0x111] sm:$0xff]
    %v7674 = vpack.c.bf16 %v7658, %v7658
    %v7675 = vpack.c.bf16 %v7659, %v7659
    %v7676 = vpack.c.bf16 %v7660, %v7660
    %v7677 = vpack.c.bf16 %v7661, %v7661
    %v7678 = vpack.c.bf16 %v7662, %v7662
    %v7679 = vpack.c.bf16 %v7663, %v7663
    %v7680 = vpack.c.bf16 %v7664, %v7664
    %v7681 = vpack.c.bf16 %v7665, %v7665
    %v7682 = vpack.c.bf16 %v7666, %v7666
    %v7683 = vpack.c.bf16 %v7667, %v7667
    %v7684 = vpack.c.bf16 %v7668, %v7668
    %v7685 = vpack.c.bf16 %v7669, %v7669
    %v7686 = vpack.c.bf16 %v7670, %v7670
    %v7687 = vpack.c.bf16 %v7671, %v7671
    %v7688 = vpack.c.bf16 %v7672, %v7672
    %v7689 = vpack.c.bf16 %v7673, %v7673
    %v7690 = vld [vmem:[%s373 + $0x2] sm:$0xff]
    %v7691 = vld [vmem:[%s373 + $0x12] sm:$0xff]
    %v7692 = vld [vmem:[%s373 + $0x22] sm:$0xff]
    %v7693 = vld [vmem:[%s373 + $0x32] sm:$0xff]
    %v7694 = vld [vmem:[%s373 + $0x42] sm:$0xff]
    %v7695 = vld [vmem:[%s373 + $0x52] sm:$0xff]
    %v7696 = vld [vmem:[%s373 + $0x62] sm:$0xff]
    %v7697 = vld [vmem:[%s373 + $0x72] sm:$0xff]
    %v7698 = vld [vmem:[%s373 + $0xa2] sm:$0xff]
    %v7699 = vld [vmem:[%s373 + $0xb2] sm:$0xff]
    %v7700 = vld [vmem:[%s373 + $0xc2] sm:$0xff]
    %v7701 = vld [vmem:[%s373 + $0xd2] sm:$0xff]
    %v7702 = vld [vmem:[%s373 + $0xe2] sm:$0xff]
    %v7703 = vld [vmem:[%s373 + $0xf2] sm:$0xff]
    %v7704 = vld [vmem:[%s373 + $0x102] sm:$0xff]
    %v7705 = vld [vmem:[%s373 + $0x112] sm:$0xff]
    %v7706 = vpack.c.bf16 %v7690, %v7690
    %v7707 = vpack.c.bf16 %v7691, %v7691
    %v7708 = vpack.c.bf16 %v7692, %v7692
    %v7709 = vpack.c.bf16 %v7693, %v7693
    %v7710 = vpack.c.bf16 %v7694, %v7694
    %v7711 = vpack.c.bf16 %v7695, %v7695
    %v7712 = vpack.c.bf16 %v7696, %v7696
    %v7713 = vpack.c.bf16 %v7697, %v7697
    %v7714 = vpack.c.bf16 %v7698, %v7698
    %v7715 = vpack.c.bf16 %v7699, %v7699
    %v7716 = vpack.c.bf16 %v7700, %v7700
    %v7717 = vpack.c.bf16 %v7701, %v7701
    %v7718 = vpack.c.bf16 %v7702, %v7702
    %v7719 = vpack.c.bf16 %v7703, %v7703
    %v7720 = vpack.c.bf16 %v7704, %v7704
    %v7721 = vpack.c.bf16 %v7705, %v7705
    %v7738 = vunpack.c.l.b16 %v7450
    %v7739 = vunpack.c.l.b16 %v7451
    %v7740 = vunpack.c.l.b16 %v7452
    %v7741 = vunpack.c.l.b16 %v7453
    %v7742 = vunpack.c.l.b16 %v7454
    %v7743 = vunpack.c.l.b16 %v7455
    %v7744 = vunpack.c.l.b16 %v7456
    %v7745 = vunpack.c.l.b16 %v7457
    %v7746 = vunpack.c.l.b16 %v7458
    %v7747 = vunpack.c.l.b16 %v7459
    %v7748 = vunpack.c.l.b16 %v7460
    %v7749 = vunpack.c.l.b16 %v7461
    %v7750 = vunpack.c.l.b16 %v7462
    %v7751 = vunpack.c.l.b16 %v7463
    %v7752 = vunpack.c.l.b16 %v7464
    %v7753 = vunpack.c.l.b16 %v7465
    %v7754 = vpack.c.b16 %v7739, %v7738
    %v7755 = vpack.c.b16 %v7741, %v7740
    %v7756 = vpack.c.b16 %v7743, %v7742
    %v7757 = vpack.c.b16 %v7745, %v7744
    %v7758 = vpack.c.b16 %v7747, %v7746
    %v7759 = vpack.c.b16 %v7749, %v7748
    %v7760 = vpack.c.b16 %v7751, %v7750
    %v7761 = vpack.c.b16 %v7753, %v7752
    %v7778 = vunpack.c.l.b16 %v7482
    %v7779 = vunpack.c.l.b16 %v7483
    %v7780 = vunpack.c.l.b16 %v7484
    %v7781 = vunpack.c.l.b16 %v7485
    %v7782 = vunpack.c.l.b16 %v7486
    %v7783 = vunpack.c.l.b16 %v7487
    %v7784 = vunpack.c.l.b16 %v7488
    %v7785 = vunpack.c.l.b16 %v7489
    %v7786 = vunpack.c.l.b16 %v7490
    %v7787 = vunpack.c.l.b16 %v7491
    %v7788 = vunpack.c.l.b16 %v7492
    %v7789 = vunpack.c.l.b16 %v7493
    %v7790 = vunpack.c.l.b16 %v7494
    %v7791 = vunpack.c.l.b16 %v7495
    %v7792 = vunpack.c.l.b16 %v7496
    %v7793 = vunpack.c.l.b16 %v7497
    %v7794 = vpack.c.b16 %v7779, %v7778
    %v7795 = vpack.c.b16 %v7781, %v7780
    %v7796 = vpack.c.b16 %v7783, %v7782
    %v7797 = vpack.c.b16 %v7785, %v7784
    %v7798 = vpack.c.b16 %v7787, %v7786
    %v7799 = vpack.c.b16 %v7789, %v7788
    %v7800 = vpack.c.b16 %v7791, %v7790
    %v7801 = vpack.c.b16 %v7793, %v7792
    %7802 = vrot.lane.b32.xlu0 %v7794, 32
    %v7803 = vpop.permute.xlu0 %7802
    %7804 = vrot.lane.b32.xlu0 %v7795, 32
    %v7805 = vpop.permute.xlu0 %7804
    %7806 = vrot.lane.b32.xlu0 %v7796, 32
    %v7807 = vpop.permute.xlu0 %7806
    %7808 = vrot.lane.b32.xlu0 %v7797, 32
    %v7809 = vpop.permute.xlu0 %7808
    %7810 = vrot.lane.b32.xlu0 %v7798, 32
    %v7811 = vpop.permute.xlu0 %7810
    %7812 = vrot.lane.b32.xlu0 %v7799, 32
    %v7813 = vpop.permute.xlu0 %7812
    %7814 = vrot.lane.b32.xlu0 %v7800, 32
    %v7815 = vpop.permute.xlu0 %7814
    %7816 = vrot.lane.b32.xlu0 %v7801, 32
    %v7817 = vpop.permute.xlu0 %7816
    %v7834 = vunpack.c.l.b16 %v7514
    %v7835 = vunpack.c.l.b16 %v7515
    %v7836 = vunpack.c.l.b16 %v7516
    %v7837 = vunpack.c.l.b16 %v7517
    %v7838 = vunpack.c.l.b16 %v7518
    %v7839 = vunpack.c.l.b16 %v7519
    %v7840 = vunpack.c.l.b16 %v7520
    %v7841 = vunpack.c.l.b16 %v7521
    %v7842 = vunpack.c.l.b16 %v7522
    %v7843 = vunpack.c.l.b16 %v7523
    %v7844 = vunpack.c.l.b16 %v7524
    %v7845 = vunpack.c.l.b16 %v7525
    %v7846 = vunpack.c.l.b16 %v7526
    %v7847 = vunpack.c.l.b16 %v7527
    %v7848 = vunpack.c.l.b16 %v7528
    %v7849 = vunpack.c.l.b16 %v7529
    %v7850 = vpack.c.b16 %v7835, %v7834
    %v7851 = vpack.c.b16 %v7837, %v7836
    %v7852 = vpack.c.b16 %v7839, %v7838
    %v7853 = vpack.c.b16 %v7841, %v7840
    %v7854 = vpack.c.b16 %v7843, %v7842
    %v7855 = vpack.c.b16 %v7845, %v7844
    %v7856 = vpack.c.b16 %v7847, %v7846
    %v7857 = vpack.c.b16 %v7849, %v7848
    %7858 = vrot.lane.b32.xlu0 %v7850, 64
    %v7859 = vpop.permute.xlu0 %7858
    %7860 = vrot.lane.b32.xlu0 %v7851, 64
    %v7861 = vpop.permute.xlu0 %7860
    %7862 = vrot.lane.b32.xlu0 %v7852, 64
    %v7863 = vpop.permute.xlu0 %7862
    %7864 = vrot.lane.b32.xlu0 %v7853, 64
    %v7865 = vpop.permute.xlu0 %7864
    %7866 = vrot.lane.b32.xlu0 %v7854, 64
    %v7867 = vpop.permute.xlu0 %7866
    %7868 = vrot.lane.b32.xlu0 %v7855, 64
    %v7869 = vpop.permute.xlu0 %7868
    %7870 = vrot.lane.b32.xlu0 %v7856, 64
    %v7871 = vpop.permute.xlu0 %7870
    %7872 = vrot.lane.b32.xlu0 %v7857, 64
    %v7873 = vpop.permute.xlu0 %7872
    %v7890 = vunpack.c.l.b16 %v7546
    %v7891 = vunpack.c.l.b16 %v7547
    %v7892 = vunpack.c.l.b16 %v7548
    %v7893 = vunpack.c.l.b16 %v7549
    %v7894 = vunpack.c.l.b16 %v7550
    %v7895 = vunpack.c.l.b16 %v7551
    %v7896 = vunpack.c.l.b16 %v7552
    %v7897 = vunpack.c.l.b16 %v7553
    %v7898 = vunpack.c.l.b16 %v7554
    %v7899 = vunpack.c.l.b16 %v7555
    %v7900 = vunpack.c.l.b16 %v7556
    %v7901 = vunpack.c.l.b16 %v7557
    %v7902 = vunpack.c.l.b16 %v7558
    %v7903 = vunpack.c.l.b16 %v7559
    %v7904 = vunpack.c.l.b16 %v7560
    %v7905 = vunpack.c.l.b16 %v7561
    %v7906 = vpack.c.b16 %v7891, %v7890
    %v7907 = vpack.c.b16 %v7893, %v7892
    %v7908 = vpack.c.b16 %v7895, %v7894
    %v7909 = vpack.c.b16 %v7897, %v7896
    %v7910 = vpack.c.b16 %v7899, %v7898
    %v7911 = vpack.c.b16 %v7901, %v7900
    %v7912 = vpack.c.b16 %v7903, %v7902
    %v7913 = vpack.c.b16 %v7905, %v7904
    %7914 = vrot.lane.b32.xlu0 %v7906, 96
    %v7915 = vpop.permute.xlu0 %7914
    %7916 = vrot.lane.b32.xlu0 %v7907, 96
    %v7917 = vpop.permute.xlu0 %7916
    %7918 = vrot.lane.b32.xlu0 %v7908, 96
    %v7919 = vpop.permute.xlu0 %7918
    %7920 = vrot.lane.b32.xlu0 %v7909, 96
    %v7921 = vpop.permute.xlu0 %7920
    %7922 = vrot.lane.b32.xlu0 %v7910, 96
    %v7923 = vpop.permute.xlu0 %7922
    %7924 = vrot.lane.b32.xlu0 %v7911, 96
    %v7925 = vpop.permute.xlu0 %7924
    %7926 = vrot.lane.b32.xlu0 %v7912, 96
    %v7927 = vpop.permute.xlu0 %7926
    %7928 = vrot.lane.b32.xlu0 %v7913, 96
    %v7929 = vpop.permute.xlu0 %7928
    %v7946 = vunpack.c.l.b16 %v7578
    %v7947 = vunpack.c.l.b16 %v7579
    %v7948 = vunpack.c.l.b16 %v7580
    %v7949 = vunpack.c.l.b16 %v7581
    %v7950 = vunpack.c.l.b16 %v7582
    %v7951 = vunpack.c.l.b16 %v7583
    %v7952 = vunpack.c.l.b16 %v7584
    %v7953 = vunpack.c.l.b16 %v7585
    %v7954 = vunpack.c.l.b16 %v7586
    %v7955 = vunpack.c.l.b16 %v7587
    %v7956 = vunpack.c.l.b16 %v7588
    %v7957 = vunpack.c.l.b16 %v7589
    %v7958 = vunpack.c.l.b16 %v7590
    %v7959 = vunpack.c.l.b16 %v7591
    %v7960 = vunpack.c.l.b16 %v7592
    %v7961 = vunpack.c.l.b16 %v7593
    %v7962 = vpack.c.b16 %v7947, %v7946
    %v7963 = vpack.c.b16 %v7949, %v7948
    %v7964 = vpack.c.b16 %v7951, %v7950
    %v7965 = vpack.c.b16 %v7953, %v7952
    %v7966 = vpack.c.b16 %v7955, %v7954
    %v7967 = vpack.c.b16 %v7957, %v7956
    %v7968 = vpack.c.b16 %v7959, %v7958
    %v7969 = vpack.c.b16 %v7961, %v7960
    %v7986 = vunpack.c.l.b16 %v7610
    %v7987 = vunpack.c.l.b16 %v7611
    %v7988 = vunpack.c.l.b16 %v7612
    %v7989 = vunpack.c.l.b16 %v7613
    %v7990 = vunpack.c.l.b16 %v7614
    %v7991 = vunpack.c.l.b16 %v7615
    %v7992 = vunpack.c.l.b16 %v7616
    %v7993 = vunpack.c.l.b16 %v7617
    %v7994 = vunpack.c.l.b16 %v7618
    %v7995 = vunpack.c.l.b16 %v7619
    %v7996 = vunpack.c.l.b16 %v7620
    %v7997 = vunpack.c.l.b16 %v7621
    %v7998 = vunpack.c.l.b16 %v7622
    %v7999 = vunpack.c.l.b16 %v7623
    %v8000 = vunpack.c.l.b16 %v7624
    %v8001 = vunpack.c.l.b16 %v7625
    %v8002 = vpack.c.b16 %v7987, %v7986
    %v8003 = vpack.c.b16 %v7989, %v7988
    %v8004 = vpack.c.b16 %v7991, %v7990
    %v8005 = vpack.c.b16 %v7993, %v7992
    %v8006 = vpack.c.b16 %v7995, %v7994
    %v8007 = vpack.c.b16 %v7997, %v7996
    %v8008 = vpack.c.b16 %v7999, %v7998
    %v8009 = vpack.c.b16 %v8001, %v8000
    %8010 = vrot.lane.b32.xlu0 %v8002, 32
    %v8011 = vpop.permute.xlu0 %8010
    %8012 = vrot.lane.b32.xlu0 %v8003, 32
    %v8013 = vpop.permute.xlu0 %8012
    %8014 = vrot.lane.b32.xlu0 %v8004, 32
    %v8015 = vpop.permute.xlu0 %8014
    %8016 = vrot.lane.b32.xlu0 %v8005, 32
    %v8017 = vpop.permute.xlu0 %8016
    %8018 = vrot.lane.b32.xlu0 %v8006, 32
    %v8019 = vpop.permute.xlu0 %8018
    %8020 = vrot.lane.b32.xlu0 %v8007, 32
    %v8021 = vpop.permute.xlu0 %8020
    %8022 = vrot.lane.b32.xlu0 %v8008, 32
    %v8023 = vpop.permute.xlu0 %8022
    %8024 = vrot.lane.b32.xlu0 %v8009, 32
    %v8025 = vpop.permute.xlu0 %8024
    %v8042 = vunpack.c.l.b16 %v7642
    %v8043 = vunpack.c.l.b16 %v7643
    %v8044 = vunpack.c.l.b16 %v7644
    %v8045 = vunpack.c.l.b16 %v7645
    %v8046 = vunpack.c.l.b16 %v7646
    %v8047 = vunpack.c.l.b16 %v7647
    %v8048 = vunpack.c.l.b16 %v7648
    %v8049 = vunpack.c.l.b16 %v7649
    %v8050 = vunpack.c.l.b16 %v7650
    %v8051 = vunpack.c.l.b16 %v7651
    %v8052 = vunpack.c.l.b16 %v7652
    %v8053 = vunpack.c.l.b16 %v7653
    %v8054 = vunpack.c.l.b16 %v7654
    %v8055 = vunpack.c.l.b16 %v7655
    %v8056 = vunpack.c.l.b16 %v7656
    %v8057 = vunpack.c.l.b16 %v7657
    %v8058 = vpack.c.b16 %v8043, %v8042
    %v8059 = vpack.c.b16 %v8045, %v8044
    %v8060 = vpack.c.b16 %v8047, %v8046
    %v8061 = vpack.c.b16 %v8049, %v8048
    %v8062 = vpack.c.b16 %v8051, %v8050
    %v8063 = vpack.c.b16 %v8053, %v8052
    %v8064 = vpack.c.b16 %v8055, %v8054
    %v8065 = vpack.c.b16 %v8057, %v8056
    %8066 = vrot.lane.b32.xlu0 %v8058, 64
    %v8067 = vpop.permute.xlu0 %8066
    %8068 = vrot.lane.b32.xlu0 %v8059, 64
    %v8069 = vpop.permute.xlu0 %8068
    %8070 = vrot.lane.b32.xlu0 %v8060, 64
    %v8071 = vpop.permute.xlu0 %8070
    %8072 = vrot.lane.b32.xlu0 %v8061, 64
    %v8073 = vpop.permute.xlu0 %8072
    %8074 = vrot.lane.b32.xlu0 %v8062, 64
    %v8075 = vpop.permute.xlu0 %8074
    %8076 = vrot.lane.b32.xlu0 %v8063, 64
    %v8077 = vpop.permute.xlu0 %8076
    %8078 = vrot.lane.b32.xlu0 %v8064, 64
    %v8079 = vpop.permute.xlu0 %8078
    %8080 = vrot.lane.b32.xlu0 %v8065, 64
    %v8081 = vpop.permute.xlu0 %8080
    %v8098 = vunpack.c.l.b16 %v7674
    %v8099 = vunpack.c.l.b16 %v7675
    %v8100 = vunpack.c.l.b16 %v7676
    %v8101 = vunpack.c.l.b16 %v7677
    %v8102 = vunpack.c.l.b16 %v7678
    %v8103 = vunpack.c.l.b16 %v7679
    %v8104 = vunpack.c.l.b16 %v7680
    %v8105 = vunpack.c.l.b16 %v7681
    %v8106 = vunpack.c.l.b16 %v7682
    %v8107 = vunpack.c.l.b16 %v7683
    %v8108 = vunpack.c.l.b16 %v7684
    %v8109 = vunpack.c.l.b16 %v7685
    %v8110 = vunpack.c.l.b16 %v7686
    %v8111 = vunpack.c.l.b16 %v7687
    %v8112 = vunpack.c.l.b16 %v7688
    %v8113 = vunpack.c.l.b16 %v7689
    %v8114 = vpack.c.b16 %v8099, %v8098
    %v8115 = vpack.c.b16 %v8101, %v8100
    %v8116 = vpack.c.b16 %v8103, %v8102
    %v8117 = vpack.c.b16 %v8105, %v8104
    %v8118 = vpack.c.b16 %v8107, %v8106
    %v8119 = vpack.c.b16 %v8109, %v8108
    %v8120 = vpack.c.b16 %v8111, %v8110
    %v8121 = vpack.c.b16 %v8113, %v8112
    %8122 = vrot.lane.b32.xlu0 %v8114, 96
    %v8123 = vpop.permute.xlu0 %8122
    %8124 = vrot.lane.b32.xlu0 %v8115, 96
    %v8125 = vpop.permute.xlu0 %8124
    %8126 = vrot.lane.b32.xlu0 %v8116, 96
    %v8127 = vpop.permute.xlu0 %8126
    %8128 = vrot.lane.b32.xlu0 %v8117, 96
    %v8129 = vpop.permute.xlu0 %8128
    %8130 = vrot.lane.b32.xlu0 %v8118, 96
    %v8131 = vpop.permute.xlu0 %8130
    %8132 = vrot.lane.b32.xlu0 %v8119, 96
    %v8133 = vpop.permute.xlu0 %8132
    %8134 = vrot.lane.b32.xlu0 %v8120, 96
    %v8135 = vpop.permute.xlu0 %8134
    %8136 = vrot.lane.b32.xlu0 %v8121, 96
    %v8137 = vpop.permute.xlu0 %8136
    %v8154 = vunpack.c.l.b16 %v7706
    %v8155 = vunpack.c.l.b16 %v7707
    %v8156 = vunpack.c.l.b16 %v7708
    %v8157 = vunpack.c.l.b16 %v7709
    %v8158 = vunpack.c.l.b16 %v7710
    %v8159 = vunpack.c.l.b16 %v7711
    %v8160 = vunpack.c.l.b16 %v7712
    %v8161 = vunpack.c.l.b16 %v7713
    %v8162 = vunpack.c.l.b16 %v7714
    %v8163 = vunpack.c.l.b16 %v7715
    %v8164 = vunpack.c.l.b16 %v7716
    %v8165 = vunpack.c.l.b16 %v7717
    %v8166 = vunpack.c.l.b16 %v7718
    %v8167 = vunpack.c.l.b16 %v7719
    %v8168 = vunpack.c.l.b16 %v7720
    %v8169 = vunpack.c.l.b16 %v7721
    %v8170 = vpack.c.b16 %v8155, %v8154
    %v8171 = vpack.c.b16 %v8157, %v8156
    %v8172 = vpack.c.b16 %v8159, %v8158
    %v8173 = vpack.c.b16 %v8161, %v8160
    %v8174 = vpack.c.b16 %v8163, %v8162
    %v8175 = vpack.c.b16 %v8165, %v8164
    %v8176 = vpack.c.b16 %v8167, %v8166
    %v8177 = vpack.c.b16 %v8169, %v8168
    %v8180 = vsel %vm105, %v7754, %v7803
    %v8183 = vsel %vm105, %v7755, %v7805
    %v8186 = vsel %vm105, %v7756, %v7807
    %v8189 = vsel %vm105, %v7757, %v7809
    %v8192 = vsel %vm105, %v7758, %v7811
    %v8195 = vsel %vm105, %v7759, %v7813
    %v8198 = vsel %vm105, %v7760, %v7815
    %v8201 = vsel %vm105, %v7761, %v7817
    %v8203 = vsel %vm950, %v8180, %v7859
    %v8205 = vsel %vm950, %v8183, %v7861
    %v8207 = vsel %vm950, %v8186, %v7863
    %v8209 = vsel %vm950, %v8189, %v7865
    %v8211 = vsel %vm950, %v8192, %v7867
    %v8213 = vsel %vm950, %v8195, %v7869
    %v8215 = vsel %vm950, %v8198, %v7871
    %v8217 = vsel %vm950, %v8201, %v7873
    %v8219 = vsel %vm967, %v8203, %v7915
    %v8222 = vsel %vm967, %v8205, %v7917
    %v8225 = vsel %vm967, %v8207, %v7919
    %v8228 = vsel %vm967, %v8209, %v7921
    %v8231 = vsel %vm967, %v8211, %v7923
    %v8234 = vsel %vm967, %v8213, %v7925
    %v8237 = vsel %vm967, %v8215, %v7927
    %v8240 = vsel %vm967, %v8217, %v7929
    %v8244 = vsel %vm105, %v7962, %v8011
    %v8247 = vsel %vm105, %v7963, %v8013
    %v8250 = vsel %vm105, %v7964, %v8015
    %v8253 = vsel %vm105, %v7965, %v8017
    %v8256 = vsel %vm105, %v7966, %v8019
    %v8259 = vsel %vm105, %v7967, %v8021
    %v8262 = vsel %vm105, %v7968, %v8023
    %v8265 = vsel %vm105, %v7969, %v8025
    %v8267 = vsel %vm950, %v8244, %v8067
    %v8269 = vsel %vm950, %v8247, %v8069
    %v8271 = vsel %vm950, %v8250, %v8071
    %v8273 = vsel %vm950, %v8253, %v8073
    %v8275 = vsel %vm950, %v8256, %v8075
    %v8277 = vsel %vm950, %v8259, %v8077
    %v8279 = vsel %vm950, %v8262, %v8079
    %v8281 = vsel %vm950, %v8265, %v8081
    %v8283 = vsel %vm967, %v8267, %v8123
    %v8286 = vsel %vm967, %v8269, %v8125
    %v8289 = vsel %vm967, %v8271, %v8127
    %v8292 = vsel %vm967, %v8273, %v8129
    %v8295 = vsel %vm967, %v8275, %v8131
    %v8298 = vsel %vm967, %v8277, %v8133
    %v8301 = vsel %vm967, %v8279, %v8135
    %v8304 = vsel %vm967, %v8281, %v8137
    %v8306 = vld [vmem:[#allocation8] sm:$0xf]
    %v8307 = vld [vmem:[#allocation8 + $0x4] sm:$0xf]
    %v8308 = vld [vmem:[#allocation8 + $0x8] sm:$0xf]
    %v8309 = vld [vmem:[#allocation8 + $0xc] sm:$0xf]
    %v8310 = vld [vmem:[#allocation8 + $0x10] sm:$0xf]
    %v8311 = vld [vmem:[#allocation8 + $0x14] sm:$0xf]
    %v8312 = vld [vmem:[#allocation8 + $0x18] sm:$0xf]
    %v8313 = vld [vmem:[#allocation8 + $0x1c] sm:$0xf]
    %v8314 = vld [vmem:[#allocation8 + $0x20] sm:$0xf]
    %v8315 = vld [vmem:[#allocation8 + $0x24] sm:$0xf]
    %v8316 = vld [vmem:[#allocation8 + $0x28] sm:$0xf]
    %v8317 = vld [vmem:[#allocation8 + $0x2c] sm:$0xf]
    %v8318 = vld [vmem:[#allocation8 + $0x30] sm:$0xf]
    %v8319 = vld [vmem:[#allocation8 + $0x34] sm:$0xf]
    %v8320 = vld [vmem:[#allocation8 + $0x38] sm:$0xf]
    %v8321 = vld [vmem:[#allocation8 + $0x3c] sm:$0xf]
    %v8322 = vld [vmem:[#allocation8 + $0x40] sm:$0xf]
    %v8323 = vld [vmem:[#allocation8 + $0x44] sm:$0xf]
    %v8324 = vld [vmem:[#allocation8 + $0x48] sm:$0xf]
    %v8325 = vld [vmem:[#allocation8 + $0x4c] sm:$0xf]
    %v8326 = vld [vmem:[#allocation8 + $0x50] sm:$0xf]
    %v8327 = vld [vmem:[#allocation8 + $0x54] sm:$0xf]
    %v8328 = vld [vmem:[#allocation8 + $0x58] sm:$0xf]
    %v8329 = vld [vmem:[#allocation8 + $0x5c] sm:$0xf]
    %v8330 = vld [vmem:[#allocation8 + $0x60] sm:$0xf]
    %v8331 = vld [vmem:[#allocation8 + $0x64] sm:$0xf]
    %v8332 = vld [vmem:[#allocation8 + $0x68] sm:$0xf]
    %v8333 = vld [vmem:[#allocation8 + $0x6c] sm:$0xf]
    %v8334 = vld [vmem:[#allocation8 + $0x70] sm:$0xf]
    %v8335 = vld [vmem:[#allocation8 + $0x74] sm:$0xf]
    %v8336 = vld [vmem:[#allocation8 + $0x78] sm:$0xf]
    %v8337 = vld [vmem:[#allocation8 + $0x7c] sm:$0xf]
    %v8338 = vld [vmem:[#allocation8 + $0x80] sm:$0xf]
    %v8339 = vld [vmem:[#allocation8 + $0x84] sm:$0xf]
    %v8340 = vld [vmem:[#allocation8 + $0x88] sm:$0xf]
    %v8341 = vld [vmem:[#allocation8 + $0x8c] sm:$0xf]
    %v8342 = vld [vmem:[#allocation10] sm:$0x1]
    %v8343 = vld [vmem:[#allocation11] sm:$0x1]
    %v8380 = vunpack.c.l.b16 %v8306
    %v8381 = vunpack.c.l.b16 %v8307
    %v8382 = vunpack.c.l.b16 %v8308
    %v8383 = vunpack.c.l.b16 %v8309
    %v8384 = vunpack.c.l.b16 %v8310
    %v8385 = vunpack.c.l.b16 %v8311
    %v8386 = vunpack.c.l.b16 %v8312
    %v8387 = vunpack.c.l.b16 %v8313
    %v8388 = vunpack.c.l.b16 %v8314
    %v8389 = vunpack.c.l.b16 %v8315
    %v8390 = vunpack.c.l.b16 %v8316
    %v8391 = vunpack.c.l.b16 %v8317
    %v8392 = vunpack.c.l.b16 %v8318
    %v8393 = vunpack.c.l.b16 %v8319
    %v8394 = vunpack.c.l.b16 %v8320
    %v8395 = vunpack.c.l.b16 %v8321
    %v8396 = vunpack.c.l.b16 %v8322
    %v8397 = vunpack.c.l.b16 %v8323
    %v8398 = vunpack.c.l.b16 %v8324
    %v8399 = vunpack.c.l.b16 %v8325
    %v8400 = vunpack.c.l.b16 %v8326
    %v8401 = vunpack.c.l.b16 %v8327
    %v8402 = vunpack.c.l.b16 %v8328
    %v8403 = vunpack.c.l.b16 %v8329
    %v8404 = vunpack.c.l.b16 %v8330
    %v8405 = vunpack.c.l.b16 %v8331
    %v8406 = vunpack.c.l.b16 %v8332
    %v8407 = vunpack.c.l.b16 %v8333
    %v8408 = vunpack.c.l.b16 %v8334
    %v8409 = vunpack.c.l.b16 %v8335
    %v8410 = vunpack.c.l.b16 %v8336
    %v8411 = vunpack.c.l.b16 %v8337
    %v8412 = vunpack.c.l.b16 %v8338
    %v8413 = vunpack.c.l.b16 %v8339
    %v8414 = vunpack.c.l.b16 %v8340
    %v8415 = vunpack.c.l.b16 %v8341
    %v8416 = vpack.c.b16 %v8381, %v8380
    %v8417 = vpack.c.b16 %v8383, %v8382
    %v8418 = vpack.c.b16 %v8385, %v8384
    %v8419 = vpack.c.b16 %v8387, %v8386
    %v8420 = vpack.c.b16 %v8389, %v8388
    %v8421 = vpack.c.b16 %v8391, %v8390
    %v8422 = vpack.c.b16 %v8393, %v8392
    %v8423 = vpack.c.b16 %v8395, %v8394
    %v8424 = vpack.c.b16 %v8397, %v8396
    %v8425 = vpack.c.b16 %v8399, %v8398
    %v8426 = vpack.c.b16 %v8401, %v8400
    %v8427 = vpack.c.b16 %v8403, %v8402
    %v8428 = vpack.c.b16 %v8405, %v8404
    %v8429 = vpack.c.b16 %v8407, %v8406
    %v8430 = vpack.c.b16 %v8409, %v8408
    %v8431 = vpack.c.b16 %v8411, %v8410
    %v8432 = vpack.c.b16 %v8413, %v8412
    %v8433 = vpack.c.b16 %v8415, %v8414
    %v8453 = vsel %vm105, %v8170, 0
    %v8456 = vsel %vm105, %v8171, 0
    %v8459 = vsel %vm105, %v8172, 0
    %v8462 = vsel %vm105, %v8173, 0
    %v8465 = vsel %vm105, %v8174, 0
    %v8468 = vsel %vm105, %v8175, 0
    %v8471 = vsel %vm105, %v8176, 0
    %v8474 = vsel %vm105, %v8177, 0
    %8476 = vmatprep.subr.bf16.mxu0 0
    %8477 = vmatpush1.bf16.msra.mxu0 %v8416
    %8478 = vmatprep.subr.bf16.mxu0 0
    %8479 = vmatpush1.bf16.msra.mxu0 %v8417
    %8480 = vmatprep.subr.bf16.mxu0 0
    %8481 = vmatpush1.bf16.msra.mxu0 %v8418
    %8482 = vmatprep.subr.bf16.mxu0 0
    %8483 = vmatpush1.bf16.msra.mxu0 %v8419
    %8484 = vmatprep.subr.bf16.mxu0 0
    %8485 = vmatpush1.bf16.msra.mxu0 %v8420
    %8486 = vmatprep.subr.bf16.mxu0 0
    %8487 = vmatpush1.bf16.msra.mxu0 %v8421
    %8488 = vmatprep.subr.bf16.mxu0 0
    %8489 = vmatpush1.bf16.msra.mxu0 %v8422
    %8490 = vmatprep.subr.bf16.mxu0 0
    %8491 = vmatpush1.bf16.msra.mxu0 %v8423
    %8492 = vmatprep.subr.bf16.mxu0 0
    %8493 = vmatpush1.bf16.msra.mxu0 %v8424
    %8494 = vmatprep.subr.bf16.mxu0 0
    %8495 = vmatpush1.bf16.msra.mxu0 %v8425
    %8496 = vmatprep.subr.bf16.mxu0 0
    %8497 = vmatpush1.bf16.msra.mxu0 %v8426
    %8498 = vmatprep.subr.bf16.mxu0 0
    %8499 = vmatpush1.bf16.msra.mxu0 %v8427
    %8500 = vmatprep.subr.bf16.mxu0 0
    %8501 = vmatpush1.bf16.msra.mxu0 %v8428
    %8502 = vmatprep.subr.bf16.mxu0 0
    %8503 = vmatpush1.bf16.msra.mxu0 %v8429
    %8504 = vmatprep.subr.bf16.mxu0 0
    %8505 = vmatpush1.bf16.msra.mxu0 %v8430
    %8506 = vmatprep.subr.bf16.mxu0 0
    %8507 = vmatpush1.bf16.msra.mxu0 %v8431
    %8508 = vmatprep.mubr.bf16.mxu0 %v8283
    %8509 = vmatmul.mubr.bf16.gmra.mrb[0].mxu0 %v8219
    %v8510 = vpop.f32.mrb[0].mxu0
    %v8511 = vadd.f32 0.0, %v8510
    %v8512 = vpop.f32.mrb[0].mxu0
    %v8513 = vpop.f32.mrb[0].mxu0
    %v8514 = vadd.f32 0.0, %v8513
    %v8515 = vpop.f32.mrb[0].mxu0
    %8516 = vmatprep.mubr.bf16.mxu0 %v8286
    %8517 = vmatmul.mubr.bf16.gmra.mrb[0].mxu0 %v8222
    %v8518 = vpop.f32.mrb[0].mxu0
    %v8519 = vadd.f32 0.0, %v8518
    %v8520 = vpop.f32.mrb[0].mxu0
    %v8521 = vpop.f32.mrb[0].mxu0
    %v8522 = vadd.f32 0.0, %v8521
    %v8523 = vpop.f32.mrb[0].mxu0
    %8524 = vmatprep.mubr.bf16.mxu0 %v8289
    %8525 = vmatmul.mubr.bf16.gmra.mrb[0].mxu0 %v8225
    %v8526 = vpop.f32.mrb[0].mxu0
    %v8527 = vadd.f32 0.0, %v8526
    %v8528 = vpop.f32.mrb[0].mxu0
    %v8529 = vpop.f32.mrb[0].mxu0
    %v8530 = vadd.f32 0.0, %v8529
    %v8531 = vpop.f32.mrb[0].mxu0
    %8532 = vmatprep.mubr.bf16.mxu0 %v8292
    %8533 = vmatmul.mubr.bf16.gmra.mrb[0].mxu0 %v8228
    %v8534 = vpop.f32.mrb[0].mxu0
    %v8535 = vadd.f32 0.0, %v8534
    %v8536 = vpop.f32.mrb[0].mxu0
    %v8537 = vpop.f32.mrb[0].mxu0
    %v8538 = vadd.f32 0.0, %v8537
    %v8539 = vpop.f32.mrb[0].mxu0
    %8540 = vmatprep.mubr.bf16.mxu0 %v8295
    %8541 = vmatmul.mubr.bf16.gmra.mrb[0].mxu0 %v8231
    %v8542 = vpop.f32.mrb[0].mxu0
    %v8543 = vadd.f32 0.0, %v8542
    %v8544 = vpop.f32.mrb[0].mxu0
    %v8545 = vpop.f32.mrb[0].mxu0
    %v8546 = vadd.f32 0.0, %v8545
    %v8547 = vpop.f32.mrb[0].mxu0
    %8548 = vmatprep.mubr.bf16.mxu0 %v8298
    %8549 = vmatmul.mubr.bf16.gmra.mrb[0].mxu0 %v8234
    %v8550 = vpop.f32.mrb[0].mxu0
    %v8551 = vadd.f32 0.0, %v8550
    %v8552 = vpop.f32.mrb[0].mxu0
    %v8553 = vpop.f32.mrb[0].mxu0
    %v8554 = vadd.f32 0.0, %v8553
    %v8555 = vpop.f32.mrb[0].mxu0
    %8556 = vmatprep.mubr.bf16.mxu0 %v8301
    %8557 = vmatmul.mubr.bf16.gmra.mrb[0].mxu0 %v8237
    %v8558 = vpop.f32.mrb[0].mxu0
    %v8559 = vadd.f32 0.0, %v8558
    %v8560 = vpop.f32.mrb[0].mxu0
    %v8561 = vpop.f32.mrb[0].mxu0
    %v8562 = vadd.f32 0.0, %v8561
    %v8563 = vpop.f32.mrb[0].mxu0
    %8564 = vmatprep.mubr.bf16.mxu0 %v8304
    %8565 = vmatmul.mubr.bf16.gmra.mrb[0].mxu0 %v8240
    %v8566 = vpop.f32.mrb[0].mxu0
    %v8567 = vadd.f32 0.0, %v8566
    %v8568 = vpop.f32.mrb[0].mxu0
    %v8569 = vpop.f32.mrb[0].mxu0
    %v8570 = vadd.f32 0.0, %v8569
    %v8571 = vpop.f32.mrb[0].mxu0
    %8572 = vdwg.mxu0
    %8573 = vmatprep.subr.bf16.mxu0 0
    %8574 = vmatpush1.bf16.msra.mxu0 %v8432
    %8575 = vmatprep.subr.bf16.mxu0 0
    %8576 = vmatpush1.bf16.msra.mxu0 %v8433
    %8577 = vmatprep.subr.bf16.mxu0 0
    %8578 = vmatpush1.bf16.msra.mxu0 0
    %8579 = vmatprep.subr.bf16.mxu0 0
    %8580 = vmatpush1.bf16.msra.mxu0 0
    %8581 = vmatprep.subr.bf16.mxu0 0
    %8582 = vmatpush1.bf16.msra.mxu0 0
    %8583 = vmatprep.subr.bf16.mxu0 0
    %8584 = vmatpush1.bf16.msra.mxu0 0
    %8585 = vmatprep.subr.bf16.mxu0 0
    %8586 = vmatpush1.bf16.msra.mxu0 0
    %8587 = vmatprep.subr.bf16.mxu0 0
    %8588 = vmatpush1.bf16.msra.mxu0 0
    %8589 = vmatprep.subr.bf16.mxu0 0
    %8590 = vmatpush1.bf16.msra.mxu0 0
    %8591 = vmatprep.subr.bf16.mxu0 0
    %8592 = vmatpush1.bf16.msra.mxu0 0
    %8593 = vmatprep.subr.bf16.mxu0 0
    %8594 = vmatpush1.bf16.msra.mxu0 0
    %8595 = vmatprep.subr.bf16.mxu0 0
    %8596 = vmatpush1.bf16.msra.mxu0 0
    %8597 = vmatprep.subr.bf16.mxu0 0
    %8598 = vmatpush1.bf16.msra.mxu0 0
    %8599 = vmatprep.subr.bf16.mxu0 0
    %8600 = vmatpush1.bf16.msra.mxu0 0
    %8601 = vmatprep.subr.bf16.mxu0 0
    %8602 = vmatpush1.bf16.msra.mxu0 0
    %8603 = vmatprep.subr.bf16.mxu0 0
    %8604 = vmatpush1.bf16.msra.mxu0 0
    %8605 = vmatprep.mubr.bf16.mxu0 0
    %8606 = vmatmul.mubr.bf16.gmra.mrb[0].mxu0 %v8453
    %v8607 = vpop.f32.mrb[0].mxu0
    %v8608 = vadd.f32 %v8511, %v8607
    %v8609 = vpop.f32.mrb[0].mxu0
    %v8610 = vpop.f32.mrb[0].mxu0
    %v8611 = vadd.f32 %v8514, %v8610
    %v8612 = vpop.f32.mrb[0].mxu0
    %8613 = vmatprep.mubr.bf16.mxu0 0
    %8614 = vmatmul.mubr.bf16.gmra.mrb[0].mxu0 %v8456
    %v8615 = vpop.f32.mrb[0].mxu0
    %v8616 = vadd.f32 %v8519, %v8615
    %v8617 = vpop.f32.mrb[0].mxu0
    %v8618 = vpop.f32.mrb[0].mxu0
    %v8619 = vadd.f32 %v8522, %v8618
    %v8620 = vpop.f32.mrb[0].mxu0
    %8621 = vmatprep.mubr.bf16.mxu0 0
    %8622 = vmatmul.mubr.bf16.gmra.mrb[0].mxu0 %v8459
    %v8623 = vpop.f32.mrb[0].mxu0
    %v8624 = vadd.f32 %v8527, %v8623
    %v8625 = vpop.f32.mrb[0].mxu0
    %v8626 = vpop.f32.mrb[0].mxu0
    %v8627 = vadd.f32 %v8530, %v8626
    %v8628 = vpop.f32.mrb[0].mxu0
    %8629 = vmatprep.mubr.bf16.mxu0 0
    %8630 = vmatmul.mubr.bf16.gmra.mrb[0].mxu0 %v8462
    %v8631 = vpop.f32.mrb[0].mxu0
    %v8632 = vadd.f32 %v8535, %v8631
    %v8633 = vpop.f32.mrb[0].mxu0
    %v8634 = vpop.f32.mrb[0].mxu0
    %v8635 = vadd.f32 %v8538, %v8634
    %v8636 = vpop.f32.mrb[0].mxu0
    %8637 = vmatprep.mubr.bf16.mxu0 0
    %8638 = vmatmul.mubr.bf16.gmra.mrb[0].mxu0 %v8465
    %v8639 = vpop.f32.mrb[0].mxu0
    %v8640 = vadd.f32 %v8543, %v8639
    %v8641 = vpop.f32.mrb[0].mxu0
    %v8642 = vpop.f32.mrb[0].mxu0
    %v8643 = vadd.f32 %v8546, %v8642
    %v8644 = vpop.f32.mrb[0].mxu0
    %8645 = vmatprep.mubr.bf16.mxu0 0
    %8646 = vmatmul.mubr.bf16.gmra.mrb[0].mxu0 %v8468
    %v8647 = vpop.f32.mrb[0].mxu0
    %v8648 = vadd.f32 %v8551, %v8647
    %v8649 = vpop.f32.mrb[0].mxu0
    %v8650 = vpop.f32.mrb[0].mxu0
    %v8651 = vadd.f32 %v8554, %v8650
    %v8652 = vpop.f32.mrb[0].mxu0
    %8653 = vmatprep.mubr.bf16.mxu0 0
    %8654 = vmatmul.mubr.bf16.gmra.mrb[0].mxu0 %v8471
    %v8655 = vpop.f32.mrb[0].mxu0
    %v8656 = vadd.f32 %v8559, %v8655
    %v8657 = vpop.f32.mrb[0].mxu0
    %v8658 = vpop.f32.mrb[0].mxu0
    %v8659 = vadd.f32 %v8562, %v8658
    %v8660 = vpop.f32.mrb[0].mxu0
    %8661 = vmatprep.mubr.bf16.mxu0 0
    %8662 = vmatmul.mubr.bf16.gmra.mrb[0].mxu0 %v8474
    %v8663 = vpop.f32.mrb[0].mxu0
    %v8664 = vadd.f32 %v8567, %v8663
    %v8665 = vpop.f32.mrb[0].mxu0
    %v8666 = vpop.f32.mrb[0].mxu0
    %v8667 = vadd.f32 %v8570, %v8666
    %v8668 = vpop.f32.mrb[0].mxu0
    %8669 = vdwg.mxu0
    %v8670 = vadd.f32 %v8608, %v8611
    %v8671 = vadd.f32 %v8670, %v8616
    %v8672 = vadd.f32 %v8671, %v8619
    %v8673 = vadd.f32 %v8672, %v8624
    %v8674 = vadd.f32 %v8673, %v8627
    %v8675 = vadd.f32 %v8674, %v8632
    %v8676 = vadd.f32 %v8675, %v8635
    %v8677 = vadd.f32 %v8676, %v8640
    %v8678 = vadd.f32 %v8677, %v8643
    %v8679 = vadd.f32 %v8678, %v8648
    %v8680 = vadd.f32 %v8679, %v8651
    %v8681 = vadd.f32 %v8680, %v8656
    %v8682 = vadd.f32 %v8681, %v8659
    %v8683 = vadd.f32 %v8682, %v8664
    %v8684 = vadd.f32 %v8683, %v8667
    %v8685 = vrot.slane %v8684, 4
    %v8686 = vadd.f32 %v8684, %v8685
    %v8687 = vrot.slane %v8686, 2
    %v8688 = vadd.f32 %v8686, %v8687
    %v8689 = vrot.slane %v8688, 1
    %v8690 = vadd.f32 %v8688, %v8689
    %v8691 = vmul.f32 %v8690, %v1457
    %v8692 = vmul.f32 %v8608, %v8608
    %v8693 = vmul.f32 %v8611, %v8611
    %v8694 = vmul.f32 %v8616, %v8616
    %v8695 = vmul.f32 %v8619, %v8619
    %v8696 = vmul.f32 %v8624, %v8624
    %v8697 = vmul.f32 %v8627, %v8627
    %v8698 = vmul.f32 %v8632, %v8632
    %v8699 = vmul.f32 %v8635, %v8635
    %v8700 = vmul.f32 %v8640, %v8640
    %v8701 = vmul.f32 %v8643, %v8643
    %v8702 = vmul.f32 %v8648, %v8648
    %v8703 = vmul.f32 %v8651, %v8651
    %v8704 = vmul.f32 %v8656, %v8656
    %v8705 = vmul.f32 %v8659, %v8659
    %v8706 = vmul.f32 %v8664, %v8664
    %v8707 = vmul.f32 %v8667, %v8667
    %v8708 = vadd.f32 %v8692, %v8693
    %v8709 = vadd.f32 %v8708, %v8694
    %v8710 = vadd.f32 %v8709, %v8695
    %v8711 = vadd.f32 %v8710, %v8696
    %v8712 = vadd.f32 %v8711, %v8697
    %v8713 = vadd.f32 %v8712, %v8698
    %v8714 = vadd.f32 %v8713, %v8699
    %v8715 = vadd.f32 %v8714, %v8700
    %v8716 = vadd.f32 %v8715, %v8701
    %v8717 = vadd.f32 %v8716, %v8702
    %v8718 = vadd.f32 %v8717, %v8703
    %v8719 = vadd.f32 %v8718, %v8704
    %v8720 = vadd.f32 %v8719, %v8705
    %v8721 = vadd.f32 %v8720, %v8706
    %v8722 = vadd.f32 %v8721, %v8707
    %v8723 = vrot.slane %v8722, 4
    %v8724 = vadd.f32 %v8722, %v8723
    %v8725 = vrot.slane %v8724, 2
    %v8726 = vadd.f32 %v8724, %v8725
    %v8727 = vrot.slane %v8726, 1
    %v8728 = vadd.f32 %v8726, %v8727
    %v8729 = vmul.f32 %v8728, %v1457
    %v8730 = vmul.f32 %v8691, %v8691
    %v8731 = vsub.f32 %v8729, %v8730
    %v8732 = vmax.f32 %v8731, 0.0
    %v8733 = vsub.f32 %v8608, %v8691
    %v8734 = vsub.f32 %v8611, %v8691
    %v8735 = vsub.f32 %v8616, %v8691
    %v8736 = vsub.f32 %v8619, %v8691
    %v8737 = vsub.f32 %v8624, %v8691
    %v8738 = vsub.f32 %v8627, %v8691
    %v8739 = vsub.f32 %v8632, %v8691
    %v8740 = vsub.f32 %v8635, %v8691
    %v8741 = vsub.f32 %v8640, %v8691
    %v8742 = vsub.f32 %v8643, %v8691
    %v8743 = vsub.f32 %v8648, %v8691
    %v8744 = vsub.f32 %v8651, %v8691
    %v8745 = vsub.f32 %v8656, %v8691
    %v8746 = vsub.f32 %v8659, %v8691
    %v8747 = vsub.f32 %v8664, %v8691
    %v8748 = vsub.f32 %v8667, %v8691
    %v8749 = vadd.f32 %v8732, 1e-05
    %v8750 = vrsqrt.pop %v8749
    %v8751 = vmul.f32 %v8733, %v8750
    %v8752 = vmul.f32 %v8734, %v8750
    %v8753 = vmul.f32 %v8735, %v8750
    %v8754 = vmul.f32 %v8736, %v8750
    %v8755 = vmul.f32 %v8737, %v8750
    %v8756 = vmul.f32 %v8738, %v8750
    %v8757 = vmul.f32 %v8739, %v8750
    %v8758 = vmul.f32 %v8740, %v8750
    %v8759 = vmul.f32 %v8741, %v8750
    %v8760 = vmul.f32 %v8742, %v8750
    %v8761 = vmul.f32 %v8743, %v8750
    %v8762 = vmul.f32 %v8744, %v8750
    %v8763 = vmul.f32 %v8745, %v8750
    %v8764 = vmul.f32 %v8746, %v8750
    %v8765 = vmul.f32 %v8747, %v8750
    %v8766 = vmul.f32 %v8748, %v8750
    %v8768 = vlaneseq
    %v8769 = vshrl.u32 %v8768, 7
    %v8770 = vsub.s32 0, %v8769
    %v8771 = vrot.slane %v8342, %v8770
    %v8773 = vmul.f32 %v8751, %v8771
    %v8774 = vmul.f32 %v8752, %v8771
    %v8775 = vmul.f32 %v8753, %v8771
    %v8776 = vmul.f32 %v8754, %v8771
    %v8777 = vmul.f32 %v8755, %v8771
    %v8778 = vmul.f32 %v8756, %v8771
    %v8779 = vmul.f32 %v8757, %v8771
    %v8780 = vmul.f32 %v8758, %v8771
    %v8781 = vmul.f32 %v8759, %v8771
    %v8782 = vmul.f32 %v8760, %v8771
    %v8783 = vmul.f32 %v8761, %v8771
    %v8784 = vmul.f32 %v8762, %v8771
    %v8785 = vmul.f32 %v8763, %v8771
    %v8786 = vmul.f32 %v8764, %v8771
    %v8787 = vmul.f32 %v8765, %v8771
    %v8788 = vmul.f32 %v8766, %v8771
    %v8790 = vlaneseq
    %v8791 = vshrl.u32 %v8790, 7
    %v8792 = vsub.s32 0, %v8791
    %v8793 = vrot.slane %v8343, %v8792
    %v8795 = vadd.f32 %v8773, %v8793
    %v8796 = vadd.f32 %v8774, %v8793
    %v8797 = vadd.f32 %v8775, %v8793
    %v8798 = vadd.f32 %v8776, %v8793
    %v8799 = vadd.f32 %v8777, %v8793
    %v8800 = vadd.f32 %v8778, %v8793
    %v8801 = vadd.f32 %v8779, %v8793
    %v8802 = vadd.f32 %v8780, %v8793
    %v8803 = vadd.f32 %v8781, %v8793
    %v8804 = vadd.f32 %v8782, %v8793
    %v8805 = vadd.f32 %v8783, %v8793
    %v8806 = vadd.f32 %v8784, %v8793
    %v8807 = vadd.f32 %v8785, %v8793
    %v8808 = vadd.f32 %v8786, %v8793
    %v8809 = vadd.f32 %v8787, %v8793
    %v8810 = vadd.f32 %v8788, %v8793
    %v8811 = vmax.f32 %v8795, 0.0
    %v8812 = vmax.f32 %v8796, 0.0
    %v8813 = vmax.f32 %v8797, 0.0
    %v8814 = vmax.f32 %v8798, 0.0
    %v8815 = vmax.f32 %v8799, 0.0
    %v8816 = vmax.f32 %v8800, 0.0
    %v8817 = vmax.f32 %v8801, 0.0
    %v8818 = vmax.f32 %v8802, 0.0
    %v8819 = vmax.f32 %v8803, 0.0
    %v8820 = vmax.f32 %v8804, 0.0
    %v8821 = vmax.f32 %v8805, 0.0
    %v8822 = vmax.f32 %v8806, 0.0
    %v8823 = vmax.f32 %v8807, 0.0
    %v8824 = vmax.f32 %v8808, 0.0
    %v8825 = vmax.f32 %v8809, 0.0
    %v8826 = vmax.f32 %v8810, 0.0
    %v8827 = vpack.c.bf16 %v8812, %v8811
    %v8828 = vpack.c.bf16 %v8814, %v8813
    %v8829 = vpack.c.bf16 %v8816, %v8815
    %v8830 = vpack.c.bf16 %v8818, %v8817
    %v8831 = vpack.c.bf16 %v8820, %v8819
    %v8832 = vpack.c.bf16 %v8822, %v8821
    %v8833 = vpack.c.bf16 %v8824, %v8823
    %v8834 = vpack.c.bf16 %v8826, %v8825
    %v8843 = vunpack.c.l.b16 %v8827
    %v8844 = vunpack.c.h.b16 %v8827
    %v8845 = vunpack.c.l.b16 %v8828
    %v8846 = vunpack.c.h.b16 %v8828
    %v8847 = vunpack.c.l.b16 %v8829
    %v8848 = vunpack.c.h.b16 %v8829
    %v8849 = vunpack.c.l.b16 %v8830
    %v8850 = vunpack.c.h.b16 %v8830
    %v8851 = vunpack.c.l.b16 %v8831
    %v8852 = vunpack.c.h.b16 %v8831
    %v8853 = vunpack.c.l.b16 %v8832
    %v8854 = vunpack.c.h.b16 %v8832
    %v8855 = vunpack.c.l.b16 %v8833
    %v8856 = vunpack.c.h.b16 %v8833
    %v8857 = vunpack.c.l.b16 %v8834
    %v8858 = vunpack.c.h.b16 %v8834
    %v8859 = vpack.c.b16 %v8843, %v8843
    %v8860 = vpack.c.b16 %v8844, %v8844
    %v8861 = vpack.c.b16 %v8845, %v8845
    %v8862 = vpack.c.b16 %v8846, %v8846
    %v8863 = vpack.c.b16 %v8847, %v8847
    %v8864 = vpack.c.b16 %v8848, %v8848
    %v8865 = vpack.c.b16 %v8849, %v8849
    %v8866 = vpack.c.b16 %v8850, %v8850
    %v8867 = vpack.c.b16 %v8851, %v8851
    %v8868 = vpack.c.b16 %v8852, %v8852
    %v8869 = vpack.c.b16 %v8853, %v8853
    %v8870 = vpack.c.b16 %v8854, %v8854
    %v8871 = vpack.c.b16 %v8855, %v8855
    %v8872 = vpack.c.b16 %v8856, %v8856
    %v8873 = vpack.c.b16 %v8857, %v8857
    %v8874 = vpack.c.b16 %v8858, %v8858
    %8891 = vst [vmem:[%s7] sm:$0xf] %v8859
    %8892 = vst [vmem:[%s7 + $0x4] sm:$0xf] %v8860
    %8893 = vst [vmem:[%s7 + $0x8] sm:$0xf] %v8861
    %8894 = vst [vmem:[%s7 + $0xc] sm:$0xf] %v8862
    %8895 = vst [vmem:[%s7 + $0x10] sm:$0xf] %v8863
    %8896 = vst [vmem:[%s7 + $0x14] sm:$0xf] %v8864
    %8897 = vst [vmem:[%s7 + $0x18] sm:$0xf] %v8865
    %8898 = vst [vmem:[%s7 + $0x1c] sm:$0xf] %v8866
    %8899 = vst [vmem:[%s7 + $0x20] sm:$0xf] %v8867
    %8900 = vst [vmem:[%s7 + $0x24] sm:$0xf] %v8868
    %8901 = vst [vmem:[%s7 + $0x28] sm:$0xf] %v8869
    %8902 = vst [vmem:[%s7 + $0x2c] sm:$0xf] %v8870
    %8903 = vst [vmem:[%s7 + $0x30] sm:$0xf] %v8871
    %8904 = vst [vmem:[%s7 + $0x34] sm:$0xf] %v8872
    %8905 = vst [vmem:[%s7 + $0x38] sm:$0xf] %v8873
    %8906 = vst [vmem:[%s7 + $0x3c] sm:$0xf] %v8874
    // Predicated region
    $region54: #{resnet_forward.2} parent=1 // pred_check
      _
    $region55: #{resnet_forward.2} parent=1 // pred_check_branch
      %8908 = sbr.rel (0) target = $region57
    $region56: #{resnet_forward.2} parent=1 // pred_region
      _
    $region57: #{resnet_forward.2} parent=1 // pred_fallthru
      _
    // Predicated region
    $region58: #{resnet_forward.2} parent=1 // pred_check
      _
    $region59: #{resnet_forward.2} parent=1 // pred_check_branch
      %8910 = sbr.rel (0) target = $region61
    $region60: #{resnet_forward.2} parent=1 // pred_region
      _
    $region61: #{resnet_forward.2} parent=1 // pred_fallthru
      _
    %8911 = vsyncpa [#allocation4], 1
    %8912 = vsyncpa [#allocation6], 1
    %8913 = vsyncpa [#allocation9], 1
    %8914 = vsyncpa [#allocation12], 1

</llo_original>
